<compile_context>
chip_gen: v7x
topology: tpu7x:2x2x1
jax: 0.10.0
libtpu: 0.0.40
codegen_flags: <defaults>
</compile_context>

<pallas_src>
import math

import jax
import jax.numpy as jnp
from jax.experimental import pallas as pl
from jax.experimental.pallas import tpu as pltpu


# ---------------------------------------------------------------------------
# Bilinear (align_corners=True) 1-D interpolation matrix, PyTorch semantics.
# ---------------------------------------------------------------------------
def _interp_matrix(n_in, n_out):
    rows = []
    for i in range(n_out):
        row = [0.0] * n_in
        if n_in == 1 or n_out == 1:
            row[0] = 1.0
        else:
            src = i * (n_in - 1) / (n_out - 1)
            i0 = int(math.floor(src))
            i1 = min(i0 + 1, n_in - 1)
            f = src - i0
            row[i0] += 1.0 - f
            row[i1] += f
        rows.append(row)
    return jnp.array(rows, dtype=jnp.float32)


# ---------------------------------------------------------------------------
# In-kernel helpers (pure jnp on values; no scratch, no serial loops).
# ---------------------------------------------------------------------------
def _shift_matrix(length, d):
    """(L, L) matrix P with P[t, t-d] = 1:  (P @ x)[t] = x[t-d], 0 for t < d."""
    row = jax.lax.broadcasted_iota(jnp.int32, (length, length), 0)
    col = jax.lax.broadcasted_iota(jnp.int32, (length, length), 1)
    return jnp.where(col == row - d, 1.0, 0.0)


def _mamba_ln_relu_stage(xin, z, t_mat, g_mat, conv_w, conv_b, wb, wc, wdt,
                         b_dt, ta, d_vec, w_out, gamma, beta):
    """One Mamba block (post in_proj) + LayerNorm + ReLU, fully vectorized.

    xin, z : (L, d_inner)              two halves of the in_proj output
    t_mat  : (d_inner, S*d_inner)      lane-tile expansion (repeat over states)
    g_mat  : (S*d_inner, d_inner)      sum-over-states reduction
    wb, wc : (d_inner, S*d_inner)      x_proj B / C rows pre-expanded to packed lanes
    wdt    : (d_inner, d_inner)        x_proj dt column folded with dt_proj
    ta     : (d_inner, S*d_inner)      t_mat scaled by A = -exp(A_log) (packed)
    """
    seq_len, _ = xin.shape
    d_conv = conv_w.shape[0]

    # ---- causal depthwise conv1d (tap j applies x[t - j]) + SiLU ----------
    cw = conv_w.astype(jnp.float32)
    conv = cw[d_conv - 1:d_conv, :] * xin
    for j in range(1, d_conv):
        shifted = jnp.dot(_shift_matrix(seq_len, j), xin,
                          preferred_element_type=jnp.float32)
        conv = conv + cw[d_conv - 1 - j:d_conv - j, :] * shifted
    conv = conv + conv_b
    u = conv * jax.nn.sigmoid(conv)                                      # (L, di)

    # ---- dt / B / C projections (folded, lane-packed; no lane slicing) ----
    dlin = jnp.dot(u, wdt, preferred_element_type=jnp.float32) + b_dt
    delta = jnp.where(dlin > 30.0, dlin,
                      jnp.log(1.0 + jnp.exp(jnp.minimum(dlin, 30.0))))   # softplus
    a = jnp.exp(jnp.dot(delta, ta, preferred_element_type=jnp.float32))  # (L, S*di)
    b = (jnp.dot(delta * u, t_mat, preferred_element_type=jnp.float32)
         * jnp.dot(u, wb, preferred_element_type=jnp.float32))           # (L, S*di)
    cm = jnp.dot(u, wc, preferred_element_type=jnp.float32)              # (L, S*di)

    # ---- log-depth associative scan over L:  h_t = a_t * h_{t-1} + b_t ----
    h, acc = b, a
    d = 1
    while d < seq_len:
        p = _shift_matrix(seq_len, d)
        lt = jnp.where(
            jax.lax.broadcasted_iota(jnp.int32, (seq_len, 1), 0) < d, 1.0, 0.0)
        h = h + acc * jnp.dot(p, h, preferred_element_type=jnp.float32)
        acc = acc * (jnp.dot(p, acc, preferred_element_type=jnp.float32) + lt)
        d *= 2

    ys = jnp.dot(h * cm, g_mat, preferred_element_type=jnp.float32)      # (L, di)
    y = (ys + u * d_vec) * (z * jax.nn.sigmoid(z))                       # SiLU gate
    out = jnp.dot(y, w_out, preferred_element_type=jnp.float32)          # (L, out_c)

    # ---- fused LayerNorm (over channels) + ReLU ----------------------------
    mu = jnp.mean(out, axis=-1, keepdims=True)
    dev = out - mu
    var = jnp.mean(dev * dev, axis=-1, keepdims=True)
    return jnp.maximum(dev * jax.lax.rsqrt(var + 1e-5) * gamma + beta, 0.0)


_N_STAGE = 11  # conv_w, conv_b, WB, WC, Wdt, b_dt, TA, D, w_out, gamma, beta


def _up_fused_kernel(*refs):
    """Whole Up.forward for one batch element: upsample + 2x (Mamba+LN+ReLU)."""
    o_ref = refs[-1]
    x1_ref, x2_ref, wup_ref, t_ref, g_ref = refs[0:5]
    w1xa_ref, w1xb_ref, w1za_ref, w1zb_ref = refs[5:9]
    stage1_refs = refs[9:9 + _N_STAGE]
    w2x_ref, w2z_ref = refs[9 + _N_STAGE:11 + _N_STAGE]
    stage2_refs = refs[11 + _N_STAGE:11 + 2 * _N_STAGE]

    t_mat = t_ref[...]
    g_mat = g_ref[...]

    # ---- bilinear x2 upsample of x1 (spatial-only contraction) ------------
    x1b = x1_ref[0].astype(jnp.float32)                     # (H*W, C1)
    x2b = x2_ref[0].astype(jnp.float32)                     # (L,   C2)
    x1u = jnp.dot(wup_ref[...], x1b, preferred_element_type=jnp.float32)  # (L, C1)

    # ---- channel concat realized as a split in_proj (no concat op) --------
    xin1 = (jnp.dot(x1u, w1xa_ref[...], preferred_element_type=jnp.float32)
            + jnp.dot(x2b, w1xb_ref[...], preferred_element_type=jnp.float32))
    z1 = (jnp.dot(x1u, w1za_ref[...], preferred_element_type=jnp.float32)
          + jnp.dot(x2b, w1zb_ref[...], preferred_element_type=jnp.float32))

    s1 = _mamba_ln_relu_stage(xin1, z1, t_mat, g_mat,
                              *[r[...] for r in stage1_refs])             # (L, n_ch)

    xin2 = jnp.dot(s1, w2x_ref[...], preferred_element_type=jnp.float32)
    z2 = jnp.dot(s1, w2z_ref[...], preferred_element_type=jnp.float32)
    out = _mamba_ln_relu_stage(xin2, z2, t_mat, g_mat,
                               *[r[...] for r in stage2_refs])            # (L, n_ch//3)

    o_ref[0] = out.astype(o_ref.dtype)


# ---------------------------------------------------------------------------
# Wrapper: weight folding + the single pallas_call.
# ---------------------------------------------------------------------------
def _stage_weight_list(p, ln):
    """Folded, lane-packed per-stage weights in the order the kernel expects."""
    _, d_inner = p["conv_w"].shape
    d_state = p["A_log"].shape[0]
    dt_rank = p["w_dtp"].shape[0]
    eye_di = jnp.eye(d_inner, dtype=jnp.float32)
    t_mat = jnp.tile(eye_di, (1, d_state))                                # (di, S*di)
    a_flat = (-jnp.exp(p["A_log"].astype(jnp.float32))).reshape(1, d_state * d_inner)
    ta = t_mat * a_flat                                                   # (di, S*di)
    expand_s = jnp.kron(jnp.eye(d_state, dtype=jnp.float32),
                        jnp.ones((1, d_inner), jnp.float32))              # (S, S*di)
    wb = p["w_xp"][:, dt_rank:dt_rank + d_state] @ expand_s               # (di, S*di)
    wc = p["w_xp"][:, dt_rank + d_state:] @ expand_s                      # (di, S*di)
    wdt = p["w_xp"][:, :dt_rank] @ p["w_dtp"]                             # (di, di)
    return [p["conv_w"], p["conv_b"], wb, wc, wdt, p["b_dtp"], ta,
            p["D"], p["w_out"], ln["gamma"], ln["beta"]]


def up_forward(params, x1, x2):
    """Up.forward: bilinear x2 upsample of x1, channel concat, double SSM block."""
    B, c1, H, W = x1.shape
    c2 = x2.shape[1]
    Ho, Wo = 2 * H, 2 * W
    L = Ho * Wo
    p1, p2 = params["ssm1"], params["ssm2"]
    d_inner = p1["conv_w"].shape[1]
    d_state = p1["A_log"].shape[0]
    out_c = p2["w_out"].shape[1]

    # channel-last, flattened views of the (tiny) raw inputs
    x1f = jnp.transpose(x1, (0, 2, 3, 1)).reshape(B, H * W, c1)
    x2f = jnp.transpose(x2, (0, 2, 3, 1)).reshape(B, L, c2)

    # spatial-only x2 bilinear interpolation matrix (align_corners=True)
    wup = jnp.kron(_interp_matrix(H, Ho), _interp_matrix(W, Wo))          # (L, H*W)

    eye_di = jnp.eye(d_inner, dtype=jnp.float32)
    t_mat = jnp.tile(eye_di, (1, d_state))                                # (di, S*di)
    g_mat = jnp.tile(eye_di, (d_state, 1))                                # (S*di, di)

    # in_proj split into x/z halves (and by input channel for stage 1)
    w_in1, w_in2 = p1["w_in"], p2["w_in"]
    w1xa, w1xb = w_in1[:c1, :d_inner], w_in1[c1:, :d_inner]
    w1za, w1zb = w_in1[:c1, d_inner:], w_in1[c1:, d_inner:]
    w2x, w2z = w_in2[:, :d_inner], w_in2[:, d_inner:]

    inputs = ([x1f, x2f, wup, t_mat, g_mat, w1xa, w1xb, w1za, w1zb]
              + _stage_weight_list(p1, params["ln1"])
              + [w2x, w2z]
              + _stage_weight_list(p2, params["ln2"]))

    in_specs = [
        pl.BlockSpec((1, H * W, c1), lambda b: (b, 0, 0)),
        pl.BlockSpec((1, L, c2), lambda b: (b, 0, 0)),
    ] + [pl.BlockSpec(w.shape, lambda b: (0, 0)) for w in inputs[2:]]

    y = pl.pallas_call(
        _up_fused_kernel,
        grid=(B,),
        in_specs=in_specs,
        out_specs=pl.BlockSpec((1, L, out_c), lambda b: (b, 0, 0)),
        out_shape=jax.ShapeDtypeStruct((B, L, out_c), jnp.float32),
        compiler_params=pltpu.CompilerParams(dimension_semantics=("parallel",)),
    )(*inputs)

    # Match the PyTorch epilogue exactly: reshape to (b, h, w, c//3) and then
    # permute(0, 3, 2, 1) -> (B, C', 2W, 2H).  (The reference module itself
    # swaps the two spatial axes here; we reproduce that behaviour.)
    y = y.reshape(B, Ho, Wo, out_c)
    return jnp.transpose(y, (0, 3, 2, 1))


# ---------------------------------------------------------------------------
# Parameter init (deterministic, synthetic).
# ---------------------------------------------------------------------------
def init_mamba_params(key, d_model, out_c, d_state=16, d_conv=4, expand=2):
    d_inner = expand * d_model
    dt_rank = math.ceil(d_model / 16)
    ks = jax.random.split(key, 5)

    def lin(kk, fan_in, shape):
        return jax.random.normal(kk, shape, jnp.float32) / math.sqrt(fan_in)

    return {
        "w_in": lin(ks[0], d_model, (d_model, 2 * d_inner)),              # merged in_proj
        "conv_w": lin(ks[1], d_conv, (d_conv, d_inner)),                  # depthwise taps
        "conv_b": jnp.zeros((1, d_inner), jnp.float32),
        "w_xp": lin(ks[2], d_inner, (d_inner, dt_rank + 2 * d_state)),    # merged x_proj
        "w_dtp": lin(ks[3], dt_rank, (dt_rank, d_inner)),
        "b_dtp": jnp.full((1, d_inner), math.log(math.expm1(0.05)), jnp.float32),
        "A_log": jnp.tile(jnp.log(jnp.arange(1, d_state + 1,
                                             dtype=jnp.float32))[:, None], (1, d_inner)),
        "D": jnp.ones((1, d_inner), jnp.float32),
        "w_out": lin(ks[4], d_inner, (d_inner, out_c)),
    }


# ---------------------------------------------------------------------------
# Pure-JAX reference (independent formulation) for numerical validation.
# ---------------------------------------------------------------------------
def _ref_mamba(p, x):
    B, L, _ = x.shape
    d_conv, d_inner = p["conv_w"].shape
    d_state = p["A_log"].shape[0]
    dt_rank = p["w_dtp"].shape[0]
    hp = jax.lax.Precision.HIGHEST

    proj = jnp.einsum("bld,de->ble", x, p["w_in"], precision=hp)
    xin, z = proj[..., :d_inner], proj[..., d_inner:]

    xpad = jnp.pad(xin, ((0, 0), (d_conv - 1, 0), (0, 0)))
    conv = sum(p["conv_w"][k] * xpad[:, k:k + L, :] for k in range(d_conv)) + p["conv_b"]
    u = conv * jax.nn.sigmoid(conv)

    xp = jnp.einsum("bld,de->ble", u, p["w_xp"], precision=hp)
    dt_in = xp[..., :dt_rank]
    bm = xp[..., dt_rank:dt_rank + d_state]
    cm = xp[..., dt_rank + d_state:]
    delta = jax.nn.softplus(
        jnp.einsum("blr,rd->bld", dt_in, p["w_dtp"], precision=hp) + p["b_dtp"])
    a_mat = -jnp.exp(p["A_log"])                                          # (S, di)

    def step(h, inp):
        d_t, u_t, b_t, c_t = inp
        h = jnp.exp(d_t[:, None, :] * a_mat[None]) * h \
            + (d_t * u_t)[:, None, :] * b_t[:, :, None]
        return h, jnp.einsum("bs,bsd->bd", c_t, h, precision=hp)

    h0 = jnp.zeros((B, d_state, d_inner), jnp.float32)
    _, ys = jax.lax.scan(step, h0,
                         (jnp.moveaxis(delta, 1, 0), jnp.moveaxis(u, 1, 0),
                          jnp.moveaxis(bm, 1, 0), jnp.moveaxis(cm, 1, 0)))
    ys = jnp.moveaxis(ys, 0, 1)
    y = (ys + u * p["D"]) * (z * jax.nn.sigmoid(z))
    return jnp.einsum("bld,de->ble", y, p["w_out"], precision=hp)


def _ref_ln_relu(ln, x):
    mu = jnp.mean(x, axis=-1, keepdims=True)
    var = jnp.mean((x - mu) ** 2, axis=-1, keepdims=True)
    return jnp.maximum((x - mu) * jax.lax.rsqrt(var + 1e-5) * ln["gamma"] + ln["beta"], 0.0)


def ref_up_forward(params, x1, x2):
    B, c1, H, W = x1.shape
    wr, wc = _interp_matrix(H, 2 * H), _interp_matrix(W, 2 * W)
    x1cl = jnp.transpose(x1, (0, 2, 3, 1))
    x2cl = jnp.transpose(x2, (0, 2, 3, 1))
    x1u = jnp.einsum("oh,pw,bhwc->bopc", wr, wc, x1cl,
                     precision=jax.lax.Precision.HIGHEST)
    x = jnp.concatenate([x1u, x2cl], axis=-1)
    b, h, w, c = x.shape
    xs = x.reshape(b, h * w, c)
    y = _ref_ln_relu(params["ln1"], _ref_mamba(params["ssm1"], xs))
    y = _ref_ln_relu(params["ln2"], _ref_mamba(params["ssm2"], y))
    y = y.reshape(b, h, w, c // 3)
    return jnp.transpose(y, (0, 3, 2, 1))


if __name__ == "__main__":
    in_channels = 4
    B, H, W = 2, 4, 4
    n_channels = in_channels + in_channels // 2                           # 6 (divisible by 3)

    key = jax.random.PRNGKey(0)
    k1, k2, ks1, ks2 = jax.random.split(key, 4)
    x1 = jax.random.normal(k1, (B, in_channels, H, W), jnp.float32)
    x2 = jax.random.normal(k2, (B, in_channels // 2, 2 * H, 2 * W), jnp.float32)

    params = {
        "ssm1": init_mamba_params(ks1, n_channels, n_channels),
        "ssm2": init_mamba_params(ks2, n_channels, n_channels // 3),
        "ln1": {"gamma": jnp.ones((1, n_channels), jnp.float32),
                "beta": jnp.zeros((1, n_channels), jnp.float32)},
        "ln2": {"gamma": jnp.ones((1, n_channels // 3), jnp.float32),
                "beta": jnp.zeros((1, n_channels // 3), jnp.float32)},
    }

    out = jax.jit(up_forward)(params, x1, x2)
    jax.block_until_ready(out)

    assert out.shape == (B, n_channels // 3, 2 * W, 2 * H), out.shape
    assert bool(jnp.all(jnp.isfinite(out)))

    # Validate numerics against an independent pure-JAX reference.
    ref = ref_up_forward(params, x1, x2)
    max_err = float(jnp.max(jnp.abs(out - ref)))
    assert max_err < 5e-3, f"mismatch vs reference: {max_err}"

    print("KERNEL_OK")
</pallas_src>

<mosaic_0001>
module attributes {stable_mosaic.version = 11 : i64} {
  func.func @_up_fused_kernel(%arg0: i32, %arg1: memref<1x16x4xf32, #tpu.memory_space<vmem>>, %arg2: memref<1x64x2xf32, #tpu.memory_space<vmem>>, %arg3: memref<64x16xf32, #tpu.memory_space<vmem>>, %arg4: memref<12x192xf32, #tpu.memory_space<vmem>>, %arg5: memref<192x12xf32, #tpu.memory_space<vmem>>, %arg6: memref<4x12xf32, #tpu.memory_space<vmem>>, %arg7: memref<2x12xf32, #tpu.memory_space<vmem>>, %arg8: memref<4x12xf32, #tpu.memory_space<vmem>>, %arg9: memref<2x12xf32, #tpu.memory_space<vmem>>, %arg10: memref<4x12xf32, #tpu.memory_space<vmem>>, %arg11: memref<1x12xf32, #tpu.memory_space<vmem>>, %arg12: memref<12x192xf32, #tpu.memory_space<vmem>>, %arg13: memref<12x192xf32, #tpu.memory_space<vmem>>, %arg14: memref<12x12xf32, #tpu.memory_space<vmem>>, %arg15: memref<1x12xf32, #tpu.memory_space<vmem>>, %arg16: memref<12x192xf32, #tpu.memory_space<vmem>>, %arg17: memref<1x12xf32, #tpu.memory_space<vmem>>, %arg18: memref<12x6xf32, #tpu.memory_space<vmem>>, %arg19: memref<1x6xf32, #tpu.memory_space<vmem>>, %arg20: memref<1x6xf32, #tpu.memory_space<vmem>>, %arg21: memref<6x12xf32, #tpu.memory_space<vmem>>, %arg22: memref<6x12xf32, #tpu.memory_space<vmem>>, %arg23: memref<4x12xf32, #tpu.memory_space<vmem>>, %arg24: memref<1x12xf32, #tpu.memory_space<vmem>>, %arg25: memref<12x192xf32, #tpu.memory_space<vmem>>, %arg26: memref<12x192xf32, #tpu.memory_space<vmem>>, %arg27: memref<12x12xf32, #tpu.memory_space<vmem>>, %arg28: memref<1x12xf32, #tpu.memory_space<vmem>>, %arg29: memref<12x192xf32, #tpu.memory_space<vmem>>, %arg30: memref<1x12xf32, #tpu.memory_space<vmem>>, %arg31: memref<12x2xf32, #tpu.memory_space<vmem>>, %arg32: memref<1x2xf32, #tpu.memory_space<vmem>>, %arg33: memref<1x2xf32, #tpu.memory_space<vmem>>, %arg34: memref<1x64x2xf32, #tpu.memory_space<vmem>>) attributes {dimension_semantics = [#tpu.dimension_semantics<parallel>], iteration_bounds = array<i64: 2>, scalar_prefetch = 0 : i64, scratch_operands = 0 : i64, tpu.core_type = #tpu.core_type<tc>, window_params = [{transform_indices = @transform_0, window_bounds = array<i64: 1, 16, 4>}, {transform_indices = @transform_1, window_bounds = array<i64: 1, 64, 2>}, {pipeline_mode = #tpu.pipeline_mode<synchronous>, transform_indices = @transform_2, window_bounds = array<i64: 64, 16>}, {pipeline_mode = #tpu.pipeline_mode<synchronous>, transform_indices = @transform_3, window_bounds = array<i64: 12, 192>}, {pipeline_mode = #tpu.pipeline_mode<synchronous>, transform_indices = @transform_4, window_bounds = array<i64: 192, 12>}, {pipeline_mode = #tpu.pipeline_mode<synchronous>, transform_indices = @transform_5, window_bounds = array<i64: 4, 12>}, {pipeline_mode = #tpu.pipeline_mode<synchronous>, transform_indices = @transform_6, window_bounds = array<i64: 2, 12>}, {pipeline_mode = #tpu.pipeline_mode<synchronous>, transform_indices = @transform_7, window_bounds = array<i64: 4, 12>}, {pipeline_mode = #tpu.pipeline_mode<synchronous>, transform_indices = @transform_8, window_bounds = array<i64: 2, 12>}, {pipeline_mode = #tpu.pipeline_mode<synchronous>, transform_indices = @transform_9, window_bounds = array<i64: 4, 12>}, {pipeline_mode = #tpu.pipeline_mode<synchronous>, transform_indices = @transform_10, window_bounds = array<i64: 1, 12>}, {pipeline_mode = #tpu.pipeline_mode<synchronous>, transform_indices = @transform_11, window_bounds = array<i64: 12, 192>}, {pipeline_mode = #tpu.pipeline_mode<synchronous>, transform_indices = @transform_12, window_bounds = array<i64: 12, 192>}, {pipeline_mode = #tpu.pipeline_mode<synchronous>, transform_indices = @transform_13, window_bounds = array<i64: 12, 12>}, {pipeline_mode = #tpu.pipeline_mode<synchronous>, transform_indices = @transform_14, window_bounds = array<i64: 1, 12>}, {pipeline_mode = #tpu.pipeline_mode<synchronous>, transform_indices = @transform_15, window_bounds = array<i64: 12, 192>}, {pipeline_mode = #tpu.pipeline_mode<synchronous>, transform_indices = @transform_16, window_bounds = array<i64: 1, 12>}, {pipeline_mode = #tpu.pipeline_mode<synchronous>, transform_indices = @transform_17, window_bounds = array<i64: 12, 6>}, {pipeline_mode = #tpu.pipeline_mode<synchronous>, transform_indices = @transform_18, window_bounds = array<i64: 1, 6>}, {pipeline_mode = #tpu.pipeline_mode<synchronous>, transform_indices = @transform_19, window_bounds = array<i64: 1, 6>}, {pipeline_mode = #tpu.pipeline_mode<synchronous>, transform_indices = @transform_20, window_bounds = array<i64: 6, 12>}, {pipeline_mode = #tpu.pipeline_mode<synchronous>, transform_indices = @transform_21, window_bounds = array<i64: 6, 12>}, {pipeline_mode = #tpu.pipeline_mode<synchronous>, transform_indices = @transform_22, window_bounds = array<i64: 4, 12>}, {pipeline_mode = #tpu.pipeline_mode<synchronous>, transform_indices = @transform_23, window_bounds = array<i64: 1, 12>}, {pipeline_mode = #tpu.pipeline_mode<synchronous>, transform_indices = @transform_24, window_bounds = array<i64: 12, 192>}, {pipeline_mode = #tpu.pipeline_mode<synchronous>, transform_indices = @transform_25, window_bounds = array<i64: 12, 192>}, {pipeline_mode = #tpu.pipeline_mode<synchronous>, transform_indices = @transform_26, window_bounds = array<i64: 12, 12>}, {pipeline_mode = #tpu.pipeline_mode<synchronous>, transform_indices = @transform_27, window_bounds = array<i64: 1, 12>}, {pipeline_mode = #tpu.pipeline_mode<synchronous>, transform_indices = @transform_28, window_bounds = array<i64: 12, 192>}, {pipeline_mode = #tpu.pipeline_mode<synchronous>, transform_indices = @transform_29, window_bounds = array<i64: 1, 12>}, {pipeline_mode = #tpu.pipeline_mode<synchronous>, transform_indices = @transform_30, window_bounds = array<i64: 12, 2>}, {pipeline_mode = #tpu.pipeline_mode<synchronous>, transform_indices = @transform_31, window_bounds = array<i64: 1, 2>}, {pipeline_mode = #tpu.pipeline_mode<synchronous>, transform_indices = @transform_32, window_bounds = array<i64: 1, 2>}, {transform_indices = @transform_33, window_bounds = array<i64: 1, 64, 2>}]} {
    %c0 = arith.constant 0 : index
    %c0_0 = arith.constant 0 : index
    %0 = vector.load %arg4[%c0, %c0_0] : memref<12x192xf32, #tpu.memory_space<vmem>>, vector<12x192xf32>
    %c0_1 = arith.constant 0 : index
    %c0_2 = arith.constant 0 : index
    %1 = vector.load %arg5[%c0_1, %c0_2] : memref<192x12xf32, #tpu.memory_space<vmem>>, vector<192x12xf32>
    %c0_3 = arith.constant 0 : index
    %c0_4 = arith.constant 0 : index
    %c0_5 = arith.constant 0 : index
    %2 = vector.load %arg1[%c0_3, %c0_4, %c0_5] : memref<1x16x4xf32, #tpu.memory_space<vmem>>, vector<1x16x4xf32>
    %3 = vector.shape_cast %2 : vector<1x16x4xf32> to vector<16x4xf32>
    %c0_6 = arith.constant 0 : index
    %c0_7 = arith.constant 0 : index
    %c0_8 = arith.constant 0 : index
    %4 = vector.load %arg2[%c0_6, %c0_7, %c0_8] : memref<1x64x2xf32, #tpu.memory_space<vmem>>, vector<1x64x2xf32>
    %5 = vector.shape_cast %4 : vector<1x64x2xf32> to vector<64x2xf32>
    %c0_9 = arith.constant 0 : index
    %c0_10 = arith.constant 0 : index
    %6 = vector.load %arg3[%c0_9, %c0_10] : memref<64x16xf32, #tpu.memory_space<vmem>>, vector<64x16xf32>
    %cst = arith.constant dense<0.000000e+00> : vector<64x4xf32>
    %7 = tpu.matmul %6, %3, %cst {dimension_numbers = #tpu.dot_dimension_numbers<[1], [0], [0], [1], [0, 0, 1, 1], [], []>} : vector<64x16xf32>, vector<16x4xf32>, vector<64x4xf32> -> vector<64x4xf32>
    %c0_11 = arith.constant 0 : index
    %c0_12 = arith.constant 0 : index
    %8 = vector.load %arg6[%c0_11, %c0_12] : memref<4x12xf32, #tpu.memory_space<vmem>>, vector<4x12xf32>
    %cst_13 = arith.constant dense<0.000000e+00> : vector<64x12xf32>
    %9 = tpu.matmul %7, %8, %cst_13 {dimension_numbers = #tpu.dot_dimension_numbers<[1], [0], [0], [1], [0, 0, 1, 1], [], []>} : vector<64x4xf32>, vector<4x12xf32>, vector<64x12xf32> -> vector<64x12xf32>
    %c0_14 = arith.constant 0 : index
    %c0_15 = arith.constant 0 : index
    %10 = vector.load %arg7[%c0_14, %c0_15] : memref<2x12xf32, #tpu.memory_space<vmem>>, vector<2x12xf32>
    %cst_16 = arith.constant dense<0.000000e+00> : vector<64x12xf32>
    %11 = tpu.matmul %5, %10, %cst_16 {dimension_numbers = #tpu.dot_dimension_numbers<[1], [0], [0], [1], [0, 0, 1, 1], [], []>} : vector<64x2xf32>, vector<2x12xf32>, vector<64x12xf32> -> vector<64x12xf32>
    %12 = arith.addf %9, %11 : vector<64x12xf32>
    %c0_17 = arith.constant 0 : index
    %c0_18 = arith.constant 0 : index
    %13 = vector.load %arg8[%c0_17, %c0_18] : memref<4x12xf32, #tpu.memory_space<vmem>>, vector<4x12xf32>
    %cst_19 = arith.constant dense<0.000000e+00> : vector<64x12xf32>
    %14 = tpu.matmul %7, %13, %cst_19 {dimension_numbers = #tpu.dot_dimension_numbers<[1], [0], [0], [1], [0, 0, 1, 1], [], []>} : vector<64x4xf32>, vector<4x12xf32>, vector<64x12xf32> -> vector<64x12xf32>
    %c0_20 = arith.constant 0 : index
    %c0_21 = arith.constant 0 : index
    %15 = vector.load %arg9[%c0_20, %c0_21] : memref<2x12xf32, #tpu.memory_space<vmem>>, vector<2x12xf32>
    %cst_22 = arith.constant dense<0.000000e+00> : vector<64x12xf32>
    %16 = tpu.matmul %5, %15, %cst_22 {dimension_numbers = #tpu.dot_dimension_numbers<[1], [0], [0], [1], [0, 0, 1, 1], [], []>} : vector<64x2xf32>, vector<2x12xf32>, vector<64x12xf32> -> vector<64x12xf32>
    %17 = arith.addf %14, %16 : vector<64x12xf32>
    %c0_23 = arith.constant 0 : index
    %c0_24 = arith.constant 0 : index
    %18 = vector.load %arg10[%c0_23, %c0_24] : memref<4x12xf32, #tpu.memory_space<vmem>>, vector<4x12xf32>
    %c0_25 = arith.constant 0 : index
    %c0_26 = arith.constant 0 : index
    %19 = vector.load %arg11[%c0_25, %c0_26] : memref<1x12xf32, #tpu.memory_space<vmem>>, vector<1x12xf32>
    %c0_27 = arith.constant 0 : index
    %c0_28 = arith.constant 0 : index
    %20 = vector.load %arg12[%c0_27, %c0_28] : memref<12x192xf32, #tpu.memory_space<vmem>>, vector<12x192xf32>
    %c0_29 = arith.constant 0 : index
    %c0_30 = arith.constant 0 : index
    %21 = vector.load %arg13[%c0_29, %c0_30] : memref<12x192xf32, #tpu.memory_space<vmem>>, vector<12x192xf32>
    %c0_31 = arith.constant 0 : index
    %c0_32 = arith.constant 0 : index
    %22 = vector.load %arg14[%c0_31, %c0_32] : memref<12x12xf32, #tpu.memory_space<vmem>>, vector<12x12xf32>
    %c0_33 = arith.constant 0 : index
    %c0_34 = arith.constant 0 : index
    %23 = vector.load %arg15[%c0_33, %c0_34] : memref<1x12xf32, #tpu.memory_space<vmem>>, vector<1x12xf32>
    %c0_35 = arith.constant 0 : index
    %c0_36 = arith.constant 0 : index
    %24 = vector.load %arg16[%c0_35, %c0_36] : memref<12x192xf32, #tpu.memory_space<vmem>>, vector<12x192xf32>
    %c0_37 = arith.constant 0 : index
    %c0_38 = arith.constant 0 : index
    %25 = vector.load %arg17[%c0_37, %c0_38] : memref<1x12xf32, #tpu.memory_space<vmem>>, vector<1x12xf32>
    %c0_39 = arith.constant 0 : index
    %c0_40 = arith.constant 0 : index
    %26 = vector.load %arg18[%c0_39, %c0_40] : memref<12x6xf32, #tpu.memory_space<vmem>>, vector<12x6xf32>
    %c0_41 = arith.constant 0 : index
    %c0_42 = arith.constant 0 : index
    %27 = vector.load %arg19[%c0_41, %c0_42] : memref<1x6xf32, #tpu.memory_space<vmem>>, vector<1x6xf32>
    %c0_43 = arith.constant 0 : index
    %c0_44 = arith.constant 0 : index
    %28 = vector.load %arg20[%c0_43, %c0_44] : memref<1x6xf32, #tpu.memory_space<vmem>>, vector<1x6xf32>
    %29 = vector.extract_strided_slice %18 {offsets = [3, 0], sizes = [1, 12], strides = [1, 1]} : vector<4x12xf32> to vector<1x12xf32>
    %30 = vector.broadcast %29 : vector<1x12xf32> to vector<64x12xf32>
    %31 = arith.mulf %30, %12 : vector<64x12xf32>
    %32 = tpu.iota {dimensions = array<i32: 0>} : vector<64x64xi32>
    %33 = tpu.iota {dimensions = array<i32: 1>} : vector<64x64xi32>
    %c1_i32 = arith.constant 1 : i32
    %34 = vector.broadcast %c1_i32 : i32 to vector<64x64xi32>
    %35 = arith.subi %32, %34 : vector<64x64xi32>
    %36 = arith.cmpi eq, %33, %35 : vector<64x64xi32>
    %cst_45 = arith.constant 1.000000e+00 : f32
    %cst_46 = arith.constant 0.000000e+00 : f32
    %37 = vector.broadcast %cst_45 : f32 to vector<64x64xf32>
    %38 = vector.broadcast %cst_46 : f32 to vector<64x64xf32>
    %39 = arith.select %36, %37, %38 : vector<64x64xi1>, vector<64x64xf32>
    %cst_47 = arith.constant dense<0.000000e+00> : vector<64x12xf32>
    %40 = tpu.matmul %39, %12, %cst_47 {dimension_numbers = #tpu.dot_dimension_numbers<[1], [0], [0], [1], [0, 0, 1, 1], [], []>} : vector<64x64xf32>, vector<64x12xf32>, vector<64x12xf32> -> vector<64x12xf32>
    %41 = vector.extract_strided_slice %18 {offsets = [2, 0], sizes = [1, 12], strides = [1, 1]} : vector<4x12xf32> to vector<1x12xf32>
    %42 = vector.broadcast %41 : vector<1x12xf32> to vector<64x12xf32>
    %43 = arith.mulf %42, %40 : vector<64x12xf32>
    %44 = arith.addf %31, %43 : vector<64x12xf32>
    %45 = tpu.iota {dimensions = array<i32: 0>} : vector<64x64xi32>
    %46 = tpu.iota {dimensions = array<i32: 1>} : vector<64x64xi32>
    %c2_i32 = arith.constant 2 : i32
    %47 = vector.broadcast %c2_i32 : i32 to vector<64x64xi32>
    %48 = arith.subi %45, %47 : vector<64x64xi32>
    %49 = arith.cmpi eq, %46, %48 : vector<64x64xi32>
    %cst_48 = arith.constant 1.000000e+00 : f32
    %cst_49 = arith.constant 0.000000e+00 : f32
    %50 = vector.broadcast %cst_48 : f32 to vector<64x64xf32>
    %51 = vector.broadcast %cst_49 : f32 to vector<64x64xf32>
    %52 = arith.select %49, %50, %51 : vector<64x64xi1>, vector<64x64xf32>
    %cst_50 = arith.constant dense<0.000000e+00> : vector<64x12xf32>
    %53 = tpu.matmul %52, %12, %cst_50 {dimension_numbers = #tpu.dot_dimension_numbers<[1], [0], [0], [1], [0, 0, 1, 1], [], []>} : vector<64x64xf32>, vector<64x12xf32>, vector<64x12xf32> -> vector<64x12xf32>
    %54 = vector.extract_strided_slice %18 {offsets = [1, 0], sizes = [1, 12], strides = [1, 1]} : vector<4x12xf32> to vector<1x12xf32>
    %55 = vector.broadcast %54 : vector<1x12xf32> to vector<64x12xf32>
    %56 = arith.mulf %55, %53 : vector<64x12xf32>
    %57 = arith.addf %44, %56 : vector<64x12xf32>
    %58 = tpu.iota {dimensions = array<i32: 0>} : vector<64x64xi32>
    %59 = tpu.iota {dimensions = array<i32: 1>} : vector<64x64xi32>
    %c3_i32 = arith.constant 3 : i32
    %60 = vector.broadcast %c3_i32 : i32 to vector<64x64xi32>
    %61 = arith.subi %58, %60 : vector<64x64xi32>
    %62 = arith.cmpi eq, %59, %61 : vector<64x64xi32>
    %cst_51 = arith.constant 1.000000e+00 : f32
    %cst_52 = arith.constant 0.000000e+00 : f32
    %63 = vector.broadcast %cst_51 : f32 to vector<64x64xf32>
    %64 = vector.broadcast %cst_52 : f32 to vector<64x64xf32>
    %65 = arith.select %62, %63, %64 : vector<64x64xi1>, vector<64x64xf32>
    %cst_53 = arith.constant dense<0.000000e+00> : vector<64x12xf32>
    %66 = tpu.matmul %65, %12, %cst_53 {dimension_numbers = #tpu.dot_dimension_numbers<[1], [0], [0], [1], [0, 0, 1, 1], [], []>} : vector<64x64xf32>, vector<64x12xf32>, vector<64x12xf32> -> vector<64x12xf32>
    %67 = vector.extract_strided_slice %18 {offsets = [0, 0], sizes = [1, 12], strides = [1, 1]} : vector<4x12xf32> to vector<1x12xf32>
    %68 = vector.broadcast %67 : vector<1x12xf32> to vector<64x12xf32>
    %69 = arith.mulf %68, %66 : vector<64x12xf32>
    %70 = arith.addf %57, %69 : vector<64x12xf32>
    %71 = vector.broadcast %19 : vector<1x12xf32> to vector<64x12xf32>
    %72 = arith.addf %70, %71 : vector<64x12xf32>
    %73 = arith.negf %72 : vector<64x12xf32>
    %74 = math.exp %73 : vector<64x12xf32>
    %cst_54 = arith.constant 1.000000e+00 : f32
    %75 = vector.broadcast %cst_54 : f32 to vector<64x12xf32>
    %76 = arith.addf %75, %74 : vector<64x12xf32>
    %77 = arith.divf %75, %76 : vector<64x12xf32>
    %78 = arith.mulf %72, %77 : vector<64x12xf32>
    %cst_55 = arith.constant dense<0.000000e+00> : vector<64x12xf32>
    %79 = tpu.matmul %78, %22, %cst_55 {dimension_numbers = #tpu.dot_dimension_numbers<[1], [0], [0], [1], [0, 0, 1, 1], [], []>} : vector<64x12xf32>, vector<12x12xf32>, vector<64x12xf32> -> vector<64x12xf32>
    %80 = vector.broadcast %23 : vector<1x12xf32> to vector<64x12xf32>
    %81 = arith.addf %79, %80 : vector<64x12xf32>
    %cst_56 = arith.constant 3.000000e+01 : f32
    %82 = vector.broadcast %cst_56 : f32 to vector<64x12xf32>
    %83 = arith.cmpf ogt, %81, %82 : vector<64x12xf32>
    %cst_57 = arith.constant 3.000000e+01 : f32
    %84 = vector.broadcast %cst_57 : f32 to vector<64x12xf32>
    %85 = arith.minimumf %81, %84 : vector<64x12xf32>
    %86 = math.exp %85 : vector<64x12xf32>
    %cst_58 = arith.constant 1.000000e+00 : f32
    %87 = vector.broadcast %cst_58 : f32 to vector<64x12xf32>
    %88 = arith.addf %87, %86 : vector<64x12xf32>
    %89 = math.log %88 : vector<64x12xf32>
    %90 = arith.select %83, %81, %89 : vector<64x12xi1>, vector<64x12xf32>
    %cst_59 = arith.constant dense<0.000000e+00> : vector<64x192xf32>
    %91 = tpu.matmul %90, %24, %cst_59 {dimension_numbers = #tpu.dot_dimension_numbers<[1], [0], [0], [1], [0, 0, 1, 1], [], []>} : vector<64x12xf32>, vector<12x192xf32>, vector<64x192xf32> -> vector<64x192xf32>
    %92 = math.exp %91 : vector<64x192xf32>
    %93 = arith.mulf %90, %78 : vector<64x12xf32>
    %cst_60 = arith.constant dense<0.000000e+00> : vector<64x192xf32>
    %94 = tpu.matmul %93, %0, %cst_60 {dimension_numbers = #tpu.dot_dimension_numbers<[1], [0], [0], [1], [0, 0, 1, 1], [], []>} : vector<64x12xf32>, vector<12x192xf32>, vector<64x192xf32> -> vector<64x192xf32>
    %cst_61 = arith.constant dense<0.000000e+00> : vector<64x192xf32>
    %95 = tpu.matmul %78, %20, %cst_61 {dimension_numbers = #tpu.dot_dimension_numbers<[1], [0], [0], [1], [0, 0, 1, 1], [], []>} : vector<64x12xf32>, vector<12x192xf32>, vector<64x192xf32> -> vector<64x192xf32>
    %96 = arith.mulf %94, %95 : vector<64x192xf32>
    %cst_62 = arith.constant dense<0.000000e+00> : vector<64x192xf32>
    %97 = tpu.matmul %78, %21, %cst_62 {dimension_numbers = #tpu.dot_dimension_numbers<[1], [0], [0], [1], [0, 0, 1, 1], [], []>} : vector<64x12xf32>, vector<12x192xf32>, vector<64x192xf32> -> vector<64x192xf32>
    %98 = tpu.iota {dimensions = array<i32: 0>} : vector<64x64xi32>
    %99 = tpu.iota {dimensions = array<i32: 1>} : vector<64x64xi32>
    %c1_i32_63 = arith.constant 1 : i32
    %100 = vector.broadcast %c1_i32_63 : i32 to vector<64x64xi32>
    %101 = arith.subi %98, %100 : vector<64x64xi32>
    %102 = arith.cmpi eq, %99, %101 : vector<64x64xi32>
    %cst_64 = arith.constant 1.000000e+00 : f32
    %cst_65 = arith.constant 0.000000e+00 : f32
    %103 = vector.broadcast %cst_64 : f32 to vector<64x64xf32>
    %104 = vector.broadcast %cst_65 : f32 to vector<64x64xf32>
    %105 = arith.select %102, %103, %104 : vector<64x64xi1>, vector<64x64xf32>
    %106 = tpu.iota {dimensions = array<i32: 0>} : vector<64x1xi32>
    %c1_i32_66 = arith.constant 1 : i32
    %107 = vector.broadcast %c1_i32_66 : i32 to vector<64x1xi32>
    %108 = arith.cmpi slt, %106, %107 : vector<64x1xi32>
    %cst_67 = arith.constant 1.000000e+00 : f32
    %cst_68 = arith.constant 0.000000e+00 : f32
    %109 = vector.broadcast %cst_67 : f32 to vector<64x1xf32>
    %110 = vector.broadcast %cst_68 : f32 to vector<64x1xf32>
    %111 = arith.select %108, %109, %110 : vector<64x1xi1>, vector<64x1xf32>
    %cst_69 = arith.constant dense<0.000000e+00> : vector<64x192xf32>
    %112 = tpu.matmul %105, %96, %cst_69 {dimension_numbers = #tpu.dot_dimension_numbers<[1], [0], [0], [1], [0, 0, 1, 1], [], []>} : vector<64x64xf32>, vector<64x192xf32>, vector<64x192xf32> -> vector<64x192xf32>
    %113 = arith.mulf %92, %112 : vector<64x192xf32>
    %114 = arith.addf %96, %113 : vector<64x192xf32>
    %cst_70 = arith.constant dense<0.000000e+00> : vector<64x192xf32>
    %115 = tpu.matmul %105, %92, %cst_70 {dimension_numbers = #tpu.dot_dimension_numbers<[1], [0], [0], [1], [0, 0, 1, 1], [], []>} : vector<64x64xf32>, vector<64x192xf32>, vector<64x192xf32> -> vector<64x192xf32>
    %116 = vector.broadcast %111 : vector<64x1xf32> to vector<64x192xf32>
    %117 = arith.addf %115, %116 : vector<64x192xf32>
    %118 = arith.mulf %92, %117 : vector<64x192xf32>
    %119 = tpu.iota {dimensions = array<i32: 0>} : vector<64x64xi32>
    %120 = tpu.iota {dimensions = array<i32: 1>} : vector<64x64xi32>
    %c2_i32_71 = arith.constant 2 : i32
    %121 = vector.broadcast %c2_i32_71 : i32 to vector<64x64xi32>
    %122 = arith.subi %119, %121 : vector<64x64xi32>
    %123 = arith.cmpi eq, %120, %122 : vector<64x64xi32>
    %cst_72 = arith.constant 1.000000e+00 : f32
    %cst_73 = arith.constant 0.000000e+00 : f32
    %124 = vector.broadcast %cst_72 : f32 to vector<64x64xf32>
    %125 = vector.broadcast %cst_73 : f32 to vector<64x64xf32>
    %126 = arith.select %123, %124, %125 : vector<64x64xi1>, vector<64x64xf32>
    %127 = tpu.iota {dimensions = array<i32: 0>} : vector<64x1xi32>
    %c2_i32_74 = arith.constant 2 : i32
    %128 = vector.broadcast %c2_i32_74 : i32 to vector<64x1xi32>
    %129 = arith.cmpi slt, %127, %128 : vector<64x1xi32>
    %cst_75 = arith.constant 1.000000e+00 : f32
    %cst_76 = arith.constant 0.000000e+00 : f32
    %130 = vector.broadcast %cst_75 : f32 to vector<64x1xf32>
    %131 = vector.broadcast %cst_76 : f32 to vector<64x1xf32>
    %132 = arith.select %129, %130, %131 : vector<64x1xi1>, vector<64x1xf32>
    %cst_77 = arith.constant dense<0.000000e+00> : vector<64x192xf32>
    %133 = tpu.matmul %126, %114, %cst_77 {dimension_numbers = #tpu.dot_dimension_numbers<[1], [0], [0], [1], [0, 0, 1, 1], [], []>} : vector<64x64xf32>, vector<64x192xf32>, vector<64x192xf32> -> vector<64x192xf32>
    %134 = arith.mulf %118, %133 : vector<64x192xf32>
    %135 = arith.addf %114, %134 : vector<64x192xf32>
    %cst_78 = arith.constant dense<0.000000e+00> : vector<64x192xf32>
    %136 = tpu.matmul %126, %118, %cst_78 {dimension_numbers = #tpu.dot_dimension_numbers<[1], [0], [0], [1], [0, 0, 1, 1], [], []>} : vector<64x64xf32>, vector<64x192xf32>, vector<64x192xf32> -> vector<64x192xf32>
    %137 = vector.broadcast %132 : vector<64x1xf32> to vector<64x192xf32>
    %138 = arith.addf %136, %137 : vector<64x192xf32>
    %139 = arith.mulf %118, %138 : vector<64x192xf32>
    %140 = tpu.iota {dimensions = array<i32: 0>} : vector<64x64xi32>
    %141 = tpu.iota {dimensions = array<i32: 1>} : vector<64x64xi32>
    %c4_i32 = arith.constant 4 : i32
    %142 = vector.broadcast %c4_i32 : i32 to vector<64x64xi32>
    %143 = arith.subi %140, %142 : vector<64x64xi32>
    %144 = arith.cmpi eq, %141, %143 : vector<64x64xi32>
    %cst_79 = arith.constant 1.000000e+00 : f32
    %cst_80 = arith.constant 0.000000e+00 : f32
    %145 = vector.broadcast %cst_79 : f32 to vector<64x64xf32>
    %146 = vector.broadcast %cst_80 : f32 to vector<64x64xf32>
    %147 = arith.select %144, %145, %146 : vector<64x64xi1>, vector<64x64xf32>
    %148 = tpu.iota {dimensions = array<i32: 0>} : vector<64x1xi32>
    %c4_i32_81 = arith.constant 4 : i32
    %149 = vector.broadcast %c4_i32_81 : i32 to vector<64x1xi32>
    %150 = arith.cmpi slt, %148, %149 : vector<64x1xi32>
    %cst_82 = arith.constant 1.000000e+00 : f32
    %cst_83 = arith.constant 0.000000e+00 : f32
    %151 = vector.broadcast %cst_82 : f32 to vector<64x1xf32>
    %152 = vector.broadcast %cst_83 : f32 to vector<64x1xf32>
    %153 = arith.select %150, %151, %152 : vector<64x1xi1>, vector<64x1xf32>
    %cst_84 = arith.constant dense<0.000000e+00> : vector<64x192xf32>
    %154 = tpu.matmul %147, %135, %cst_84 {dimension_numbers = #tpu.dot_dimension_numbers<[1], [0], [0], [1], [0, 0, 1, 1], [], []>} : vector<64x64xf32>, vector<64x192xf32>, vector<64x192xf32> -> vector<64x192xf32>
    %155 = arith.mulf %139, %154 : vector<64x192xf32>
    %156 = arith.addf %135, %155 : vector<64x192xf32>
    %cst_85 = arith.constant dense<0.000000e+00> : vector<64x192xf32>
    %157 = tpu.matmul %147, %139, %cst_85 {dimension_numbers = #tpu.dot_dimension_numbers<[1], [0], [0], [1], [0, 0, 1, 1], [], []>} : vector<64x64xf32>, vector<64x192xf32>, vector<64x192xf32> -> vector<64x192xf32>
    %158 = vector.broadcast %153 : vector<64x1xf32> to vector<64x192xf32>
    %159 = arith.addf %157, %158 : vector<64x192xf32>
    %160 = arith.mulf %139, %159 : vector<64x192xf32>
    %161 = tpu.iota {dimensions = array<i32: 0>} : vector<64x64xi32>
    %162 = tpu.iota {dimensions = array<i32: 1>} : vector<64x64xi32>
    %c8_i32 = arith.constant 8 : i32
    %163 = vector.broadcast %c8_i32 : i32 to vector<64x64xi32>
    %164 = arith.subi %161, %163 : vector<64x64xi32>
    %165 = arith.cmpi eq, %162, %164 : vector<64x64xi32>
    %cst_86 = arith.constant 1.000000e+00 : f32
    %cst_87 = arith.constant 0.000000e+00 : f32
    %166 = vector.broadcast %cst_86 : f32 to vector<64x64xf32>
    %167 = vector.broadcast %cst_87 : f32 to vector<64x64xf32>
    %168 = arith.select %165, %166, %167 : vector<64x64xi1>, vector<64x64xf32>
    %169 = tpu.iota {dimensions = array<i32: 0>} : vector<64x1xi32>
    %c8_i32_88 = arith.constant 8 : i32
    %170 = vector.broadcast %c8_i32_88 : i32 to vector<64x1xi32>
    %171 = arith.cmpi slt, %169, %170 : vector<64x1xi32>
    %cst_89 = arith.constant 1.000000e+00 : f32
    %cst_90 = arith.constant 0.000000e+00 : f32
    %172 = vector.broadcast %cst_89 : f32 to vector<64x1xf32>
    %173 = vector.broadcast %cst_90 : f32 to vector<64x1xf32>
    %174 = arith.select %171, %172, %173 : vector<64x1xi1>, vector<64x1xf32>
    %cst_91 = arith.constant dense<0.000000e+00> : vector<64x192xf32>
    %175 = tpu.matmul %168, %156, %cst_91 {dimension_numbers = #tpu.dot_dimension_numbers<[1], [0], [0], [1], [0, 0, 1, 1], [], []>} : vector<64x64xf32>, vector<64x192xf32>, vector<64x192xf32> -> vector<64x192xf32>
    %176 = arith.mulf %160, %175 : vector<64x192xf32>
    %177 = arith.addf %156, %176 : vector<64x192xf32>
    %cst_92 = arith.constant dense<0.000000e+00> : vector<64x192xf32>
    %178 = tpu.matmul %168, %160, %cst_92 {dimension_numbers = #tpu.dot_dimension_numbers<[1], [0], [0], [1], [0, 0, 1, 1], [], []>} : vector<64x64xf32>, vector<64x192xf32>, vector<64x192xf32> -> vector<64x192xf32>
    %179 = vector.broadcast %174 : vector<64x1xf32> to vector<64x192xf32>
    %180 = arith.addf %178, %179 : vector<64x192xf32>
    %181 = arith.mulf %160, %180 : vector<64x192xf32>
    %182 = tpu.iota {dimensions = array<i32: 0>} : vector<64x64xi32>
    %183 = tpu.iota {dimensions = array<i32: 1>} : vector<64x64xi32>
    %c16_i32 = arith.constant 16 : i32
    %184 = vector.broadcast %c16_i32 : i32 to vector<64x64xi32>
    %185 = arith.subi %182, %184 : vector<64x64xi32>
    %186 = arith.cmpi eq, %183, %185 : vector<64x64xi32>
    %cst_93 = arith.constant 1.000000e+00 : f32
    %cst_94 = arith.constant 0.000000e+00 : f32
    %187 = vector.broadcast %cst_93 : f32 to vector<64x64xf32>
    %188 = vector.broadcast %cst_94 : f32 to vector<64x64xf32>
    %189 = arith.select %186, %187, %188 : vector<64x64xi1>, vector<64x64xf32>
    %190 = tpu.iota {dimensions = array<i32: 0>} : vector<64x1xi32>
    %c16_i32_95 = arith.constant 16 : i32
    %191 = vector.broadcast %c16_i32_95 : i32 to vector<64x1xi32>
    %192 = arith.cmpi slt, %190, %191 : vector<64x1xi32>
    %cst_96 = arith.constant 1.000000e+00 : f32
    %cst_97 = arith.constant 0.000000e+00 : f32
    %193 = vector.broadcast %cst_96 : f32 to vector<64x1xf32>
    %194 = vector.broadcast %cst_97 : f32 to vector<64x1xf32>
    %195 = arith.select %192, %193, %194 : vector<64x1xi1>, vector<64x1xf32>
    %cst_98 = arith.constant dense<0.000000e+00> : vector<64x192xf32>
    %196 = tpu.matmul %189, %177, %cst_98 {dimension_numbers = #tpu.dot_dimension_numbers<[1], [0], [0], [1], [0, 0, 1, 1], [], []>} : vector<64x64xf32>, vector<64x192xf32>, vector<64x192xf32> -> vector<64x192xf32>
    %197 = arith.mulf %181, %196 : vector<64x192xf32>
    %198 = arith.addf %177, %197 : vector<64x192xf32>
    %cst_99 = arith.constant dense<0.000000e+00> : vector<64x192xf32>
    %199 = tpu.matmul %189, %181, %cst_99 {dimension_numbers = #tpu.dot_dimension_numbers<[1], [0], [0], [1], [0, 0, 1, 1], [], []>} : vector<64x64xf32>, vector<64x192xf32>, vector<64x192xf32> -> vector<64x192xf32>
    %200 = vector.broadcast %195 : vector<64x1xf32> to vector<64x192xf32>
    %201 = arith.addf %199, %200 : vector<64x192xf32>
    %202 = arith.mulf %181, %201 : vector<64x192xf32>
    %203 = tpu.iota {dimensions = array<i32: 0>} : vector<64x64xi32>
    %204 = tpu.iota {dimensions = array<i32: 1>} : vector<64x64xi32>
    %c32_i32 = arith.constant 32 : i32
    %205 = vector.broadcast %c32_i32 : i32 to vector<64x64xi32>
    %206 = arith.subi %203, %205 : vector<64x64xi32>
    %207 = arith.cmpi eq, %204, %206 : vector<64x64xi32>
    %cst_100 = arith.constant 1.000000e+00 : f32
    %cst_101 = arith.constant 0.000000e+00 : f32
    %208 = vector.broadcast %cst_100 : f32 to vector<64x64xf32>
    %209 = vector.broadcast %cst_101 : f32 to vector<64x64xf32>
    %210 = arith.select %207, %208, %209 : vector<64x64xi1>, vector<64x64xf32>
    %cst_102 = arith.constant dense<0.000000e+00> : vector<64x192xf32>
    %211 = tpu.matmul %210, %198, %cst_102 {dimension_numbers = #tpu.dot_dimension_numbers<[1], [0], [0], [1], [0, 0, 1, 1], [], []>} : vector<64x64xf32>, vector<64x192xf32>, vector<64x192xf32> -> vector<64x192xf32>
    %212 = arith.mulf %202, %211 : vector<64x192xf32>
    %213 = arith.addf %198, %212 : vector<64x192xf32>
    %214 = arith.mulf %213, %97 : vector<64x192xf32>
    %cst_103 = arith.constant dense<0.000000e+00> : vector<64x12xf32>
    %215 = tpu.matmul %214, %1, %cst_103 {dimension_numbers = #tpu.dot_dimension_numbers<[1], [0], [0], [1], [0, 0, 1, 1], [], []>} : vector<64x192xf32>, vector<192x12xf32>, vector<64x12xf32> -> vector<64x12xf32>
    %216 = vector.broadcast %25 : vector<1x12xf32> to vector<64x12xf32>
    %217 = arith.mulf %78, %216 : vector<64x12xf32>
    %218 = arith.addf %215, %217 : vector<64x12xf32>
    %219 = arith.negf %17 : vector<64x12xf32>
    %220 = math.exp %219 : vector<64x12xf32>
    %cst_104 = arith.constant 1.000000e+00 : f32
    %221 = vector.broadcast %cst_104 : f32 to vector<64x12xf32>
    %222 = arith.addf %221, %220 : vector<64x12xf32>
    %223 = arith.divf %221, %222 : vector<64x12xf32>
    %224 = arith.mulf %17, %223 : vector<64x12xf32>
    %225 = arith.mulf %218, %224 : vector<64x12xf32>
    %cst_105 = arith.constant dense<0.000000e+00> : vector<64x6xf32>
    %226 = tpu.matmul %225, %26, %cst_105 {dimension_numbers = #tpu.dot_dimension_numbers<[1], [0], [0], [1], [0, 0, 1, 1], [], []>} : vector<64x12xf32>, vector<12x6xf32>, vector<64x6xf32> -> vector<64x6xf32>
    %cst_106 = arith.constant dense<0.000000e+00> : vector<64xf32>
    %227 = vector.multi_reduction <add>, %226, %cst_106 [1] : vector<64x6xf32> to vector<64xf32>
    %228 = vector.shape_cast %227 : vector<64xf32> to vector<64x1xf32>
    %cst_107 = arith.constant 6.000000e+00 : f32
    %229 = vector.broadcast %cst_107 : f32 to vector<64x1xf32>
    %230 = arith.divf %228, %229 : vector<64x1xf32>
    %231 = vector.broadcast %230 : vector<64x1xf32> to vector<64x6xf32>
    %232 = arith.subf %226, %231 : vector<64x6xf32>
    %233 = arith.mulf %232, %232 : vector<64x6xf32>
    %cst_108 = arith.constant dense<0.000000e+00> : vector<64xf32>
    %234 = vector.multi_reduction <add>, %233, %cst_108 [1] : vector<64x6xf32> to vector<64xf32>
    %235 = vector.shape_cast %234 : vector<64xf32> to vector<64x1xf32>
    %cst_109 = arith.constant 6.000000e+00 : f32
    %236 = vector.broadcast %cst_109 : f32 to vector<64x1xf32>
    %237 = arith.divf %235, %236 : vector<64x1xf32>
    %cst_110 = arith.constant 9.99999974E-6 : f32
    %238 = vector.broadcast %cst_110 : f32 to vector<64x1xf32>
    %239 = arith.addf %237, %238 : vector<64x1xf32>
    %240 = math.rsqrt %239 : vector<64x1xf32>
    %241 = vector.broadcast %240 : vector<64x1xf32> to vector<64x6xf32>
    %242 = arith.mulf %232, %241 : vector<64x6xf32>
    %243 = vector.broadcast %27 : vector<1x6xf32> to vector<64x6xf32>
    %244 = arith.mulf %242, %243 : vector<64x6xf32>
    %245 = vector.broadcast %28 : vector<1x6xf32> to vector<64x6xf32>
    %246 = arith.addf %244, %245 : vector<64x6xf32>
    %cst_111 = arith.constant 0.000000e+00 : f32
    %247 = vector.broadcast %cst_111 : f32 to vector<64x6xf32>
    %248 = arith.maximumf %246, %247 : vector<64x6xf32>
    %c0_112 = arith.constant 0 : index
    %c0_113 = arith.constant 0 : index
    %249 = vector.load %arg21[%c0_112, %c0_113] : memref<6x12xf32, #tpu.memory_space<vmem>>, vector<6x12xf32>
    %cst_114 = arith.constant dense<0.000000e+00> : vector<64x12xf32>
    %250 = tpu.matmul %248, %249, %cst_114 {dimension_numbers = #tpu.dot_dimension_numbers<[1], [0], [0], [1], [0, 0, 1, 1], [], []>} : vector<64x6xf32>, vector<6x12xf32>, vector<64x12xf32> -> vector<64x12xf32>
    %c0_115 = arith.constant 0 : index
    %c0_116 = arith.constant 0 : index
    %251 = vector.load %arg22[%c0_115, %c0_116] : memref<6x12xf32, #tpu.memory_space<vmem>>, vector<6x12xf32>
    %cst_117 = arith.constant dense<0.000000e+00> : vector<64x12xf32>
    %252 = tpu.matmul %248, %251, %cst_117 {dimension_numbers = #tpu.dot_dimension_numbers<[1], [0], [0], [1], [0, 0, 1, 1], [], []>} : vector<64x6xf32>, vector<6x12xf32>, vector<64x12xf32> -> vector<64x12xf32>
    %c0_118 = arith.constant 0 : index
    %c0_119 = arith.constant 0 : index
    %253 = vector.load %arg23[%c0_118, %c0_119] : memref<4x12xf32, #tpu.memory_space<vmem>>, vector<4x12xf32>
    %c0_120 = arith.constant 0 : index
    %c0_121 = arith.constant 0 : index
    %254 = vector.load %arg24[%c0_120, %c0_121] : memref<1x12xf32, #tpu.memory_space<vmem>>, vector<1x12xf32>
    %c0_122 = arith.constant 0 : index
    %c0_123 = arith.constant 0 : index
    %255 = vector.load %arg25[%c0_122, %c0_123] : memref<12x192xf32, #tpu.memory_space<vmem>>, vector<12x192xf32>
    %c0_124 = arith.constant 0 : index
    %c0_125 = arith.constant 0 : index
    %256 = vector.load %arg26[%c0_124, %c0_125] : memref<12x192xf32, #tpu.memory_space<vmem>>, vector<12x192xf32>
    %c0_126 = arith.constant 0 : index
    %c0_127 = arith.constant 0 : index
    %257 = vector.load %arg27[%c0_126, %c0_127] : memref<12x12xf32, #tpu.memory_space<vmem>>, vector<12x12xf32>
    %c0_128 = arith.constant 0 : index
    %c0_129 = arith.constant 0 : index
    %258 = vector.load %arg28[%c0_128, %c0_129] : memref<1x12xf32, #tpu.memory_space<vmem>>, vector<1x12xf32>
    %c0_130 = arith.constant 0 : index
    %c0_131 = arith.constant 0 : index
    %259 = vector.load %arg29[%c0_130, %c0_131] : memref<12x192xf32, #tpu.memory_space<vmem>>, vector<12x192xf32>
    %c0_132 = arith.constant 0 : index
    %c0_133 = arith.constant 0 : index
    %260 = vector.load %arg30[%c0_132, %c0_133] : memref<1x12xf32, #tpu.memory_space<vmem>>, vector<1x12xf32>
    %c0_134 = arith.constant 0 : index
    %c0_135 = arith.constant 0 : index
    %261 = vector.load %arg31[%c0_134, %c0_135] : memref<12x2xf32, #tpu.memory_space<vmem>>, vector<12x2xf32>
    %c0_136 = arith.constant 0 : index
    %c0_137 = arith.constant 0 : index
    %262 = vector.load %arg32[%c0_136, %c0_137] : memref<1x2xf32, #tpu.memory_space<vmem>>, vector<1x2xf32>
    %c0_138 = arith.constant 0 : index
    %c0_139 = arith.constant 0 : index
    %263 = vector.load %arg33[%c0_138, %c0_139] : memref<1x2xf32, #tpu.memory_space<vmem>>, vector<1x2xf32>
    %264 = vector.extract_strided_slice %253 {offsets = [3, 0], sizes = [1, 12], strides = [1, 1]} : vector<4x12xf32> to vector<1x12xf32>
    %265 = vector.broadcast %264 : vector<1x12xf32> to vector<64x12xf32>
    %266 = arith.mulf %265, %250 : vector<64x12xf32>
    %267 = tpu.iota {dimensions = array<i32: 0>} : vector<64x64xi32>
    %268 = tpu.iota {dimensions = array<i32: 1>} : vector<64x64xi32>
    %c1_i32_140 = arith.constant 1 : i32
    %269 = vector.broadcast %c1_i32_140 : i32 to vector<64x64xi32>
    %270 = arith.subi %267, %269 : vector<64x64xi32>
    %271 = arith.cmpi eq, %268, %270 : vector<64x64xi32>
    %cst_141 = arith.constant 1.000000e+00 : f32
    %cst_142 = arith.constant 0.000000e+00 : f32
    %272 = vector.broadcast %cst_141 : f32 to vector<64x64xf32>
    %273 = vector.broadcast %cst_142 : f32 to vector<64x64xf32>
    %274 = arith.select %271, %272, %273 : vector<64x64xi1>, vector<64x64xf32>
    %cst_143 = arith.constant dense<0.000000e+00> : vector<64x12xf32>
    %275 = tpu.matmul %274, %250, %cst_143 {dimension_numbers = #tpu.dot_dimension_numbers<[1], [0], [0], [1], [0, 0, 1, 1], [], []>} : vector<64x64xf32>, vector<64x12xf32>, vector<64x12xf32> -> vector<64x12xf32>
    %276 = vector.extract_strided_slice %253 {offsets = [2, 0], sizes = [1, 12], strides = [1, 1]} : vector<4x12xf32> to vector<1x12xf32>
    %277 = vector.broadcast %276 : vector<1x12xf32> to vector<64x12xf32>
    %278 = arith.mulf %277, %275 : vector<64x12xf32>
    %279 = arith.addf %266, %278 : vector<64x12xf32>
    %280 = tpu.iota {dimensions = array<i32: 0>} : vector<64x64xi32>
    %281 = tpu.iota {dimensions = array<i32: 1>} : vector<64x64xi32>
    %c2_i32_144 = arith.constant 2 : i32
    %282 = vector.broadcast %c2_i32_144 : i32 to vector<64x64xi32>
    %283 = arith.subi %280, %282 : vector<64x64xi32>
    %284 = arith.cmpi eq, %281, %283 : vector<64x64xi32>
    %cst_145 = arith.constant 1.000000e+00 : f32
    %cst_146 = arith.constant 0.000000e+00 : f32
    %285 = vector.broadcast %cst_145 : f32 to vector<64x64xf32>
    %286 = vector.broadcast %cst_146 : f32 to vector<64x64xf32>
    %287 = arith.select %284, %285, %286 : vector<64x64xi1>, vector<64x64xf32>
    %cst_147 = arith.constant dense<0.000000e+00> : vector<64x12xf32>
    %288 = tpu.matmul %287, %250, %cst_147 {dimension_numbers = #tpu.dot_dimension_numbers<[1], [0], [0], [1], [0, 0, 1, 1], [], []>} : vector<64x64xf32>, vector<64x12xf32>, vector<64x12xf32> -> vector<64x12xf32>
    %289 = vector.extract_strided_slice %253 {offsets = [1, 0], sizes = [1, 12], strides = [1, 1]} : vector<4x12xf32> to vector<1x12xf32>
    %290 = vector.broadcast %289 : vector<1x12xf32> to vector<64x12xf32>
    %291 = arith.mulf %290, %288 : vector<64x12xf32>
    %292 = arith.addf %279, %291 : vector<64x12xf32>
    %293 = tpu.iota {dimensions = array<i32: 0>} : vector<64x64xi32>
    %294 = tpu.iota {dimensions = array<i32: 1>} : vector<64x64xi32>
    %c3_i32_148 = arith.constant 3 : i32
    %295 = vector.broadcast %c3_i32_148 : i32 to vector<64x64xi32>
    %296 = arith.subi %293, %295 : vector<64x64xi32>
    %297 = arith.cmpi eq, %294, %296 : vector<64x64xi32>
    %cst_149 = arith.constant 1.000000e+00 : f32
    %cst_150 = arith.constant 0.000000e+00 : f32
    %298 = vector.broadcast %cst_149 : f32 to vector<64x64xf32>
    %299 = vector.broadcast %cst_150 : f32 to vector<64x64xf32>
    %300 = arith.select %297, %298, %299 : vector<64x64xi1>, vector<64x64xf32>
    %cst_151 = arith.constant dense<0.000000e+00> : vector<64x12xf32>
    %301 = tpu.matmul %300, %250, %cst_151 {dimension_numbers = #tpu.dot_dimension_numbers<[1], [0], [0], [1], [0, 0, 1, 1], [], []>} : vector<64x64xf32>, vector<64x12xf32>, vector<64x12xf32> -> vector<64x12xf32>
    %302 = vector.extract_strided_slice %253 {offsets = [0, 0], sizes = [1, 12], strides = [1, 1]} : vector<4x12xf32> to vector<1x12xf32>
    %303 = vector.broadcast %302 : vector<1x12xf32> to vector<64x12xf32>
    %304 = arith.mulf %303, %301 : vector<64x12xf32>
    %305 = arith.addf %292, %304 : vector<64x12xf32>
    %306 = vector.broadcast %254 : vector<1x12xf32> to vector<64x12xf32>
    %307 = arith.addf %305, %306 : vector<64x12xf32>
    %308 = arith.negf %307 : vector<64x12xf32>
    %309 = math.exp %308 : vector<64x12xf32>
    %cst_152 = arith.constant 1.000000e+00 : f32
    %310 = vector.broadcast %cst_152 : f32 to vector<64x12xf32>
    %311 = arith.addf %310, %309 : vector<64x12xf32>
    %312 = arith.divf %310, %311 : vector<64x12xf32>
    %313 = arith.mulf %307, %312 : vector<64x12xf32>
    %cst_153 = arith.constant dense<0.000000e+00> : vector<64x12xf32>
    %314 = tpu.matmul %313, %257, %cst_153 {dimension_numbers = #tpu.dot_dimension_numbers<[1], [0], [0], [1], [0, 0, 1, 1], [], []>} : vector<64x12xf32>, vector<12x12xf32>, vector<64x12xf32> -> vector<64x12xf32>
    %315 = vector.broadcast %258 : vector<1x12xf32> to vector<64x12xf32>
    %316 = arith.addf %314, %315 : vector<64x12xf32>
    %cst_154 = arith.constant 3.000000e+01 : f32
    %317 = vector.broadcast %cst_154 : f32 to vector<64x12xf32>
    %318 = arith.cmpf ogt, %316, %317 : vector<64x12xf32>
    %cst_155 = arith.constant 3.000000e+01 : f32
    %319 = vector.broadcast %cst_155 : f32 to vector<64x12xf32>
    %320 = arith.minimumf %316, %319 : vector<64x12xf32>
    %321 = math.exp %320 : vector<64x12xf32>
    %cst_156 = arith.constant 1.000000e+00 : f32
    %322 = vector.broadcast %cst_156 : f32 to vector<64x12xf32>
    %323 = arith.addf %322, %321 : vector<64x12xf32>
    %324 = math.log %323 : vector<64x12xf32>
    %325 = arith.select %318, %316, %324 : vector<64x12xi1>, vector<64x12xf32>
    %cst_157 = arith.constant dense<0.000000e+00> : vector<64x192xf32>
    %326 = tpu.matmul %325, %259, %cst_157 {dimension_numbers = #tpu.dot_dimension_numbers<[1], [0], [0], [1], [0, 0, 1, 1], [], []>} : vector<64x12xf32>, vector<12x192xf32>, vector<64x192xf32> -> vector<64x192xf32>
    %327 = math.exp %326 : vector<64x192xf32>
    %328 = arith.mulf %325, %313 : vector<64x12xf32>
    %cst_158 = arith.constant dense<0.000000e+00> : vector<64x192xf32>
    %329 = tpu.matmul %328, %0, %cst_158 {dimension_numbers = #tpu.dot_dimension_numbers<[1], [0], [0], [1], [0, 0, 1, 1], [], []>} : vector<64x12xf32>, vector<12x192xf32>, vector<64x192xf32> -> vector<64x192xf32>
    %cst_159 = arith.constant dense<0.000000e+00> : vector<64x192xf32>
    %330 = tpu.matmul %313, %255, %cst_159 {dimension_numbers = #tpu.dot_dimension_numbers<[1], [0], [0], [1], [0, 0, 1, 1], [], []>} : vector<64x12xf32>, vector<12x192xf32>, vector<64x192xf32> -> vector<64x192xf32>
    %331 = arith.mulf %329, %330 : vector<64x192xf32>
    %cst_160 = arith.constant dense<0.000000e+00> : vector<64x192xf32>
    %332 = tpu.matmul %313, %256, %cst_160 {dimension_numbers = #tpu.dot_dimension_numbers<[1], [0], [0], [1], [0, 0, 1, 1], [], []>} : vector<64x12xf32>, vector<12x192xf32>, vector<64x192xf32> -> vector<64x192xf32>
    %333 = tpu.iota {dimensions = array<i32: 0>} : vector<64x64xi32>
    %334 = tpu.iota {dimensions = array<i32: 1>} : vector<64x64xi32>
    %c1_i32_161 = arith.constant 1 : i32
    %335 = vector.broadcast %c1_i32_161 : i32 to vector<64x64xi32>
    %336 = arith.subi %333, %335 : vector<64x64xi32>
    %337 = arith.cmpi eq, %334, %336 : vector<64x64xi32>
    %cst_162 = arith.constant 1.000000e+00 : f32
    %cst_163 = arith.constant 0.000000e+00 : f32
    %338 = vector.broadcast %cst_162 : f32 to vector<64x64xf32>
    %339 = vector.broadcast %cst_163 : f32 to vector<64x64xf32>
    %340 = arith.select %337, %338, %339 : vector<64x64xi1>, vector<64x64xf32>
    %341 = tpu.iota {dimensions = array<i32: 0>} : vector<64x1xi32>
    %c1_i32_164 = arith.constant 1 : i32
    %342 = vector.broadcast %c1_i32_164 : i32 to vector<64x1xi32>
    %343 = arith.cmpi slt, %341, %342 : vector<64x1xi32>
    %cst_165 = arith.constant 1.000000e+00 : f32
    %cst_166 = arith.constant 0.000000e+00 : f32
    %344 = vector.broadcast %cst_165 : f32 to vector<64x1xf32>
    %345 = vector.broadcast %cst_166 : f32 to vector<64x1xf32>
    %346 = arith.select %343, %344, %345 : vector<64x1xi1>, vector<64x1xf32>
    %cst_167 = arith.constant dense<0.000000e+00> : vector<64x192xf32>
    %347 = tpu.matmul %340, %331, %cst_167 {dimension_numbers = #tpu.dot_dimension_numbers<[1], [0], [0], [1], [0, 0, 1, 1], [], []>} : vector<64x64xf32>, vector<64x192xf32>, vector<64x192xf32> -> vector<64x192xf32>
    %348 = arith.mulf %327, %347 : vector<64x192xf32>
    %349 = arith.addf %331, %348 : vector<64x192xf32>
    %cst_168 = arith.constant dense<0.000000e+00> : vector<64x192xf32>
    %350 = tpu.matmul %340, %327, %cst_168 {dimension_numbers = #tpu.dot_dimension_numbers<[1], [0], [0], [1], [0, 0, 1, 1], [], []>} : vector<64x64xf32>, vector<64x192xf32>, vector<64x192xf32> -> vector<64x192xf32>
    %351 = vector.broadcast %346 : vector<64x1xf32> to vector<64x192xf32>
    %352 = arith.addf %350, %351 : vector<64x192xf32>
    %353 = arith.mulf %327, %352 : vector<64x192xf32>
    %354 = tpu.iota {dimensions = array<i32: 0>} : vector<64x64xi32>
    %355 = tpu.iota {dimensions = array<i32: 1>} : vector<64x64xi32>
    %c2_i32_169 = arith.constant 2 : i32
    %356 = vector.broadcast %c2_i32_169 : i32 to vector<64x64xi32>
    %357 = arith.subi %354, %356 : vector<64x64xi32>
    %358 = arith.cmpi eq, %355, %357 : vector<64x64xi32>
    %cst_170 = arith.constant 1.000000e+00 : f32
    %cst_171 = arith.constant 0.000000e+00 : f32
    %359 = vector.broadcast %cst_170 : f32 to vector<64x64xf32>
    %360 = vector.broadcast %cst_171 : f32 to vector<64x64xf32>
    %361 = arith.select %358, %359, %360 : vector<64x64xi1>, vector<64x64xf32>
    %362 = tpu.iota {dimensions = array<i32: 0>} : vector<64x1xi32>
    %c2_i32_172 = arith.constant 2 : i32
    %363 = vector.broadcast %c2_i32_172 : i32 to vector<64x1xi32>
    %364 = arith.cmpi slt, %362, %363 : vector<64x1xi32>
    %cst_173 = arith.constant 1.000000e+00 : f32
    %cst_174 = arith.constant 0.000000e+00 : f32
    %365 = vector.broadcast %cst_173 : f32 to vector<64x1xf32>
    %366 = vector.broadcast %cst_174 : f32 to vector<64x1xf32>
    %367 = arith.select %364, %365, %366 : vector<64x1xi1>, vector<64x1xf32>
    %cst_175 = arith.constant dense<0.000000e+00> : vector<64x192xf32>
    %368 = tpu.matmul %361, %349, %cst_175 {dimension_numbers = #tpu.dot_dimension_numbers<[1], [0], [0], [1], [0, 0, 1, 1], [], []>} : vector<64x64xf32>, vector<64x192xf32>, vector<64x192xf32> -> vector<64x192xf32>
    %369 = arith.mulf %353, %368 : vector<64x192xf32>
    %370 = arith.addf %349, %369 : vector<64x192xf32>
    %cst_176 = arith.constant dense<0.000000e+00> : vector<64x192xf32>
    %371 = tpu.matmul %361, %353, %cst_176 {dimension_numbers = #tpu.dot_dimension_numbers<[1], [0], [0], [1], [0, 0, 1, 1], [], []>} : vector<64x64xf32>, vector<64x192xf32>, vector<64x192xf32> -> vector<64x192xf32>
    %372 = vector.broadcast %367 : vector<64x1xf32> to vector<64x192xf32>
    %373 = arith.addf %371, %372 : vector<64x192xf32>
    %374 = arith.mulf %353, %373 : vector<64x192xf32>
    %375 = tpu.iota {dimensions = array<i32: 0>} : vector<64x64xi32>
    %376 = tpu.iota {dimensions = array<i32: 1>} : vector<64x64xi32>
    %c4_i32_177 = arith.constant 4 : i32
    %377 = vector.broadcast %c4_i32_177 : i32 to vector<64x64xi32>
    %378 = arith.subi %375, %377 : vector<64x64xi32>
    %379 = arith.cmpi eq, %376, %378 : vector<64x64xi32>
    %cst_178 = arith.constant 1.000000e+00 : f32
    %cst_179 = arith.constant 0.000000e+00 : f32
    %380 = vector.broadcast %cst_178 : f32 to vector<64x64xf32>
    %381 = vector.broadcast %cst_179 : f32 to vector<64x64xf32>
    %382 = arith.select %379, %380, %381 : vector<64x64xi1>, vector<64x64xf32>
    %383 = tpu.iota {dimensions = array<i32: 0>} : vector<64x1xi32>
    %c4_i32_180 = arith.constant 4 : i32
    %384 = vector.broadcast %c4_i32_180 : i32 to vector<64x1xi32>
    %385 = arith.cmpi slt, %383, %384 : vector<64x1xi32>
    %cst_181 = arith.constant 1.000000e+00 : f32
    %cst_182 = arith.constant 0.000000e+00 : f32
    %386 = vector.broadcast %cst_181 : f32 to vector<64x1xf32>
    %387 = vector.broadcast %cst_182 : f32 to vector<64x1xf32>
    %388 = arith.select %385, %386, %387 : vector<64x1xi1>, vector<64x1xf32>
    %cst_183 = arith.constant dense<0.000000e+00> : vector<64x192xf32>
    %389 = tpu.matmul %382, %370, %cst_183 {dimension_numbers = #tpu.dot_dimension_numbers<[1], [0], [0], [1], [0, 0, 1, 1], [], []>} : vector<64x64xf32>, vector<64x192xf32>, vector<64x192xf32> -> vector<64x192xf32>
    %390 = arith.mulf %374, %389 : vector<64x192xf32>
    %391 = arith.addf %370, %390 : vector<64x192xf32>
    %cst_184 = arith.constant dense<0.000000e+00> : vector<64x192xf32>
    %392 = tpu.matmul %382, %374, %cst_184 {dimension_numbers = #tpu.dot_dimension_numbers<[1], [0], [0], [1], [0, 0, 1, 1], [], []>} : vector<64x64xf32>, vector<64x192xf32>, vector<64x192xf32> -> vector<64x192xf32>
    %393 = vector.broadcast %388 : vector<64x1xf32> to vector<64x192xf32>
    %394 = arith.addf %392, %393 : vector<64x192xf32>
    %395 = arith.mulf %374, %394 : vector<64x192xf32>
    %396 = tpu.iota {dimensions = array<i32: 0>} : vector<64x64xi32>
    %397 = tpu.iota {dimensions = array<i32: 1>} : vector<64x64xi32>
    %c8_i32_185 = arith.constant 8 : i32
    %398 = vector.broadcast %c8_i32_185 : i32 to vector<64x64xi32>
    %399 = arith.subi %396, %398 : vector<64x64xi32>
    %400 = arith.cmpi eq, %397, %399 : vector<64x64xi32>
    %cst_186 = arith.constant 1.000000e+00 : f32
    %cst_187 = arith.constant 0.000000e+00 : f32
    %401 = vector.broadcast %cst_186 : f32 to vector<64x64xf32>
    %402 = vector.broadcast %cst_187 : f32 to vector<64x64xf32>
    %403 = arith.select %400, %401, %402 : vector<64x64xi1>, vector<64x64xf32>
    %404 = tpu.iota {dimensions = array<i32: 0>} : vector<64x1xi32>
    %c8_i32_188 = arith.constant 8 : i32
    %405 = vector.broadcast %c8_i32_188 : i32 to vector<64x1xi32>
    %406 = arith.cmpi slt, %404, %405 : vector<64x1xi32>
    %cst_189 = arith.constant 1.000000e+00 : f32
    %cst_190 = arith.constant 0.000000e+00 : f32
    %407 = vector.broadcast %cst_189 : f32 to vector<64x1xf32>
    %408 = vector.broadcast %cst_190 : f32 to vector<64x1xf32>
    %409 = arith.select %406, %407, %408 : vector<64x1xi1>, vector<64x1xf32>
    %cst_191 = arith.constant dense<0.000000e+00> : vector<64x192xf32>
    %410 = tpu.matmul %403, %391, %cst_191 {dimension_numbers = #tpu.dot_dimension_numbers<[1], [0], [0], [1], [0, 0, 1, 1], [], []>} : vector<64x64xf32>, vector<64x192xf32>, vector<64x192xf32> -> vector<64x192xf32>
    %411 = arith.mulf %395, %410 : vector<64x192xf32>
    %412 = arith.addf %391, %411 : vector<64x192xf32>
    %cst_192 = arith.constant dense<0.000000e+00> : vector<64x192xf32>
    %413 = tpu.matmul %403, %395, %cst_192 {dimension_numbers = #tpu.dot_dimension_numbers<[1], [0], [0], [1], [0, 0, 1, 1], [], []>} : vector<64x64xf32>, vector<64x192xf32>, vector<64x192xf32> -> vector<64x192xf32>
    %414 = vector.broadcast %409 : vector<64x1xf32> to vector<64x192xf32>
    %415 = arith.addf %413, %414 : vector<64x192xf32>
    %416 = arith.mulf %395, %415 : vector<64x192xf32>
    %417 = tpu.iota {dimensions = array<i32: 0>} : vector<64x64xi32>
    %418 = tpu.iota {dimensions = array<i32: 1>} : vector<64x64xi32>
    %c16_i32_193 = arith.constant 16 : i32
    %419 = vector.broadcast %c16_i32_193 : i32 to vector<64x64xi32>
    %420 = arith.subi %417, %419 : vector<64x64xi32>
    %421 = arith.cmpi eq, %418, %420 : vector<64x64xi32>
    %cst_194 = arith.constant 1.000000e+00 : f32
    %cst_195 = arith.constant 0.000000e+00 : f32
    %422 = vector.broadcast %cst_194 : f32 to vector<64x64xf32>
    %423 = vector.broadcast %cst_195 : f32 to vector<64x64xf32>
    %424 = arith.select %421, %422, %423 : vector<64x64xi1>, vector<64x64xf32>
    %425 = tpu.iota {dimensions = array<i32: 0>} : vector<64x1xi32>
    %c16_i32_196 = arith.constant 16 : i32
    %426 = vector.broadcast %c16_i32_196 : i32 to vector<64x1xi32>
    %427 = arith.cmpi slt, %425, %426 : vector<64x1xi32>
    %cst_197 = arith.constant 1.000000e+00 : f32
    %cst_198 = arith.constant 0.000000e+00 : f32
    %428 = vector.broadcast %cst_197 : f32 to vector<64x1xf32>
    %429 = vector.broadcast %cst_198 : f32 to vector<64x1xf32>
    %430 = arith.select %427, %428, %429 : vector<64x1xi1>, vector<64x1xf32>
    %cst_199 = arith.constant dense<0.000000e+00> : vector<64x192xf32>
    %431 = tpu.matmul %424, %412, %cst_199 {dimension_numbers = #tpu.dot_dimension_numbers<[1], [0], [0], [1], [0, 0, 1, 1], [], []>} : vector<64x64xf32>, vector<64x192xf32>, vector<64x192xf32> -> vector<64x192xf32>
    %432 = arith.mulf %416, %431 : vector<64x192xf32>
    %433 = arith.addf %412, %432 : vector<64x192xf32>
    %cst_200 = arith.constant dense<0.000000e+00> : vector<64x192xf32>
    %434 = tpu.matmul %424, %416, %cst_200 {dimension_numbers = #tpu.dot_dimension_numbers<[1], [0], [0], [1], [0, 0, 1, 1], [], []>} : vector<64x64xf32>, vector<64x192xf32>, vector<64x192xf32> -> vector<64x192xf32>
    %435 = vector.broadcast %430 : vector<64x1xf32> to vector<64x192xf32>
    %436 = arith.addf %434, %435 : vector<64x192xf32>
    %437 = arith.mulf %416, %436 : vector<64x192xf32>
    %438 = tpu.iota {dimensions = array<i32: 0>} : vector<64x64xi32>
    %439 = tpu.iota {dimensions = array<i32: 1>} : vector<64x64xi32>
    %c32_i32_201 = arith.constant 32 : i32
    %440 = vector.broadcast %c32_i32_201 : i32 to vector<64x64xi32>
    %441 = arith.subi %438, %440 : vector<64x64xi32>
    %442 = arith.cmpi eq, %439, %441 : vector<64x64xi32>
    %cst_202 = arith.constant 1.000000e+00 : f32
    %cst_203 = arith.constant 0.000000e+00 : f32
    %443 = vector.broadcast %cst_202 : f32 to vector<64x64xf32>
    %444 = vector.broadcast %cst_203 : f32 to vector<64x64xf32>
    %445 = arith.select %442, %443, %444 : vector<64x64xi1>, vector<64x64xf32>
    %cst_204 = arith.constant dense<0.000000e+00> : vector<64x192xf32>
    %446 = tpu.matmul %445, %433, %cst_204 {dimension_numbers = #tpu.dot_dimension_numbers<[1], [0], [0], [1], [0, 0, 1, 1], [], []>} : vector<64x64xf32>, vector<64x192xf32>, vector<64x192xf32> -> vector<64x192xf32>
    %447 = arith.mulf %437, %446 : vector<64x192xf32>
    %448 = arith.addf %433, %447 : vector<64x192xf32>
    %449 = arith.mulf %448, %332 : vector<64x192xf32>
    %cst_205 = arith.constant dense<0.000000e+00> : vector<64x12xf32>
    %450 = tpu.matmul %449, %1, %cst_205 {dimension_numbers = #tpu.dot_dimension_numbers<[1], [0], [0], [1], [0, 0, 1, 1], [], []>} : vector<64x192xf32>, vector<192x12xf32>, vector<64x12xf32> -> vector<64x12xf32>
    %451 = vector.broadcast %260 : vector<1x12xf32> to vector<64x12xf32>
    %452 = arith.mulf %313, %451 : vector<64x12xf32>
    %453 = arith.addf %450, %452 : vector<64x12xf32>
    %454 = arith.negf %252 : vector<64x12xf32>
    %455 = math.exp %454 : vector<64x12xf32>
    %cst_206 = arith.constant 1.000000e+00 : f32
    %456 = vector.broadcast %cst_206 : f32 to vector<64x12xf32>
    %457 = arith.addf %456, %455 : vector<64x12xf32>
    %458 = arith.divf %456, %457 : vector<64x12xf32>
    %459 = arith.mulf %252, %458 : vector<64x12xf32>
    %460 = arith.mulf %453, %459 : vector<64x12xf32>
    %cst_207 = arith.constant dense<0.000000e+00> : vector<64x2xf32>
    %461 = tpu.matmul %460, %261, %cst_207 {dimension_numbers = #tpu.dot_dimension_numbers<[1], [0], [0], [1], [0, 0, 1, 1], [], []>} : vector<64x12xf32>, vector<12x2xf32>, vector<64x2xf32> -> vector<64x2xf32>
    %cst_208 = arith.constant dense<0.000000e+00> : vector<64xf32>
    %462 = vector.multi_reduction <add>, %461, %cst_208 [1] : vector<64x2xf32> to vector<64xf32>
    %463 = vector.shape_cast %462 : vector<64xf32> to vector<64x1xf32>
    %cst_209 = arith.constant 2.000000e+00 : f32
    %464 = vector.broadcast %cst_209 : f32 to vector<64x1xf32>
    %465 = arith.divf %463, %464 : vector<64x1xf32>
    %466 = vector.broadcast %465 : vector<64x1xf32> to vector<64x2xf32>
    %467 = arith.subf %461, %466 : vector<64x2xf32>
    %468 = arith.mulf %467, %467 : vector<64x2xf32>
    %cst_210 = arith.constant dense<0.000000e+00> : vector<64xf32>
    %469 = vector.multi_reduction <add>, %468, %cst_210 [1] : vector<64x2xf32> to vector<64xf32>
    %470 = vector.shape_cast %469 : vector<64xf32> to vector<64x1xf32>
    %cst_211 = arith.constant 2.000000e+00 : f32
    %471 = vector.broadcast %cst_211 : f32 to vector<64x1xf32>
    %472 = arith.divf %470, %471 : vector<64x1xf32>
    %cst_212 = arith.constant 9.99999974E-6 : f32
    %473 = vector.broadcast %cst_212 : f32 to vector<64x1xf32>
    %474 = arith.addf %472, %473 : vector<64x1xf32>
    %475 = math.rsqrt %474 : vector<64x1xf32>
    %476 = vector.broadcast %475 : vector<64x1xf32> to vector<64x2xf32>
    %477 = arith.mulf %467, %476 : vector<64x2xf32>
    %478 = vector.broadcast %262 : vector<1x2xf32> to vector<64x2xf32>
    %479 = arith.mulf %477, %478 : vector<64x2xf32>
    %480 = vector.broadcast %263 : vector<1x2xf32> to vector<64x2xf32>
    %481 = arith.addf %479, %480 : vector<64x2xf32>
    %cst_213 = arith.constant 0.000000e+00 : f32
    %482 = vector.broadcast %cst_213 : f32 to vector<64x2xf32>
    %483 = arith.maximumf %481, %482 : vector<64x2xf32>
    %c0_214 = arith.constant 0 : index
    %c0_215 = arith.constant 0 : index
    %c0_216 = arith.constant 0 : index
    %484 = vector.load %arg34[%c0_214, %c0_215, %c0_216] : memref<1x64x2xf32, #tpu.memory_space<vmem>>, vector<1x64x2xf32>
    %485 = vector.shape_cast %484 : vector<1x64x2xf32> to vector<64x2xf32>
    %486 = vector.shape_cast %483 : vector<64x2xf32> to vector<1x64x2xf32>
    tpu.vector_store %arg34[%c0_214, %c0_215, %c0_216], %486 {strides = array<i32>} : memref<1x64x2xf32, #tpu.memory_space<vmem>>, vector<1x64x2xf32>,
    return
  }
  func.func @transform_0(%arg0: i32) -> (i32, i32, i32) {
    %c0_i32 = arith.constant 0 : i32
    %c0_i32_0 = arith.constant 0 : i32
    %c0_i32_1 = arith.constant 0 : i32
    return %arg0, %c0_i32, %c0_i32_0 : i32, i32, i32
  }
  func.func @transform_1(%arg0: i32) -> (i32, i32, i32) {
    %c0_i32 = arith.constant 0 : i32
    %c0_i32_0 = arith.constant 0 : i32
    %c0_i32_1 = arith.constant 0 : i32
    return %arg0, %c0_i32, %c0_i32_0 : i32, i32, i32
  }
  func.func @transform_2(%arg0: i32) -> (i32, i32) {
    %c0_i32 = arith.constant 0 : i32
    %c0_i32_0 = arith.constant 0 : i32
    %c0_i32_1 = arith.constant 0 : i32
    return %c0_i32, %c0_i32_0 : i32, i32
  }
  func.func @transform_3(%arg0: i32) -> (i32, i32) {
    %c0_i32 = arith.constant 0 : i32
    %c0_i32_0 = arith.constant 0 : i32
    %c0_i32_1 = arith.constant 0 : i32
    return %c0_i32, %c0_i32_0 : i32, i32
  }
  func.func @transform_4(%arg0: i32) -> (i32, i32) {
    %c0_i32 = arith.constant 0 : i32
    %c0_i32_0 = arith.constant 0 : i32
    %c0_i32_1 = arith.constant 0 : i32
    return %c0_i32, %c0_i32_0 : i32, i32
  }
  func.func @transform_5(%arg0: i32) -> (i32, i32) {
    %c0_i32 = arith.constant 0 : i32
    %c0_i32_0 = arith.constant 0 : i32
    %c0_i32_1 = arith.constant 0 : i32
    return %c0_i32, %c0_i32_0 : i32, i32
  }
  func.func @transform_6(%arg0: i32) -> (i32, i32) {
    %c0_i32 = arith.constant 0 : i32
    %c0_i32_0 = arith.constant 0 : i32
    %c0_i32_1 = arith.constant 0 : i32
    return %c0_i32, %c0_i32_0 : i32, i32
  }
  func.func @transform_7(%arg0: i32) -> (i32, i32) {
    %c0_i32 = arith.constant 0 : i32
    %c0_i32_0 = arith.constant 0 : i32
    %c0_i32_1 = arith.constant 0 : i32
    return %c0_i32, %c0_i32_0 : i32, i32
  }
  func.func @transform_8(%arg0: i32) -> (i32, i32) {
    %c0_i32 = arith.constant 0 : i32
    %c0_i32_0 = arith.constant 0 : i32
    %c0_i32_1 = arith.constant 0 : i32
    return %c0_i32, %c0_i32_0 : i32, i32
  }
  func.func @transform_9(%arg0: i32) -> (i32, i32) {
    %c0_i32 = arith.constant 0 : i32
    %c0_i32_0 = arith.constant 0 : i32
    %c0_i32_1 = arith.constant 0 : i32
    return %c0_i32, %c0_i32_0 : i32, i32
  }
  func.func @transform_10(%arg0: i32) -> (i32, i32) {
    %c0_i32 = arith.constant 0 : i32
    %c0_i32_0 = arith.constant 0 : i32
    %c0_i32_1 = arith.constant 0 : i32
    return %c0_i32, %c0_i32_0 : i32, i32
  }
  func.func @transform_11(%arg0: i32) -> (i32, i32) {
    %c0_i32 = arith.constant 0 : i32
    %c0_i32_0 = arith.constant 0 : i32
    %c0_i32_1 = arith.constant 0 : i32
    return %c0_i32, %c0_i32_0 : i32, i32
  }
  func.func @transform_12(%arg0: i32) -> (i32, i32) {
    %c0_i32 = arith.constant 0 : i32
    %c0_i32_0 = arith.constant 0 : i32
    %c0_i32_1 = arith.constant 0 : i32
    return %c0_i32, %c0_i32_0 : i32, i32
  }
  func.func @transform_13(%arg0: i32) -> (i32, i32) {
    %c0_i32 = arith.constant 0 : i32
    %c0_i32_0 = arith.constant 0 : i32
    %c0_i32_1 = arith.constant 0 : i32
    return %c0_i32, %c0_i32_0 : i32, i32
  }
  func.func @transform_14(%arg0: i32) -> (i32, i32) {
    %c0_i32 = arith.constant 0 : i32
    %c0_i32_0 = arith.constant 0 : i32
    %c0_i32_1 = arith.constant 0 : i32
    return %c0_i32, %c0_i32_0 : i32, i32
  }
  func.func @transform_15(%arg0: i32) -> (i32, i32) {
    %c0_i32 = arith.constant 0 : i32
    %c0_i32_0 = arith.constant 0 : i32
    %c0_i32_1 = arith.constant 0 : i32
    return %c0_i32, %c0_i32_0 : i32, i32
  }
  func.func @transform_16(%arg0: i32) -> (i32, i32) {
    %c0_i32 = arith.constant 0 : i32
    %c0_i32_0 = arith.constant 0 : i32
    %c0_i32_1 = arith.constant 0 : i32
    return %c0_i32, %c0_i32_0 : i32, i32
  }
  func.func @transform_17(%arg0: i32) -> (i32, i32) {
    %c0_i32 = arith.constant 0 : i32
    %c0_i32_0 = arith.constant 0 : i32
    %c0_i32_1 = arith.constant 0 : i32
    return %c0_i32, %c0_i32_0 : i32, i32
  }
  func.func @transform_18(%arg0: i32) -> (i32, i32) {
    %c0_i32 = arith.constant 0 : i32
    %c0_i32_0 = arith.constant 0 : i32
    %c0_i32_1 = arith.constant 0 : i32
    return %c0_i32, %c0_i32_0 : i32, i32
  }
  func.func @transform_19(%arg0: i32) -> (i32, i32) {
    %c0_i32 = arith.constant 0 : i32
    %c0_i32_0 = arith.constant 0 : i32
    %c0_i32_1 = arith.constant 0 : i32
    return %c0_i32, %c0_i32_0 : i32, i32
  }
  func.func @transform_20(%arg0: i32) -> (i32, i32) {
    %c0_i32 = arith.constant 0 : i32
    %c0_i32_0 = arith.constant 0 : i32
    %c0_i32_1 = arith.constant 0 : i32
    return %c0_i32, %c0_i32_0 : i32, i32
  }
  func.func @transform_21(%arg0: i32) -> (i32, i32) {
    %c0_i32 = arith.constant 0 : i32
    %c0_i32_0 = arith.constant 0 : i32
    %c0_i32_1 = arith.constant 0 : i32
    return %c0_i32, %c0_i32_0 : i32, i32
  }
  func.func @transform_22(%arg0: i32) -> (i32, i32) {
    %c0_i32 = arith.constant 0 : i32
    %c0_i32_0 = arith.constant 0 : i32
    %c0_i32_1 = arith.constant 0 : i32
    return %c0_i32, %c0_i32_0 : i32, i32
  }
  func.func @transform_23(%arg0: i32) -> (i32, i32) {
    %c0_i32 = arith.constant 0 : i32
    %c0_i32_0 = arith.constant 0 : i32
    %c0_i32_1 = arith.constant 0 : i32
    return %c0_i32, %c0_i32_0 : i32, i32
  }
  func.func @transform_24(%arg0: i32) -> (i32, i32) {
    %c0_i32 = arith.constant 0 : i32
    %c0_i32_0 = arith.constant 0 : i32
    %c0_i32_1 = arith.constant 0 : i32
    return %c0_i32, %c0_i32_0 : i32, i32
  }
  func.func @transform_25(%arg0: i32) -> (i32, i32) {
    %c0_i32 = arith.constant 0 : i32
    %c0_i32_0 = arith.constant 0 : i32
    %c0_i32_1 = arith.constant 0 : i32
    return %c0_i32, %c0_i32_0 : i32, i32
  }
  func.func @transform_26(%arg0: i32) -> (i32, i32) {
    %c0_i32 = arith.constant 0 : i32
    %c0_i32_0 = arith.constant 0 : i32
    %c0_i32_1 = arith.constant 0 : i32
    return %c0_i32, %c0_i32_0 : i32, i32
  }
  func.func @transform_27(%arg0: i32) -> (i32, i32) {
    %c0_i32 = arith.constant 0 : i32
    %c0_i32_0 = arith.constant 0 : i32
    %c0_i32_1 = arith.constant 0 : i32
    return %c0_i32, %c0_i32_0 : i32, i32
  }
  func.func @transform_28(%arg0: i32) -> (i32, i32) {
    %c0_i32 = arith.constant 0 : i32
    %c0_i32_0 = arith.constant 0 : i32
    %c0_i32_1 = arith.constant 0 : i32
    return %c0_i32, %c0_i32_0 : i32, i32
  }
  func.func @transform_29(%arg0: i32) -> (i32, i32) {
    %c0_i32 = arith.constant 0 : i32
    %c0_i32_0 = arith.constant 0 : i32
    %c0_i32_1 = arith.constant 0 : i32
    return %c0_i32, %c0_i32_0 : i32, i32
  }
  func.func @transform_30(%arg0: i32) -> (i32, i32) {
    %c0_i32 = arith.constant 0 : i32
    %c0_i32_0 = arith.constant 0 : i32
    %c0_i32_1 = arith.constant 0 : i32
    return %c0_i32, %c0_i32_0 : i32, i32
  }
  func.func @transform_31(%arg0: i32) -> (i32, i32) {
    %c0_i32 = arith.constant 0 : i32
    %c0_i32_0 = arith.constant 0 : i32
    %c0_i32_1 = arith.constant 0 : i32
    return %c0_i32, %c0_i32_0 : i32, i32
  }
  func.func @transform_32(%arg0: i32) -> (i32, i32) {
    %c0_i32 = arith.constant 0 : i32
    %c0_i32_0 = arith.constant 0 : i32
    %c0_i32_1 = arith.constant 0 : i32
    return %c0_i32, %c0_i32_0 : i32, i32
  }
  func.func @transform_33(%arg0: i32) -> (i32, i32, i32) {
    %c0_i32 = arith.constant 0 : i32
    %c0_i32_0 = arith.constant 0 : i32
    %c0_i32_1 = arith.constant 0 : i32
    return %arg0, %c0_i32, %c0_i32_0 : i32, i32, i32
  }
}

</mosaic_0001>

<llo_original>
// kernel: tile.24
$region0: #{tile.24}
  %s0 = inlined_call_operand.vmem [shape: f32[12,16,12], index: 0, kind: input, shape index: {}]
  %s1 = inlined_call_operand.vmem [shape: f32[12,192], index: 1, kind: output, shape index: {}]
  %s2 = smov 3
  %v3 = vld [vmem:[%s0] ss:$16 sm:%s2]
  %s4 = smov 12
  %v5 = vld [vmem:[%s0] ss:$16 sm:%s4]
  %vm6 = vcmask 1043458
  %v7 = vsel %vm6, %v5, %v3
  %s8 = smov 48
  %v9 = vld [vmem:[%s0] ss:$16 sm:%s8]
  %vm10 = vcmask 1045508
  %v11 = vsel %vm10, %v9, %v7
  %s12 = smov 192
  %v13 = vld [vmem:[%s0] ss:$16 sm:%s12]
  %vm14 = vcmask 1047558
  %v15 = vsel %vm14, %v13, %v11
  %vm16 = vcmask 97280
  %17 = vst.msk [vmem:[%s1] sm:$0xff] %vm16, %v15
  %s18 = scalar_lea.vmem %s0, 128
  %s19 = smov 3
  %v20 = vld [vmem:[%s18] ss:$16 sm:%s19]
  %s21 = scalar_lea.vmem %s0, 128
  %s22 = smov 12
  %v23 = vld [vmem:[%s21] ss:$16 sm:%s22]
  %vm24 = vcmask 1043458
  %v25 = vsel %vm24, %v23, %v20
  %vm26 = vcmask 97280
  %s27 = scalar_lea.vmem %s1, 16
  %28 = vst.msk [vmem:[%s27] sm:$0xf] %vm26, %v25
  %s29 = scalar_lea.vmem %s0, 10
  %s30 = smov 3
  %v31 = vld [vmem:[%s29] ss:$16 sm:%s30]
  %s32 = scalar_lea.vmem %s0, 10
  %s33 = smov 12
  %v34 = vld [vmem:[%s32] ss:$16 sm:%s33]
  %vm35 = vcmask 1043458
  %v36 = vsel %vm35, %v34, %v31
  %s37 = scalar_lea.vmem %s0, 10
  %s38 = smov 48
  %v39 = vld [vmem:[%s37] ss:$16 sm:%s38]
  %vm40 = vcmask 1045508
  %v41 = vsel %vm40, %v39, %v36
  %s42 = scalar_lea.vmem %s0, 10
  %s43 = smov 192
  %v44 = vld [vmem:[%s42] ss:$16 sm:%s43]
  %vm45 = vcmask 1047558
  %v46 = vsel %vm45, %v44, %v41
  %s47 = scalar_lea.vmem %s0, 10
  %s48 = smov 3
  %v49 = vld [vmem:[%s47] ss:$16 sm:%s48]
  %s50 = scalar_lea.vmem %s0, 10
  %s51 = smov 12
  %v52 = vld [vmem:[%s50] ss:$16 sm:%s51]
  %vm53 = vcmask 1043458
  %v54 = vsel %vm53, %v52, %v49
  %s55 = scalar_lea.vmem %s0, 10
  %s56 = smov 48
  %v57 = vld [vmem:[%s55] ss:$16 sm:%s56]
  %vm58 = vcmask 1045508
  %v59 = vsel %vm58, %v57, %v54
  %s60 = scalar_lea.vmem %s0, 10
  %s61 = smov 192
  %v62 = vld [vmem:[%s60] ss:$16 sm:%s61]
  %vm63 = vcmask 1047558
  %v64 = vsel %vm63, %v62, %v59
  %vm65 = vcmask 64512
  %v66 = vsel %vm65, %v64, %v46
  %67 = vrot.lane.b32.xlu0 %v66, 120
  %v68 = vpop.permute.xlu0 %67
  %vm69 = vcmask 31744
  %s70 = scalar_lea.vmem %s1, 8
  %71 = vst.msk [vmem:[%s70] sm:$0xff] %vm69, %v68
  %vm72 = vcmask 1048512
  %73 = vst.msk [vmem:[%s1] sm:$0xff] %vm72, %v68
  %s74 = scalar_lea.vmem %s0, 138
  %s75 = smov 3
  %v76 = vld [vmem:[%s74] ss:$16 sm:%s75]
  %s77 = scalar_lea.vmem %s0, 138
  %s78 = smov 12
  %v79 = vld [vmem:[%s77] ss:$16 sm:%s78]
  %vm80 = vcmask 1043458
  %v81 = vsel %vm80, %v79, %v76
  %s82 = scalar_lea.vmem %s0, 138
  %s83 = smov 3
  %v84 = vld [vmem:[%s82] ss:$16 sm:%s83]
  %s85 = scalar_lea.vmem %s0, 138
  %s86 = smov 12
  %v87 = vld [vmem:[%s85] ss:$16 sm:%s86]
  %vm88 = vcmask 1043458
  %v89 = vsel %vm88, %v87, %v84
  %vm90 = vcmask 64512
  %v91 = vsel %vm90, %v89, %v81
  %92 = vrot.lane.b32.xlu0 %v91, 120
  %v93 = vpop.permute.xlu0 %92
  %vm94 = vcmask 31744
  %s95 = scalar_lea.vmem %s1, 24
  %96 = vst.msk [vmem:[%s95] sm:$0xf] %vm94, %v93
  %vm97 = vcmask 1048512
  %s98 = scalar_lea.vmem %s1, 16
  %99 = vst.msk [vmem:[%s98] sm:$0xf] %vm97, %v93
  %s100 = scalar_lea.vmem %s0, 9
  %s101 = smov 3
  %v102 = vld [vmem:[%s100] ss:$16 sm:%s101]
  %s103 = scalar_lea.vmem %s0, 9
  %s104 = smov 12
  %v105 = vld [vmem:[%s103] ss:$16 sm:%s104]
  %vm106 = vcmask 1043458
  %v107 = vsel %vm106, %v105, %v102
  %s108 = scalar_lea.vmem %s0, 9
  %s109 = smov 48
  %v110 = vld [vmem:[%s108] ss:$16 sm:%s109]
  %vm111 = vcmask 1045508
  %v112 = vsel %vm111, %v110, %v107
  %s113 = scalar_lea.vmem %s0, 9
  %s114 = smov 192
  %v115 = vld [vmem:[%s113] ss:$16 sm:%s114]
  %vm116 = vcmask 1047558
  %v117 = vsel %vm116, %v115, %v112
  %118 = vrot.lane.b32.xlu0 %v117, 108
  %v119 = vpop.permute.xlu0 %118
  %vm120 = vcmask 982880
  %121 = vst.msk [vmem:[%s1] sm:$0xff] %vm120, %v119
  %s122 = scalar_lea.vmem %s0, 137
  %s123 = smov 3
  %v124 = vld [vmem:[%s122] ss:$16 sm:%s123]
  %s125 = scalar_lea.vmem %s0, 137
  %s126 = smov 12
  %v127 = vld [vmem:[%s125] ss:$16 sm:%s126]
  %vm128 = vcmask 1043458
  %v129 = vsel %vm128, %v127, %v124
  %130 = vrot.lane.b32.xlu0 %v129, 108
  %v131 = vpop.permute.xlu0 %130
  %vm132 = vcmask 982880
  %s133 = scalar_lea.vmem %s1, 16
  %134 = vst.msk [vmem:[%s133] sm:$0xf] %vm132, %v131
  %s135 = scalar_lea.vmem %s0, 8
  %s136 = smov 3
  %v137 = vld [vmem:[%s135] ss:$16 sm:%s136]
  %s138 = scalar_lea.vmem %s0, 8
  %s139 = smov 12
  %v140 = vld [vmem:[%s138] ss:$16 sm:%s139]
  %vm141 = vcmask 1043458
  %v142 = vsel %vm141, %v140, %v137
  %s143 = scalar_lea.vmem %s0, 8
  %s144 = smov 48
  %v145 = vld [vmem:[%s143] ss:$16 sm:%s144]
  %vm146 = vcmask 1045508
  %v147 = vsel %vm146, %v145, %v142
  %s148 = scalar_lea.vmem %s0, 8
  %s149 = smov 192
  %v150 = vld [vmem:[%s148] ss:$16 sm:%s149]
  %vm151 = vcmask 1047558
  %v152 = vsel %vm151, %v150, %v147
  %153 = vrot.lane.b32.xlu0 %v152, 96
  %v154 = vpop.permute.xlu0 %153
  %vm155 = vcmask 884480
  %156 = vst.msk [vmem:[%s1] sm:$0xff] %vm155, %v154
  %s157 = scalar_lea.vmem %s0, 136
  %s158 = smov 3
  %v159 = vld [vmem:[%s157] ss:$16 sm:%s158]
  %s160 = scalar_lea.vmem %s0, 136
  %s161 = smov 12
  %v162 = vld [vmem:[%s160] ss:$16 sm:%s161]
  %vm163 = vcmask 1043458
  %v164 = vsel %vm163, %v162, %v159
  %165 = vrot.lane.b32.xlu0 %v164, 96
  %v166 = vpop.permute.xlu0 %165
  %vm167 = vcmask 884480
  %s168 = scalar_lea.vmem %s1, 16
  %169 = vst.msk [vmem:[%s168] sm:$0xf] %vm167, %v166
  %s170 = scalar_lea.vmem %s0, 7
  %s171 = smov 3
  %v172 = vld [vmem:[%s170] ss:$16 sm:%s171]
  %s173 = scalar_lea.vmem %s0, 7
  %s174 = smov 12
  %v175 = vld [vmem:[%s173] ss:$16 sm:%s174]
  %vm176 = vcmask 1043458
  %v177 = vsel %vm176, %v175, %v172
  %s178 = scalar_lea.vmem %s0, 7
  %s179 = smov 48
  %v180 = vld [vmem:[%s178] ss:$16 sm:%s179]
  %vm181 = vcmask 1045508
  %v182 = vsel %vm181, %v180, %v177
  %s183 = scalar_lea.vmem %s0, 7
  %s184 = smov 192
  %v185 = vld [vmem:[%s183] ss:$16 sm:%s184]
  %vm186 = vcmask 1047558
  %v187 = vsel %vm186, %v185, %v182
  %188 = vrot.lane.b32.xlu0 %v187, 84
  %v189 = vpop.permute.xlu0 %188
  %vm190 = vcmask 786080
  %191 = vst.msk [vmem:[%s1] sm:$0xff] %vm190, %v189
  %s192 = scalar_lea.vmem %s0, 135
  %s193 = smov 3
  %v194 = vld [vmem:[%s192] ss:$16 sm:%s193]
  %s195 = scalar_lea.vmem %s0, 135
  %s196 = smov 12
  %v197 = vld [vmem:[%s195] ss:$16 sm:%s196]
  %vm198 = vcmask 1043458
  %v199 = vsel %vm198, %v197, %v194
  %200 = vrot.lane.b32.xlu0 %v199, 84
  %v201 = vpop.permute.xlu0 %200
  %vm202 = vcmask 786080
  %s203 = scalar_lea.vmem %s1, 16
  %204 = vst.msk [vmem:[%s203] sm:$0xf] %vm202, %v201
  %s205 = scalar_lea.vmem %s0, 6
  %s206 = smov 3
  %v207 = vld [vmem:[%s205] ss:$16 sm:%s206]
  %s208 = scalar_lea.vmem %s0, 6
  %s209 = smov 12
  %v210 = vld [vmem:[%s208] ss:$16 sm:%s209]
  %vm211 = vcmask 1043458
  %v212 = vsel %vm211, %v210, %v207
  %s213 = scalar_lea.vmem %s0, 6
  %s214 = smov 48
  %v215 = vld [vmem:[%s213] ss:$16 sm:%s214]
  %vm216 = vcmask 1045508
  %v217 = vsel %vm216, %v215, %v212
  %s218 = scalar_lea.vmem %s0, 6
  %s219 = smov 192
  %v220 = vld [vmem:[%s218] ss:$16 sm:%s219]
  %vm221 = vcmask 1047558
  %v222 = vsel %vm221, %v220, %v217
  %223 = vrot.lane.b32.xlu0 %v222, 72
  %v224 = vpop.permute.xlu0 %223
  %vm225 = vcmask 687680
  %226 = vst.msk [vmem:[%s1] sm:$0xff] %vm225, %v224
  %s227 = scalar_lea.vmem %s0, 134
  %s228 = smov 3
  %v229 = vld [vmem:[%s227] ss:$16 sm:%s228]
  %s230 = scalar_lea.vmem %s0, 134
  %s231 = smov 12
  %v232 = vld [vmem:[%s230] ss:$16 sm:%s231]
  %vm233 = vcmask 1043458
  %v234 = vsel %vm233, %v232, %v229
  %235 = vrot.lane.b32.xlu0 %v234, 72
  %v236 = vpop.permute.xlu0 %235
  %vm237 = vcmask 687680
  %s238 = scalar_lea.vmem %s1, 16
  %239 = vst.msk [vmem:[%s238] sm:$0xf] %vm237, %v236
  %s240 = scalar_lea.vmem %s0, 5
  %s241 = smov 3
  %v242 = vld [vmem:[%s240] ss:$16 sm:%s241]
  %s243 = scalar_lea.vmem %s0, 5
  %s244 = smov 12
  %v245 = vld [vmem:[%s243] ss:$16 sm:%s244]
  %vm246 = vcmask 1043458
  %v247 = vsel %vm246, %v245, %v242
  %s248 = scalar_lea.vmem %s0, 5
  %s249 = smov 48
  %v250 = vld [vmem:[%s248] ss:$16 sm:%s249]
  %vm251 = vcmask 1045508
  %v252 = vsel %vm251, %v250, %v247
  %s253 = scalar_lea.vmem %s0, 5
  %s254 = smov 192
  %v255 = vld [vmem:[%s253] ss:$16 sm:%s254]
  %vm256 = vcmask 1047558
  %v257 = vsel %vm256, %v255, %v252
  %258 = vrot.lane.b32.xlu0 %v257, 60
  %v259 = vpop.permute.xlu0 %258
  %vm260 = vcmask 589280
  %261 = vst.msk [vmem:[%s1] sm:$0xff] %vm260, %v259
  %s262 = scalar_lea.vmem %s0, 133
  %s263 = smov 3
  %v264 = vld [vmem:[%s262] ss:$16 sm:%s263]
  %s265 = scalar_lea.vmem %s0, 133
  %s266 = smov 12
  %v267 = vld [vmem:[%s265] ss:$16 sm:%s266]
  %vm268 = vcmask 1043458
  %v269 = vsel %vm268, %v267, %v264
  %270 = vrot.lane.b32.xlu0 %v269, 60
  %v271 = vpop.permute.xlu0 %270
  %vm272 = vcmask 589280
  %s273 = scalar_lea.vmem %s1, 16
  %274 = vst.msk [vmem:[%s273] sm:$0xf] %vm272, %v271
  %s275 = scalar_lea.vmem %s0, 15
  %s276 = smov 3
  %v277 = vld [vmem:[%s275] ss:$16 sm:%s276]
  %s278 = scalar_lea.vmem %s0, 15
  %s279 = smov 12
  %v280 = vld [vmem:[%s278] ss:$16 sm:%s279]
  %vm281 = vcmask 1043458
  %v282 = vsel %vm281, %v280, %v277
  %s283 = scalar_lea.vmem %s0, 15
  %s284 = smov 48
  %v285 = vld [vmem:[%s283] ss:$16 sm:%s284]
  %vm286 = vcmask 1045508
  %v287 = vsel %vm286, %v285, %v282
  %s288 = scalar_lea.vmem %s0, 15
  %s289 = smov 192
  %v290 = vld [vmem:[%s288] ss:$16 sm:%s289]
  %vm291 = vcmask 1047558
  %v292 = vsel %vm291, %v290, %v287
  %293 = vrot.lane.b32.xlu0 %v292, 52
  %v294 = vpop.permute.xlu0 %293
  %vm295 = vcmask 523680
  %s296 = scalar_lea.vmem %s1, 8
  %297 = vst.msk [vmem:[%s296] sm:$0xff] %vm295, %v294
  %s298 = scalar_lea.vmem %s0, 143
  %s299 = smov 3
  %v300 = vld [vmem:[%s298] ss:$16 sm:%s299]
  %s301 = scalar_lea.vmem %s0, 143
  %s302 = smov 12
  %v303 = vld [vmem:[%s301] ss:$16 sm:%s302]
  %vm304 = vcmask 1043458
  %v305 = vsel %vm304, %v303, %v300
  %306 = vrot.lane.b32.xlu0 %v305, 52
  %v307 = vpop.permute.xlu0 %306
  %vm308 = vcmask 523680
  %s309 = scalar_lea.vmem %s1, 24
  %310 = vst.msk [vmem:[%s309] sm:$0xf] %vm308, %v307
  %s311 = scalar_lea.vmem %s0, 4
  %s312 = smov 3
  %v313 = vld [vmem:[%s311] ss:$16 sm:%s312]
  %s314 = scalar_lea.vmem %s0, 4
  %s315 = smov 12
  %v316 = vld [vmem:[%s314] ss:$16 sm:%s315]
  %vm317 = vcmask 1043458
  %v318 = vsel %vm317, %v316, %v313
  %s319 = scalar_lea.vmem %s0, 4
  %s320 = smov 48
  %v321 = vld [vmem:[%s319] ss:$16 sm:%s320]
  %vm322 = vcmask 1045508
  %v323 = vsel %vm322, %v321, %v318
  %s324 = scalar_lea.vmem %s0, 4
  %s325 = smov 192
  %v326 = vld [vmem:[%s324] ss:$16 sm:%s325]
  %vm327 = vcmask 1047558
  %v328 = vsel %vm327, %v326, %v323
  %329 = vrot.lane.b32.xlu0 %v328, 48
  %v330 = vpop.permute.xlu0 %329
  %vm331 = vcmask 490880
  %332 = vst.msk [vmem:[%s1] sm:$0xff] %vm331, %v330
  %s333 = scalar_lea.vmem %s0, 132
  %s334 = smov 3
  %v335 = vld [vmem:[%s333] ss:$16 sm:%s334]
  %s336 = scalar_lea.vmem %s0, 132
  %s337 = smov 12
  %v338 = vld [vmem:[%s336] ss:$16 sm:%s337]
  %vm339 = vcmask 1043458
  %v340 = vsel %vm339, %v338, %v335
  %341 = vrot.lane.b32.xlu0 %v340, 48
  %v342 = vpop.permute.xlu0 %341
  %vm343 = vcmask 490880
  %s344 = scalar_lea.vmem %s1, 16
  %345 = vst.msk [vmem:[%s344] sm:$0xf] %vm343, %v342
  %s346 = scalar_lea.vmem %s0, 14
  %s347 = smov 3
  %v348 = vld [vmem:[%s346] ss:$16 sm:%s347]
  %s349 = scalar_lea.vmem %s0, 14
  %s350 = smov 12
  %v351 = vld [vmem:[%s349] ss:$16 sm:%s350]
  %vm352 = vcmask 1043458
  %v353 = vsel %vm352, %v351, %v348
  %s354 = scalar_lea.vmem %s0, 14
  %s355 = smov 48
  %v356 = vld [vmem:[%s354] ss:$16 sm:%s355]
  %vm357 = vcmask 1045508
  %v358 = vsel %vm357, %v356, %v353
  %s359 = scalar_lea.vmem %s0, 14
  %s360 = smov 192
  %v361 = vld [vmem:[%s359] ss:$16 sm:%s360]
  %vm362 = vcmask 1047558
  %v363 = vsel %vm362, %v361, %v358
  %364 = vrot.lane.b32.xlu0 %v363, 40
  %v365 = vpop.permute.xlu0 %364
  %vm366 = vcmask 425280
  %s367 = scalar_lea.vmem %s1, 8
  %368 = vst.msk [vmem:[%s367] sm:$0xff] %vm366, %v365
  %s369 = scalar_lea.vmem %s0, 142
  %s370 = smov 3
  %v371 = vld [vmem:[%s369] ss:$16 sm:%s370]
  %s372 = scalar_lea.vmem %s0, 142
  %s373 = smov 12
  %v374 = vld [vmem:[%s372] ss:$16 sm:%s373]
  %vm375 = vcmask 1043458
  %v376 = vsel %vm375, %v374, %v371
  %377 = vrot.lane.b32.xlu0 %v376, 40
  %v378 = vpop.permute.xlu0 %377
  %vm379 = vcmask 425280
  %s380 = scalar_lea.vmem %s1, 24
  %381 = vst.msk [vmem:[%s380] sm:$0xf] %vm379, %v378
  %s382 = scalar_lea.vmem %s0, 3
  %s383 = smov 3
  %v384 = vld [vmem:[%s382] ss:$16 sm:%s383]
  %s385 = scalar_lea.vmem %s0, 3
  %s386 = smov 12
  %v387 = vld [vmem:[%s385] ss:$16 sm:%s386]
  %vm388 = vcmask 1043458
  %v389 = vsel %vm388, %v387, %v384
  %s390 = scalar_lea.vmem %s0, 3
  %s391 = smov 48
  %v392 = vld [vmem:[%s390] ss:$16 sm:%s391]
  %vm393 = vcmask 1045508
  %v394 = vsel %vm393, %v392, %v389
  %s395 = scalar_lea.vmem %s0, 3
  %s396 = smov 192
  %v397 = vld [vmem:[%s395] ss:$16 sm:%s396]
  %vm398 = vcmask 1047558
  %v399 = vsel %vm398, %v397, %v394
  %400 = vrot.lane.b32.xlu0 %v399, 36
  %v401 = vpop.permute.xlu0 %400
  %vm402 = vcmask 392480
  %403 = vst.msk [vmem:[%s1] sm:$0xff] %vm402, %v401
  %s404 = scalar_lea.vmem %s0, 131
  %s405 = smov 3
  %v406 = vld [vmem:[%s404] ss:$16 sm:%s405]
  %s407 = scalar_lea.vmem %s0, 131
  %s408 = smov 12
  %v409 = vld [vmem:[%s407] ss:$16 sm:%s408]
  %vm410 = vcmask 1043458
  %v411 = vsel %vm410, %v409, %v406
  %412 = vrot.lane.b32.xlu0 %v411, 36
  %v413 = vpop.permute.xlu0 %412
  %vm414 = vcmask 392480
  %s415 = scalar_lea.vmem %s1, 16
  %416 = vst.msk [vmem:[%s415] sm:$0xf] %vm414, %v413
  %s417 = scalar_lea.vmem %s0, 13
  %s418 = smov 3
  %v419 = vld [vmem:[%s417] ss:$16 sm:%s418]
  %s420 = scalar_lea.vmem %s0, 13
  %s421 = smov 12
  %v422 = vld [vmem:[%s420] ss:$16 sm:%s421]
  %vm423 = vcmask 1043458
  %v424 = vsel %vm423, %v422, %v419
  %s425 = scalar_lea.vmem %s0, 13
  %s426 = smov 48
  %v427 = vld [vmem:[%s425] ss:$16 sm:%s426]
  %vm428 = vcmask 1045508
  %v429 = vsel %vm428, %v427, %v424
  %s430 = scalar_lea.vmem %s0, 13
  %s431 = smov 192
  %v432 = vld [vmem:[%s430] ss:$16 sm:%s431]
  %vm433 = vcmask 1047558
  %v434 = vsel %vm433, %v432, %v429
  %435 = vrot.lane.b32.xlu0 %v434, 28
  %v436 = vpop.permute.xlu0 %435
  %vm437 = vcmask 326880
  %s438 = scalar_lea.vmem %s1, 8
  %439 = vst.msk [vmem:[%s438] sm:$0xff] %vm437, %v436
  %s440 = scalar_lea.vmem %s0, 141
  %s441 = smov 3
  %v442 = vld [vmem:[%s440] ss:$16 sm:%s441]
  %s443 = scalar_lea.vmem %s0, 141
  %s444 = smov 12
  %v445 = vld [vmem:[%s443] ss:$16 sm:%s444]
  %vm446 = vcmask 1043458
  %v447 = vsel %vm446, %v445, %v442
  %448 = vrot.lane.b32.xlu0 %v447, 28
  %v449 = vpop.permute.xlu0 %448
  %vm450 = vcmask 326880
  %s451 = scalar_lea.vmem %s1, 24
  %452 = vst.msk [vmem:[%s451] sm:$0xf] %vm450, %v449
  %s453 = scalar_lea.vmem %s0, 2
  %s454 = smov 3
  %v455 = vld [vmem:[%s453] ss:$16 sm:%s454]
  %s456 = scalar_lea.vmem %s0, 2
  %s457 = smov 12
  %v458 = vld [vmem:[%s456] ss:$16 sm:%s457]
  %vm459 = vcmask 1043458
  %v460 = vsel %vm459, %v458, %v455
  %s461 = scalar_lea.vmem %s0, 2
  %s462 = smov 48
  %v463 = vld [vmem:[%s461] ss:$16 sm:%s462]
  %vm464 = vcmask 1045508
  %v465 = vsel %vm464, %v463, %v460
  %s466 = scalar_lea.vmem %s0, 2
  %s467 = smov 192
  %v468 = vld [vmem:[%s466] ss:$16 sm:%s467]
  %vm469 = vcmask 1047558
  %v470 = vsel %vm469, %v468, %v465
  %471 = vrot.lane.b32.xlu0 %v470, 24
  %v472 = vpop.permute.xlu0 %471
  %vm473 = vcmask 294080
  %474 = vst.msk [vmem:[%s1] sm:$0xff] %vm473, %v472
  %s475 = scalar_lea.vmem %s0, 130
  %s476 = smov 3
  %v477 = vld [vmem:[%s475] ss:$16 sm:%s476]
  %s478 = scalar_lea.vmem %s0, 130
  %s479 = smov 12
  %v480 = vld [vmem:[%s478] ss:$16 sm:%s479]
  %vm481 = vcmask 1043458
  %v482 = vsel %vm481, %v480, %v477
  %483 = vrot.lane.b32.xlu0 %v482, 24
  %v484 = vpop.permute.xlu0 %483
  %vm485 = vcmask 294080
  %s486 = scalar_lea.vmem %s1, 16
  %487 = vst.msk [vmem:[%s486] sm:$0xf] %vm485, %v484
  %s488 = scalar_lea.vmem %s0, 12
  %s489 = smov 3
  %v490 = vld [vmem:[%s488] ss:$16 sm:%s489]
  %s491 = scalar_lea.vmem %s0, 12
  %s492 = smov 12
  %v493 = vld [vmem:[%s491] ss:$16 sm:%s492]
  %vm494 = vcmask 1043458
  %v495 = vsel %vm494, %v493, %v490
  %s496 = scalar_lea.vmem %s0, 12
  %s497 = smov 48
  %v498 = vld [vmem:[%s496] ss:$16 sm:%s497]
  %vm499 = vcmask 1045508
  %v500 = vsel %vm499, %v498, %v495
  %s501 = scalar_lea.vmem %s0, 12
  %s502 = smov 192
  %v503 = vld [vmem:[%s501] ss:$16 sm:%s502]
  %vm504 = vcmask 1047558
  %v505 = vsel %vm504, %v503, %v500
  %506 = vrot.lane.b32.xlu0 %v505, 16
  %v507 = vpop.permute.xlu0 %506
  %vm508 = vcmask 228480
  %s509 = scalar_lea.vmem %s1, 8
  %510 = vst.msk [vmem:[%s509] sm:$0xff] %vm508, %v507
  %s511 = scalar_lea.vmem %s0, 140
  %s512 = smov 3
  %v513 = vld [vmem:[%s511] ss:$16 sm:%s512]
  %s514 = scalar_lea.vmem %s0, 140
  %s515 = smov 12
  %v516 = vld [vmem:[%s514] ss:$16 sm:%s515]
  %vm517 = vcmask 1043458
  %v518 = vsel %vm517, %v516, %v513
  %519 = vrot.lane.b32.xlu0 %v518, 16
  %v520 = vpop.permute.xlu0 %519
  %vm521 = vcmask 228480
  %s522 = scalar_lea.vmem %s1, 24
  %523 = vst.msk [vmem:[%s522] sm:$0xf] %vm521, %v520
  %s524 = scalar_lea.vmem %s0, 1
  %s525 = smov 3
  %v526 = vld [vmem:[%s524] ss:$16 sm:%s525]
  %s527 = scalar_lea.vmem %s0, 1
  %s528 = smov 12
  %v529 = vld [vmem:[%s527] ss:$16 sm:%s528]
  %vm530 = vcmask 1043458
  %v531 = vsel %vm530, %v529, %v526
  %s532 = scalar_lea.vmem %s0, 1
  %s533 = smov 48
  %v534 = vld [vmem:[%s532] ss:$16 sm:%s533]
  %vm535 = vcmask 1045508
  %v536 = vsel %vm535, %v534, %v531
  %s537 = scalar_lea.vmem %s0, 1
  %s538 = smov 192
  %v539 = vld [vmem:[%s537] ss:$16 sm:%s538]
  %vm540 = vcmask 1047558
  %v541 = vsel %vm540, %v539, %v536
  %542 = vrot.lane.b32.xlu0 %v541, 12
  %v543 = vpop.permute.xlu0 %542
  %vm544 = vcmask 195680
  %545 = vst.msk [vmem:[%s1] sm:$0xff] %vm544, %v543
  %s546 = scalar_lea.vmem %s0, 129
  %s547 = smov 3
  %v548 = vld [vmem:[%s546] ss:$16 sm:%s547]
  %s549 = scalar_lea.vmem %s0, 129
  %s550 = smov 12
  %v551 = vld [vmem:[%s549] ss:$16 sm:%s550]
  %vm552 = vcmask 1043458
  %v553 = vsel %vm552, %v551, %v548
  %554 = vrot.lane.b32.xlu0 %v553, 12
  %v555 = vpop.permute.xlu0 %554
  %vm556 = vcmask 195680
  %s557 = scalar_lea.vmem %s1, 16
  %558 = vst.msk [vmem:[%s557] sm:$0xf] %vm556, %v555
  %s559 = scalar_lea.vmem %s0, 11
  %s560 = smov 3
  %v561 = vld [vmem:[%s559] ss:$16 sm:%s560]
  %s562 = scalar_lea.vmem %s0, 11
  %s563 = smov 12
  %v564 = vld [vmem:[%s562] ss:$16 sm:%s563]
  %vm565 = vcmask 1043458
  %v566 = vsel %vm565, %v564, %v561
  %s567 = scalar_lea.vmem %s0, 11
  %s568 = smov 48
  %v569 = vld [vmem:[%s567] ss:$16 sm:%s568]
  %vm570 = vcmask 1045508
  %v571 = vsel %vm570, %v569, %v566
  %s572 = scalar_lea.vmem %s0, 11
  %s573 = smov 192
  %v574 = vld [vmem:[%s572] ss:$16 sm:%s573]
  %vm575 = vcmask 1047558
  %v576 = vsel %vm575, %v574, %v571
  %577 = vrot.lane.b32.xlu0 %v576, 4
  %v578 = vpop.permute.xlu0 %577
  %vm579 = vcmask 130080
  %s580 = scalar_lea.vmem %s1, 8
  %581 = vst.msk [vmem:[%s580] sm:$0xff] %vm579, %v578
  %s582 = scalar_lea.vmem %s0, 139
  %s583 = smov 3
  %v584 = vld [vmem:[%s582] ss:$16 sm:%s583]
  %s585 = scalar_lea.vmem %s0, 139
  %s586 = smov 12
  %v587 = vld [vmem:[%s585] ss:$16 sm:%s586]
  %vm588 = vcmask 1043458
  %v589 = vsel %vm588, %v587, %v584
  %590 = vrot.lane.b32.xlu0 %v589, 4
  %v591 = vpop.permute.xlu0 %590
  %vm592 = vcmask 130080
  %s593 = scalar_lea.vmem %s1, 24
  %594 = vst.msk [vmem:[%s593] sm:$0xf] %vm592, %v591

// kernel: mul.37
$region0: #{mul.37}
  %s0 = inlined_call_operand.vmem [shape: f32[16,12], index: 0, kind: input, shape index: {}]
  %s1 = inlined_call_operand.vmem [shape: f32[192], index: 1, kind: output, shape index: {}]
  $region1: #{mul.37} parent=0
    #allocation0 [shape = 'u8[4096]{0}', space=vmem, size = 0x1000, scoped, tag = 'scoped mem for output reshape']
    %v2 = vld [vmem:[%s0] sm:$0x1]
    %vm3 = vcmask 97280
    %4 = vst.msk [vmem:[#allocation0] sm:$0x1] %vm3, %v2
    %s5 = scalar_lea.vmem %s0, 10
    %v6 = vld [vmem:[%s5] sm:$0x1]
    %s7 = scalar_lea.vmem %s0, 10
    %v8 = vld [vmem:[%s7] sm:$0x1]
    %vm9 = vcmask 64512
    %v10 = vsel %vm9, %v8, %v6
    %11 = vrot.lane.b32.xlu0 %v10, 120
    %v12 = vpop.permute.xlu0 %11
    %vm13 = vcmask 31744
    %s14 = scalar_lea.vmem [#allocation0], 1
    %15 = vst.msk [vmem:[%s14] sm:$0x1] %vm13, %v12
    %vm16 = vcmask 1048512
    %17 = vst.msk [vmem:[#allocation0] sm:$0x1] %vm16, %v12
    %s18 = scalar_lea.vmem %s0, 9
    %v19 = vld [vmem:[%s18] sm:$0x1]
    %20 = vrot.lane.b32.xlu0 %v19, 108
    %v21 = vpop.permute.xlu0 %20
    %vm22 = vcmask 982880
    %23 = vst.msk [vmem:[#allocation0] sm:$0x1] %vm22, %v21
    %s24 = scalar_lea.vmem %s0, 8
    %v25 = vld [vmem:[%s24] sm:$0x1]
    %26 = vrot.lane.b32.xlu0 %v25, 96
    %v27 = vpop.permute.xlu0 %26
    %vm28 = vcmask 884480
    %29 = vst.msk [vmem:[#allocation0] sm:$0x1] %vm28, %v27
    %s30 = scalar_lea.vmem %s0, 7
    %v31 = vld [vmem:[%s30] sm:$0x1]
    %32 = vrot.lane.b32.xlu0 %v31, 84
    %v33 = vpop.permute.xlu0 %32
    %vm34 = vcmask 786080
    %35 = vst.msk [vmem:[#allocation0] sm:$0x1] %vm34, %v33
    %s36 = scalar_lea.vmem %s0, 6
    %v37 = vld [vmem:[%s36] sm:$0x1]
    %38 = vrot.lane.b32.xlu0 %v37, 72
    %v39 = vpop.permute.xlu0 %38
    %vm40 = vcmask 687680
    %41 = vst.msk [vmem:[#allocation0] sm:$0x1] %vm40, %v39
    %s42 = scalar_lea.vmem %s0, 5
    %v43 = vld [vmem:[%s42] sm:$0x1]
    %44 = vrot.lane.b32.xlu0 %v43, 60
    %v45 = vpop.permute.xlu0 %44
    %vm46 = vcmask 589280
    %47 = vst.msk [vmem:[#allocation0] sm:$0x1] %vm46, %v45
    %s48 = scalar_lea.vmem %s0, 15
    %v49 = vld [vmem:[%s48] sm:$0x1]
    %50 = vrot.lane.b32.xlu0 %v49, 52
    %v51 = vpop.permute.xlu0 %50
    %vm52 = vcmask 523680
    %s53 = scalar_lea.vmem [#allocation0], 1
    %54 = vst.msk [vmem:[%s53] sm:$0x1] %vm52, %v51
    %s55 = scalar_lea.vmem %s0, 4
    %v56 = vld [vmem:[%s55] sm:$0x1]
    %57 = vrot.lane.b32.xlu0 %v56, 48
    %v58 = vpop.permute.xlu0 %57
    %vm59 = vcmask 490880
    %60 = vst.msk [vmem:[#allocation0] sm:$0x1] %vm59, %v58
    %s61 = scalar_lea.vmem %s0, 14
    %v62 = vld [vmem:[%s61] sm:$0x1]
    %63 = vrot.lane.b32.xlu0 %v62, 40
    %v64 = vpop.permute.xlu0 %63
    %vm65 = vcmask 425280
    %s66 = scalar_lea.vmem [#allocation0], 1
    %67 = vst.msk [vmem:[%s66] sm:$0x1] %vm65, %v64
    %s68 = scalar_lea.vmem %s0, 3
    %v69 = vld [vmem:[%s68] sm:$0x1]
    %70 = vrot.lane.b32.xlu0 %v69, 36
    %v71 = vpop.permute.xlu0 %70
    %vm72 = vcmask 392480
    %73 = vst.msk [vmem:[#allocation0] sm:$0x1] %vm72, %v71
    %s74 = scalar_lea.vmem %s0, 13
    %v75 = vld [vmem:[%s74] sm:$0x1]
    %76 = vrot.lane.b32.xlu0 %v75, 28
    %v77 = vpop.permute.xlu0 %76
    %vm78 = vcmask 326880
    %s79 = scalar_lea.vmem [#allocation0], 1
    %80 = vst.msk [vmem:[%s79] sm:$0x1] %vm78, %v77
    %s81 = scalar_lea.vmem %s0, 2
    %v82 = vld [vmem:[%s81] sm:$0x1]
    %83 = vrot.lane.b32.xlu0 %v82, 24
    %v84 = vpop.permute.xlu0 %83
    %vm85 = vcmask 294080
    %86 = vst.msk [vmem:[#allocation0] sm:$0x1] %vm85, %v84
    %s87 = scalar_lea.vmem %s0, 12
    %v88 = vld [vmem:[%s87] sm:$0x1]
    %89 = vrot.lane.b32.xlu0 %v88, 16
    %v90 = vpop.permute.xlu0 %89
    %vm91 = vcmask 228480
    %s92 = scalar_lea.vmem [#allocation0], 1
    %93 = vst.msk [vmem:[%s92] sm:$0x1] %vm91, %v90
    %s94 = scalar_lea.vmem %s0, 1
    %v95 = vld [vmem:[%s94] sm:$0x1]
    %96 = vrot.lane.b32.xlu0 %v95, 12
    %v97 = vpop.permute.xlu0 %96
    %vm98 = vcmask 195680
    %99 = vst.msk [vmem:[#allocation0] sm:$0x1] %vm98, %v97
    %s100 = scalar_lea.vmem %s0, 11
    %v101 = vld [vmem:[%s100] sm:$0x1]
    %102 = vrot.lane.b32.xlu0 %v101, 4
    %v103 = vpop.permute.xlu0 %102
    %vm104 = vcmask 130080
    %s105 = scalar_lea.vmem [#allocation0], 1
    %106 = vst.msk [vmem:[%s105] sm:$0x1] %vm104, %v103
    %s108 = sshllo.u32 0, 2
    %v110 = vld [vmem:[#allocation0] sm:%s108]
    %s111 = sshllo.u32 0, 2
    %112 = vst [vmem:[%s1] sm:%s111] %v110

// kernel: tile.29
$region0: #{tile.29}
  %s0 = inlined_call_operand.vmem [shape: f32[16,12,12], index: 0, kind: input, shape index: {}]
  %s1 = inlined_call_operand.vmem [shape: f32[192,12], index: 1, kind: output, shape index: {}]
  %s2 = smov 3
  %v3 = vld [vmem:[%s0] ss:$16 sm:%s2]
  %s4 = smov 12
  %v5 = vld [vmem:[%s0] ss:$16 sm:%s4]
  %vm6 = vcmask 1043458
  %v7 = vsel %vm6, %v5, %v3
  %s8 = smov 48
  %v9 = vld [vmem:[%s0] ss:$16 sm:%s8]
  %vm10 = vcmask 1045508
  %v11 = vsel %vm10, %v9, %v7
  %s12 = smov 192
  %v13 = vld [vmem:[%s0] ss:$16 sm:%s12]
  %vm14 = vcmask 1047558
  %v15 = vsel %vm14, %v13, %v11
  %vm16 = vcmask 97280
  %17 = vst.msk [vmem:[%s1] sm:$0xff] %vm16, %v15
  %s18 = scalar_lea.vmem %s0, 128
  %s19 = smov 3
  %v20 = vld [vmem:[%s18] ss:$16 sm:%s19]
  %s21 = scalar_lea.vmem %s0, 128
  %s22 = smov 12
  %v23 = vld [vmem:[%s21] ss:$16 sm:%s22]
  %vm24 = vcmask 1043458
  %v25 = vsel %vm24, %v23, %v20
  %vm26 = vcmask 97280
  %s27 = scalar_lea.vmem %s1, 16
  %28 = vst.msk [vmem:[%s27] sm:$0xf] %vm26, %v25
  %s29 = scalar_lea.vmem %s0, 10
  %s30 = smov 3
  %v31 = vld [vmem:[%s29] ss:$16 sm:%s30]
  %s32 = scalar_lea.vmem %s0, 10
  %s33 = smov 12
  %v34 = vld [vmem:[%s32] ss:$16 sm:%s33]
  %vm35 = vcmask 1043458
  %v36 = vsel %vm35, %v34, %v31
  %s37 = scalar_lea.vmem %s0, 10
  %s38 = smov 48
  %v39 = vld [vmem:[%s37] ss:$16 sm:%s38]
  %vm40 = vcmask 1045508
  %v41 = vsel %vm40, %v39, %v36
  %s42 = scalar_lea.vmem %s0, 10
  %s43 = smov 192
  %v44 = vld [vmem:[%s42] ss:$16 sm:%s43]
  %vm45 = vcmask 1047558
  %v46 = vsel %vm45, %v44, %v41
  %s47 = scalar_lea.vmem %s0, 10
  %s48 = smov 3
  %v49 = vld [vmem:[%s47] ss:$16 sm:%s48]
  %s50 = scalar_lea.vmem %s0, 10
  %s51 = smov 12
  %v52 = vld [vmem:[%s50] ss:$16 sm:%s51]
  %vm53 = vcmask 1043458
  %v54 = vsel %vm53, %v52, %v49
  %s55 = scalar_lea.vmem %s0, 10
  %s56 = smov 48
  %v57 = vld [vmem:[%s55] ss:$16 sm:%s56]
  %vm58 = vcmask 1045508
  %v59 = vsel %vm58, %v57, %v54
  %s60 = scalar_lea.vmem %s0, 10
  %s61 = smov 192
  %v62 = vld [vmem:[%s60] ss:$16 sm:%s61]
  %vm63 = vcmask 1047558
  %v64 = vsel %vm63, %v62, %v59
  %vm65 = vcmask 64512
  %v66 = vsel %vm65, %v64, %v46
  %67 = vrot.lane.b32.xlu0 %v66, 120
  %v68 = vpop.permute.xlu0 %67
  %vm69 = vcmask 31744
  %s70 = scalar_lea.vmem %s1, 8
  %71 = vst.msk [vmem:[%s70] sm:$0xff] %vm69, %v68
  %vm72 = vcmask 1048512
  %73 = vst.msk [vmem:[%s1] sm:$0xff] %vm72, %v68
  %s74 = scalar_lea.vmem %s0, 138
  %s75 = smov 3
  %v76 = vld [vmem:[%s74] ss:$16 sm:%s75]
  %s77 = scalar_lea.vmem %s0, 138
  %s78 = smov 12
  %v79 = vld [vmem:[%s77] ss:$16 sm:%s78]
  %vm80 = vcmask 1043458
  %v81 = vsel %vm80, %v79, %v76
  %s82 = scalar_lea.vmem %s0, 138
  %s83 = smov 3
  %v84 = vld [vmem:[%s82] ss:$16 sm:%s83]
  %s85 = scalar_lea.vmem %s0, 138
  %s86 = smov 12
  %v87 = vld [vmem:[%s85] ss:$16 sm:%s86]
  %vm88 = vcmask 1043458
  %v89 = vsel %vm88, %v87, %v84
  %vm90 = vcmask 64512
  %v91 = vsel %vm90, %v89, %v81
  %92 = vrot.lane.b32.xlu0 %v91, 120
  %v93 = vpop.permute.xlu0 %92
  %vm94 = vcmask 31744
  %s95 = scalar_lea.vmem %s1, 24
  %96 = vst.msk [vmem:[%s95] sm:$0xf] %vm94, %v93
  %vm97 = vcmask 1048512
  %s98 = scalar_lea.vmem %s1, 16
  %99 = vst.msk [vmem:[%s98] sm:$0xf] %vm97, %v93
  %s100 = scalar_lea.vmem %s0, 9
  %s101 = smov 3
  %v102 = vld [vmem:[%s100] ss:$16 sm:%s101]
  %s103 = scalar_lea.vmem %s0, 9
  %s104 = smov 12
  %v105 = vld [vmem:[%s103] ss:$16 sm:%s104]
  %vm106 = vcmask 1043458
  %v107 = vsel %vm106, %v105, %v102
  %s108 = scalar_lea.vmem %s0, 9
  %s109 = smov 48
  %v110 = vld [vmem:[%s108] ss:$16 sm:%s109]
  %vm111 = vcmask 1045508
  %v112 = vsel %vm111, %v110, %v107
  %s113 = scalar_lea.vmem %s0, 9
  %s114 = smov 192
  %v115 = vld [vmem:[%s113] ss:$16 sm:%s114]
  %vm116 = vcmask 1047558
  %v117 = vsel %vm116, %v115, %v112
  %118 = vrot.lane.b32.xlu0 %v117, 108
  %v119 = vpop.permute.xlu0 %118
  %vm120 = vcmask 982880
  %121 = vst.msk [vmem:[%s1] sm:$0xff] %vm120, %v119
  %s122 = scalar_lea.vmem %s0, 137
  %s123 = smov 3
  %v124 = vld [vmem:[%s122] ss:$16 sm:%s123]
  %s125 = scalar_lea.vmem %s0, 137
  %s126 = smov 12
  %v127 = vld [vmem:[%s125] ss:$16 sm:%s126]
  %vm128 = vcmask 1043458
  %v129 = vsel %vm128, %v127, %v124
  %130 = vrot.lane.b32.xlu0 %v129, 108
  %v131 = vpop.permute.xlu0 %130
  %vm132 = vcmask 982880
  %s133 = scalar_lea.vmem %s1, 16
  %134 = vst.msk [vmem:[%s133] sm:$0xf] %vm132, %v131
  %s135 = scalar_lea.vmem %s0, 8
  %s136 = smov 3
  %v137 = vld [vmem:[%s135] ss:$16 sm:%s136]
  %s138 = scalar_lea.vmem %s0, 8
  %s139 = smov 12
  %v140 = vld [vmem:[%s138] ss:$16 sm:%s139]
  %vm141 = vcmask 1043458
  %v142 = vsel %vm141, %v140, %v137
  %s143 = scalar_lea.vmem %s0, 8
  %s144 = smov 48
  %v145 = vld [vmem:[%s143] ss:$16 sm:%s144]
  %vm146 = vcmask 1045508
  %v147 = vsel %vm146, %v145, %v142
  %s148 = scalar_lea.vmem %s0, 8
  %s149 = smov 192
  %v150 = vld [vmem:[%s148] ss:$16 sm:%s149]
  %vm151 = vcmask 1047558
  %v152 = vsel %vm151, %v150, %v147
  %153 = vrot.lane.b32.xlu0 %v152, 96
  %v154 = vpop.permute.xlu0 %153
  %vm155 = vcmask 884480
  %156 = vst.msk [vmem:[%s1] sm:$0xff] %vm155, %v154
  %s157 = scalar_lea.vmem %s0, 136
  %s158 = smov 3
  %v159 = vld [vmem:[%s157] ss:$16 sm:%s158]
  %s160 = scalar_lea.vmem %s0, 136
  %s161 = smov 12
  %v162 = vld [vmem:[%s160] ss:$16 sm:%s161]
  %vm163 = vcmask 1043458
  %v164 = vsel %vm163, %v162, %v159
  %165 = vrot.lane.b32.xlu0 %v164, 96
  %v166 = vpop.permute.xlu0 %165
  %vm167 = vcmask 884480
  %s168 = scalar_lea.vmem %s1, 16
  %169 = vst.msk [vmem:[%s168] sm:$0xf] %vm167, %v166
  %s170 = scalar_lea.vmem %s0, 7
  %s171 = smov 3
  %v172 = vld [vmem:[%s170] ss:$16 sm:%s171]
  %s173 = scalar_lea.vmem %s0, 7
  %s174 = smov 12
  %v175 = vld [vmem:[%s173] ss:$16 sm:%s174]
  %vm176 = vcmask 1043458
  %v177 = vsel %vm176, %v175, %v172
  %s178 = scalar_lea.vmem %s0, 7
  %s179 = smov 48
  %v180 = vld [vmem:[%s178] ss:$16 sm:%s179]
  %vm181 = vcmask 1045508
  %v182 = vsel %vm181, %v180, %v177
  %s183 = scalar_lea.vmem %s0, 7
  %s184 = smov 192
  %v185 = vld [vmem:[%s183] ss:$16 sm:%s184]
  %vm186 = vcmask 1047558
  %v187 = vsel %vm186, %v185, %v182
  %188 = vrot.lane.b32.xlu0 %v187, 84
  %v189 = vpop.permute.xlu0 %188
  %vm190 = vcmask 786080
  %191 = vst.msk [vmem:[%s1] sm:$0xff] %vm190, %v189
  %s192 = scalar_lea.vmem %s0, 135
  %s193 = smov 3
  %v194 = vld [vmem:[%s192] ss:$16 sm:%s193]
  %s195 = scalar_lea.vmem %s0, 135
  %s196 = smov 12
  %v197 = vld [vmem:[%s195] ss:$16 sm:%s196]
  %vm198 = vcmask 1043458
  %v199 = vsel %vm198, %v197, %v194
  %200 = vrot.lane.b32.xlu0 %v199, 84
  %v201 = vpop.permute.xlu0 %200
  %vm202 = vcmask 786080
  %s203 = scalar_lea.vmem %s1, 16
  %204 = vst.msk [vmem:[%s203] sm:$0xf] %vm202, %v201
  %s205 = scalar_lea.vmem %s0, 6
  %s206 = smov 3
  %v207 = vld [vmem:[%s205] ss:$16 sm:%s206]
  %s208 = scalar_lea.vmem %s0, 6
  %s209 = smov 12
  %v210 = vld [vmem:[%s208] ss:$16 sm:%s209]
  %vm211 = vcmask 1043458
  %v212 = vsel %vm211, %v210, %v207
  %s213 = scalar_lea.vmem %s0, 6
  %s214 = smov 48
  %v215 = vld [vmem:[%s213] ss:$16 sm:%s214]
  %vm216 = vcmask 1045508
  %v217 = vsel %vm216, %v215, %v212
  %s218 = scalar_lea.vmem %s0, 6
  %s219 = smov 192
  %v220 = vld [vmem:[%s218] ss:$16 sm:%s219]
  %vm221 = vcmask 1047558
  %v222 = vsel %vm221, %v220, %v217
  %223 = vrot.lane.b32.xlu0 %v222, 72
  %v224 = vpop.permute.xlu0 %223
  %vm225 = vcmask 687680
  %226 = vst.msk [vmem:[%s1] sm:$0xff] %vm225, %v224
  %s227 = scalar_lea.vmem %s0, 134
  %s228 = smov 3
  %v229 = vld [vmem:[%s227] ss:$16 sm:%s228]
  %s230 = scalar_lea.vmem %s0, 134
  %s231 = smov 12
  %v232 = vld [vmem:[%s230] ss:$16 sm:%s231]
  %vm233 = vcmask 1043458
  %v234 = vsel %vm233, %v232, %v229
  %235 = vrot.lane.b32.xlu0 %v234, 72
  %v236 = vpop.permute.xlu0 %235
  %vm237 = vcmask 687680
  %s238 = scalar_lea.vmem %s1, 16
  %239 = vst.msk [vmem:[%s238] sm:$0xf] %vm237, %v236
  %s240 = scalar_lea.vmem %s0, 5
  %s241 = smov 3
  %v242 = vld [vmem:[%s240] ss:$16 sm:%s241]
  %s243 = scalar_lea.vmem %s0, 5
  %s244 = smov 12
  %v245 = vld [vmem:[%s243] ss:$16 sm:%s244]
  %vm246 = vcmask 1043458
  %v247 = vsel %vm246, %v245, %v242
  %s248 = scalar_lea.vmem %s0, 5
  %s249 = smov 48
  %v250 = vld [vmem:[%s248] ss:$16 sm:%s249]
  %vm251 = vcmask 1045508
  %v252 = vsel %vm251, %v250, %v247
  %s253 = scalar_lea.vmem %s0, 5
  %s254 = smov 192
  %v255 = vld [vmem:[%s253] ss:$16 sm:%s254]
  %vm256 = vcmask 1047558
  %v257 = vsel %vm256, %v255, %v252
  %258 = vrot.lane.b32.xlu0 %v257, 60
  %v259 = vpop.permute.xlu0 %258
  %vm260 = vcmask 589280
  %261 = vst.msk [vmem:[%s1] sm:$0xff] %vm260, %v259
  %s262 = scalar_lea.vmem %s0, 133
  %s263 = smov 3
  %v264 = vld [vmem:[%s262] ss:$16 sm:%s263]
  %s265 = scalar_lea.vmem %s0, 133
  %s266 = smov 12
  %v267 = vld [vmem:[%s265] ss:$16 sm:%s266]
  %vm268 = vcmask 1043458
  %v269 = vsel %vm268, %v267, %v264
  %270 = vrot.lane.b32.xlu0 %v269, 60
  %v271 = vpop.permute.xlu0 %270
  %vm272 = vcmask 589280
  %s273 = scalar_lea.vmem %s1, 16
  %274 = vst.msk [vmem:[%s273] sm:$0xf] %vm272, %v271
  %s275 = scalar_lea.vmem %s0, 15
  %s276 = smov 3
  %v277 = vld [vmem:[%s275] ss:$16 sm:%s276]
  %s278 = scalar_lea.vmem %s0, 15
  %s279 = smov 12
  %v280 = vld [vmem:[%s278] ss:$16 sm:%s279]
  %vm281 = vcmask 1043458
  %v282 = vsel %vm281, %v280, %v277
  %s283 = scalar_lea.vmem %s0, 15
  %s284 = smov 48
  %v285 = vld [vmem:[%s283] ss:$16 sm:%s284]
  %vm286 = vcmask 1045508
  %v287 = vsel %vm286, %v285, %v282
  %s288 = scalar_lea.vmem %s0, 15
  %s289 = smov 192
  %v290 = vld [vmem:[%s288] ss:$16 sm:%s289]
  %vm291 = vcmask 1047558
  %v292 = vsel %vm291, %v290, %v287
  %293 = vrot.lane.b32.xlu0 %v292, 52
  %v294 = vpop.permute.xlu0 %293
  %vm295 = vcmask 523680
  %s296 = scalar_lea.vmem %s1, 8
  %297 = vst.msk [vmem:[%s296] sm:$0xff] %vm295, %v294
  %s298 = scalar_lea.vmem %s0, 143
  %s299 = smov 3
  %v300 = vld [vmem:[%s298] ss:$16 sm:%s299]
  %s301 = scalar_lea.vmem %s0, 143
  %s302 = smov 12
  %v303 = vld [vmem:[%s301] ss:$16 sm:%s302]
  %vm304 = vcmask 1043458
  %v305 = vsel %vm304, %v303, %v300
  %306 = vrot.lane.b32.xlu0 %v305, 52
  %v307 = vpop.permute.xlu0 %306
  %vm308 = vcmask 523680
  %s309 = scalar_lea.vmem %s1, 24
  %310 = vst.msk [vmem:[%s309] sm:$0xf] %vm308, %v307
  %s311 = scalar_lea.vmem %s0, 4
  %s312 = smov 3
  %v313 = vld [vmem:[%s311] ss:$16 sm:%s312]
  %s314 = scalar_lea.vmem %s0, 4
  %s315 = smov 12
  %v316 = vld [vmem:[%s314] ss:$16 sm:%s315]
  %vm317 = vcmask 1043458
  %v318 = vsel %vm317, %v316, %v313
  %s319 = scalar_lea.vmem %s0, 4
  %s320 = smov 48
  %v321 = vld [vmem:[%s319] ss:$16 sm:%s320]
  %vm322 = vcmask 1045508
  %v323 = vsel %vm322, %v321, %v318
  %s324 = scalar_lea.vmem %s0, 4
  %s325 = smov 192
  %v326 = vld [vmem:[%s324] ss:$16 sm:%s325]
  %vm327 = vcmask 1047558
  %v328 = vsel %vm327, %v326, %v323
  %329 = vrot.lane.b32.xlu0 %v328, 48
  %v330 = vpop.permute.xlu0 %329
  %vm331 = vcmask 490880
  %332 = vst.msk [vmem:[%s1] sm:$0xff] %vm331, %v330
  %s333 = scalar_lea.vmem %s0, 132
  %s334 = smov 3
  %v335 = vld [vmem:[%s333] ss:$16 sm:%s334]
  %s336 = scalar_lea.vmem %s0, 132
  %s337 = smov 12
  %v338 = vld [vmem:[%s336] ss:$16 sm:%s337]
  %vm339 = vcmask 1043458
  %v340 = vsel %vm339, %v338, %v335
  %341 = vrot.lane.b32.xlu0 %v340, 48
  %v342 = vpop.permute.xlu0 %341
  %vm343 = vcmask 490880
  %s344 = scalar_lea.vmem %s1, 16
  %345 = vst.msk [vmem:[%s344] sm:$0xf] %vm343, %v342
  %s346 = scalar_lea.vmem %s0, 14
  %s347 = smov 3
  %v348 = vld [vmem:[%s346] ss:$16 sm:%s347]
  %s349 = scalar_lea.vmem %s0, 14
  %s350 = smov 12
  %v351 = vld [vmem:[%s349] ss:$16 sm:%s350]
  %vm352 = vcmask 1043458
  %v353 = vsel %vm352, %v351, %v348
  %s354 = scalar_lea.vmem %s0, 14
  %s355 = smov 48
  %v356 = vld [vmem:[%s354] ss:$16 sm:%s355]
  %vm357 = vcmask 1045508
  %v358 = vsel %vm357, %v356, %v353
  %s359 = scalar_lea.vmem %s0, 14
  %s360 = smov 192
  %v361 = vld [vmem:[%s359] ss:$16 sm:%s360]
  %vm362 = vcmask 1047558
  %v363 = vsel %vm362, %v361, %v358
  %364 = vrot.lane.b32.xlu0 %v363, 40
  %v365 = vpop.permute.xlu0 %364
  %vm366 = vcmask 425280
  %s367 = scalar_lea.vmem %s1, 8
  %368 = vst.msk [vmem:[%s367] sm:$0xff] %vm366, %v365
  %s369 = scalar_lea.vmem %s0, 142
  %s370 = smov 3
  %v371 = vld [vmem:[%s369] ss:$16 sm:%s370]
  %s372 = scalar_lea.vmem %s0, 142
  %s373 = smov 12
  %v374 = vld [vmem:[%s372] ss:$16 sm:%s373]
  %vm375 = vcmask 1043458
  %v376 = vsel %vm375, %v374, %v371
  %377 = vrot.lane.b32.xlu0 %v376, 40
  %v378 = vpop.permute.xlu0 %377
  %vm379 = vcmask 425280
  %s380 = scalar_lea.vmem %s1, 24
  %381 = vst.msk [vmem:[%s380] sm:$0xf] %vm379, %v378
  %s382 = scalar_lea.vmem %s0, 3
  %s383 = smov 3
  %v384 = vld [vmem:[%s382] ss:$16 sm:%s383]
  %s385 = scalar_lea.vmem %s0, 3
  %s386 = smov 12
  %v387 = vld [vmem:[%s385] ss:$16 sm:%s386]
  %vm388 = vcmask 1043458
  %v389 = vsel %vm388, %v387, %v384
  %s390 = scalar_lea.vmem %s0, 3
  %s391 = smov 48
  %v392 = vld [vmem:[%s390] ss:$16 sm:%s391]
  %vm393 = vcmask 1045508
  %v394 = vsel %vm393, %v392, %v389
  %s395 = scalar_lea.vmem %s0, 3
  %s396 = smov 192
  %v397 = vld [vmem:[%s395] ss:$16 sm:%s396]
  %vm398 = vcmask 1047558
  %v399 = vsel %vm398, %v397, %v394
  %400 = vrot.lane.b32.xlu0 %v399, 36
  %v401 = vpop.permute.xlu0 %400
  %vm402 = vcmask 392480
  %403 = vst.msk [vmem:[%s1] sm:$0xff] %vm402, %v401
  %s404 = scalar_lea.vmem %s0, 131
  %s405 = smov 3
  %v406 = vld [vmem:[%s404] ss:$16 sm:%s405]
  %s407 = scalar_lea.vmem %s0, 131
  %s408 = smov 12
  %v409 = vld [vmem:[%s407] ss:$16 sm:%s408]
  %vm410 = vcmask 1043458
  %v411 = vsel %vm410, %v409, %v406
  %412 = vrot.lane.b32.xlu0 %v411, 36
  %v413 = vpop.permute.xlu0 %412
  %vm414 = vcmask 392480
  %s415 = scalar_lea.vmem %s1, 16
  %416 = vst.msk [vmem:[%s415] sm:$0xf] %vm414, %v413
  %s417 = scalar_lea.vmem %s0, 13
  %s418 = smov 3
  %v419 = vld [vmem:[%s417] ss:$16 sm:%s418]
  %s420 = scalar_lea.vmem %s0, 13
  %s421 = smov 12
  %v422 = vld [vmem:[%s420] ss:$16 sm:%s421]
  %vm423 = vcmask 1043458
  %v424 = vsel %vm423, %v422, %v419
  %s425 = scalar_lea.vmem %s0, 13
  %s426 = smov 48
  %v427 = vld [vmem:[%s425] ss:$16 sm:%s426]
  %vm428 = vcmask 1045508
  %v429 = vsel %vm428, %v427, %v424
  %s430 = scalar_lea.vmem %s0, 13
  %s431 = smov 192
  %v432 = vld [vmem:[%s430] ss:$16 sm:%s431]
  %vm433 = vcmask 1047558
  %v434 = vsel %vm433, %v432, %v429
  %435 = vrot.lane.b32.xlu0 %v434, 28
  %v436 = vpop.permute.xlu0 %435
  %vm437 = vcmask 326880
  %s438 = scalar_lea.vmem %s1, 8
  %439 = vst.msk [vmem:[%s438] sm:$0xff] %vm437, %v436
  %s440 = scalar_lea.vmem %s0, 141
  %s441 = smov 3
  %v442 = vld [vmem:[%s440] ss:$16 sm:%s441]
  %s443 = scalar_lea.vmem %s0, 141
  %s444 = smov 12
  %v445 = vld [vmem:[%s443] ss:$16 sm:%s444]
  %vm446 = vcmask 1043458
  %v447 = vsel %vm446, %v445, %v442
  %448 = vrot.lane.b32.xlu0 %v447, 28
  %v449 = vpop.permute.xlu0 %448
  %vm450 = vcmask 326880
  %s451 = scalar_lea.vmem %s1, 24
  %452 = vst.msk [vmem:[%s451] sm:$0xf] %vm450, %v449
  %s453 = scalar_lea.vmem %s0, 2
  %s454 = smov 3
  %v455 = vld [vmem:[%s453] ss:$16 sm:%s454]
  %s456 = scalar_lea.vmem %s0, 2
  %s457 = smov 12
  %v458 = vld [vmem:[%s456] ss:$16 sm:%s457]
  %vm459 = vcmask 1043458
  %v460 = vsel %vm459, %v458, %v455
  %s461 = scalar_lea.vmem %s0, 2
  %s462 = smov 48
  %v463 = vld [vmem:[%s461] ss:$16 sm:%s462]
  %vm464 = vcmask 1045508
  %v465 = vsel %vm464, %v463, %v460
  %s466 = scalar_lea.vmem %s0, 2
  %s467 = smov 192
  %v468 = vld [vmem:[%s466] ss:$16 sm:%s467]
  %vm469 = vcmask 1047558
  %v470 = vsel %vm469, %v468, %v465
  %471 = vrot.lane.b32.xlu0 %v470, 24
  %v472 = vpop.permute.xlu0 %471
  %vm473 = vcmask 294080
  %474 = vst.msk [vmem:[%s1] sm:$0xff] %vm473, %v472
  %s475 = scalar_lea.vmem %s0, 130
  %s476 = smov 3
  %v477 = vld [vmem:[%s475] ss:$16 sm:%s476]
  %s478 = scalar_lea.vmem %s0, 130
  %s479 = smov 12
  %v480 = vld [vmem:[%s478] ss:$16 sm:%s479]
  %vm481 = vcmask 1043458
  %v482 = vsel %vm481, %v480, %v477
  %483 = vrot.lane.b32.xlu0 %v482, 24
  %v484 = vpop.permute.xlu0 %483
  %vm485 = vcmask 294080
  %s486 = scalar_lea.vmem %s1, 16
  %487 = vst.msk [vmem:[%s486] sm:$0xf] %vm485, %v484
  %s488 = scalar_lea.vmem %s0, 12
  %s489 = smov 3
  %v490 = vld [vmem:[%s488] ss:$16 sm:%s489]
  %s491 = scalar_lea.vmem %s0, 12
  %s492 = smov 12
  %v493 = vld [vmem:[%s491] ss:$16 sm:%s492]
  %vm494 = vcmask 1043458
  %v495 = vsel %vm494, %v493, %v490
  %s496 = scalar_lea.vmem %s0, 12
  %s497 = smov 48
  %v498 = vld [vmem:[%s496] ss:$16 sm:%s497]
  %vm499 = vcmask 1045508
  %v500 = vsel %vm499, %v498, %v495
  %s501 = scalar_lea.vmem %s0, 12
  %s502 = smov 192
  %v503 = vld [vmem:[%s501] ss:$16 sm:%s502]
  %vm504 = vcmask 1047558
  %v505 = vsel %vm504, %v503, %v500
  %506 = vrot.lane.b32.xlu0 %v505, 16
  %v507 = vpop.permute.xlu0 %506
  %vm508 = vcmask 228480
  %s509 = scalar_lea.vmem %s1, 8
  %510 = vst.msk [vmem:[%s509] sm:$0xff] %vm508, %v507
  %s511 = scalar_lea.vmem %s0, 140
  %s512 = smov 3
  %v513 = vld [vmem:[%s511] ss:$16 sm:%s512]
  %s514 = scalar_lea.vmem %s0, 140
  %s515 = smov 12
  %v516 = vld [vmem:[%s514] ss:$16 sm:%s515]
  %vm517 = vcmask 1043458
  %v518 = vsel %vm517, %v516, %v513
  %519 = vrot.lane.b32.xlu0 %v518, 16
  %v520 = vpop.permute.xlu0 %519
  %vm521 = vcmask 228480
  %s522 = scalar_lea.vmem %s1, 24
  %523 = vst.msk [vmem:[%s522] sm:$0xf] %vm521, %v520
  %s524 = scalar_lea.vmem %s0, 1
  %s525 = smov 3
  %v526 = vld [vmem:[%s524] ss:$16 sm:%s525]
  %s527 = scalar_lea.vmem %s0, 1
  %s528 = smov 12
  %v529 = vld [vmem:[%s527] ss:$16 sm:%s528]
  %vm530 = vcmask 1043458
  %v531 = vsel %vm530, %v529, %v526
  %s532 = scalar_lea.vmem %s0, 1
  %s533 = smov 48
  %v534 = vld [vmem:[%s532] ss:$16 sm:%s533]
  %vm535 = vcmask 1045508
  %v536 = vsel %vm535, %v534, %v531
  %s537 = scalar_lea.vmem %s0, 1
  %s538 = smov 192
  %v539 = vld [vmem:[%s537] ss:$16 sm:%s538]
  %vm540 = vcmask 1047558
  %v541 = vsel %vm540, %v539, %v536
  %542 = vrot.lane.b32.xlu0 %v541, 12
  %v543 = vpop.permute.xlu0 %542
  %vm544 = vcmask 195680
  %545 = vst.msk [vmem:[%s1] sm:$0xff] %vm544, %v543
  %s546 = scalar_lea.vmem %s0, 129
  %s547 = smov 3
  %v548 = vld [vmem:[%s546] ss:$16 sm:%s547]
  %s549 = scalar_lea.vmem %s0, 129
  %s550 = smov 12
  %v551 = vld [vmem:[%s549] ss:$16 sm:%s550]
  %vm552 = vcmask 1043458
  %v553 = vsel %vm552, %v551, %v548
  %554 = vrot.lane.b32.xlu0 %v553, 12
  %v555 = vpop.permute.xlu0 %554
  %vm556 = vcmask 195680
  %s557 = scalar_lea.vmem %s1, 16
  %558 = vst.msk [vmem:[%s557] sm:$0xf] %vm556, %v555
  %s559 = scalar_lea.vmem %s0, 11
  %s560 = smov 3
  %v561 = vld [vmem:[%s559] ss:$16 sm:%s560]
  %s562 = scalar_lea.vmem %s0, 11
  %s563 = smov 12
  %v564 = vld [vmem:[%s562] ss:$16 sm:%s563]
  %vm565 = vcmask 1043458
  %v566 = vsel %vm565, %v564, %v561
  %s567 = scalar_lea.vmem %s0, 11
  %s568 = smov 48
  %v569 = vld [vmem:[%s567] ss:$16 sm:%s568]
  %vm570 = vcmask 1045508
  %v571 = vsel %vm570, %v569, %v566
  %s572 = scalar_lea.vmem %s0, 11
  %s573 = smov 192
  %v574 = vld [vmem:[%s572] ss:$16 sm:%s573]
  %vm575 = vcmask 1047558
  %v576 = vsel %vm575, %v574, %v571
  %577 = vrot.lane.b32.xlu0 %v576, 4
  %v578 = vpop.permute.xlu0 %577
  %vm579 = vcmask 130080
  %s580 = scalar_lea.vmem %s1, 8
  %581 = vst.msk [vmem:[%s580] sm:$0xff] %vm579, %v578
  %s582 = scalar_lea.vmem %s0, 139
  %s583 = smov 3
  %v584 = vld [vmem:[%s582] ss:$16 sm:%s583]
  %s585 = scalar_lea.vmem %s0, 139
  %s586 = smov 12
  %v587 = vld [vmem:[%s585] ss:$16 sm:%s586]
  %vm588 = vcmask 1043458
  %v589 = vsel %vm588, %v587, %v584
  %590 = vrot.lane.b32.xlu0 %v589, 4
  %v591 = vpop.permute.xlu0 %590
  %vm592 = vcmask 130080
  %s593 = scalar_lea.vmem %s1, 24
  %594 = vst.msk [vmem:[%s593] sm:$0xf] %vm592, %v591

// kernel: up_forward.1
$region0: #{up_forward.1}
  #allocation0 [shape = 'u32[]', space=smem, size = 0x4, offset = 0x4, fixed_abs, tag = 'smem constant byte address 0x4 - core index']
  #allocation1 [shape = 'u32[144,128]{1,0:T(1,128)}', space=vmem, size = 0x12000, scoped, tag = 'internal scratch']
  %s0 = inlined_call_operand.smem [shape: u32[34], index: -1, kind: input, shape index: {}]
  %s1 = sld [smem:[%s0]]
  %s2 = scalar_lea.smem %s0, 1
  %s3 = sld [smem:[%s2]]
  %s4 = scalar_lea.smem %s0, 2
  %s5 = sld [smem:[%s4]]
  %s6 = scalar_lea.smem %s0, 3
  %s7 = sld [smem:[%s6]]
  %s8 = scalar_lea.smem %s0, 4
  %s9 = sld [smem:[%s8]]
  %s10 = scalar_lea.smem %s0, 5
  %s11 = sld [smem:[%s10]]
  %s12 = scalar_lea.smem %s0, 6
  %s13 = sld [smem:[%s12]]
  %s14 = scalar_lea.smem %s0, 7
  %s15 = sld [smem:[%s14]]
  %s16 = scalar_lea.smem %s0, 8
  %s17 = sld [smem:[%s16]]
  %s18 = scalar_lea.smem %s0, 9
  %s19 = sld [smem:[%s18]]
  %s20 = scalar_lea.smem %s0, 10
  %s21 = sld [smem:[%s20]]
  %s22 = scalar_lea.smem %s0, 11
  %s23 = sld [smem:[%s22]]
  %s24 = scalar_lea.smem %s0, 12
  %s25 = sld [smem:[%s24]]
  %s26 = scalar_lea.smem %s0, 13
  %s27 = sld [smem:[%s26]]
  %s28 = scalar_lea.smem %s0, 14
  %s29 = sld [smem:[%s28]]
  %s30 = scalar_lea.smem %s0, 15
  %s31 = sld [smem:[%s30]]
  %s32 = scalar_lea.smem %s0, 16
  %s33 = sld [smem:[%s32]]
  %s34 = scalar_lea.smem %s0, 17
  %s35 = sld [smem:[%s34]]
  %s36 = scalar_lea.smem %s0, 18
  %s37 = sld [smem:[%s36]]
  %s38 = scalar_lea.smem %s0, 19
  %s39 = sld [smem:[%s38]]
  %s40 = scalar_lea.smem %s0, 20
  %s41 = sld [smem:[%s40]]
  %s42 = scalar_lea.smem %s0, 21
  %s43 = sld [smem:[%s42]]
  %s44 = scalar_lea.smem %s0, 22
  %s45 = sld [smem:[%s44]]
  %s46 = scalar_lea.smem %s0, 23
  %s47 = sld [smem:[%s46]]
  %s48 = scalar_lea.smem %s0, 24
  %s49 = sld [smem:[%s48]]
  %s50 = scalar_lea.smem %s0, 25
  %s51 = sld [smem:[%s50]]
  %s52 = scalar_lea.smem %s0, 26
  %s53 = sld [smem:[%s52]]
  %s54 = scalar_lea.smem %s0, 27
  %s55 = sld [smem:[%s54]]
  %s56 = scalar_lea.smem %s0, 28
  %s57 = sld [smem:[%s56]]
  %s58 = scalar_lea.smem %s0, 29
  %s59 = sld [smem:[%s58]]
  %s60 = scalar_lea.smem %s0, 30
  %s61 = sld [smem:[%s60]]
  %s62 = scalar_lea.smem %s0, 31
  %s63 = sld [smem:[%s62]]
  %s64 = scalar_lea.smem %s0, 32
  %s65 = sld [smem:[%s64]]
  %s66 = scalar_lea.smem %s0, 33
  %s67 = sld [smem:[%s66]]
  %s68 = sld [smem:[#allocation0]]
  $region165: #{up_forward.1} parent=0
    _
  %s70 = ssub.s32 1, %s68
  %s71 = scalar_select 0, %s70, %s68
  loop: start=0, step=1, limit=4
  $region2: #{up_forward.1} parent=0 // loop_pre_header
    _
  $region3: #{up_forward.1} parent=0 // loop_header
    %s73 = sphi 0, %s77
    %p74 = scmp.ge.s32.totalorder %s73, 4
    %s83 = sphi 0, %s85
    %s86 = sphi 0, %s83
    %s87 = sphi 0, %s86
    %s103 = sphi 0, %s87
    %s109 = sphi 0, %s111
    %s112 = sphi 0, %s109
    %s113 = sphi 0, %s112
    %s129 = sphi 0, %s113
    %s133 = sphi 0, %s133
    %s135 = sphi 0, %s133
    %s136 = sphi 0, %s135
    %s150 = sphi 0, %s136
    %s154 = sphi 0, %s154
    %s156 = sphi 0, %s154
    %s157 = sphi 0, %s156
    %s171 = sphi 0, %s157
    %s175 = sphi 0, %s175
    %s177 = sphi 0, %s175
    %s178 = sphi 0, %s177
    %s192 = sphi 0, %s178
    %s196 = sphi 0, %s196
    %s198 = sphi 0, %s196
    %s199 = sphi 0, %s198
    %s213 = sphi 0, %s199
    %s217 = sphi 0, %s217
    %s219 = sphi 0, %s217
    %s220 = sphi 0, %s219
    %s234 = sphi 0, %s220
    %s238 = sphi 0, %s238
    %s240 = sphi 0, %s238
    %s241 = sphi 0, %s240
    %s255 = sphi 0, %s241
    %s259 = sphi 0, %s259
    %s261 = sphi 0, %s259
    %s262 = sphi 0, %s261
    %s276 = sphi 0, %s262
    %s280 = sphi 0, %s280
    %s282 = sphi 0, %s280
    %s283 = sphi 0, %s282
    %s297 = sphi 0, %s283
    %s301 = sphi 0, %s301
    %s303 = sphi 0, %s301
    %s304 = sphi 0, %s303
    %s318 = sphi 0, %s304
    %s322 = sphi 0, %s322
    %s324 = sphi 0, %s322
    %s325 = sphi 0, %s324
    %s339 = sphi 0, %s325
    %s343 = sphi 0, %s343
    %s345 = sphi 0, %s343
    %s346 = sphi 0, %s345
    %s360 = sphi 0, %s346
    %s364 = sphi 0, %s364
    %s366 = sphi 0, %s364
    %s367 = sphi 0, %s366
    %s381 = sphi 0, %s367
    %s385 = sphi 0, %s385
    %s387 = sphi 0, %s385
    %s388 = sphi 0, %s387
    %s402 = sphi 0, %s388
    %s406 = sphi 0, %s406
    %s408 = sphi 0, %s406
    %s409 = sphi 0, %s408
    %s423 = sphi 0, %s409
    %s427 = sphi 0, %s427
    %s429 = sphi 0, %s427
    %s430 = sphi 0, %s429
    %s444 = sphi 0, %s430
    %s448 = sphi 0, %s448
    %s450 = sphi 0, %s448
    %s451 = sphi 0, %s450
    %s465 = sphi 0, %s451
    %s469 = sphi 0, %s469
    %s471 = sphi 0, %s469
    %s472 = sphi 0, %s471
    %s486 = sphi 0, %s472
    %s490 = sphi 0, %s490
    %s492 = sphi 0, %s490
    %s493 = sphi 0, %s492
    %s507 = sphi 0, %s493
    %s511 = sphi 0, %s511
    %s513 = sphi 0, %s511
    %s514 = sphi 0, %s513
    %s528 = sphi 0, %s514
    %s532 = sphi 0, %s532
    %s534 = sphi 0, %s532
    %s535 = sphi 0, %s534
    %s549 = sphi 0, %s535
    %s553 = sphi 0, %s553
    %s555 = sphi 0, %s553
    %s556 = sphi 0, %s555
    %s570 = sphi 0, %s556
    %s574 = sphi 0, %s574
    %s576 = sphi 0, %s574
    %s577 = sphi 0, %s576
    %s591 = sphi 0, %s577
    %s595 = sphi 0, %s595
    %s597 = sphi 0, %s595
    %s598 = sphi 0, %s597
    %s612 = sphi 0, %s598
    %s616 = sphi 0, %s616
    %s618 = sphi 0, %s616
    %s619 = sphi 0, %s618
    %s633 = sphi 0, %s619
    %s637 = sphi 0, %s637
    %s639 = sphi 0, %s637
    %s640 = sphi 0, %s639
    %s654 = sphi 0, %s640
    %s658 = sphi 0, %s658
    %s660 = sphi 0, %s658
    %s661 = sphi 0, %s660
    %s675 = sphi 0, %s661
    %s679 = sphi 0, %s679
    %s681 = sphi 0, %s679
    %s682 = sphi 0, %s681
    %s696 = sphi 0, %s682
    %s700 = sphi 0, %s700
    %s702 = sphi 0, %s700
    %s703 = sphi 0, %s702
    %s717 = sphi 0, %s703
    %s721 = sphi 0, %s721
    %s723 = sphi 0, %s721
    %s724 = sphi 0, %s723
    %s738 = sphi 0, %s724
    %s742 = sphi 0, %s742
    %s744 = sphi 0, %s742
    %s745 = sphi 0, %s744
    %s759 = sphi 0, %s745
    %s763 = sphi 0, %s763
    %s765 = sphi 0, %s763
    %s766 = sphi 0, %s765
    %s780 = sphi 0, %s766
    %s786 = sphi 0, %s788
    %s789 = sphi 0, %s786
    %s790 = sphi 0, %s789
    %s806 = sphi 0, %s790
  $region4: #{up_forward.1} parent=0 // loop_header_branch
    %76 = sbr.rel (%p74) target = $region8
  $region5: #{up_forward.1} parent=0 // loop_body
    %s78 = ssub.s32 %s73, 1
    %s79 = ssub.s32 %s73, 2
    %s80 = sadd.s32 %s73, 1
    %s81 = ssub.s32 %s73, %s80
    %p82 = scmp.eq.s32.totalorder %s81, 0
    %s84 = sadd.s32 %s83, 1
    %s85 = scalar_select %p82, %s83, %s84
    %p88 = pneg %p82
    %p89 = scmp.eq.s32.totalorder %s73, 1
    %p90 = por %p88, %p89
    %p91 = scmp.ne.s32.totalorder %s83, %s86
    %p92 = scmp.eq.s32.totalorder %s73, 0
    %p93 = por %p91, %p92
    %p94 = scmp.ne.s32.totalorder %s83, %s86
    %p95 = scmp.eq.s32.totalorder %s78, 1
    %p96 = por %p94, %p95
    %p97 = scmp.ne.s32.totalorder %s86, %s87
    %p98 = scmp.eq.s32.totalorder %s78, 0
    %p99 = por %p97, %p98
    %p100 = scmp.ne.s32.totalorder %s86, %s87
    %p101 = scmp.eq.s32.totalorder %s79, 1
    %p102 = por %p100, %p101
    %p104 = scmp.ne.s32.totalorder %s87, %s103
    %p105 = scmp.eq.s32.totalorder %s79, 0
    %p106 = por %p104, %p105
    %s107 = ssub.s32 %s73, %s80
    %p108 = scmp.eq.s32.totalorder %s107, 0
    %s110 = sadd.s32 %s109, 1
    %s111 = scalar_select %p108, %s109, %s110
    %p114 = pneg %p108
    %p115 = scmp.eq.s32.totalorder %s73, 1
    %p116 = por %p114, %p115
    %p117 = scmp.ne.s32.totalorder %s109, %s112
    %p118 = scmp.eq.s32.totalorder %s73, 0
    %p119 = por %p117, %p118
    %p120 = scmp.ne.s32.totalorder %s109, %s112
    %p121 = scmp.eq.s32.totalorder %s78, 1
    %p122 = por %p120, %p121
    %p123 = scmp.ne.s32.totalorder %s112, %s113
    %p124 = scmp.eq.s32.totalorder %s78, 0
    %p125 = por %p123, %p124
    %p126 = scmp.ne.s32.totalorder %s112, %s113
    %p127 = scmp.eq.s32.totalorder %s79, 1
    %p128 = por %p126, %p127
    %p130 = scmp.ne.s32.totalorder %s113, %s129
    %p131 = scmp.eq.s32.totalorder %s79, 0
    %p132 = por %p130, %p131
    %s134 = sadd.s32 %s133, 1
    %p137 = scmp.eq.s32.totalorder %s73, 1
    %p138 = scmp.ne.s32.totalorder %s133, %s135
    %p139 = scmp.eq.s32.totalorder %s73, 0
    %p140 = por %p138, %p139
    %p141 = scmp.ne.s32.totalorder %s133, %s135
    %p142 = scmp.eq.s32.totalorder %s78, 1
    %p143 = por %p141, %p142
    %p144 = scmp.ne.s32.totalorder %s135, %s136
    %p145 = scmp.eq.s32.totalorder %s78, 0
    %p146 = por %p144, %p145
    %p147 = scmp.ne.s32.totalorder %s135, %s136
    %p148 = scmp.eq.s32.totalorder %s79, 1
    %p149 = por %p147, %p148
    %p151 = scmp.ne.s32.totalorder %s136, %s150
    %p152 = scmp.eq.s32.totalorder %s79, 0
    %p153 = por %p151, %p152
    %s155 = sadd.s32 %s154, 1
    %p158 = scmp.eq.s32.totalorder %s73, 1
    %p159 = scmp.ne.s32.totalorder %s154, %s156
    %p160 = scmp.eq.s32.totalorder %s73, 0
    %p161 = por %p159, %p160
    %p162 = scmp.ne.s32.totalorder %s154, %s156
    %p163 = scmp.eq.s32.totalorder %s78, 1
    %p164 = por %p162, %p163
    %p165 = scmp.ne.s32.totalorder %s156, %s157
    %p166 = scmp.eq.s32.totalorder %s78, 0
    %p167 = por %p165, %p166
    %p168 = scmp.ne.s32.totalorder %s156, %s157
    %p169 = scmp.eq.s32.totalorder %s79, 1
    %p170 = por %p168, %p169
    %p172 = scmp.ne.s32.totalorder %s157, %s171
    %p173 = scmp.eq.s32.totalorder %s79, 0
    %p174 = por %p172, %p173
    %s176 = sadd.s32 %s175, 1
    %p179 = scmp.eq.s32.totalorder %s73, 1
    %p180 = scmp.ne.s32.totalorder %s175, %s177
    %p181 = scmp.eq.s32.totalorder %s73, 0
    %p182 = por %p180, %p181
    %p183 = scmp.ne.s32.totalorder %s175, %s177
    %p184 = scmp.eq.s32.totalorder %s78, 1
    %p185 = por %p183, %p184
    %p186 = scmp.ne.s32.totalorder %s177, %s178
    %p187 = scmp.eq.s32.totalorder %s78, 0
    %p188 = por %p186, %p187
    %p189 = scmp.ne.s32.totalorder %s177, %s178
    %p190 = scmp.eq.s32.totalorder %s79, 1
    %p191 = por %p189, %p190
    %p193 = scmp.ne.s32.totalorder %s178, %s192
    %p194 = scmp.eq.s32.totalorder %s79, 0
    %p195 = por %p193, %p194
    %s197 = sadd.s32 %s196, 1
    %p200 = scmp.eq.s32.totalorder %s73, 1
    %p201 = scmp.ne.s32.totalorder %s196, %s198
    %p202 = scmp.eq.s32.totalorder %s73, 0
    %p203 = por %p201, %p202
    %p204 = scmp.ne.s32.totalorder %s196, %s198
    %p205 = scmp.eq.s32.totalorder %s78, 1
    %p206 = por %p204, %p205
    %p207 = scmp.ne.s32.totalorder %s198, %s199
    %p208 = scmp.eq.s32.totalorder %s78, 0
    %p209 = por %p207, %p208
    %p210 = scmp.ne.s32.totalorder %s198, %s199
    %p211 = scmp.eq.s32.totalorder %s79, 1
    %p212 = por %p210, %p211
    %p214 = scmp.ne.s32.totalorder %s199, %s213
    %p215 = scmp.eq.s32.totalorder %s79, 0
    %p216 = por %p214, %p215
    %s218 = sadd.s32 %s217, 1
    %p221 = scmp.eq.s32.totalorder %s73, 1
    %p222 = scmp.ne.s32.totalorder %s217, %s219
    %p223 = scmp.eq.s32.totalorder %s73, 0
    %p224 = por %p222, %p223
    %p225 = scmp.ne.s32.totalorder %s217, %s219
    %p226 = scmp.eq.s32.totalorder %s78, 1
    %p227 = por %p225, %p226
    %p228 = scmp.ne.s32.totalorder %s219, %s220
    %p229 = scmp.eq.s32.totalorder %s78, 0
    %p230 = por %p228, %p229
    %p231 = scmp.ne.s32.totalorder %s219, %s220
    %p232 = scmp.eq.s32.totalorder %s79, 1
    %p233 = por %p231, %p232
    %p235 = scmp.ne.s32.totalorder %s220, %s234
    %p236 = scmp.eq.s32.totalorder %s79, 0
    %p237 = por %p235, %p236
    %s239 = sadd.s32 %s238, 1
    %p242 = scmp.eq.s32.totalorder %s73, 1
    %p243 = scmp.ne.s32.totalorder %s238, %s240
    %p244 = scmp.eq.s32.totalorder %s73, 0
    %p245 = por %p243, %p244
    %p246 = scmp.ne.s32.totalorder %s238, %s240
    %p247 = scmp.eq.s32.totalorder %s78, 1
    %p248 = por %p246, %p247
    %p249 = scmp.ne.s32.totalorder %s240, %s241
    %p250 = scmp.eq.s32.totalorder %s78, 0
    %p251 = por %p249, %p250
    %p252 = scmp.ne.s32.totalorder %s240, %s241
    %p253 = scmp.eq.s32.totalorder %s79, 1
    %p254 = por %p252, %p253
    %p256 = scmp.ne.s32.totalorder %s241, %s255
    %p257 = scmp.eq.s32.totalorder %s79, 0
    %p258 = por %p256, %p257
    %s260 = sadd.s32 %s259, 1
    %p263 = scmp.eq.s32.totalorder %s73, 1
    %p264 = scmp.ne.s32.totalorder %s259, %s261
    %p265 = scmp.eq.s32.totalorder %s73, 0
    %p266 = por %p264, %p265
    %p267 = scmp.ne.s32.totalorder %s259, %s261
    %p268 = scmp.eq.s32.totalorder %s78, 1
    %p269 = por %p267, %p268
    %p270 = scmp.ne.s32.totalorder %s261, %s262
    %p271 = scmp.eq.s32.totalorder %s78, 0
    %p272 = por %p270, %p271
    %p273 = scmp.ne.s32.totalorder %s261, %s262
    %p274 = scmp.eq.s32.totalorder %s79, 1
    %p275 = por %p273, %p274
    %p277 = scmp.ne.s32.totalorder %s262, %s276
    %p278 = scmp.eq.s32.totalorder %s79, 0
    %p279 = por %p277, %p278
    %s281 = sadd.s32 %s280, 1
    %p284 = scmp.eq.s32.totalorder %s73, 1
    %p285 = scmp.ne.s32.totalorder %s280, %s282
    %p286 = scmp.eq.s32.totalorder %s73, 0
    %p287 = por %p285, %p286
    %p288 = scmp.ne.s32.totalorder %s280, %s282
    %p289 = scmp.eq.s32.totalorder %s78, 1
    %p290 = por %p288, %p289
    %p291 = scmp.ne.s32.totalorder %s282, %s283
    %p292 = scmp.eq.s32.totalorder %s78, 0
    %p293 = por %p291, %p292
    %p294 = scmp.ne.s32.totalorder %s282, %s283
    %p295 = scmp.eq.s32.totalorder %s79, 1
    %p296 = por %p294, %p295
    %p298 = scmp.ne.s32.totalorder %s283, %s297
    %p299 = scmp.eq.s32.totalorder %s79, 0
    %p300 = por %p298, %p299
    %s302 = sadd.s32 %s301, 1
    %p305 = scmp.eq.s32.totalorder %s73, 1
    %p306 = scmp.ne.s32.totalorder %s301, %s303
    %p307 = scmp.eq.s32.totalorder %s73, 0
    %p308 = por %p306, %p307
    %p309 = scmp.ne.s32.totalorder %s301, %s303
    %p310 = scmp.eq.s32.totalorder %s78, 1
    %p311 = por %p309, %p310
    %p312 = scmp.ne.s32.totalorder %s303, %s304
    %p313 = scmp.eq.s32.totalorder %s78, 0
    %p314 = por %p312, %p313
    %p315 = scmp.ne.s32.totalorder %s303, %s304
    %p316 = scmp.eq.s32.totalorder %s79, 1
    %p317 = por %p315, %p316
    %p319 = scmp.ne.s32.totalorder %s304, %s318
    %p320 = scmp.eq.s32.totalorder %s79, 0
    %p321 = por %p319, %p320
    %s323 = sadd.s32 %s322, 1
    %p326 = scmp.eq.s32.totalorder %s73, 1
    %p327 = scmp.ne.s32.totalorder %s322, %s324
    %p328 = scmp.eq.s32.totalorder %s73, 0
    %p329 = por %p327, %p328
    %p330 = scmp.ne.s32.totalorder %s322, %s324
    %p331 = scmp.eq.s32.totalorder %s78, 1
    %p332 = por %p330, %p331
    %p333 = scmp.ne.s32.totalorder %s324, %s325
    %p334 = scmp.eq.s32.totalorder %s78, 0
    %p335 = por %p333, %p334
    %p336 = scmp.ne.s32.totalorder %s324, %s325
    %p337 = scmp.eq.s32.totalorder %s79, 1
    %p338 = por %p336, %p337
    %p340 = scmp.ne.s32.totalorder %s325, %s339
    %p341 = scmp.eq.s32.totalorder %s79, 0
    %p342 = por %p340, %p341
    %s344 = sadd.s32 %s343, 1
    %p347 = scmp.eq.s32.totalorder %s73, 1
    %p348 = scmp.ne.s32.totalorder %s343, %s345
    %p349 = scmp.eq.s32.totalorder %s73, 0
    %p350 = por %p348, %p349
    %p351 = scmp.ne.s32.totalorder %s343, %s345
    %p352 = scmp.eq.s32.totalorder %s78, 1
    %p353 = por %p351, %p352
    %p354 = scmp.ne.s32.totalorder %s345, %s346
    %p355 = scmp.eq.s32.totalorder %s78, 0
    %p356 = por %p354, %p355
    %p357 = scmp.ne.s32.totalorder %s345, %s346
    %p358 = scmp.eq.s32.totalorder %s79, 1
    %p359 = por %p357, %p358
    %p361 = scmp.ne.s32.totalorder %s346, %s360
    %p362 = scmp.eq.s32.totalorder %s79, 0
    %p363 = por %p361, %p362
    %s365 = sadd.s32 %s364, 1
    %p368 = scmp.eq.s32.totalorder %s73, 1
    %p369 = scmp.ne.s32.totalorder %s364, %s366
    %p370 = scmp.eq.s32.totalorder %s73, 0
    %p371 = por %p369, %p370
    %p372 = scmp.ne.s32.totalorder %s364, %s366
    %p373 = scmp.eq.s32.totalorder %s78, 1
    %p374 = por %p372, %p373
    %p375 = scmp.ne.s32.totalorder %s366, %s367
    %p376 = scmp.eq.s32.totalorder %s78, 0
    %p377 = por %p375, %p376
    %p378 = scmp.ne.s32.totalorder %s366, %s367
    %p379 = scmp.eq.s32.totalorder %s79, 1
    %p380 = por %p378, %p379
    %p382 = scmp.ne.s32.totalorder %s367, %s381
    %p383 = scmp.eq.s32.totalorder %s79, 0
    %p384 = por %p382, %p383
    %s386 = sadd.s32 %s385, 1
    %p389 = scmp.eq.s32.totalorder %s73, 1
    %p390 = scmp.ne.s32.totalorder %s385, %s387
    %p391 = scmp.eq.s32.totalorder %s73, 0
    %p392 = por %p390, %p391
    %p393 = scmp.ne.s32.totalorder %s385, %s387
    %p394 = scmp.eq.s32.totalorder %s78, 1
    %p395 = por %p393, %p394
    %p396 = scmp.ne.s32.totalorder %s387, %s388
    %p397 = scmp.eq.s32.totalorder %s78, 0
    %p398 = por %p396, %p397
    %p399 = scmp.ne.s32.totalorder %s387, %s388
    %p400 = scmp.eq.s32.totalorder %s79, 1
    %p401 = por %p399, %p400
    %p403 = scmp.ne.s32.totalorder %s388, %s402
    %p404 = scmp.eq.s32.totalorder %s79, 0
    %p405 = por %p403, %p404
    %s407 = sadd.s32 %s406, 1
    %p410 = scmp.eq.s32.totalorder %s73, 1
    %p411 = scmp.ne.s32.totalorder %s406, %s408
    %p412 = scmp.eq.s32.totalorder %s73, 0
    %p413 = por %p411, %p412
    %p414 = scmp.ne.s32.totalorder %s406, %s408
    %p415 = scmp.eq.s32.totalorder %s78, 1
    %p416 = por %p414, %p415
    %p417 = scmp.ne.s32.totalorder %s408, %s409
    %p418 = scmp.eq.s32.totalorder %s78, 0
    %p419 = por %p417, %p418
    %p420 = scmp.ne.s32.totalorder %s408, %s409
    %p421 = scmp.eq.s32.totalorder %s79, 1
    %p422 = por %p420, %p421
    %p424 = scmp.ne.s32.totalorder %s409, %s423
    %p425 = scmp.eq.s32.totalorder %s79, 0
    %p426 = por %p424, %p425
    %s428 = sadd.s32 %s427, 1
    %p431 = scmp.eq.s32.totalorder %s73, 1
    %p432 = scmp.ne.s32.totalorder %s427, %s429
    %p433 = scmp.eq.s32.totalorder %s73, 0
    %p434 = por %p432, %p433
    %p435 = scmp.ne.s32.totalorder %s427, %s429
    %p436 = scmp.eq.s32.totalorder %s78, 1
    %p437 = por %p435, %p436
    %p438 = scmp.ne.s32.totalorder %s429, %s430
    %p439 = scmp.eq.s32.totalorder %s78, 0
    %p440 = por %p438, %p439
    %p441 = scmp.ne.s32.totalorder %s429, %s430
    %p442 = scmp.eq.s32.totalorder %s79, 1
    %p443 = por %p441, %p442
    %p445 = scmp.ne.s32.totalorder %s430, %s444
    %p446 = scmp.eq.s32.totalorder %s79, 0
    %p447 = por %p445, %p446
    %s449 = sadd.s32 %s448, 1
    %p452 = scmp.eq.s32.totalorder %s73, 1
    %p453 = scmp.ne.s32.totalorder %s448, %s450
    %p454 = scmp.eq.s32.totalorder %s73, 0
    %p455 = por %p453, %p454
    %p456 = scmp.ne.s32.totalorder %s448, %s450
    %p457 = scmp.eq.s32.totalorder %s78, 1
    %p458 = por %p456, %p457
    %p459 = scmp.ne.s32.totalorder %s450, %s451
    %p460 = scmp.eq.s32.totalorder %s78, 0
    %p461 = por %p459, %p460
    %p462 = scmp.ne.s32.totalorder %s450, %s451
    %p463 = scmp.eq.s32.totalorder %s79, 1
    %p464 = por %p462, %p463
    %p466 = scmp.ne.s32.totalorder %s451, %s465
    %p467 = scmp.eq.s32.totalorder %s79, 0
    %p468 = por %p466, %p467
    %s470 = sadd.s32 %s469, 1
    %p473 = scmp.eq.s32.totalorder %s73, 1
    %p474 = scmp.ne.s32.totalorder %s469, %s471
    %p475 = scmp.eq.s32.totalorder %s73, 0
    %p476 = por %p474, %p475
    %p477 = scmp.ne.s32.totalorder %s469, %s471
    %p478 = scmp.eq.s32.totalorder %s78, 1
    %p479 = por %p477, %p478
    %p480 = scmp.ne.s32.totalorder %s471, %s472
    %p481 = scmp.eq.s32.totalorder %s78, 0
    %p482 = por %p480, %p481
    %p483 = scmp.ne.s32.totalorder %s471, %s472
    %p484 = scmp.eq.s32.totalorder %s79, 1
    %p485 = por %p483, %p484
    %p487 = scmp.ne.s32.totalorder %s472, %s486
    %p488 = scmp.eq.s32.totalorder %s79, 0
    %p489 = por %p487, %p488
    %s491 = sadd.s32 %s490, 1
    %p494 = scmp.eq.s32.totalorder %s73, 1
    %p495 = scmp.ne.s32.totalorder %s490, %s492
    %p496 = scmp.eq.s32.totalorder %s73, 0
    %p497 = por %p495, %p496
    %p498 = scmp.ne.s32.totalorder %s490, %s492
    %p499 = scmp.eq.s32.totalorder %s78, 1
    %p500 = por %p498, %p499
    %p501 = scmp.ne.s32.totalorder %s492, %s493
    %p502 = scmp.eq.s32.totalorder %s78, 0
    %p503 = por %p501, %p502
    %p504 = scmp.ne.s32.totalorder %s492, %s493
    %p505 = scmp.eq.s32.totalorder %s79, 1
    %p506 = por %p504, %p505
    %p508 = scmp.ne.s32.totalorder %s493, %s507
    %p509 = scmp.eq.s32.totalorder %s79, 0
    %p510 = por %p508, %p509
    %s512 = sadd.s32 %s511, 1
    %p515 = scmp.eq.s32.totalorder %s73, 1
    %p516 = scmp.ne.s32.totalorder %s511, %s513
    %p517 = scmp.eq.s32.totalorder %s73, 0
    %p518 = por %p516, %p517
    %p519 = scmp.ne.s32.totalorder %s511, %s513
    %p520 = scmp.eq.s32.totalorder %s78, 1
    %p521 = por %p519, %p520
    %p522 = scmp.ne.s32.totalorder %s513, %s514
    %p523 = scmp.eq.s32.totalorder %s78, 0
    %p524 = por %p522, %p523
    %p525 = scmp.ne.s32.totalorder %s513, %s514
    %p526 = scmp.eq.s32.totalorder %s79, 1
    %p527 = por %p525, %p526
    %p529 = scmp.ne.s32.totalorder %s514, %s528
    %p530 = scmp.eq.s32.totalorder %s79, 0
    %p531 = por %p529, %p530
    %s533 = sadd.s32 %s532, 1
    %p536 = scmp.eq.s32.totalorder %s73, 1
    %p537 = scmp.ne.s32.totalorder %s532, %s534
    %p538 = scmp.eq.s32.totalorder %s73, 0
    %p539 = por %p537, %p538
    %p540 = scmp.ne.s32.totalorder %s532, %s534
    %p541 = scmp.eq.s32.totalorder %s78, 1
    %p542 = por %p540, %p541
    %p543 = scmp.ne.s32.totalorder %s534, %s535
    %p544 = scmp.eq.s32.totalorder %s78, 0
    %p545 = por %p543, %p544
    %p546 = scmp.ne.s32.totalorder %s534, %s535
    %p547 = scmp.eq.s32.totalorder %s79, 1
    %p548 = por %p546, %p547
    %p550 = scmp.ne.s32.totalorder %s535, %s549
    %p551 = scmp.eq.s32.totalorder %s79, 0
    %p552 = por %p550, %p551
    %s554 = sadd.s32 %s553, 1
    %p557 = scmp.eq.s32.totalorder %s73, 1
    %p558 = scmp.ne.s32.totalorder %s553, %s555
    %p559 = scmp.eq.s32.totalorder %s73, 0
    %p560 = por %p558, %p559
    %p561 = scmp.ne.s32.totalorder %s553, %s555
    %p562 = scmp.eq.s32.totalorder %s78, 1
    %p563 = por %p561, %p562
    %p564 = scmp.ne.s32.totalorder %s555, %s556
    %p565 = scmp.eq.s32.totalorder %s78, 0
    %p566 = por %p564, %p565
    %p567 = scmp.ne.s32.totalorder %s555, %s556
    %p568 = scmp.eq.s32.totalorder %s79, 1
    %p569 = por %p567, %p568
    %p571 = scmp.ne.s32.totalorder %s556, %s570
    %p572 = scmp.eq.s32.totalorder %s79, 0
    %p573 = por %p571, %p572
    %s575 = sadd.s32 %s574, 1
    %p578 = scmp.eq.s32.totalorder %s73, 1
    %p579 = scmp.ne.s32.totalorder %s574, %s576
    %p580 = scmp.eq.s32.totalorder %s73, 0
    %p581 = por %p579, %p580
    %p582 = scmp.ne.s32.totalorder %s574, %s576
    %p583 = scmp.eq.s32.totalorder %s78, 1
    %p584 = por %p582, %p583
    %p585 = scmp.ne.s32.totalorder %s576, %s577
    %p586 = scmp.eq.s32.totalorder %s78, 0
    %p587 = por %p585, %p586
    %p588 = scmp.ne.s32.totalorder %s576, %s577
    %p589 = scmp.eq.s32.totalorder %s79, 1
    %p590 = por %p588, %p589
    %p592 = scmp.ne.s32.totalorder %s577, %s591
    %p593 = scmp.eq.s32.totalorder %s79, 0
    %p594 = por %p592, %p593
    %s596 = sadd.s32 %s595, 1
    %p599 = scmp.eq.s32.totalorder %s73, 1
    %p600 = scmp.ne.s32.totalorder %s595, %s597
    %p601 = scmp.eq.s32.totalorder %s73, 0
    %p602 = por %p600, %p601
    %p603 = scmp.ne.s32.totalorder %s595, %s597
    %p604 = scmp.eq.s32.totalorder %s78, 1
    %p605 = por %p603, %p604
    %p606 = scmp.ne.s32.totalorder %s597, %s598
    %p607 = scmp.eq.s32.totalorder %s78, 0
    %p608 = por %p606, %p607
    %p609 = scmp.ne.s32.totalorder %s597, %s598
    %p610 = scmp.eq.s32.totalorder %s79, 1
    %p611 = por %p609, %p610
    %p613 = scmp.ne.s32.totalorder %s598, %s612
    %p614 = scmp.eq.s32.totalorder %s79, 0
    %p615 = por %p613, %p614
    %s617 = sadd.s32 %s616, 1
    %p620 = scmp.eq.s32.totalorder %s73, 1
    %p621 = scmp.ne.s32.totalorder %s616, %s618
    %p622 = scmp.eq.s32.totalorder %s73, 0
    %p623 = por %p621, %p622
    %p624 = scmp.ne.s32.totalorder %s616, %s618
    %p625 = scmp.eq.s32.totalorder %s78, 1
    %p626 = por %p624, %p625
    %p627 = scmp.ne.s32.totalorder %s618, %s619
    %p628 = scmp.eq.s32.totalorder %s78, 0
    %p629 = por %p627, %p628
    %p630 = scmp.ne.s32.totalorder %s618, %s619
    %p631 = scmp.eq.s32.totalorder %s79, 1
    %p632 = por %p630, %p631
    %p634 = scmp.ne.s32.totalorder %s619, %s633
    %p635 = scmp.eq.s32.totalorder %s79, 0
    %p636 = por %p634, %p635
    %s638 = sadd.s32 %s637, 1
    %p641 = scmp.eq.s32.totalorder %s73, 1
    %p642 = scmp.ne.s32.totalorder %s637, %s639
    %p643 = scmp.eq.s32.totalorder %s73, 0
    %p644 = por %p642, %p643
    %p645 = scmp.ne.s32.totalorder %s637, %s639
    %p646 = scmp.eq.s32.totalorder %s78, 1
    %p647 = por %p645, %p646
    %p648 = scmp.ne.s32.totalorder %s639, %s640
    %p649 = scmp.eq.s32.totalorder %s78, 0
    %p650 = por %p648, %p649
    %p651 = scmp.ne.s32.totalorder %s639, %s640
    %p652 = scmp.eq.s32.totalorder %s79, 1
    %p653 = por %p651, %p652
    %p655 = scmp.ne.s32.totalorder %s640, %s654
    %p656 = scmp.eq.s32.totalorder %s79, 0
    %p657 = por %p655, %p656
    %s659 = sadd.s32 %s658, 1
    %p662 = scmp.eq.s32.totalorder %s73, 1
    %p663 = scmp.ne.s32.totalorder %s658, %s660
    %p664 = scmp.eq.s32.totalorder %s73, 0
    %p665 = por %p663, %p664
    %p666 = scmp.ne.s32.totalorder %s658, %s660
    %p667 = scmp.eq.s32.totalorder %s78, 1
    %p668 = por %p666, %p667
    %p669 = scmp.ne.s32.totalorder %s660, %s661
    %p670 = scmp.eq.s32.totalorder %s78, 0
    %p671 = por %p669, %p670
    %p672 = scmp.ne.s32.totalorder %s660, %s661
    %p673 = scmp.eq.s32.totalorder %s79, 1
    %p674 = por %p672, %p673
    %p676 = scmp.ne.s32.totalorder %s661, %s675
    %p677 = scmp.eq.s32.totalorder %s79, 0
    %p678 = por %p676, %p677
    %s680 = sadd.s32 %s679, 1
    %p683 = scmp.eq.s32.totalorder %s73, 1
    %p684 = scmp.ne.s32.totalorder %s679, %s681
    %p685 = scmp.eq.s32.totalorder %s73, 0
    %p686 = por %p684, %p685
    %p687 = scmp.ne.s32.totalorder %s679, %s681
    %p688 = scmp.eq.s32.totalorder %s78, 1
    %p689 = por %p687, %p688
    %p690 = scmp.ne.s32.totalorder %s681, %s682
    %p691 = scmp.eq.s32.totalorder %s78, 0
    %p692 = por %p690, %p691
    %p693 = scmp.ne.s32.totalorder %s681, %s682
    %p694 = scmp.eq.s32.totalorder %s79, 1
    %p695 = por %p693, %p694
    %p697 = scmp.ne.s32.totalorder %s682, %s696
    %p698 = scmp.eq.s32.totalorder %s79, 0
    %p699 = por %p697, %p698
    %s701 = sadd.s32 %s700, 1
    %p704 = scmp.eq.s32.totalorder %s73, 1
    %p705 = scmp.ne.s32.totalorder %s700, %s702
    %p706 = scmp.eq.s32.totalorder %s73, 0
    %p707 = por %p705, %p706
    %p708 = scmp.ne.s32.totalorder %s700, %s702
    %p709 = scmp.eq.s32.totalorder %s78, 1
    %p710 = por %p708, %p709
    %p711 = scmp.ne.s32.totalorder %s702, %s703
    %p712 = scmp.eq.s32.totalorder %s78, 0
    %p713 = por %p711, %p712
    %p714 = scmp.ne.s32.totalorder %s702, %s703
    %p715 = scmp.eq.s32.totalorder %s79, 1
    %p716 = por %p714, %p715
    %p718 = scmp.ne.s32.totalorder %s703, %s717
    %p719 = scmp.eq.s32.totalorder %s79, 0
    %p720 = por %p718, %p719
    %s722 = sadd.s32 %s721, 1
    %p725 = scmp.eq.s32.totalorder %s73, 1
    %p726 = scmp.ne.s32.totalorder %s721, %s723
    %p727 = scmp.eq.s32.totalorder %s73, 0
    %p728 = por %p726, %p727
    %p729 = scmp.ne.s32.totalorder %s721, %s723
    %p730 = scmp.eq.s32.totalorder %s78, 1
    %p731 = por %p729, %p730
    %p732 = scmp.ne.s32.totalorder %s723, %s724
    %p733 = scmp.eq.s32.totalorder %s78, 0
    %p734 = por %p732, %p733
    %p735 = scmp.ne.s32.totalorder %s723, %s724
    %p736 = scmp.eq.s32.totalorder %s79, 1
    %p737 = por %p735, %p736
    %p739 = scmp.ne.s32.totalorder %s724, %s738
    %p740 = scmp.eq.s32.totalorder %s79, 0
    %p741 = por %p739, %p740
    %s743 = sadd.s32 %s742, 1
    %p746 = scmp.eq.s32.totalorder %s73, 1
    %p747 = scmp.ne.s32.totalorder %s742, %s744
    %p748 = scmp.eq.s32.totalorder %s73, 0
    %p749 = por %p747, %p748
    %p750 = scmp.ne.s32.totalorder %s742, %s744
    %p751 = scmp.eq.s32.totalorder %s78, 1
    %p752 = por %p750, %p751
    %p753 = scmp.ne.s32.totalorder %s744, %s745
    %p754 = scmp.eq.s32.totalorder %s78, 0
    %p755 = por %p753, %p754
    %p756 = scmp.ne.s32.totalorder %s744, %s745
    %p757 = scmp.eq.s32.totalorder %s79, 1
    %p758 = por %p756, %p757
    %p760 = scmp.ne.s32.totalorder %s745, %s759
    %p761 = scmp.eq.s32.totalorder %s79, 0
    %p762 = por %p760, %p761
    %s764 = sadd.s32 %s763, 1
    %p767 = scmp.eq.s32.totalorder %s73, 1
    %p768 = scmp.ne.s32.totalorder %s763, %s765
    %p769 = scmp.eq.s32.totalorder %s73, 0
    %p770 = por %p768, %p769
    %p771 = scmp.ne.s32.totalorder %s763, %s765
    %p772 = scmp.eq.s32.totalorder %s78, 1
    %p773 = por %p771, %p772
    %p774 = scmp.ne.s32.totalorder %s765, %s766
    %p775 = scmp.eq.s32.totalorder %s78, 0
    %p776 = por %p774, %p775
    %p777 = scmp.ne.s32.totalorder %s765, %s766
    %p778 = scmp.eq.s32.totalorder %s79, 1
    %p779 = por %p777, %p778
    %p781 = scmp.ne.s32.totalorder %s766, %s780
    %p782 = scmp.eq.s32.totalorder %s79, 0
    %p783 = por %p781, %p782
    %s784 = ssub.s32 %s73, %s80
    %p785 = scmp.eq.s32.totalorder %s784, 0
    %s787 = sadd.s32 %s786, 1
    %s788 = scalar_select %p785, %s786, %s787
    %p791 = pneg %p785
    %p792 = scmp.eq.s32.totalorder %s73, 1
    %p793 = por %p791, %p792
    %p794 = scmp.ne.s32.totalorder %s786, %s789
    %p795 = scmp.eq.s32.totalorder %s73, 0
    %p796 = por %p794, %p795
    %p797 = scmp.ne.s32.totalorder %s786, %s789
    %p798 = scmp.eq.s32.totalorder %s78, 1
    %p799 = por %p797, %p798
    %p800 = scmp.ne.s32.totalorder %s789, %s790
    %p801 = scmp.eq.s32.totalorder %s78, 0
    %p802 = por %p800, %p801
    %p803 = scmp.ne.s32.totalorder %s789, %s790
    %p804 = scmp.eq.s32.totalorder %s79, 1
    %p805 = por %p803, %p804
    %p807 = scmp.ne.s32.totalorder %s790, %s806
    %p808 = scmp.eq.s32.totalorder %s79, 0
    %p809 = por %p807, %p808
    %p810 = scmp.le.s32.totalorder 1, %s73
    %p811 = scmp.lt.s32.totalorder %s73, 3
    %p812 = pnand %p810, %p811
    %p813 = pneg %p812
    // Predicated region
    $region9: #{up_forward.1} parent=5 // pred_check
      _
    $region10: #{up_forward.1} parent=5 // pred_check_branch
      %815 = sbr.rel (%p812) target = $region12
    $region11: #{up_forward.1} parent=5 // pred_region
      %s816 = ssub.s32 %s73, 1
      // Predicated region
      $region13: #{up_forward.1} parent=11 // pred_check
        %p817 = pneg %p146
      $region14: #{up_forward.1} parent=11 // pred_check_branch
        %819 = sbr.rel (%p817) target = $region16
      $region15: #{up_forward.1} parent=11 // pred_region
        _
      $region16: #{up_forward.1} parent=11 // pred_fallthru
        _
      // Predicated region
      $region17: #{up_forward.1} parent=11 // pred_check
        %p820 = pneg %p167
      $region18: #{up_forward.1} parent=11 // pred_check_branch
        %822 = sbr.rel (%p820) target = $region20
      $region19: #{up_forward.1} parent=11 // pred_region
        _
      $region20: #{up_forward.1} parent=11 // pred_fallthru
        _
      // Predicated region
      $region21: #{up_forward.1} parent=11 // pred_check
        %p823 = pneg %p188
      $region22: #{up_forward.1} parent=11 // pred_check_branch
        %825 = sbr.rel (%p823) target = $region24
      $region23: #{up_forward.1} parent=11 // pred_region
        _
      $region24: #{up_forward.1} parent=11 // pred_fallthru
        _
      // Predicated region
      $region25: #{up_forward.1} parent=11 // pred_check
        %p826 = pneg %p209
      $region26: #{up_forward.1} parent=11 // pred_check_branch
        %828 = sbr.rel (%p826) target = $region28
      $region27: #{up_forward.1} parent=11 // pred_region
        _
      $region28: #{up_forward.1} parent=11 // pred_fallthru
        _
      // Predicated region
      $region29: #{up_forward.1} parent=11 // pred_check
        %p829 = pneg %p230
      $region30: #{up_forward.1} parent=11 // pred_check_branch
        %831 = sbr.rel (%p829) target = $region32
      $region31: #{up_forward.1} parent=11 // pred_region
        _
      $region32: #{up_forward.1} parent=11 // pred_fallthru
        _
      // Predicated region
      $region33: #{up_forward.1} parent=11 // pred_check
        %p832 = pneg %p251
      $region34: #{up_forward.1} parent=11 // pred_check_branch
        %834 = sbr.rel (%p832) target = $region36
      $region35: #{up_forward.1} parent=11 // pred_region
        _
      $region36: #{up_forward.1} parent=11 // pred_fallthru
        _
      // Predicated region
      $region37: #{up_forward.1} parent=11 // pred_check
        %p835 = pneg %p272
      $region38: #{up_forward.1} parent=11 // pred_check_branch
        %837 = sbr.rel (%p835) target = $region40
      $region39: #{up_forward.1} parent=11 // pred_region
        _
      $region40: #{up_forward.1} parent=11 // pred_fallthru
        _
      // Predicated region
      $region41: #{up_forward.1} parent=11 // pred_check
        %p838 = pneg %p293
      $region42: #{up_forward.1} parent=11 // pred_check_branch
        %840 = sbr.rel (%p838) target = $region44
      $region43: #{up_forward.1} parent=11 // pred_region
        _
      $region44: #{up_forward.1} parent=11 // pred_fallthru
        _
      // Predicated region
      $region45: #{up_forward.1} parent=11 // pred_check
        %p841 = pneg %p314
      $region46: #{up_forward.1} parent=11 // pred_check_branch
        %843 = sbr.rel (%p841) target = $region48
      $region47: #{up_forward.1} parent=11 // pred_region
        _
      $region48: #{up_forward.1} parent=11 // pred_fallthru
        _
      // Predicated region
      $region49: #{up_forward.1} parent=11 // pred_check
        %p844 = pneg %p335
      $region50: #{up_forward.1} parent=11 // pred_check_branch
        %846 = sbr.rel (%p844) target = $region52
      $region51: #{up_forward.1} parent=11 // pred_region
        _
      $region52: #{up_forward.1} parent=11 // pred_fallthru
        _
      // Predicated region
      $region53: #{up_forward.1} parent=11 // pred_check
        %p847 = pneg %p356
      $region54: #{up_forward.1} parent=11 // pred_check_branch
        %849 = sbr.rel (%p847) target = $region56
      $region55: #{up_forward.1} parent=11 // pred_region
        _
      $region56: #{up_forward.1} parent=11 // pred_fallthru
        _
      // Predicated region
      $region57: #{up_forward.1} parent=11 // pred_check
        %p850 = pneg %p377
      $region58: #{up_forward.1} parent=11 // pred_check_branch
        %852 = sbr.rel (%p850) target = $region60
      $region59: #{up_forward.1} parent=11 // pred_region
        _
      $region60: #{up_forward.1} parent=11 // pred_fallthru
        _
      // Predicated region
      $region61: #{up_forward.1} parent=11 // pred_check
        %p853 = pneg %p398
      $region62: #{up_forward.1} parent=11 // pred_check_branch
        %855 = sbr.rel (%p853) target = $region64
      $region63: #{up_forward.1} parent=11 // pred_region
        _
      $region64: #{up_forward.1} parent=11 // pred_fallthru
        _
      // Predicated region
      $region65: #{up_forward.1} parent=11 // pred_check
        %p856 = pneg %p419
      $region66: #{up_forward.1} parent=11 // pred_check_branch
        %858 = sbr.rel (%p856) target = $region68
      $region67: #{up_forward.1} parent=11 // pred_region
        _
      $region68: #{up_forward.1} parent=11 // pred_fallthru
        _
      // Predicated region
      $region69: #{up_forward.1} parent=11 // pred_check
        %p859 = pneg %p440
      $region70: #{up_forward.1} parent=11 // pred_check_branch
        %861 = sbr.rel (%p859) target = $region72
      $region71: #{up_forward.1} parent=11 // pred_region
        _
      $region72: #{up_forward.1} parent=11 // pred_fallthru
        _
      // Predicated region
      $region73: #{up_forward.1} parent=11 // pred_check
        %p862 = pneg %p461
      $region74: #{up_forward.1} parent=11 // pred_check_branch
        %864 = sbr.rel (%p862) target = $region76
      $region75: #{up_forward.1} parent=11 // pred_region
        _
      $region76: #{up_forward.1} parent=11 // pred_fallthru
        _
      // Predicated region
      $region77: #{up_forward.1} parent=11 // pred_check
        %p865 = pneg %p482
      $region78: #{up_forward.1} parent=11 // pred_check_branch
        %867 = sbr.rel (%p865) target = $region80
      $region79: #{up_forward.1} parent=11 // pred_region
        _
      $region80: #{up_forward.1} parent=11 // pred_fallthru
        _
      // Predicated region
      $region81: #{up_forward.1} parent=11 // pred_check
        %p868 = pneg %p503
      $region82: #{up_forward.1} parent=11 // pred_check_branch
        %870 = sbr.rel (%p868) target = $region84
      $region83: #{up_forward.1} parent=11 // pred_region
        _
      $region84: #{up_forward.1} parent=11 // pred_fallthru
        _
      // Predicated region
      $region85: #{up_forward.1} parent=11 // pred_check
        %p871 = pneg %p524
      $region86: #{up_forward.1} parent=11 // pred_check_branch
        %873 = sbr.rel (%p871) target = $region88
      $region87: #{up_forward.1} parent=11 // pred_region
        _
      $region88: #{up_forward.1} parent=11 // pred_fallthru
        _
      // Predicated region
      $region89: #{up_forward.1} parent=11 // pred_check
        %p874 = pneg %p545
      $region90: #{up_forward.1} parent=11 // pred_check_branch
        %876 = sbr.rel (%p874) target = $region92
      $region91: #{up_forward.1} parent=11 // pred_region
        _
      $region92: #{up_forward.1} parent=11 // pred_fallthru
        _
      // Predicated region
      $region93: #{up_forward.1} parent=11 // pred_check
        %p877 = pneg %p566
      $region94: #{up_forward.1} parent=11 // pred_check_branch
        %879 = sbr.rel (%p877) target = $region96
      $region95: #{up_forward.1} parent=11 // pred_region
        _
      $region96: #{up_forward.1} parent=11 // pred_fallthru
        _
      // Predicated region
      $region97: #{up_forward.1} parent=11 // pred_check
        %p880 = pneg %p587
      $region98: #{up_forward.1} parent=11 // pred_check_branch
        %882 = sbr.rel (%p880) target = $region100
      $region99: #{up_forward.1} parent=11 // pred_region
        _
      $region100: #{up_forward.1} parent=11 // pred_fallthru
        _
      // Predicated region
      $region101: #{up_forward.1} parent=11 // pred_check
        %p883 = pneg %p608
      $region102: #{up_forward.1} parent=11 // pred_check_branch
        %885 = sbr.rel (%p883) target = $region104
      $region103: #{up_forward.1} parent=11 // pred_region
        _
      $region104: #{up_forward.1} parent=11 // pred_fallthru
        _
      // Predicated region
      $region105: #{up_forward.1} parent=11 // pred_check
        %p886 = pneg %p629
      $region106: #{up_forward.1} parent=11 // pred_check_branch
        %888 = sbr.rel (%p886) target = $region108
      $region107: #{up_forward.1} parent=11 // pred_region
        _
      $region108: #{up_forward.1} parent=11 // pred_fallthru
        _
      // Predicated region
      $region109: #{up_forward.1} parent=11 // pred_check
        %p889 = pneg %p650
      $region110: #{up_forward.1} parent=11 // pred_check_branch
        %891 = sbr.rel (%p889) target = $region112
      $region111: #{up_forward.1} parent=11 // pred_region
        _
      $region112: #{up_forward.1} parent=11 // pred_fallthru
        _
      // Predicated region
      $region113: #{up_forward.1} parent=11 // pred_check
        %p892 = pneg %p671
      $region114: #{up_forward.1} parent=11 // pred_check_branch
        %894 = sbr.rel (%p892) target = $region116
      $region115: #{up_forward.1} parent=11 // pred_region
        _
      $region116: #{up_forward.1} parent=11 // pred_fallthru
        _
      // Predicated region
      $region117: #{up_forward.1} parent=11 // pred_check
        %p895 = pneg %p692
      $region118: #{up_forward.1} parent=11 // pred_check_branch
        %897 = sbr.rel (%p895) target = $region120
      $region119: #{up_forward.1} parent=11 // pred_region
        _
      $region120: #{up_forward.1} parent=11 // pred_fallthru
        _
      // Predicated region
      $region121: #{up_forward.1} parent=11 // pred_check
        %p898 = pneg %p713
      $region122: #{up_forward.1} parent=11 // pred_check_branch
        %900 = sbr.rel (%p898) target = $region124
      $region123: #{up_forward.1} parent=11 // pred_region
        _
      $region124: #{up_forward.1} parent=11 // pred_fallthru
        _
      // Predicated region
      $region125: #{up_forward.1} parent=11 // pred_check
        %p901 = pneg %p734
      $region126: #{up_forward.1} parent=11 // pred_check_branch
        %903 = sbr.rel (%p901) target = $region128
      $region127: #{up_forward.1} parent=11 // pred_region
        _
      $region128: #{up_forward.1} parent=11 // pred_fallthru
        _
      // Predicated region
      $region129: #{up_forward.1} parent=11 // pred_check
        %p904 = pneg %p755
      $region130: #{up_forward.1} parent=11 // pred_check_branch
        %906 = sbr.rel (%p904) target = $region132
      $region131: #{up_forward.1} parent=11 // pred_region
        _
      $region132: #{up_forward.1} parent=11 // pred_fallthru
        _
      // Predicated region
      $region133: #{up_forward.1} parent=11 // pred_check
        %p907 = pneg %p776
      $region134: #{up_forward.1} parent=11 // pred_check_branch
        %909 = sbr.rel (%p907) target = $region136
      $region135: #{up_forward.1} parent=11 // pred_region
        _
      $region136: #{up_forward.1} parent=11 // pred_fallthru
        _
    $region12: #{up_forward.1} parent=5 // pred_fallthru
      _
    %p910 = scmp.lt.s32.totalorder %s73, 2
    // Predicated region
    $region137: #{up_forward.1} parent=5 // pred_check
      %p911 = pneg %p910
    $region138: #{up_forward.1} parent=5 // pred_check_branch
      %913 = sbr.rel (%p911) target = $region140
    $region139: #{up_forward.1} parent=5 // pred_region
      // Predicated region
      $region141: #{up_forward.1} parent=139 // pred_check
        %p914 = pneg %p93
      $region142: #{up_forward.1} parent=139 // pred_check_branch
        %916 = sbr.rel (%p914) target = $region144
      $region143: #{up_forward.1} parent=139 // pred_region
        %p917 = scmp.lt.s32.totalorder %s73, 1
        %s918 = scalar_select %p917, %s73, 1
        %s919 = smul.addr %s918, 2
        %s920 = smul.addr %s919, 8
        %s921 = scalar_lea.vmem %s1, %s920
      $region144: #{up_forward.1} parent=139 // pred_fallthru
        _
      // Predicated region
      $region145: #{up_forward.1} parent=139 // pred_check
        %p922 = pneg %p119
      $region146: #{up_forward.1} parent=139 // pred_check_branch
        %924 = sbr.rel (%p922) target = $region148
      $region147: #{up_forward.1} parent=139 // pred_region
        %p925 = scmp.lt.s32.totalorder %s73, 1
        %s926 = scalar_select %p925, %s73, 1
        %s927 = smul.addr %s926, 8
        %s928 = smul.addr %s927, 8
        %s929 = scalar_lea.vmem %s3, %s928
      $region148: #{up_forward.1} parent=139 // pred_fallthru
        _
    $region140: #{up_forward.1} parent=5 // pred_fallthru
      _
    %p930 = scmp.le.s32.totalorder 1, %s73
    %p931 = scmp.lt.s32.totalorder %s73, 3
    %p932 = pnand %p930, %p931
    %p933 = pneg %p932
    // Predicated region
    $region149: #{up_forward.1} parent=5 // pred_check
      _
    $region150: #{up_forward.1} parent=5 // pred_check_branch
      %935 = sbr.rel (%p932) target = $region152
    $region151: #{up_forward.1} parent=5 // pred_region
      %s936 = ssub.s32 %s73, 1
      %p937 = scmp.lt.s32.totalorder %s78, 1
      %s938 = scalar_select %p937, %s78, 1
      %s939 = smul.addr %s938, 2
      %s940 = smul.addr %s939, 8
      %s941 = scalar_lea.vmem %s1, %s940
      %p942 = pneg %p99
      %p943 = pneg %p96
      %p944 = scmp.lt.s32.totalorder %s78, 1
      %s945 = scalar_select %p944, %s78, 1
      %s946 = smul.addr %s945, 8
      %s947 = smul.addr %s946, 8
      %s948 = scalar_lea.vmem %s3, %s947
      %p949 = pneg %p125
      %p950 = pneg %p122
      %p951 = pneg %p146
      %p952 = pneg %p143
      %p953 = pneg %p167
      %p954 = pneg %p164
      %p955 = pneg %p188
      %p956 = pneg %p185
      %p957 = pneg %p209
      %p958 = pneg %p206
      %p959 = pneg %p230
      %p960 = pneg %p227
      %p961 = pneg %p251
      %p962 = pneg %p248
      %p963 = pneg %p272
      %p964 = pneg %p269
      %p965 = pneg %p293
      %p966 = pneg %p290
      %p967 = pneg %p314
      %p968 = pneg %p311
      %p969 = pneg %p335
      %p970 = pneg %p332
      %p971 = pneg %p356
      %p972 = pneg %p353
      %p973 = pneg %p377
      %p974 = pneg %p374
      %p975 = pneg %p398
      %p976 = pneg %p395
      %p977 = pneg %p419
      %p978 = pneg %p416
      %p979 = pneg %p440
      %p980 = pneg %p437
      %p981 = pneg %p461
      %p982 = pneg %p458
      %p983 = pneg %p482
      %p984 = pneg %p479
      %p985 = pneg %p503
      %p986 = pneg %p500
      %p987 = pneg %p524
      %p988 = pneg %p521
      %p989 = pneg %p545
      %p990 = pneg %p542
      %p991 = pneg %p566
      %p992 = pneg %p563
      %p993 = pneg %p587
      %p994 = pneg %p584
      %p995 = pneg %p608
      %p996 = pneg %p605
      %p997 = pneg %p629
      %p998 = pneg %p626
      %p999 = pneg %p650
      %p1000 = pneg %p647
      %p1001 = pneg %p671
      %p1002 = pneg %p668
      %p1003 = pneg %p692
      %p1004 = pneg %p689
      %p1005 = pneg %p713
      %p1006 = pneg %p710
      %p1007 = pneg %p734
      %p1008 = pneg %p731
      %p1009 = pneg %p755
      %p1010 = pneg %p752
      %p1011 = pneg %p776
      %p1012 = pneg %p773
      %p1013 = pneg %p802
      %p1014 = pneg %p799
      %p1015 = scmp.lt.s32.totalorder %s78, 1
      %s1016 = scalar_select %p1015, %s78, 1
      %s1017 = smul.addr %s1016, 8
      %s1018 = smul.addr %s1017, 8
      %s1019 = scalar_lea.vmem %s67, %s1018
      %p1020 = scmp.lt.s32.totalorder %s78, 1
      %s1021 = scalar_select %p1020, %s78, 1
      %s1022 = smul.addr %s1021, 2
      %s1023 = smul.addr %s1022, 8
      %s1024 = scalar_lea.vmem %s1, %s1023
      %p1025 = scmp.lt.s32.totalorder %s78, 1
      %s1026 = scalar_select %p1025, %s78, 1
      %s1027 = smul.addr %s1026, 8
      %s1028 = smul.addr %s1027, 8
      %s1029 = scalar_lea.vmem %s3, %s1028
      %p1030 = scmp.lt.s32.totalorder %s78, 1
      %s1031 = scalar_select %p1030, %s78, 1
      %s1032 = smul.addr %s1031, 8
      %s1033 = smul.addr %s1032, 8
      %s1034 = scalar_lea.vmem %s67, %s1033
      %v1035 = vld [vmem:[%s7] sm:$0xff]
      %v1036 = vld [vmem:[%s7 + $0x8] sm:$0xff]
      %v1037 = vld [vmem:[%s7 + $0x10] sm:$0xf]
      %v1038 = vld [vmem:[%s7 + $0x18] sm:$0xf]
      %v1039 = vld [vmem:[%s9] sm:$0xff]
      %v1040 = vld [vmem:[%s9 + $0x8] sm:$0xff]
      %v1041 = vld [vmem:[%s9 + $0x10] sm:$0xff]
      %v1042 = vld [vmem:[%s9 + $0x18] sm:$0xff]
      %v1043 = vld [vmem:[%s9 + $0x20] sm:$0xff]
      %v1044 = vld [vmem:[%s9 + $0x28] sm:$0xff]
      %v1045 = vld [vmem:[%s9 + $0x30] sm:$0xff]
      %v1046 = vld [vmem:[%s9 + $0x38] sm:$0xff]
      %v1047 = vld [vmem:[%s9 + $0x40] sm:$0xff]
      %v1048 = vld [vmem:[%s9 + $0x48] sm:$0xff]
      %v1049 = vld [vmem:[%s9 + $0x50] sm:$0xff]
      %v1050 = vld [vmem:[%s9 + $0x58] sm:$0xff]
      %v1051 = vld [vmem:[%s9 + $0x60] sm:$0xff]
      %v1052 = vld [vmem:[%s9 + $0x68] sm:$0xff]
      %v1053 = vld [vmem:[%s9 + $0x70] sm:$0xff]
      %v1054 = vld [vmem:[%s9 + $0x78] sm:$0xff]
      %v1055 = vld [vmem:[%s9 + $0x80] sm:$0xff]
      %v1056 = vld [vmem:[%s9 + $0x88] sm:$0xff]
      %v1057 = vld [vmem:[%s9 + $0x90] sm:$0xff]
      %v1058 = vld [vmem:[%s9 + $0x98] sm:$0xff]
      %v1059 = vld [vmem:[%s9 + $0xa0] sm:$0xff]
      %v1060 = vld [vmem:[%s9 + $0xa8] sm:$0xff]
      %v1061 = vld [vmem:[%s9 + $0xb0] sm:$0xff]
      %v1062 = vld [vmem:[%s9 + $0xb8] sm:$0xff]
      %v1063 = vld [vmem:[%s1024] sm:$0xff]
      %v1064 = vld [vmem:[%s1024 + $0x8] sm:$0xff]
      %v1065 = vld [vmem:[%s1029] sm:$0xff]
      %v1066 = vld [vmem:[%s1029 + $0x8] sm:$0xff]
      %v1067 = vld [vmem:[%s1029 + $0x10] sm:$0xff]
      %v1068 = vld [vmem:[%s1029 + $0x18] sm:$0xff]
      %v1069 = vld [vmem:[%s1029 + $0x20] sm:$0xff]
      %v1070 = vld [vmem:[%s1029 + $0x28] sm:$0xff]
      %v1071 = vld [vmem:[%s1029 + $0x30] sm:$0xff]
      %v1072 = vld [vmem:[%s1029 + $0x38] sm:$0xff]
      %v1073 = vld [vmem:[%s5] sm:$0xff]
      %v1074 = vld [vmem:[%s5 + $0x8] sm:$0xff]
      %v1075 = vld [vmem:[%s5 + $0x10] sm:$0xff]
      %v1076 = vld [vmem:[%s5 + $0x18] sm:$0xff]
      %v1077 = vld [vmem:[%s5 + $0x20] sm:$0xff]
      %v1078 = vld [vmem:[%s5 + $0x28] sm:$0xff]
      %v1079 = vld [vmem:[%s5 + $0x30] sm:$0xff]
      %v1080 = vld [vmem:[%s5 + $0x38] sm:$0xff]
      %vm1081 = vcmask 130048
      %v1083 = vsel %vm1081, %v1073, 0
      %v1086 = vsel %vm1081, %v1074, 0
      %v1089 = vsel %vm1081, %v1075, 0
      %v1092 = vsel %vm1081, %v1076, 0
      %v1095 = vsel %vm1081, %v1077, 0
      %v1098 = vsel %vm1081, %v1078, 0
      %v1101 = vsel %vm1081, %v1079, 0
      %v1104 = vsel %vm1081, %v1080, 0
      %1106 = vmatprep.subr.mxu0 0.0
      %1107 = vmatpush1.msra.mxu0 %v1063
      %1108 = vmatprep.subr.mxu0 0.0
      %1109 = vmatpush1.msra.mxu0 %v1064
      %1110 = vmatprep.subr.mxu0 0.0
      %1111 = vmatpush1.msra.mxu0 0.0
      %1112 = vmatprep.subr.mxu0 0.0
      %1113 = vmatpush1.msra.mxu0 0.0
      %1114 = vmatprep.subr.mxu0 0.0
      %1115 = vmatpush1.msra.mxu0 0.0
      %1116 = vmatprep.subr.mxu0 0.0
      %1117 = vmatpush1.msra.mxu0 0.0
      %1118 = vmatprep.subr.mxu0 0.0
      %1119 = vmatpush1.msra.mxu0 0.0
      %1120 = vmatprep.subr.mxu0 0.0
      %1121 = vmatpush1.msra.mxu0 0.0
      %1122 = vmatprep.subr.mxu0 0.0
      %1123 = vmatpush1.msra.mxu0 0.0
      %1124 = vmatprep.subr.mxu0 0.0
      %1125 = vmatpush1.msra.mxu0 0.0
      %1126 = vmatprep.subr.mxu0 0.0
      %1127 = vmatpush1.msra.mxu0 0.0
      %1128 = vmatprep.subr.mxu0 0.0
      %1129 = vmatpush1.msra.mxu0 0.0
      %1130 = vmatprep.subr.mxu0 0.0
      %1131 = vmatpush1.msra.mxu0 0.0
      %1132 = vmatprep.subr.mxu0 0.0
      %1133 = vmatpush1.msra.mxu0 0.0
      %1134 = vmatprep.subr.mxu0 0.0
      %1135 = vmatpush1.msra.mxu0 0.0
      %1136 = vmatprep.subr.mxu0 0.0
      %1137 = vmatpush1.msra.mxu0 0.0
      %1138 = vmatprep.subr.mxu0 0.0
      %1139 = vmatpush1.msra.mxu0 0.0
      %1140 = vmatprep.subr.mxu0 0.0
      %1141 = vmatpush1.msra.mxu0 0.0
      %1142 = vmatprep.subr.mxu0 0.0
      %1143 = vmatpush1.msra.mxu0 0.0
      %1144 = vmatprep.subr.mxu0 0.0
      %1145 = vmatpush1.msra.mxu0 0.0
      %1146 = vmatprep.subr.mxu0 0.0
      %1147 = vmatpush1.msra.mxu0 0.0
      %1148 = vmatprep.subr.mxu0 0.0
      %1149 = vmatpush1.msra.mxu0 0.0
      %1150 = vmatprep.subr.mxu0 0.0
      %1151 = vmatpush1.msra.mxu0 0.0
      %1152 = vmatprep.subr.mxu0 0.0
      %1153 = vmatpush1.msra.mxu0 0.0
      %1154 = vmatprep.subr.mxu0 0.0
      %1155 = vmatpush1.msra.mxu0 0.0
      %1156 = vmatprep.subr.mxu0 0.0
      %1157 = vmatpush1.msra.mxu0 0.0
      %1158 = vmatprep.subr.mxu0 0.0
      %1159 = vmatpush1.msra.mxu0 0.0
      %1160 = vmatprep.subr.mxu0 0.0
      %1161 = vmatpush1.msra.mxu0 0.0
      %1162 = vmatprep.subr.mxu0 0.0
      %1163 = vmatpush1.msra.mxu0 0.0
      %1164 = vmatprep.subr.mxu0 0.0
      %1165 = vmatpush1.msra.mxu0 0.0
      %1166 = vmatprep.subr.mxu0 0.0
      %1167 = vmatpush1.msra.mxu0 0.0
      %1168 = vmatprep.subr.mxu0 0.0
      %1169 = vmatpush1.msra.mxu0 0.0
      %1170 = vmatprep.mubr.f32.mxu0 0.0
      %1171 = vmatmul.mubr.f32.gmra.mrb[0].mxu0 %v1083
      %v1172 = vpop.f32.mrb[0].mxu0
      %v1173 = vadd.f32 0.0, %v1172
      %v1174 = vpop.f32.mrb[0].mxu0
      %1175 = vmatprep.mubr.f32.mxu0 0.0
      %1176 = vmatmul.mubr.f32.gmra.mrb[0].mxu0 %v1086
      %v1177 = vpop.f32.mrb[0].mxu0
      %v1178 = vadd.f32 0.0, %v1177
      %v1179 = vpop.f32.mrb[0].mxu0
      %1180 = vmatprep.mubr.f32.mxu0 0.0
      %1181 = vmatmul.mubr.f32.gmra.mrb[0].mxu0 %v1089
      %v1182 = vpop.f32.mrb[0].mxu0
      %v1183 = vadd.f32 0.0, %v1182
      %v1184 = vpop.f32.mrb[0].mxu0
      %1185 = vmatprep.mubr.f32.mxu0 0.0
      %1186 = vmatmul.mubr.f32.gmra.mrb[0].mxu0 %v1092
      %v1187 = vpop.f32.mrb[0].mxu0
      %v1188 = vadd.f32 0.0, %v1187
      %v1189 = vpop.f32.mrb[0].mxu0
      %1190 = vmatprep.mubr.f32.mxu0 0.0
      %1191 = vmatmul.mubr.f32.gmra.mrb[0].mxu0 %v1095
      %v1192 = vpop.f32.mrb[0].mxu0
      %v1193 = vadd.f32 0.0, %v1192
      %v1194 = vpop.f32.mrb[0].mxu0
      %1195 = vmatprep.mubr.f32.mxu0 0.0
      %1196 = vmatmul.mubr.f32.gmra.mrb[0].mxu0 %v1098
      %v1197 = vpop.f32.mrb[0].mxu0
      %v1198 = vadd.f32 0.0, %v1197
      %v1199 = vpop.f32.mrb[0].mxu0
      %1200 = vmatprep.mubr.f32.mxu0 0.0
      %1201 = vmatmul.mubr.f32.gmra.mrb[0].mxu0 %v1101
      %v1202 = vpop.f32.mrb[0].mxu0
      %v1203 = vadd.f32 0.0, %v1202
      %v1204 = vpop.f32.mrb[0].mxu0
      %1205 = vmatprep.mubr.f32.mxu0 0.0
      %1206 = vmatmul.mubr.f32.gmra.mrb[0].mxu0 %v1104
      %v1207 = vpop.f32.mrb[0].mxu0
      %v1208 = vadd.f32 0.0, %v1207
      %v1209 = vpop.f32.mrb[0].mxu0
      %1210 = vdwg.mxu0
      %v1211 = vld [vmem:[%s11] sm:$0xf]
      %v1212 = vld [vmem:[%s13] sm:$0x3]
      %vm1213 = vcmask 15360
      %v1215 = vsel %vm1213, %v1065, 0
      %v1218 = vsel %vm1213, %v1066, 0
      %v1221 = vsel %vm1213, %v1067, 0
      %v1224 = vsel %vm1213, %v1068, 0
      %v1227 = vsel %vm1213, %v1069, 0
      %v1230 = vsel %vm1213, %v1070, 0
      %v1233 = vsel %vm1213, %v1071, 0
      %v1236 = vsel %vm1213, %v1072, 0
      %vm1238 = vcmask 1041408
      %v1240 = vsel %vm1238, %v1212, 0
      %1242 = vmatprep.subr.mxu0 0.0
      %1243 = vmatpush1.msra.mxu0 %v1240
      %1244 = vmatprep.subr.mxu0 0.0
      %1245 = vmatpush1.msra.mxu0 0.0
      %1246 = vmatprep.subr.mxu0 0.0
      %1247 = vmatpush1.msra.mxu0 0.0
      %1248 = vmatprep.subr.mxu0 0.0
      %1249 = vmatpush1.msra.mxu0 0.0
      %1250 = vmatprep.subr.mxu0 0.0
      %1251 = vmatpush1.msra.mxu0 0.0
      %1252 = vmatprep.subr.mxu0 0.0
      %1253 = vmatpush1.msra.mxu0 0.0
      %1254 = vmatprep.subr.mxu0 0.0
      %1255 = vmatpush1.msra.mxu0 0.0
      %1256 = vmatprep.subr.mxu0 0.0
      %1257 = vmatpush1.msra.mxu0 0.0
      %1258 = vmatprep.subr.mxu0 0.0
      %1259 = vmatpush1.msra.mxu0 0.0
      %1260 = vmatprep.subr.mxu0 0.0
      %1261 = vmatpush1.msra.mxu0 0.0
      %1262 = vmatprep.subr.mxu0 0.0
      %1263 = vmatpush1.msra.mxu0 0.0
      %1264 = vmatprep.subr.mxu0 0.0
      %1265 = vmatpush1.msra.mxu0 0.0
      %1266 = vmatprep.subr.mxu0 0.0
      %1267 = vmatpush1.msra.mxu0 0.0
      %1268 = vmatprep.subr.mxu0 0.0
      %1269 = vmatpush1.msra.mxu0 0.0
      %1270 = vmatprep.subr.mxu0 0.0
      %1271 = vmatpush1.msra.mxu0 0.0
      %1272 = vmatprep.subr.mxu0 0.0
      %1273 = vmatpush1.msra.mxu0 0.0
      %1274 = vmatprep.subr.mxu0 0.0
      %1275 = vmatpush1.msra.mxu0 0.0
      %1276 = vmatprep.subr.mxu0 0.0
      %1277 = vmatpush1.msra.mxu0 0.0
      %1278 = vmatprep.subr.mxu0 0.0
      %1279 = vmatpush1.msra.mxu0 0.0
      %1280 = vmatprep.subr.mxu0 0.0
      %1281 = vmatpush1.msra.mxu0 0.0
      %1282 = vmatprep.subr.mxu0 0.0
      %1283 = vmatpush1.msra.mxu0 0.0
      %1284 = vmatprep.subr.mxu0 0.0
      %1285 = vmatpush1.msra.mxu0 0.0
      %1286 = vmatprep.subr.mxu0 0.0
      %1287 = vmatpush1.msra.mxu0 0.0
      %1288 = vmatprep.subr.mxu0 0.0
      %1289 = vmatpush1.msra.mxu0 0.0
      %1290 = vmatprep.subr.mxu0 0.0
      %1291 = vmatpush1.msra.mxu0 0.0
      %1292 = vmatprep.subr.mxu0 0.0
      %1293 = vmatpush1.msra.mxu0 0.0
      %1294 = vmatprep.subr.mxu0 0.0
      %1295 = vmatpush1.msra.mxu0 0.0
      %1296 = vmatprep.subr.mxu0 0.0
      %1297 = vmatpush1.msra.mxu0 0.0
      %1298 = vmatprep.subr.mxu0 0.0
      %1299 = vmatpush1.msra.mxu0 0.0
      %1300 = vmatprep.subr.mxu0 0.0
      %1301 = vmatpush1.msra.mxu0 0.0
      %1302 = vmatprep.subr.mxu0 0.0
      %1303 = vmatpush1.msra.mxu0 0.0
      %1304 = vmatprep.subr.mxu0 0.0
      %1305 = vmatpush1.msra.mxu0 0.0
      %1306 = vmatprep.mubr.f32.mxu0 0.0
      %1307 = vmatmul.mubr.f32.gmra.mrb[0].mxu0 %v1215
      %v1308 = vpop.f32.mrb[0].mxu0
      %v1309 = vadd.f32 0.0, %v1308
      %v1310 = vpop.f32.mrb[0].mxu0
      %1311 = vmatprep.mubr.f32.mxu0 0.0
      %1312 = vmatmul.mubr.f32.gmra.mrb[0].mxu0 %v1218
      %v1313 = vpop.f32.mrb[0].mxu0
      %v1314 = vadd.f32 0.0, %v1313
      %v1315 = vpop.f32.mrb[0].mxu0
      %1316 = vmatprep.mubr.f32.mxu0 0.0
      %1317 = vmatmul.mubr.f32.gmra.mrb[0].mxu0 %v1221
      %v1318 = vpop.f32.mrb[0].mxu0
      %v1319 = vadd.f32 0.0, %v1318
      %v1320 = vpop.f32.mrb[0].mxu0
      %1321 = vmatprep.mubr.f32.mxu0 0.0
      %1322 = vmatmul.mubr.f32.gmra.mrb[0].mxu0 %v1224
      %v1323 = vpop.f32.mrb[0].mxu0
      %v1324 = vadd.f32 0.0, %v1323
      %v1325 = vpop.f32.mrb[0].mxu0
      %1326 = vmatprep.mubr.f32.mxu0 0.0
      %1327 = vmatmul.mubr.f32.gmra.mrb[0].mxu0 %v1227
      %v1328 = vpop.f32.mrb[0].mxu0
      %v1329 = vadd.f32 0.0, %v1328
      %v1330 = vpop.f32.mrb[0].mxu0
      %1331 = vmatprep.mubr.f32.mxu0 0.0
      %1332 = vmatmul.mubr.f32.gmra.mrb[0].mxu0 %v1230
      %v1333 = vpop.f32.mrb[0].mxu0
      %v1334 = vadd.f32 0.0, %v1333
      %v1335 = vpop.f32.mrb[0].mxu0
      %1336 = vmatprep.mubr.f32.mxu0 0.0
      %1337 = vmatmul.mubr.f32.gmra.mrb[0].mxu0 %v1233
      %v1338 = vpop.f32.mrb[0].mxu0
      %v1339 = vadd.f32 0.0, %v1338
      %v1340 = vpop.f32.mrb[0].mxu0
      %1341 = vmatprep.mubr.f32.mxu0 0.0
      %1342 = vmatmul.mubr.f32.gmra.mrb[0].mxu0 %v1236
      %v1343 = vpop.f32.mrb[0].mxu0
      %v1344 = vadd.f32 0.0, %v1343
      %v1345 = vpop.f32.mrb[0].mxu0
      %1346 = vdwg.mxu0
      %vm1347 = vcmask 31744
      %v1349 = vsel %vm1347, %v1173, 0
      %v1352 = vsel %vm1347, %v1178, 0
      %v1355 = vsel %vm1347, %v1183, 0
      %v1358 = vsel %vm1347, %v1188, 0
      %v1361 = vsel %vm1347, %v1193, 0
      %v1364 = vsel %vm1347, %v1198, 0
      %v1367 = vsel %vm1347, %v1203, 0
      %v1370 = vsel %vm1347, %v1208, 0
      %vm1372 = vcmask 1043456
      %v1374 = vsel %vm1372, %v1211, 0
      %1376 = vmatprep.subr.mxu0 0.0
      %1377 = vmatpush1.msra.mxu0 %v1374
      %1378 = vmatprep.subr.mxu0 0.0
      %1379 = vmatpush1.msra.mxu0 0.0
      %1380 = vmatprep.subr.mxu0 0.0
      %1381 = vmatpush1.msra.mxu0 0.0
      %1382 = vmatprep.subr.mxu0 0.0
      %1383 = vmatpush1.msra.mxu0 0.0
      %1384 = vmatprep.subr.mxu0 0.0
      %1385 = vmatpush1.msra.mxu0 0.0
      %1386 = vmatprep.subr.mxu0 0.0
      %1387 = vmatpush1.msra.mxu0 0.0
      %1388 = vmatprep.subr.mxu0 0.0
      %1389 = vmatpush1.msra.mxu0 0.0
      %1390 = vmatprep.subr.mxu0 0.0
      %1391 = vmatpush1.msra.mxu0 0.0
      %1392 = vmatprep.subr.mxu0 0.0
      %1393 = vmatpush1.msra.mxu0 0.0
      %1394 = vmatprep.subr.mxu0 0.0
      %1395 = vmatpush1.msra.mxu0 0.0
      %1396 = vmatprep.subr.mxu0 0.0
      %1397 = vmatpush1.msra.mxu0 0.0
      %1398 = vmatprep.subr.mxu0 0.0
      %1399 = vmatpush1.msra.mxu0 0.0
      %1400 = vmatprep.subr.mxu0 0.0
      %1401 = vmatpush1.msra.mxu0 0.0
      %1402 = vmatprep.subr.mxu0 0.0
      %1403 = vmatpush1.msra.mxu0 0.0
      %1404 = vmatprep.subr.mxu0 0.0
      %1405 = vmatpush1.msra.mxu0 0.0
      %1406 = vmatprep.subr.mxu0 0.0
      %1407 = vmatpush1.msra.mxu0 0.0
      %1408 = vmatprep.subr.mxu0 0.0
      %1409 = vmatpush1.msra.mxu0 0.0
      %1410 = vmatprep.subr.mxu0 0.0
      %1411 = vmatpush1.msra.mxu0 0.0
      %1412 = vmatprep.subr.mxu0 0.0
      %1413 = vmatpush1.msra.mxu0 0.0
      %1414 = vmatprep.subr.mxu0 0.0
      %1415 = vmatpush1.msra.mxu0 0.0
      %1416 = vmatprep.subr.mxu0 0.0
      %1417 = vmatpush1.msra.mxu0 0.0
      %1418 = vmatprep.subr.mxu0 0.0
      %1419 = vmatpush1.msra.mxu0 0.0
      %1420 = vmatprep.subr.mxu0 0.0
      %1421 = vmatpush1.msra.mxu0 0.0
      %1422 = vmatprep.subr.mxu0 0.0
      %1423 = vmatpush1.msra.mxu0 0.0
      %1424 = vmatprep.subr.mxu0 0.0
      %1425 = vmatpush1.msra.mxu0 0.0
      %1426 = vmatprep.subr.mxu0 0.0
      %1427 = vmatpush1.msra.mxu0 0.0
      %1428 = vmatprep.subr.mxu0 0.0
      %1429 = vmatpush1.msra.mxu0 0.0
      %1430 = vmatprep.subr.mxu0 0.0
      %1431 = vmatpush1.msra.mxu0 0.0
      %1432 = vmatprep.subr.mxu0 0.0
      %1433 = vmatpush1.msra.mxu0 0.0
      %1434 = vmatprep.subr.mxu0 0.0
      %1435 = vmatpush1.msra.mxu0 0.0
      %1436 = vmatprep.subr.mxu0 0.0
      %1437 = vmatpush1.msra.mxu0 0.0
      %1438 = vmatprep.subr.mxu0 0.0
      %1439 = vmatpush1.msra.mxu0 0.0
      %1440 = vmatprep.mubr.f32.mxu0 0.0
      %1441 = vmatmul.mubr.f32.gmra.mrb[0].mxu0 %v1349
      %v1442 = vpop.f32.mrb[0].mxu0
      %v1443 = vadd.f32 %v1309, %v1442
      %v1444 = vpop.f32.mrb[0].mxu0
      %1445 = vmatprep.mubr.f32.mxu0 0.0
      %1446 = vmatmul.mubr.f32.gmra.mrb[0].mxu0 %v1352
      %v1447 = vpop.f32.mrb[0].mxu0
      %v1448 = vadd.f32 %v1314, %v1447
      %v1449 = vpop.f32.mrb[0].mxu0
      %1450 = vmatprep.mubr.f32.mxu0 0.0
      %1451 = vmatmul.mubr.f32.gmra.mrb[0].mxu0 %v1355
      %v1452 = vpop.f32.mrb[0].mxu0
      %v1453 = vadd.f32 %v1319, %v1452
      %v1454 = vpop.f32.mrb[0].mxu0
      %1455 = vmatprep.mubr.f32.mxu0 0.0
      %1456 = vmatmul.mubr.f32.gmra.mrb[0].mxu0 %v1358
      %v1457 = vpop.f32.mrb[0].mxu0
      %v1458 = vadd.f32 %v1324, %v1457
      %v1459 = vpop.f32.mrb[0].mxu0
      %1460 = vmatprep.mubr.f32.mxu0 0.0
      %1461 = vmatmul.mubr.f32.gmra.mrb[0].mxu0 %v1361
      %v1462 = vpop.f32.mrb[0].mxu0
      %v1463 = vadd.f32 %v1329, %v1462
      %v1464 = vpop.f32.mrb[0].mxu0
      %1465 = vmatprep.mubr.f32.mxu0 0.0
      %1466 = vmatmul.mubr.f32.gmra.mrb[0].mxu0 %v1364
      %v1467 = vpop.f32.mrb[0].mxu0
      %v1468 = vadd.f32 %v1334, %v1467
      %v1469 = vpop.f32.mrb[0].mxu0
      %1470 = vmatprep.mubr.f32.mxu0 0.0
      %1471 = vmatmul.mubr.f32.gmra.mrb[0].mxu0 %v1367
      %v1472 = vpop.f32.mrb[0].mxu0
      %v1473 = vadd.f32 %v1339, %v1472
      %v1474 = vpop.f32.mrb[0].mxu0
      %1475 = vmatprep.mubr.f32.mxu0 0.0
      %1476 = vmatmul.mubr.f32.gmra.mrb[0].mxu0 %v1370
      %v1477 = vpop.f32.mrb[0].mxu0
      %v1478 = vadd.f32 %v1344, %v1477
      %v1479 = vpop.f32.mrb[0].mxu0
      %1480 = vdwg.mxu0
      %v1481 = vld [vmem:[%s15] sm:$0xf]
      %v1482 = vld [vmem:[%s17] sm:$0x3]
      %v1484 = vsel %vm1238, %v1482, 0
      %1486 = vmatprep.subr.mxu0 0.0
      %1487 = vmatpush1.msra.mxu0 %v1484
      %1488 = vmatprep.subr.mxu0 0.0
      %1489 = vmatpush1.msra.mxu0 0.0
      %1490 = vmatprep.subr.mxu0 0.0
      %1491 = vmatpush1.msra.mxu0 0.0
      %1492 = vmatprep.subr.mxu0 0.0
      %1493 = vmatpush1.msra.mxu0 0.0
      %1494 = vmatprep.subr.mxu0 0.0
      %1495 = vmatpush1.msra.mxu0 0.0
      %1496 = vmatprep.subr.mxu0 0.0
      %1497 = vmatpush1.msra.mxu0 0.0
      %1498 = vmatprep.subr.mxu0 0.0
      %1499 = vmatpush1.msra.mxu0 0.0
      %1500 = vmatprep.subr.mxu0 0.0
      %1501 = vmatpush1.msra.mxu0 0.0
      %1502 = vmatprep.subr.mxu0 0.0
      %1503 = vmatpush1.msra.mxu0 0.0
      %1504 = vmatprep.subr.mxu0 0.0
      %1505 = vmatpush1.msra.mxu0 0.0
      %1506 = vmatprep.subr.mxu0 0.0
      %1507 = vmatpush1.msra.mxu0 0.0
      %1508 = vmatprep.subr.mxu0 0.0
      %1509 = vmatpush1.msra.mxu0 0.0
      %1510 = vmatprep.subr.mxu0 0.0
      %1511 = vmatpush1.msra.mxu0 0.0
      %1512 = vmatprep.subr.mxu0 0.0
      %1513 = vmatpush1.msra.mxu0 0.0
      %1514 = vmatprep.subr.mxu0 0.0
      %1515 = vmatpush1.msra.mxu0 0.0
      %1516 = vmatprep.subr.mxu0 0.0
      %1517 = vmatpush1.msra.mxu0 0.0
      %1518 = vmatprep.subr.mxu0 0.0
      %1519 = vmatpush1.msra.mxu0 0.0
      %1520 = vmatprep.subr.mxu0 0.0
      %1521 = vmatpush1.msra.mxu0 0.0
      %1522 = vmatprep.subr.mxu0 0.0
      %1523 = vmatpush1.msra.mxu0 0.0
      %1524 = vmatprep.subr.mxu0 0.0
      %1525 = vmatpush1.msra.mxu0 0.0
      %1526 = vmatprep.subr.mxu0 0.0
      %1527 = vmatpush1.msra.mxu0 0.0
      %1528 = vmatprep.subr.mxu0 0.0
      %1529 = vmatpush1.msra.mxu0 0.0
      %1530 = vmatprep.subr.mxu0 0.0
      %1531 = vmatpush1.msra.mxu0 0.0
      %1532 = vmatprep.subr.mxu0 0.0
      %1533 = vmatpush1.msra.mxu0 0.0
      %1534 = vmatprep.subr.mxu0 0.0
      %1535 = vmatpush1.msra.mxu0 0.0
      %1536 = vmatprep.subr.mxu0 0.0
      %1537 = vmatpush1.msra.mxu0 0.0
      %1538 = vmatprep.subr.mxu0 0.0
      %1539 = vmatpush1.msra.mxu0 0.0
      %1540 = vmatprep.subr.mxu0 0.0
      %1541 = vmatpush1.msra.mxu0 0.0
      %1542 = vmatprep.subr.mxu0 0.0
      %1543 = vmatpush1.msra.mxu0 0.0
      %1544 = vmatprep.subr.mxu0 0.0
      %1545 = vmatpush1.msra.mxu0 0.0
      %1546 = vmatprep.subr.mxu0 0.0
      %1547 = vmatpush1.msra.mxu0 0.0
      %1548 = vmatprep.subr.mxu0 0.0
      %1549 = vmatpush1.msra.mxu0 0.0
      %1550 = vmatprep.mubr.f32.mxu0 0.0
      %1551 = vmatmul.mubr.f32.gmra.mrb[0].mxu0 %v1215
      %v1552 = vpop.f32.mrb[0].mxu0
      %v1553 = vadd.f32 0.0, %v1552
      %v1554 = vpop.f32.mrb[0].mxu0
      %1555 = vmatprep.mubr.f32.mxu0 0.0
      %1556 = vmatmul.mubr.f32.gmra.mrb[0].mxu0 %v1218
      %v1557 = vpop.f32.mrb[0].mxu0
      %v1558 = vadd.f32 0.0, %v1557
      %v1559 = vpop.f32.mrb[0].mxu0
      %1560 = vmatprep.mubr.f32.mxu0 0.0
      %1561 = vmatmul.mubr.f32.gmra.mrb[0].mxu0 %v1221
      %v1562 = vpop.f32.mrb[0].mxu0
      %v1563 = vadd.f32 0.0, %v1562
      %v1564 = vpop.f32.mrb[0].mxu0
      %1565 = vmatprep.mubr.f32.mxu0 0.0
      %1566 = vmatmul.mubr.f32.gmra.mrb[0].mxu0 %v1224
      %v1567 = vpop.f32.mrb[0].mxu0
      %v1568 = vadd.f32 0.0, %v1567
      %v1569 = vpop.f32.mrb[0].mxu0
      %1570 = vmatprep.mubr.f32.mxu0 0.0
      %1571 = vmatmul.mubr.f32.gmra.mrb[0].mxu0 %v1227
      %v1572 = vpop.f32.mrb[0].mxu0
      %v1573 = vadd.f32 0.0, %v1572
      %v1574 = vpop.f32.mrb[0].mxu0
      %1575 = vmatprep.mubr.f32.mxu0 0.0
      %1576 = vmatmul.mubr.f32.gmra.mrb[0].mxu0 %v1230
      %v1577 = vpop.f32.mrb[0].mxu0
      %v1578 = vadd.f32 0.0, %v1577
      %v1579 = vpop.f32.mrb[0].mxu0
      %1580 = vmatprep.mubr.f32.mxu0 0.0
      %1581 = vmatmul.mubr.f32.gmra.mrb[0].mxu0 %v1233
      %v1582 = vpop.f32.mrb[0].mxu0
      %v1583 = vadd.f32 0.0, %v1582
      %v1584 = vpop.f32.mrb[0].mxu0
      %1585 = vmatprep.mubr.f32.mxu0 0.0
      %1586 = vmatmul.mubr.f32.gmra.mrb[0].mxu0 %v1236
      %v1587 = vpop.f32.mrb[0].mxu0
      %v1588 = vadd.f32 0.0, %v1587
      %v1589 = vpop.f32.mrb[0].mxu0
      %1590 = vdwg.mxu0
      %v1592 = vsel %vm1372, %v1481, 0
      %1594 = vmatprep.subr.mxu0 0.0
      %1595 = vmatpush1.msra.mxu0 %v1592
      %1596 = vmatprep.subr.mxu0 0.0
      %1597 = vmatpush1.msra.mxu0 0.0
      %1598 = vmatprep.subr.mxu0 0.0
      %1599 = vmatpush1.msra.mxu0 0.0
      %1600 = vmatprep.subr.mxu0 0.0
      %1601 = vmatpush1.msra.mxu0 0.0
      %1602 = vmatprep.subr.mxu0 0.0
      %1603 = vmatpush1.msra.mxu0 0.0
      %1604 = vmatprep.subr.mxu0 0.0
      %1605 = vmatpush1.msra.mxu0 0.0
      %1606 = vmatprep.subr.mxu0 0.0
      %1607 = vmatpush1.msra.mxu0 0.0
      %1608 = vmatprep.subr.mxu0 0.0
      %1609 = vmatpush1.msra.mxu0 0.0
      %1610 = vmatprep.subr.mxu0 0.0
      %1611 = vmatpush1.msra.mxu0 0.0
      %1612 = vmatprep.subr.mxu0 0.0
      %1613 = vmatpush1.msra.mxu0 0.0
      %1614 = vmatprep.subr.mxu0 0.0
      %1615 = vmatpush1.msra.mxu0 0.0
      %1616 = vmatprep.subr.mxu0 0.0
      %1617 = vmatpush1.msra.mxu0 0.0
      %1618 = vmatprep.subr.mxu0 0.0
      %1619 = vmatpush1.msra.mxu0 0.0
      %1620 = vmatprep.subr.mxu0 0.0
      %1621 = vmatpush1.msra.mxu0 0.0
      %1622 = vmatprep.subr.mxu0 0.0
      %1623 = vmatpush1.msra.mxu0 0.0
      %1624 = vmatprep.subr.mxu0 0.0
      %1625 = vmatpush1.msra.mxu0 0.0
      %1626 = vmatprep.subr.mxu0 0.0
      %1627 = vmatpush1.msra.mxu0 0.0
      %1628 = vmatprep.subr.mxu0 0.0
      %1629 = vmatpush1.msra.mxu0 0.0
      %1630 = vmatprep.subr.mxu0 0.0
      %1631 = vmatpush1.msra.mxu0 0.0
      %1632 = vmatprep.subr.mxu0 0.0
      %1633 = vmatpush1.msra.mxu0 0.0
      %1634 = vmatprep.subr.mxu0 0.0
      %1635 = vmatpush1.msra.mxu0 0.0
      %1636 = vmatprep.subr.mxu0 0.0
      %1637 = vmatpush1.msra.mxu0 0.0
      %1638 = vmatprep.subr.mxu0 0.0
      %1639 = vmatpush1.msra.mxu0 0.0
      %1640 = vmatprep.subr.mxu0 0.0
      %1641 = vmatpush1.msra.mxu0 0.0
      %1642 = vmatprep.subr.mxu0 0.0
      %1643 = vmatpush1.msra.mxu0 0.0
      %1644 = vmatprep.subr.mxu0 0.0
      %1645 = vmatpush1.msra.mxu0 0.0
      %1646 = vmatprep.subr.mxu0 0.0
      %1647 = vmatpush1.msra.mxu0 0.0
      %1648 = vmatprep.subr.mxu0 0.0
      %1649 = vmatpush1.msra.mxu0 0.0
      %1650 = vmatprep.subr.mxu0 0.0
      %1651 = vmatpush1.msra.mxu0 0.0
      %1652 = vmatprep.subr.mxu0 0.0
      %1653 = vmatpush1.msra.mxu0 0.0
      %1654 = vmatprep.subr.mxu0 0.0
      %1655 = vmatpush1.msra.mxu0 0.0
      %1656 = vmatprep.subr.mxu0 0.0
      %1657 = vmatpush1.msra.mxu0 0.0
      %1658 = vmatprep.mubr.f32.mxu0 0.0
      %1659 = vmatmul.mubr.f32.gmra.mrb[0].mxu0 %v1349
      %v1660 = vpop.f32.mrb[0].mxu0
      %v1661 = vadd.f32 %v1553, %v1660
      %v1662 = vpop.f32.mrb[0].mxu0
      %1663 = vmatprep.mubr.f32.mxu0 0.0
      %1664 = vmatmul.mubr.f32.gmra.mrb[0].mxu0 %v1352
      %v1665 = vpop.f32.mrb[0].mxu0
      %v1666 = vadd.f32 %v1558, %v1665
      %v1667 = vpop.f32.mrb[0].mxu0
      %1668 = vmatprep.mubr.f32.mxu0 0.0
      %1669 = vmatmul.mubr.f32.gmra.mrb[0].mxu0 %v1355
      %v1670 = vpop.f32.mrb[0].mxu0
      %v1671 = vadd.f32 %v1563, %v1670
      %v1672 = vpop.f32.mrb[0].mxu0
      %1673 = vmatprep.mubr.f32.mxu0 0.0
      %1674 = vmatmul.mubr.f32.gmra.mrb[0].mxu0 %v1358
      %v1675 = vpop.f32.mrb[0].mxu0
      %v1676 = vadd.f32 %v1568, %v1675
      %v1677 = vpop.f32.mrb[0].mxu0
      %1678 = vmatprep.mubr.f32.mxu0 0.0
      %1679 = vmatmul.mubr.f32.gmra.mrb[0].mxu0 %v1361
      %v1680 = vpop.f32.mrb[0].mxu0
      %v1681 = vadd.f32 %v1573, %v1680
      %v1682 = vpop.f32.mrb[0].mxu0
      %1683 = vmatprep.mubr.f32.mxu0 0.0
      %1684 = vmatmul.mubr.f32.gmra.mrb[0].mxu0 %v1364
      %v1685 = vpop.f32.mrb[0].mxu0
      %v1686 = vadd.f32 %v1578, %v1685
      %v1687 = vpop.f32.mrb[0].mxu0
      %1688 = vmatprep.mubr.f32.mxu0 0.0
      %1689 = vmatmul.mubr.f32.gmra.mrb[0].mxu0 %v1367
      %v1690 = vpop.f32.mrb[0].mxu0
      %v1691 = vadd.f32 %v1583, %v1690
      %v1692 = vpop.f32.mrb[0].mxu0
      %1693 = vmatprep.mubr.f32.mxu0 0.0
      %1694 = vmatmul.mubr.f32.gmra.mrb[0].mxu0 %v1370
      %v1695 = vpop.f32.mrb[0].mxu0
      %v1696 = vadd.f32 %v1588, %v1695
      %v1697 = vpop.f32.mrb[0].mxu0
      %1698 = vdwg.mxu0
      %v1699 = vld [vmem:[%s19] sm:$0xf]
      %v1700 = vld [vmem:[%s21] sm:$0x1]
      %v1701 = vld [vmem:[%s23] sm:$0xff]
      %v1702 = vld [vmem:[%s23 + $0x8] sm:$0xff]
      %v1703 = vld [vmem:[%s23 + $0x10] sm:$0xf]
      %v1704 = vld [vmem:[%s23 + $0x18] sm:$0xf]
      %v1705 = vld [vmem:[%s25] sm:$0xff]
      %v1706 = vld [vmem:[%s25 + $0x8] sm:$0xff]
      %v1707 = vld [vmem:[%s25 + $0x10] sm:$0xf]
      %v1708 = vld [vmem:[%s25 + $0x18] sm:$0xf]
      %v1709 = vld [vmem:[%s27] sm:$0xff]
      %v1710 = vld [vmem:[%s27 + $0x8] sm:$0xf]
      %v1711 = vld [vmem:[%s29] sm:$0x1]
      %v1712 = vld [vmem:[%s31] sm:$0xff]
      %v1713 = vld [vmem:[%s31 + $0x8] sm:$0xff]
      %v1714 = vld [vmem:[%s31 + $0x10] sm:$0xf]
      %v1715 = vld [vmem:[%s31 + $0x18] sm:$0xf]
      %v1716 = vld [vmem:[%s33] sm:$0x1]
      %v1717 = vld [vmem:[%s35] sm:$0xff]
      %v1718 = vld [vmem:[%s35 + $0x8] sm:$0xf]
      %v1719 = vld [vmem:[%s37] sm:$0x1]
      %v1720 = vld [vmem:[%s39] sm:$0x1]
      %v1721 = vlaneseq
      %v1722 = vshrl.u32 %v1721, 7
      %v1723 = vsub.s32 3, %v1722
      %v1724 = vrot.slane %v1699, %v1723
      %v1725 = vmul.f32 %v1724, %v1443
      %v1726 = vmul.f32 %v1724, %v1448
      %v1727 = vmul.f32 %v1724, %v1453
      %v1728 = vmul.f32 %v1724, %v1458
      %v1729 = vmul.f32 %v1724, %v1463
      %v1730 = vmul.f32 %v1724, %v1468
      %v1731 = vmul.f32 %v1724, %v1473
      %v1732 = vmul.f32 %v1724, %v1478
      %v1733 = vlaneseq
      %v1734 = vshrl.u32 %v1733, 7
      %v1735 = vadd.s32 %v1734, 8
      %v1736 = vadd.s32 %v1734, 16
      %v1737 = vadd.s32 %v1734, 24
      %v1738 = vadd.s32 %v1734, 32
      %v1739 = vadd.s32 %v1734, 40
      %v1740 = vadd.s32 %v1734, 48
      %v1741 = vadd.s32 %v1734, 56
      %v1742 = vlaneseq
      %v1743 = vand.u32 %v1742, 127
      %v1744 = vsub.s32 %v1734, 1
      %v1745 = vsub.s32 %v1735, 1
      %v1746 = vsub.s32 %v1736, 1
      %v1747 = vsub.s32 %v1737, 1
      %v1748 = vsub.s32 %v1738, 1
      %v1749 = vsub.s32 %v1739, 1
      %v1750 = vsub.s32 %v1740, 1
      %v1751 = vsub.s32 %v1741, 1
      %vm1752 = vcmp.eq.s32.totalorder %v1743, %v1744
      %vm1753 = vcmp.eq.s32.totalorder %v1743, %v1745
      %vm1754 = vcmp.eq.s32.totalorder %v1743, %v1746
      %vm1755 = vcmp.eq.s32.totalorder %v1743, %v1747
      %vm1756 = vcmp.eq.s32.totalorder %v1743, %v1748
      %vm1757 = vcmp.eq.s32.totalorder %v1743, %v1749
      %vm1758 = vcmp.eq.s32.totalorder %v1743, %v1750
      %vm1759 = vcmp.eq.s32.totalorder %v1743, %v1751
      %v1760 = vsel %vm1752, 1.0, 0.0
      %v1761 = vsel %vm1753, 1.0, 0.0
      %v1762 = vsel %vm1754, 1.0, 0.0
      %v1763 = vsel %vm1755, 1.0, 0.0
      %v1764 = vsel %vm1756, 1.0, 0.0
      %v1765 = vsel %vm1757, 1.0, 0.0
      %v1766 = vsel %vm1758, 1.0, 0.0
      %v1767 = vsel %vm1759, 1.0, 0.0
      %vm1768 = vcmask 523264
      %v1770 = vsel %vm1768, %v1760, 0
      %v1773 = vsel %vm1768, %v1761, 0
      %v1776 = vsel %vm1768, %v1762, 0
      %v1779 = vsel %vm1768, %v1763, 0
      %v1782 = vsel %vm1768, %v1764, 0
      %v1785 = vsel %vm1768, %v1765, 0
      %v1788 = vsel %vm1768, %v1766, 0
      %v1791 = vsel %vm1768, %v1767, 0
      %1793 = vmatprep.subr.mxu0 0.0
      %1794 = vmatpush1.msra.mxu0 %v1443
      %1795 = vmatprep.subr.mxu0 0.0
      %1796 = vmatpush1.msra.mxu0 %v1448
      %1797 = vmatprep.subr.mxu0 0.0
      %1798 = vmatpush1.msra.mxu0 %v1453
      %1799 = vmatprep.subr.mxu0 0.0
      %1800 = vmatpush1.msra.mxu0 %v1458
      %1801 = vmatprep.subr.mxu0 0.0
      %1802 = vmatpush1.msra.mxu0 %v1463
      %1803 = vmatprep.subr.mxu0 0.0
      %1804 = vmatpush1.msra.mxu0 %v1468
      %1805 = vmatprep.subr.mxu0 0.0
      %1806 = vmatpush1.msra.mxu0 %v1473
      %1807 = vmatprep.subr.mxu0 0.0
      %1808 = vmatpush1.msra.mxu0 %v1478
      %1809 = vmatprep.subr.mxu0 0.0
      %1810 = vmatpush1.msra.mxu0 0.0
      %1811 = vmatprep.subr.mxu0 0.0
      %1812 = vmatpush1.msra.mxu0 0.0
      %1813 = vmatprep.subr.mxu0 0.0
      %1814 = vmatpush1.msra.mxu0 0.0
      %1815 = vmatprep.subr.mxu0 0.0
      %1816 = vmatpush1.msra.mxu0 0.0
      %1817 = vmatprep.subr.mxu0 0.0
      %1818 = vmatpush1.msra.mxu0 0.0
      %1819 = vmatprep.subr.mxu0 0.0
      %1820 = vmatpush1.msra.mxu0 0.0
      %1821 = vmatprep.subr.mxu0 0.0
      %1822 = vmatpush1.msra.mxu0 0.0
      %1823 = vmatprep.subr.mxu0 0.0
      %1824 = vmatpush1.msra.mxu0 0.0
      %1825 = vmatprep.subr.mxu0 0.0
      %1826 = vmatpush1.msra.mxu0 0.0
      %1827 = vmatprep.subr.mxu0 0.0
      %1828 = vmatpush1.msra.mxu0 0.0
      %1829 = vmatprep.subr.mxu0 0.0
      %1830 = vmatpush1.msra.mxu0 0.0
      %1831 = vmatprep.subr.mxu0 0.0
      %1832 = vmatpush1.msra.mxu0 0.0
      %1833 = vmatprep.subr.mxu0 0.0
      %1834 = vmatpush1.msra.mxu0 0.0
      %1835 = vmatprep.subr.mxu0 0.0
      %1836 = vmatpush1.msra.mxu0 0.0
      %1837 = vmatprep.subr.mxu0 0.0
      %1838 = vmatpush1.msra.mxu0 0.0
      %1839 = vmatprep.subr.mxu0 0.0
      %1840 = vmatpush1.msra.mxu0 0.0
      %1841 = vmatprep.subr.mxu0 0.0
      %1842 = vmatpush1.msra.mxu0 0.0
      %1843 = vmatprep.subr.mxu0 0.0
      %1844 = vmatpush1.msra.mxu0 0.0
      %1845 = vmatprep.subr.mxu0 0.0
      %1846 = vmatpush1.msra.mxu0 0.0
      %1847 = vmatprep.subr.mxu0 0.0
      %1848 = vmatpush1.msra.mxu0 0.0
      %1849 = vmatprep.subr.mxu0 0.0
      %1850 = vmatpush1.msra.mxu0 0.0
      %1851 = vmatprep.subr.mxu0 0.0
      %1852 = vmatpush1.msra.mxu0 0.0
      %1853 = vmatprep.subr.mxu0 0.0
      %1854 = vmatpush1.msra.mxu0 0.0
      %1855 = vmatprep.subr.mxu0 0.0
      %1856 = vmatpush1.msra.mxu0 0.0
      %1857 = vmatprep.mubr.f32.mxu0 0.0
      %1858 = vmatmul.mubr.f32.gmra.mrb[0].mxu0 %v1770
      %v1859 = vpop.f32.mrb[0].mxu0
      %v1860 = vadd.f32 0.0, %v1859
      %v1861 = vpop.f32.mrb[0].mxu0
      %1862 = vmatprep.mubr.f32.mxu0 0.0
      %1863 = vmatmul.mubr.f32.gmra.mrb[0].mxu0 %v1773
      %v1864 = vpop.f32.mrb[0].mxu0
      %v1865 = vadd.f32 0.0, %v1864
      %v1866 = vpop.f32.mrb[0].mxu0
      %1867 = vmatprep.mubr.f32.mxu0 0.0
      %1868 = vmatmul.mubr.f32.gmra.mrb[0].mxu0 %v1776
      %v1869 = vpop.f32.mrb[0].mxu0
      %v1870 = vadd.f32 0.0, %v1869
      %v1871 = vpop.f32.mrb[0].mxu0
      %1872 = vmatprep.mubr.f32.mxu0 0.0
      %1873 = vmatmul.mubr.f32.gmra.mrb[0].mxu0 %v1779
      %v1874 = vpop.f32.mrb[0].mxu0
      %v1875 = vadd.f32 0.0, %v1874
      %v1876 = vpop.f32.mrb[0].mxu0
      %1877 = vmatprep.mubr.f32.mxu0 0.0
      %1878 = vmatmul.mubr.f32.gmra.mrb[0].mxu0 %v1782
      %v1879 = vpop.f32.mrb[0].mxu0
      %v1880 = vadd.f32 0.0, %v1879
      %v1881 = vpop.f32.mrb[0].mxu0
      %1882 = vmatprep.mubr.f32.mxu0 0.0
      %1883 = vmatmul.mubr.f32.gmra.mrb[0].mxu0 %v1785
      %v1884 = vpop.f32.mrb[0].mxu0
      %v1885 = vadd.f32 0.0, %v1884
      %v1886 = vpop.f32.mrb[0].mxu0
      %1887 = vmatprep.mubr.f32.mxu0 0.0
      %1888 = vmatmul.mubr.f32.gmra.mrb[0].mxu0 %v1788
      %v1889 = vpop.f32.mrb[0].mxu0
      %v1890 = vadd.f32 0.0, %v1889
      %v1891 = vpop.f32.mrb[0].mxu0
      %1892 = vmatprep.mubr.f32.mxu0 0.0
      %1893 = vmatmul.mubr.f32.gmra.mrb[0].mxu0 %v1791
      %v1894 = vpop.f32.mrb[0].mxu0
      %v1895 = vadd.f32 0.0, %v1894
      %v1896 = vpop.f32.mrb[0].mxu0
      %1897 = vdwg.mxu0
      %v1898 = vlaneseq
      %v1899 = vshrl.u32 %v1898, 7
      %v1900 = vsub.s32 2, %v1899
      %v1901 = vrot.slane %v1699, %v1900
      %v1902 = vmul.f32 %v1901, %v1860
      %v1903 = vmul.f32 %v1901, %v1865
      %v1904 = vmul.f32 %v1901, %v1870
      %v1905 = vmul.f32 %v1901, %v1875
      %v1906 = vmul.f32 %v1901, %v1880
      %v1907 = vmul.f32 %v1901, %v1885
      %v1908 = vmul.f32 %v1901, %v1890
      %v1909 = vmul.f32 %v1901, %v1895
      %v1910 = vadd.f32 %v1725, %v1902
      %v1911 = vadd.f32 %v1726, %v1903
      %v1912 = vadd.f32 %v1727, %v1904
      %v1913 = vadd.f32 %v1728, %v1905
      %v1914 = vadd.f32 %v1729, %v1906
      %v1915 = vadd.f32 %v1730, %v1907
      %v1916 = vadd.f32 %v1731, %v1908
      %v1917 = vadd.f32 %v1732, %v1909
      %v1918 = vsub.s32 %v1734, 2
      %v1919 = vsub.s32 %v1735, 2
      %v1920 = vsub.s32 %v1736, 2
      %v1921 = vsub.s32 %v1737, 2
      %v1922 = vsub.s32 %v1738, 2
      %v1923 = vsub.s32 %v1739, 2
      %v1924 = vsub.s32 %v1740, 2
      %v1925 = vsub.s32 %v1741, 2
      %vm1926 = vcmp.eq.s32.totalorder %v1743, %v1918
      %vm1927 = vcmp.eq.s32.totalorder %v1743, %v1919
      %vm1928 = vcmp.eq.s32.totalorder %v1743, %v1920
      %vm1929 = vcmp.eq.s32.totalorder %v1743, %v1921
      %vm1930 = vcmp.eq.s32.totalorder %v1743, %v1922
      %vm1931 = vcmp.eq.s32.totalorder %v1743, %v1923
      %vm1932 = vcmp.eq.s32.totalorder %v1743, %v1924
      %vm1933 = vcmp.eq.s32.totalorder %v1743, %v1925
      %v1934 = vsel %vm1926, 1.0, 0.0
      %v1935 = vsel %vm1927, 1.0, 0.0
      %v1936 = vsel %vm1928, 1.0, 0.0
      %v1937 = vsel %vm1929, 1.0, 0.0
      %v1938 = vsel %vm1930, 1.0, 0.0
      %v1939 = vsel %vm1931, 1.0, 0.0
      %v1940 = vsel %vm1932, 1.0, 0.0
      %v1941 = vsel %vm1933, 1.0, 0.0
      %v1943 = vsel %vm1768, %v1934, 0
      %v1946 = vsel %vm1768, %v1935, 0
      %v1949 = vsel %vm1768, %v1936, 0
      %v1952 = vsel %vm1768, %v1937, 0
      %v1955 = vsel %vm1768, %v1938, 0
      %v1958 = vsel %vm1768, %v1939, 0
      %v1961 = vsel %vm1768, %v1940, 0
      %v1964 = vsel %vm1768, %v1941, 0
      %1966 = vmatprep.subr.mxu0 0.0
      %1967 = vmatpush1.msra.mxu0 %v1443
      %1968 = vmatprep.subr.mxu0 0.0
      %1969 = vmatpush1.msra.mxu0 %v1448
      %1970 = vmatprep.subr.mxu0 0.0
      %1971 = vmatpush1.msra.mxu0 %v1453
      %1972 = vmatprep.subr.mxu0 0.0
      %1973 = vmatpush1.msra.mxu0 %v1458
      %1974 = vmatprep.subr.mxu0 0.0
      %1975 = vmatpush1.msra.mxu0 %v1463
      %1976 = vmatprep.subr.mxu0 0.0
      %1977 = vmatpush1.msra.mxu0 %v1468
      %1978 = vmatprep.subr.mxu0 0.0
      %1979 = vmatpush1.msra.mxu0 %v1473
      %1980 = vmatprep.subr.mxu0 0.0
      %1981 = vmatpush1.msra.mxu0 %v1478
      %1982 = vmatprep.subr.mxu0 0.0
      %1983 = vmatpush1.msra.mxu0 0.0
      %1984 = vmatprep.subr.mxu0 0.0
      %1985 = vmatpush1.msra.mxu0 0.0
      %1986 = vmatprep.subr.mxu0 0.0
      %1987 = vmatpush1.msra.mxu0 0.0
      %1988 = vmatprep.subr.mxu0 0.0
      %1989 = vmatpush1.msra.mxu0 0.0
      %1990 = vmatprep.subr.mxu0 0.0
      %1991 = vmatpush1.msra.mxu0 0.0
      %1992 = vmatprep.subr.mxu0 0.0
      %1993 = vmatpush1.msra.mxu0 0.0
      %1994 = vmatprep.subr.mxu0 0.0
      %1995 = vmatpush1.msra.mxu0 0.0
      %1996 = vmatprep.subr.mxu0 0.0
      %1997 = vmatpush1.msra.mxu0 0.0
      %1998 = vmatprep.subr.mxu0 0.0
      %1999 = vmatpush1.msra.mxu0 0.0
      %2000 = vmatprep.subr.mxu0 0.0
      %2001 = vmatpush1.msra.mxu0 0.0
      %2002 = vmatprep.subr.mxu0 0.0
      %2003 = vmatpush1.msra.mxu0 0.0
      %2004 = vmatprep.subr.mxu0 0.0
      %2005 = vmatpush1.msra.mxu0 0.0
      %2006 = vmatprep.subr.mxu0 0.0
      %2007 = vmatpush1.msra.mxu0 0.0
      %2008 = vmatprep.subr.mxu0 0.0
      %2009 = vmatpush1.msra.mxu0 0.0
      %2010 = vmatprep.subr.mxu0 0.0
      %2011 = vmatpush1.msra.mxu0 0.0
      %2012 = vmatprep.subr.mxu0 0.0
      %2013 = vmatpush1.msra.mxu0 0.0
      %2014 = vmatprep.subr.mxu0 0.0
      %2015 = vmatpush1.msra.mxu0 0.0
      %2016 = vmatprep.subr.mxu0 0.0
      %2017 = vmatpush1.msra.mxu0 0.0
      %2018 = vmatprep.subr.mxu0 0.0
      %2019 = vmatpush1.msra.mxu0 0.0
      %2020 = vmatprep.subr.mxu0 0.0
      %2021 = vmatpush1.msra.mxu0 0.0
      %2022 = vmatprep.subr.mxu0 0.0
      %2023 = vmatpush1.msra.mxu0 0.0
      %2024 = vmatprep.subr.mxu0 0.0
      %2025 = vmatpush1.msra.mxu0 0.0
      %2026 = vmatprep.subr.mxu0 0.0
      %2027 = vmatpush1.msra.mxu0 0.0
      %2028 = vmatprep.subr.mxu0 0.0
      %2029 = vmatpush1.msra.mxu0 0.0
      %2030 = vmatprep.mubr.f32.mxu0 0.0
      %2031 = vmatmul.mubr.f32.gmra.mrb[0].mxu0 %v1943
      %v2032 = vpop.f32.mrb[0].mxu0
      %v2033 = vadd.f32 0.0, %v2032
      %v2034 = vpop.f32.mrb[0].mxu0
      %2035 = vmatprep.mubr.f32.mxu0 0.0
      %2036 = vmatmul.mubr.f32.gmra.mrb[0].mxu0 %v1946
      %v2037 = vpop.f32.mrb[0].mxu0
      %v2038 = vadd.f32 0.0, %v2037
      %v2039 = vpop.f32.mrb[0].mxu0
      %2040 = vmatprep.mubr.f32.mxu0 0.0
      %2041 = vmatmul.mubr.f32.gmra.mrb[0].mxu0 %v1949
      %v2042 = vpop.f32.mrb[0].mxu0
      %v2043 = vadd.f32 0.0, %v2042
      %v2044 = vpop.f32.mrb[0].mxu0
      %2045 = vmatprep.mubr.f32.mxu0 0.0
      %2046 = vmatmul.mubr.f32.gmra.mrb[0].mxu0 %v1952
      %v2047 = vpop.f32.mrb[0].mxu0
      %v2048 = vadd.f32 0.0, %v2047
      %v2049 = vpop.f32.mrb[0].mxu0
      %2050 = vmatprep.mubr.f32.mxu0 0.0
      %2051 = vmatmul.mubr.f32.gmra.mrb[0].mxu0 %v1955
      %v2052 = vpop.f32.mrb[0].mxu0
      %v2053 = vadd.f32 0.0, %v2052
      %v2054 = vpop.f32.mrb[0].mxu0
      %2055 = vmatprep.mubr.f32.mxu0 0.0
      %2056 = vmatmul.mubr.f32.gmra.mrb[0].mxu0 %v1958
      %v2057 = vpop.f32.mrb[0].mxu0
      %v2058 = vadd.f32 0.0, %v2057
      %v2059 = vpop.f32.mrb[0].mxu0
      %2060 = vmatprep.mubr.f32.mxu0 0.0
      %2061 = vmatmul.mubr.f32.gmra.mrb[0].mxu0 %v1961
      %v2062 = vpop.f32.mrb[0].mxu0
      %v2063 = vadd.f32 0.0, %v2062
      %v2064 = vpop.f32.mrb[0].mxu0
      %2065 = vmatprep.mubr.f32.mxu0 0.0
      %2066 = vmatmul.mubr.f32.gmra.mrb[0].mxu0 %v1964
      %v2067 = vpop.f32.mrb[0].mxu0
      %v2068 = vadd.f32 0.0, %v2067
      %v2069 = vpop.f32.mrb[0].mxu0
      %2070 = vdwg.mxu0
      %v2071 = vlaneseq
      %v2072 = vshrl.u32 %v2071, 7
      %v2073 = vsub.s32 1, %v2072
      %v2074 = vrot.slane %v1699, %v2073
      %v2075 = vmul.f32 %v2074, %v2033
      %v2076 = vmul.f32 %v2074, %v2038
      %v2077 = vmul.f32 %v2074, %v2043
      %v2078 = vmul.f32 %v2074, %v2048
      %v2079 = vmul.f32 %v2074, %v2053
      %v2080 = vmul.f32 %v2074, %v2058
      %v2081 = vmul.f32 %v2074, %v2063
      %v2082 = vmul.f32 %v2074, %v2068
      %v2083 = vadd.f32 %v1910, %v2075
      %v2084 = vadd.f32 %v1911, %v2076
      %v2085 = vadd.f32 %v1912, %v2077
      %v2086 = vadd.f32 %v1913, %v2078
      %v2087 = vadd.f32 %v1914, %v2079
      %v2088 = vadd.f32 %v1915, %v2080
      %v2089 = vadd.f32 %v1916, %v2081
      %v2090 = vadd.f32 %v1917, %v2082
      %v2091 = vsub.s32 %v1734, 3
      %v2092 = vsub.s32 %v1735, 3
      %v2093 = vsub.s32 %v1736, 3
      %v2094 = vsub.s32 %v1737, 3
      %v2095 = vsub.s32 %v1738, 3
      %v2096 = vsub.s32 %v1739, 3
      %v2097 = vsub.s32 %v1740, 3
      %v2098 = vsub.s32 %v1741, 3
      %vm2099 = vcmp.eq.s32.totalorder %v1743, %v2091
      %vm2100 = vcmp.eq.s32.totalorder %v1743, %v2092
      %vm2101 = vcmp.eq.s32.totalorder %v1743, %v2093
      %vm2102 = vcmp.eq.s32.totalorder %v1743, %v2094
      %vm2103 = vcmp.eq.s32.totalorder %v1743, %v2095
      %vm2104 = vcmp.eq.s32.totalorder %v1743, %v2096
      %vm2105 = vcmp.eq.s32.totalorder %v1743, %v2097
      %vm2106 = vcmp.eq.s32.totalorder %v1743, %v2098
      %v2107 = vsel %vm2099, 1.0, 0.0
      %v2108 = vsel %vm2100, 1.0, 0.0
      %v2109 = vsel %vm2101, 1.0, 0.0
      %v2110 = vsel %vm2102, 1.0, 0.0
      %v2111 = vsel %vm2103, 1.0, 0.0
      %v2112 = vsel %vm2104, 1.0, 0.0
      %v2113 = vsel %vm2105, 1.0, 0.0
      %v2114 = vsel %vm2106, 1.0, 0.0
      %v2116 = vsel %vm1768, %v2107, 0
      %v2119 = vsel %vm1768, %v2108, 0
      %v2122 = vsel %vm1768, %v2109, 0
      %v2125 = vsel %vm1768, %v2110, 0
      %v2128 = vsel %vm1768, %v2111, 0
      %v2131 = vsel %vm1768, %v2112, 0
      %v2134 = vsel %vm1768, %v2113, 0
      %v2137 = vsel %vm1768, %v2114, 0
      %2139 = vmatprep.subr.mxu0 0.0
      %2140 = vmatpush1.msra.mxu0 %v1443
      %2141 = vmatprep.subr.mxu0 0.0
      %2142 = vmatpush1.msra.mxu0 %v1448
      %2143 = vmatprep.subr.mxu0 0.0
      %2144 = vmatpush1.msra.mxu0 %v1453
      %2145 = vmatprep.subr.mxu0 0.0
      %2146 = vmatpush1.msra.mxu0 %v1458
      %2147 = vmatprep.subr.mxu0 0.0
      %2148 = vmatpush1.msra.mxu0 %v1463
      %2149 = vmatprep.subr.mxu0 0.0
      %2150 = vmatpush1.msra.mxu0 %v1468
      %2151 = vmatprep.subr.mxu0 0.0
      %2152 = vmatpush1.msra.mxu0 %v1473
      %2153 = vmatprep.subr.mxu0 0.0
      %2154 = vmatpush1.msra.mxu0 %v1478
      %2155 = vmatprep.subr.mxu0 0.0
      %2156 = vmatpush1.msra.mxu0 0.0
      %2157 = vmatprep.subr.mxu0 0.0
      %2158 = vmatpush1.msra.mxu0 0.0
      %2159 = vmatprep.subr.mxu0 0.0
      %2160 = vmatpush1.msra.mxu0 0.0
      %2161 = vmatprep.subr.mxu0 0.0
      %2162 = vmatpush1.msra.mxu0 0.0
      %2163 = vmatprep.subr.mxu0 0.0
      %2164 = vmatpush1.msra.mxu0 0.0
      %2165 = vmatprep.subr.mxu0 0.0
      %2166 = vmatpush1.msra.mxu0 0.0
      %2167 = vmatprep.subr.mxu0 0.0
      %2168 = vmatpush1.msra.mxu0 0.0
      %2169 = vmatprep.subr.mxu0 0.0
      %2170 = vmatpush1.msra.mxu0 0.0
      %2171 = vmatprep.subr.mxu0 0.0
      %2172 = vmatpush1.msra.mxu0 0.0
      %2173 = vmatprep.subr.mxu0 0.0
      %2174 = vmatpush1.msra.mxu0 0.0
      %2175 = vmatprep.subr.mxu0 0.0
      %2176 = vmatpush1.msra.mxu0 0.0
      %2177 = vmatprep.subr.mxu0 0.0
      %2178 = vmatpush1.msra.mxu0 0.0
      %2179 = vmatprep.subr.mxu0 0.0
      %2180 = vmatpush1.msra.mxu0 0.0
      %2181 = vmatprep.subr.mxu0 0.0
      %2182 = vmatpush1.msra.mxu0 0.0
      %2183 = vmatprep.subr.mxu0 0.0
      %2184 = vmatpush1.msra.mxu0 0.0
      %2185 = vmatprep.subr.mxu0 0.0
      %2186 = vmatpush1.msra.mxu0 0.0
      %2187 = vmatprep.subr.mxu0 0.0
      %2188 = vmatpush1.msra.mxu0 0.0
      %2189 = vmatprep.subr.mxu0 0.0
      %2190 = vmatpush1.msra.mxu0 0.0
      %2191 = vmatprep.subr.mxu0 0.0
      %2192 = vmatpush1.msra.mxu0 0.0
      %2193 = vmatprep.subr.mxu0 0.0
      %2194 = vmatpush1.msra.mxu0 0.0
      %2195 = vmatprep.subr.mxu0 0.0
      %2196 = vmatpush1.msra.mxu0 0.0
      %2197 = vmatprep.subr.mxu0 0.0
      %2198 = vmatpush1.msra.mxu0 0.0
      %2199 = vmatprep.subr.mxu0 0.0
      %2200 = vmatpush1.msra.mxu0 0.0
      %2201 = vmatprep.subr.mxu0 0.0
      %2202 = vmatpush1.msra.mxu0 0.0
      %2203 = vmatprep.mubr.f32.mxu0 0.0
      %2204 = vmatmul.mubr.f32.gmra.mrb[0].mxu0 %v2116
      %v2205 = vpop.f32.mrb[0].mxu0
      %v2206 = vadd.f32 0.0, %v2205
      %v2207 = vpop.f32.mrb[0].mxu0
      %2208 = vmatprep.mubr.f32.mxu0 0.0
      %2209 = vmatmul.mubr.f32.gmra.mrb[0].mxu0 %v2119
      %v2210 = vpop.f32.mrb[0].mxu0
      %v2211 = vadd.f32 0.0, %v2210
      %v2212 = vpop.f32.mrb[0].mxu0
      %2213 = vmatprep.mubr.f32.mxu0 0.0
      %2214 = vmatmul.mubr.f32.gmra.mrb[0].mxu0 %v2122
      %v2215 = vpop.f32.mrb[0].mxu0
      %v2216 = vadd.f32 0.0, %v2215
      %v2217 = vpop.f32.mrb[0].mxu0
      %2218 = vmatprep.mubr.f32.mxu0 0.0
      %2219 = vmatmul.mubr.f32.gmra.mrb[0].mxu0 %v2125
      %v2220 = vpop.f32.mrb[0].mxu0
      %v2221 = vadd.f32 0.0, %v2220
      %v2222 = vpop.f32.mrb[0].mxu0
      %2223 = vmatprep.mubr.f32.mxu0 0.0
      %2224 = vmatmul.mubr.f32.gmra.mrb[0].mxu0 %v2128
      %v2225 = vpop.f32.mrb[0].mxu0
      %v2226 = vadd.f32 0.0, %v2225
      %v2227 = vpop.f32.mrb[0].mxu0
      %2228 = vmatprep.mubr.f32.mxu0 0.0
      %2229 = vmatmul.mubr.f32.gmra.mrb[0].mxu0 %v2131
      %v2230 = vpop.f32.mrb[0].mxu0
      %v2231 = vadd.f32 0.0, %v2230
      %v2232 = vpop.f32.mrb[0].mxu0
      %2233 = vmatprep.mubr.f32.mxu0 0.0
      %2234 = vmatmul.mubr.f32.gmra.mrb[0].mxu0 %v2134
      %v2235 = vpop.f32.mrb[0].mxu0
      %v2236 = vadd.f32 0.0, %v2235
      %v2237 = vpop.f32.mrb[0].mxu0
      %2238 = vmatprep.mubr.f32.mxu0 0.0
      %2239 = vmatmul.mubr.f32.gmra.mrb[0].mxu0 %v2137
      %v2240 = vpop.f32.mrb[0].mxu0
      %v2241 = vadd.f32 0.0, %v2240
      %v2242 = vpop.f32.mrb[0].mxu0
      %2243 = vdwg.mxu0
      %v2244 = vlaneseq
      %v2245 = vshrl.u32 %v2244, 7
      %v2246 = vsub.s32 0, %v2245
      %v2247 = vrot.slane %v1699, %v2246
      %v2248 = vmul.f32 %v2247, %v2206
      %v2249 = vmul.f32 %v2247, %v2211
      %v2250 = vmul.f32 %v2247, %v2216
      %v2251 = vmul.f32 %v2247, %v2221
      %v2252 = vmul.f32 %v2247, %v2226
      %v2253 = vmul.f32 %v2247, %v2231
      %v2254 = vmul.f32 %v2247, %v2236
      %v2255 = vmul.f32 %v2247, %v2241
      %v2256 = vadd.f32 %v2083, %v2248
      %v2257 = vadd.f32 %v2084, %v2249
      %v2258 = vadd.f32 %v2085, %v2250
      %v2259 = vadd.f32 %v2086, %v2251
      %v2260 = vadd.f32 %v2087, %v2252
      %v2261 = vadd.f32 %v2088, %v2253
      %v2262 = vadd.f32 %v2089, %v2254
      %v2263 = vadd.f32 %v2090, %v2255
      %v2265 = vlaneseq
      %v2266 = vshrl.u32 %v2265, 7
      %v2267 = vsub.s32 0, %v2266
      %v2268 = vrot.slane %v1700, %v2267
      %v2270 = vadd.f32 %v2256, %v2268
      %v2271 = vadd.f32 %v2257, %v2268
      %v2272 = vadd.f32 %v2258, %v2268
      %v2273 = vadd.f32 %v2259, %v2268
      %v2274 = vadd.f32 %v2260, %v2268
      %v2275 = vadd.f32 %v2261, %v2268
      %v2276 = vadd.f32 %v2262, %v2268
      %v2277 = vadd.f32 %v2263, %v2268
      %v2278 = vxor.u32 %v2270, 2147483648
      %v2279 = vxor.u32 %v2271, 2147483648
      %v2280 = vxor.u32 %v2272, 2147483648
      %v2281 = vxor.u32 %v2273, 2147483648
      %v2282 = vxor.u32 %v2274, 2147483648
      %v2283 = vxor.u32 %v2275, 2147483648
      %v2284 = vxor.u32 %v2276, 2147483648
      %v2285 = vxor.u32 %v2277, 2147483648
      %v2286 = vmul.f32 %v2278, 1.442695
      %v2287 = vpow.pop %v2286
      %v2288 = vmul.f32 %v2279, 1.442695
      %v2289 = vpow.pop %v2288
      %v2290 = vmul.f32 %v2280, 1.442695
      %v2291 = vpow.pop %v2290
      %v2292 = vmul.f32 %v2281, 1.442695
      %v2293 = vpow.pop %v2292
      %v2294 = vmul.f32 %v2282, 1.442695
      %v2295 = vpow.pop %v2294
      %v2296 = vmul.f32 %v2283, 1.442695
      %v2297 = vpow.pop %v2296
      %v2298 = vmul.f32 %v2284, 1.442695
      %v2299 = vpow.pop %v2298
      %v2300 = vmul.f32 %v2285, 1.442695
      %v2301 = vpow.pop %v2300
      %v2302 = vadd.f32 %v2287, 1.0
      %v2303 = vadd.f32 %v2289, 1.0
      %v2304 = vadd.f32 %v2291, 1.0
      %v2305 = vadd.f32 %v2293, 1.0
      %v2306 = vadd.f32 %v2295, 1.0
      %v2307 = vadd.f32 %v2297, 1.0
      %v2308 = vadd.f32 %v2299, 1.0
      %v2309 = vadd.f32 %v2301, 1.0
      %v2310 = vrcp.pop %v2302
      %v2311 = vmul.f32 1.0, %v2310
      %v2312 = vrcp.pop %v2303
      %v2313 = vmul.f32 1.0, %v2312
      %v2314 = vrcp.pop %v2304
      %v2315 = vmul.f32 1.0, %v2314
      %v2316 = vrcp.pop %v2305
      %v2317 = vmul.f32 1.0, %v2316
      %v2318 = vrcp.pop %v2306
      %v2319 = vmul.f32 1.0, %v2318
      %v2320 = vrcp.pop %v2307
      %v2321 = vmul.f32 1.0, %v2320
      %v2322 = vrcp.pop %v2308
      %v2323 = vmul.f32 1.0, %v2322
      %v2324 = vrcp.pop %v2309
      %v2325 = vmul.f32 1.0, %v2324
      %v2326 = vmul.f32 %v2270, %v2311
      %v2327 = vmul.f32 %v2271, %v2313
      %v2328 = vmul.f32 %v2272, %v2315
      %v2329 = vmul.f32 %v2273, %v2317
      %v2330 = vmul.f32 %v2274, %v2319
      %v2331 = vmul.f32 %v2275, %v2321
      %v2332 = vmul.f32 %v2276, %v2323
      %v2333 = vmul.f32 %v2277, %v2325
      %v2335 = vlaneseq
      %v2336 = vshrl.u32 %v2335, 7
      %v2337 = vsub.s32 0, %v2336
      %v2338 = vrot.slane %v1711, %v2337
      %vm2340 = vcmask 97280
      %v2342 = vsel %vm2340, %v2326, 0
      %v2345 = vsel %vm2340, %v2327, 0
      %v2348 = vsel %vm2340, %v2328, 0
      %v2351 = vsel %vm2340, %v2329, 0
      %v2354 = vsel %vm2340, %v2330, 0
      %v2357 = vsel %vm2340, %v2331, 0
      %v2360 = vsel %vm2340, %v2332, 0
      %v2363 = vsel %vm2340, %v2333, 0
      %v2366 = vsel %vm1372, %v1710, 0
      %2368 = vmatprep.subr.mxu0 0.0
      %2369 = vmatpush1.msra.mxu0 %v1709
      %2370 = vmatprep.subr.mxu0 0.0
      %2371 = vmatpush1.msra.mxu0 %v2366
      %2372 = vmatprep.subr.mxu0 0.0
      %2373 = vmatpush1.msra.mxu0 0.0
      %2374 = vmatprep.subr.mxu0 0.0
      %2375 = vmatpush1.msra.mxu0 0.0
      %2376 = vmatprep.subr.mxu0 0.0
      %2377 = vmatpush1.msra.mxu0 0.0
      %2378 = vmatprep.subr.mxu0 0.0
      %2379 = vmatpush1.msra.mxu0 0.0
      %2380 = vmatprep.subr.mxu0 0.0
      %2381 = vmatpush1.msra.mxu0 0.0
      %2382 = vmatprep.subr.mxu0 0.0
      %2383 = vmatpush1.msra.mxu0 0.0
      %2384 = vmatprep.subr.mxu0 0.0
      %2385 = vmatpush1.msra.mxu0 0.0
      %2386 = vmatprep.subr.mxu0 0.0
      %2387 = vmatpush1.msra.mxu0 0.0
      %2388 = vmatprep.subr.mxu0 0.0
      %2389 = vmatpush1.msra.mxu0 0.0
      %2390 = vmatprep.subr.mxu0 0.0
      %2391 = vmatpush1.msra.mxu0 0.0
      %2392 = vmatprep.subr.mxu0 0.0
      %2393 = vmatpush1.msra.mxu0 0.0
      %2394 = vmatprep.subr.mxu0 0.0
      %2395 = vmatpush1.msra.mxu0 0.0
      %2396 = vmatprep.subr.mxu0 0.0
      %2397 = vmatpush1.msra.mxu0 0.0
      %2398 = vmatprep.subr.mxu0 0.0
      %2399 = vmatpush1.msra.mxu0 0.0
      %2400 = vmatprep.subr.mxu0 0.0
      %2401 = vmatpush1.msra.mxu0 0.0
      %2402 = vmatprep.subr.mxu0 0.0
      %2403 = vmatpush1.msra.mxu0 0.0
      %2404 = vmatprep.subr.mxu0 0.0
      %2405 = vmatpush1.msra.mxu0 0.0
      %2406 = vmatprep.subr.mxu0 0.0
      %2407 = vmatpush1.msra.mxu0 0.0
      %2408 = vmatprep.subr.mxu0 0.0
      %2409 = vmatpush1.msra.mxu0 0.0
      %2410 = vmatprep.subr.mxu0 0.0
      %2411 = vmatpush1.msra.mxu0 0.0
      %2412 = vmatprep.subr.mxu0 0.0
      %2413 = vmatpush1.msra.mxu0 0.0
      %2414 = vmatprep.subr.mxu0 0.0
      %2415 = vmatpush1.msra.mxu0 0.0
      %2416 = vmatprep.subr.mxu0 0.0
      %2417 = vmatpush1.msra.mxu0 0.0
      %2418 = vmatprep.subr.mxu0 0.0
      %2419 = vmatpush1.msra.mxu0 0.0
      %2420 = vmatprep.subr.mxu0 0.0
      %2421 = vmatpush1.msra.mxu0 0.0
      %2422 = vmatprep.subr.mxu0 0.0
      %2423 = vmatpush1.msra.mxu0 0.0
      %2424 = vmatprep.subr.mxu0 0.0
      %2425 = vmatpush1.msra.mxu0 0.0
      %2426 = vmatprep.subr.mxu0 0.0
      %2427 = vmatpush1.msra.mxu0 0.0
      %2428 = vmatprep.subr.mxu0 0.0
      %2429 = vmatpush1.msra.mxu0 0.0
      %2430 = vmatprep.subr.mxu0 0.0
      %2431 = vmatpush1.msra.mxu0 0.0
      %2432 = vmatprep.mubr.f32.mxu0 0.0
      %2433 = vmatmul.mubr.f32.gmra.mrb[0].mxu0 %v2342
      %v2434 = vpop.f32.mrb[0].mxu0
      %v2435 = vadd.f32 %v2338, %v2434
      %v2436 = vpop.f32.mrb[0].mxu0
      %2437 = vmatprep.mubr.f32.mxu0 0.0
      %2438 = vmatmul.mubr.f32.gmra.mrb[0].mxu0 %v2345
      %v2439 = vpop.f32.mrb[0].mxu0
      %v2440 = vadd.f32 %v2338, %v2439
      %v2441 = vpop.f32.mrb[0].mxu0
      %2442 = vmatprep.mubr.f32.mxu0 0.0
      %2443 = vmatmul.mubr.f32.gmra.mrb[0].mxu0 %v2348
      %v2444 = vpop.f32.mrb[0].mxu0
      %v2445 = vadd.f32 %v2338, %v2444
      %v2446 = vpop.f32.mrb[0].mxu0
      %2447 = vmatprep.mubr.f32.mxu0 0.0
      %2448 = vmatmul.mubr.f32.gmra.mrb[0].mxu0 %v2351
      %v2449 = vpop.f32.mrb[0].mxu0
      %v2450 = vadd.f32 %v2338, %v2449
      %v2451 = vpop.f32.mrb[0].mxu0
      %2452 = vmatprep.mubr.f32.mxu0 0.0
      %2453 = vmatmul.mubr.f32.gmra.mrb[0].mxu0 %v2354
      %v2454 = vpop.f32.mrb[0].mxu0
      %v2455 = vadd.f32 %v2338, %v2454
      %v2456 = vpop.f32.mrb[0].mxu0
      %2457 = vmatprep.mubr.f32.mxu0 0.0
      %2458 = vmatmul.mubr.f32.gmra.mrb[0].mxu0 %v2357
      %v2459 = vpop.f32.mrb[0].mxu0
      %v2460 = vadd.f32 %v2338, %v2459
      %v2461 = vpop.f32.mrb[0].mxu0
      %2462 = vmatprep.mubr.f32.mxu0 0.0
      %2463 = vmatmul.mubr.f32.gmra.mrb[0].mxu0 %v2360
      %v2464 = vpop.f32.mrb[0].mxu0
      %v2465 = vadd.f32 %v2338, %v2464
      %v2466 = vpop.f32.mrb[0].mxu0
      %2467 = vmatprep.mubr.f32.mxu0 0.0
      %2468 = vmatmul.mubr.f32.gmra.mrb[0].mxu0 %v2363
      %v2469 = vpop.f32.mrb[0].mxu0
      %v2470 = vadd.f32 %v2338, %v2469
      %v2471 = vpop.f32.mrb[0].mxu0
      %2472 = vdwg.mxu0
      %vm2473 = vcmp.gt.f32.partialorder %v2435, 30.0
      %vm2474 = vcmp.gt.f32.partialorder %v2440, 30.0
      %vm2475 = vcmp.gt.f32.partialorder %v2445, 30.0
      %vm2476 = vcmp.gt.f32.partialorder %v2450, 30.0
      %vm2477 = vcmp.gt.f32.partialorder %v2455, 30.0
      %vm2478 = vcmp.gt.f32.partialorder %v2460, 30.0
      %vm2479 = vcmp.gt.f32.partialorder %v2465, 30.0
      %vm2480 = vcmp.gt.f32.partialorder %v2470, 30.0
      %v2481 = vmin.f32 %v2435, 30.0
      %v2482 = vmin.f32 %v2440, 30.0
      %v2483 = vmin.f32 %v2445, 30.0
      %v2484 = vmin.f32 %v2450, 30.0
      %v2485 = vmin.f32 %v2455, 30.0
      %v2486 = vmin.f32 %v2460, 30.0
      %v2487 = vmin.f32 %v2465, 30.0
      %v2488 = vmin.f32 %v2470, 30.0
      %v2489 = vmul.f32 %v2481, 1.442695
      %v2490 = vpow.pop %v2489
      %v2491 = vmul.f32 %v2482, 1.442695
      %v2492 = vpow.pop %v2491
      %v2493 = vmul.f32 %v2483, 1.442695
      %v2494 = vpow.pop %v2493
      %v2495 = vmul.f32 %v2484, 1.442695
      %v2496 = vpow.pop %v2495
      %v2497 = vmul.f32 %v2485, 1.442695
      %v2498 = vpow.pop %v2497
      %v2499 = vmul.f32 %v2486, 1.442695
      %v2500 = vpow.pop %v2499
      %v2501 = vmul.f32 %v2487, 1.442695
      %v2502 = vpow.pop %v2501
      %v2503 = vmul.f32 %v2488, 1.442695
      %v2504 = vpow.pop %v2503
      %v2505 = vadd.f32 %v2490, 1.0
      %v2506 = vadd.f32 %v2492, 1.0
      %v2507 = vadd.f32 %v2494, 1.0
      %v2508 = vadd.f32 %v2496, 1.0
      %v2509 = vadd.f32 %v2498, 1.0
      %v2510 = vadd.f32 %v2500, 1.0
      %v2511 = vadd.f32 %v2502, 1.0
      %v2512 = vadd.f32 %v2504, 1.0
      %v2513 = vlog2.pop %v2505
      %v2514 = vmul.f32 %v2513, 0.6931472
      %v2515 = vlog2.pop %v2506
      %v2516 = vmul.f32 %v2515, 0.6931472
      %v2517 = vlog2.pop %v2507
      %v2518 = vmul.f32 %v2517, 0.6931472
      %v2519 = vlog2.pop %v2508
      %v2520 = vmul.f32 %v2519, 0.6931472
      %v2521 = vlog2.pop %v2509
      %v2522 = vmul.f32 %v2521, 0.6931472
      %v2523 = vlog2.pop %v2510
      %v2524 = vmul.f32 %v2523, 0.6931472
      %v2525 = vlog2.pop %v2511
      %v2526 = vmul.f32 %v2525, 0.6931472
      %v2527 = vlog2.pop %v2512
      %v2528 = vmul.f32 %v2527, 0.6931472
      %v2529 = vsel %vm2473, %v2435, %v2514
      %v2530 = vsel %vm2474, %v2440, %v2516
      %v2531 = vsel %vm2475, %v2445, %v2518
      %v2532 = vsel %vm2476, %v2450, %v2520
      %v2533 = vsel %vm2477, %v2455, %v2522
      %v2534 = vsel %vm2478, %v2460, %v2524
      %v2535 = vsel %vm2479, %v2465, %v2526
      %v2536 = vsel %vm2480, %v2470, %v2528
      %v2538 = vsel %vm2340, %v2529, 0
      %v2541 = vsel %vm2340, %v2530, 0
      %v2544 = vsel %vm2340, %v2531, 0
      %v2547 = vsel %vm2340, %v2532, 0
      %v2550 = vsel %vm2340, %v2533, 0
      %v2553 = vsel %vm2340, %v2534, 0
      %v2556 = vsel %vm2340, %v2535, 0
      %v2559 = vsel %vm2340, %v2536, 0
      %v2562 = vsel %vm1372, %v1714, 0
      %v2565 = vsel %vm1372, %v1715, 0
      %2567 = vmatprep.subr.mxu0 %v1713
      %2568 = vmatpush1.msra.mxu0 %v1712
      %2569 = vmatprep.subr.mxu0 %v2565
      %2570 = vmatpush1.msra.mxu0 %v2562
      %2571 = vmatprep.subr.mxu0 0.0
      %2572 = vmatpush1.msra.mxu0 0.0
      %2573 = vmatprep.subr.mxu0 0.0
      %2574 = vmatpush1.msra.mxu0 0.0
      %2575 = vmatprep.subr.mxu0 0.0
      %2576 = vmatpush1.msra.mxu0 0.0
      %2577 = vmatprep.subr.mxu0 0.0
      %2578 = vmatpush1.msra.mxu0 0.0
      %2579 = vmatprep.subr.mxu0 0.0
      %2580 = vmatpush1.msra.mxu0 0.0
      %2581 = vmatprep.subr.mxu0 0.0
      %2582 = vmatpush1.msra.mxu0 0.0
      %2583 = vmatprep.subr.mxu0 0.0
      %2584 = vmatpush1.msra.mxu0 0.0
      %2585 = vmatprep.subr.mxu0 0.0
      %2586 = vmatpush1.msra.mxu0 0.0
      %2587 = vmatprep.subr.mxu0 0.0
      %2588 = vmatpush1.msra.mxu0 0.0
      %2589 = vmatprep.subr.mxu0 0.0
      %2590 = vmatpush1.msra.mxu0 0.0
      %2591 = vmatprep.subr.mxu0 0.0
      %2592 = vmatpush1.msra.mxu0 0.0
      %2593 = vmatprep.subr.mxu0 0.0
      %2594 = vmatpush1.msra.mxu0 0.0
      %2595 = vmatprep.subr.mxu0 0.0
      %2596 = vmatpush1.msra.mxu0 0.0
      %2597 = vmatprep.subr.mxu0 0.0
      %2598 = vmatpush1.msra.mxu0 0.0
      %2599 = vmatprep.subr.mxu0 0.0
      %2600 = vmatpush1.msra.mxu0 0.0
      %2601 = vmatprep.subr.mxu0 0.0
      %2602 = vmatpush1.msra.mxu0 0.0
      %2603 = vmatprep.subr.mxu0 0.0
      %2604 = vmatpush1.msra.mxu0 0.0
      %2605 = vmatprep.subr.mxu0 0.0
      %2606 = vmatpush1.msra.mxu0 0.0
      %2607 = vmatprep.subr.mxu0 0.0
      %2608 = vmatpush1.msra.mxu0 0.0
      %2609 = vmatprep.subr.mxu0 0.0
      %2610 = vmatpush1.msra.mxu0 0.0
      %2611 = vmatprep.subr.mxu0 0.0
      %2612 = vmatpush1.msra.mxu0 0.0
      %2613 = vmatprep.subr.mxu0 0.0
      %2614 = vmatpush1.msra.mxu0 0.0
      %2615 = vmatprep.subr.mxu0 0.0
      %2616 = vmatpush1.msra.mxu0 0.0
      %2617 = vmatprep.subr.mxu0 0.0
      %2618 = vmatpush1.msra.mxu0 0.0
      %2619 = vmatprep.subr.mxu0 0.0
      %2620 = vmatpush1.msra.mxu0 0.0
      %2621 = vmatprep.subr.mxu0 0.0
      %2622 = vmatpush1.msra.mxu0 0.0
      %2623 = vmatprep.subr.mxu0 0.0
      %2624 = vmatpush1.msra.mxu0 0.0
      %2625 = vmatprep.subr.mxu0 0.0
      %2626 = vmatpush1.msra.mxu0 0.0
      %2627 = vmatprep.subr.mxu0 0.0
      %2628 = vmatpush1.msra.mxu0 0.0
      %2629 = vmatprep.subr.mxu0 0.0
      %2630 = vmatpush1.msra.mxu0 0.0
      %2631 = vmatprep.mubr.f32.mxu0 0.0
      %2632 = vmatmul.mubr.f32.gmra.mrb[0].mxu0 %v2538
      %v2633 = vpop.f32.mrb[0].mxu0
      %v2634 = vadd.f32 0.0, %v2633
      %v2635 = vpop.f32.mrb[0].mxu0
      %v2636 = vadd.f32 0.0, %v2635
      %2637 = vmatprep.mubr.f32.mxu0 0.0
      %2638 = vmatmul.mubr.f32.gmra.mrb[0].mxu0 %v2541
      %v2639 = vpop.f32.mrb[0].mxu0
      %v2640 = vadd.f32 0.0, %v2639
      %v2641 = vpop.f32.mrb[0].mxu0
      %v2642 = vadd.f32 0.0, %v2641
      %2643 = vmatprep.mubr.f32.mxu0 0.0
      %2644 = vmatmul.mubr.f32.gmra.mrb[0].mxu0 %v2544
      %v2645 = vpop.f32.mrb[0].mxu0
      %v2646 = vadd.f32 0.0, %v2645
      %v2647 = vpop.f32.mrb[0].mxu0
      %v2648 = vadd.f32 0.0, %v2647
      %2649 = vmatprep.mubr.f32.mxu0 0.0
      %2650 = vmatmul.mubr.f32.gmra.mrb[0].mxu0 %v2547
      %v2651 = vpop.f32.mrb[0].mxu0
      %v2652 = vadd.f32 0.0, %v2651
      %v2653 = vpop.f32.mrb[0].mxu0
      %v2654 = vadd.f32 0.0, %v2653
      %2655 = vmatprep.mubr.f32.mxu0 0.0
      %2656 = vmatmul.mubr.f32.gmra.mrb[0].mxu0 %v2550
      %v2657 = vpop.f32.mrb[0].mxu0
      %v2658 = vadd.f32 0.0, %v2657
      %v2659 = vpop.f32.mrb[0].mxu0
      %v2660 = vadd.f32 0.0, %v2659
      %2661 = vmatprep.mubr.f32.mxu0 0.0
      %2662 = vmatmul.mubr.f32.gmra.mrb[0].mxu0 %v2553
      %v2663 = vpop.f32.mrb[0].mxu0
      %v2664 = vadd.f32 0.0, %v2663
      %v2665 = vpop.f32.mrb[0].mxu0
      %v2666 = vadd.f32 0.0, %v2665
      %2667 = vmatprep.mubr.f32.mxu0 0.0
      %2668 = vmatmul.mubr.f32.gmra.mrb[0].mxu0 %v2556
      %v2669 = vpop.f32.mrb[0].mxu0
      %v2670 = vadd.f32 0.0, %v2669
      %v2671 = vpop.f32.mrb[0].mxu0
      %v2672 = vadd.f32 0.0, %v2671
      %2673 = vmatprep.mubr.f32.mxu0 0.0
      %2674 = vmatmul.mubr.f32.gmra.mrb[0].mxu0 %v2559
      %v2675 = vpop.f32.mrb[0].mxu0
      %v2676 = vadd.f32 0.0, %v2675
      %v2677 = vpop.f32.mrb[0].mxu0
      %v2678 = vadd.f32 0.0, %v2677
      %2679 = vdwg.mxu0
      %v2680 = vmul.f32 %v2634, 1.442695
      %v2681 = vpow.pop %v2680
      %v2682 = vmul.f32 %v2636, 1.442695
      %v2683 = vpow.pop %v2682
      %v2684 = vmul.f32 %v2640, 1.442695
      %v2685 = vpow.pop %v2684
      %v2686 = vmul.f32 %v2642, 1.442695
      %v2687 = vpow.pop %v2686
      %v2688 = vmul.f32 %v2646, 1.442695
      %v2689 = vpow.pop %v2688
      %v2690 = vmul.f32 %v2648, 1.442695
      %v2691 = vpow.pop %v2690
      %v2692 = vmul.f32 %v2652, 1.442695
      %v2693 = vpow.pop %v2692
      %v2694 = vmul.f32 %v2654, 1.442695
      %v2695 = vpow.pop %v2694
      %v2696 = vmul.f32 %v2658, 1.442695
      %v2697 = vpow.pop %v2696
      %v2698 = vmul.f32 %v2660, 1.442695
      %v2699 = vpow.pop %v2698
      %v2700 = vmul.f32 %v2664, 1.442695
      %v2701 = vpow.pop %v2700
      %v2702 = vmul.f32 %v2666, 1.442695
      %v2703 = vpow.pop %v2702
      %v2704 = vmul.f32 %v2670, 1.442695
      %v2705 = vpow.pop %v2704
      %v2706 = vmul.f32 %v2672, 1.442695
      %v2707 = vpow.pop %v2706
      %v2708 = vmul.f32 %v2676, 1.442695
      %v2709 = vpow.pop %v2708
      %v2710 = vmul.f32 %v2678, 1.442695
      %v2711 = vpow.pop %v2710
      %v2712 = vmul.f32 %v2529, %v2326
      %v2713 = vmul.f32 %v2530, %v2327
      %v2714 = vmul.f32 %v2531, %v2328
      %v2715 = vmul.f32 %v2532, %v2329
      %v2716 = vmul.f32 %v2533, %v2330
      %v2717 = vmul.f32 %v2534, %v2331
      %v2718 = vmul.f32 %v2535, %v2332
      %v2719 = vmul.f32 %v2536, %v2333
      %v2721 = vsel %vm2340, %v2712, 0
      %v2724 = vsel %vm2340, %v2713, 0
      %v2727 = vsel %vm2340, %v2714, 0
      %v2730 = vsel %vm2340, %v2715, 0
      %v2733 = vsel %vm2340, %v2716, 0
      %v2736 = vsel %vm2340, %v2717, 0
      %v2739 = vsel %vm2340, %v2718, 0
      %v2742 = vsel %vm2340, %v2719, 0
      %v2745 = vsel %vm1372, %v1037, 0
      %v2748 = vsel %vm1372, %v1038, 0
      %2750 = vmatprep.subr.mxu0 %v1036
      %2751 = vmatpush1.msra.mxu0 %v1035
      %2752 = vmatprep.subr.mxu0 %v2748
      %2753 = vmatpush1.msra.mxu0 %v2745
      %2754 = vmatprep.subr.mxu0 0.0
      %2755 = vmatpush1.msra.mxu0 0.0
      %2756 = vmatprep.subr.mxu0 0.0
      %2757 = vmatpush1.msra.mxu0 0.0
      %2758 = vmatprep.subr.mxu0 0.0
      %2759 = vmatpush1.msra.mxu0 0.0
      %2760 = vmatprep.subr.mxu0 0.0
      %2761 = vmatpush1.msra.mxu0 0.0
      %2762 = vmatprep.subr.mxu0 0.0
      %2763 = vmatpush1.msra.mxu0 0.0
      %2764 = vmatprep.subr.mxu0 0.0
      %2765 = vmatpush1.msra.mxu0 0.0
      %2766 = vmatprep.subr.mxu0 0.0
      %2767 = vmatpush1.msra.mxu0 0.0
      %2768 = vmatprep.subr.mxu0 0.0
      %2769 = vmatpush1.msra.mxu0 0.0
      %2770 = vmatprep.subr.mxu0 0.0
      %2771 = vmatpush1.msra.mxu0 0.0
      %2772 = vmatprep.subr.mxu0 0.0
      %2773 = vmatpush1.msra.mxu0 0.0
      %2774 = vmatprep.subr.mxu0 0.0
      %2775 = vmatpush1.msra.mxu0 0.0
      %2776 = vmatprep.subr.mxu0 0.0
      %2777 = vmatpush1.msra.mxu0 0.0
      %2778 = vmatprep.subr.mxu0 0.0
      %2779 = vmatpush1.msra.mxu0 0.0
      %2780 = vmatprep.subr.mxu0 0.0
      %2781 = vmatpush1.msra.mxu0 0.0
      %2782 = vmatprep.subr.mxu0 0.0
      %2783 = vmatpush1.msra.mxu0 0.0
      %2784 = vmatprep.subr.mxu0 0.0
      %2785 = vmatpush1.msra.mxu0 0.0
      %2786 = vmatprep.subr.mxu0 0.0
      %2787 = vmatpush1.msra.mxu0 0.0
      %2788 = vmatprep.subr.mxu0 0.0
      %2789 = vmatpush1.msra.mxu0 0.0
      %2790 = vmatprep.subr.mxu0 0.0
      %2791 = vmatpush1.msra.mxu0 0.0
      %2792 = vmatprep.subr.mxu0 0.0
      %2793 = vmatpush1.msra.mxu0 0.0
      %2794 = vmatprep.subr.mxu0 0.0
      %2795 = vmatpush1.msra.mxu0 0.0
      %2796 = vmatprep.subr.mxu0 0.0
      %2797 = vmatpush1.msra.mxu0 0.0
      %2798 = vmatprep.subr.mxu0 0.0
      %2799 = vmatpush1.msra.mxu0 0.0
      %2800 = vmatprep.subr.mxu0 0.0
      %2801 = vmatpush1.msra.mxu0 0.0
      %2802 = vmatprep.subr.mxu0 0.0
      %2803 = vmatpush1.msra.mxu0 0.0
      %2804 = vmatprep.subr.mxu0 0.0
      %2805 = vmatpush1.msra.mxu0 0.0
      %2806 = vmatprep.subr.mxu0 0.0
      %2807 = vmatpush1.msra.mxu0 0.0
      %2808 = vmatprep.subr.mxu0 0.0
      %2809 = vmatpush1.msra.mxu0 0.0
      %2810 = vmatprep.subr.mxu0 0.0
      %2811 = vmatpush1.msra.mxu0 0.0
      %2812 = vmatprep.subr.mxu0 0.0
      %2813 = vmatpush1.msra.mxu0 0.0
      %2814 = vmatprep.mubr.f32.mxu0 0.0
      %2815 = vmatmul.mubr.f32.gmra.mrb[0].mxu0 %v2721
      %v2816 = vpop.f32.mrb[0].mxu0
      %v2817 = vadd.f32 0.0, %v2816
      %v2818 = vpop.f32.mrb[0].mxu0
      %v2819 = vadd.f32 0.0, %v2818
      %2820 = vmatprep.mubr.f32.mxu0 0.0
      %2821 = vmatmul.mubr.f32.gmra.mrb[0].mxu0 %v2724
      %v2822 = vpop.f32.mrb[0].mxu0
      %v2823 = vadd.f32 0.0, %v2822
      %v2824 = vpop.f32.mrb[0].mxu0
      %v2825 = vadd.f32 0.0, %v2824
      %2826 = vmatprep.mubr.f32.mxu0 0.0
      %2827 = vmatmul.mubr.f32.gmra.mrb[0].mxu0 %v2727
      %v2828 = vpop.f32.mrb[0].mxu0
      %v2829 = vadd.f32 0.0, %v2828
      %v2830 = vpop.f32.mrb[0].mxu0
      %v2831 = vadd.f32 0.0, %v2830
      %2832 = vmatprep.mubr.f32.mxu0 0.0
      %2833 = vmatmul.mubr.f32.gmra.mrb[0].mxu0 %v2730
      %v2834 = vpop.f32.mrb[0].mxu0
      %v2835 = vadd.f32 0.0, %v2834
      %v2836 = vpop.f32.mrb[0].mxu0
      %v2837 = vadd.f32 0.0, %v2836
      %2838 = vmatprep.mubr.f32.mxu0 0.0
      %2839 = vmatmul.mubr.f32.gmra.mrb[0].mxu0 %v2733
      %v2840 = vpop.f32.mrb[0].mxu0
      %v2841 = vadd.f32 0.0, %v2840
      %v2842 = vpop.f32.mrb[0].mxu0
      %v2843 = vadd.f32 0.0, %v2842
      %2844 = vmatprep.mubr.f32.mxu0 0.0
      %2845 = vmatmul.mubr.f32.gmra.mrb[0].mxu0 %v2736
      %v2846 = vpop.f32.mrb[0].mxu0
      %v2847 = vadd.f32 0.0, %v2846
      %v2848 = vpop.f32.mrb[0].mxu0
      %v2849 = vadd.f32 0.0, %v2848
      %2850 = vmatprep.mubr.f32.mxu0 0.0
      %2851 = vmatmul.mubr.f32.gmra.mrb[0].mxu0 %v2739
      %v2852 = vpop.f32.mrb[0].mxu0
      %v2853 = vadd.f32 0.0, %v2852
      %v2854 = vpop.f32.mrb[0].mxu0
      %v2855 = vadd.f32 0.0, %v2854
      %2856 = vmatprep.mubr.f32.mxu0 0.0
      %2857 = vmatmul.mubr.f32.gmra.mrb[0].mxu0 %v2742
      %v2858 = vpop.f32.mrb[0].mxu0
      %v2859 = vadd.f32 0.0, %v2858
      %v2860 = vpop.f32.mrb[0].mxu0
      %v2861 = vadd.f32 0.0, %v2860
      %2862 = vdwg.mxu0
      %v2864 = vsel %vm1372, %v1703, 0
      %v2867 = vsel %vm1372, %v1704, 0
      %2869 = vmatprep.subr.mxu0 %v1702
      %2870 = vmatpush1.msra.mxu0 %v1701
      %2871 = vmatprep.subr.mxu0 %v2867
      %2872 = vmatpush1.msra.mxu0 %v2864
      %2873 = vmatprep.subr.mxu0 0.0
      %2874 = vmatpush1.msra.mxu0 0.0
      %2875 = vmatprep.subr.mxu0 0.0
      %2876 = vmatpush1.msra.mxu0 0.0
      %2877 = vmatprep.subr.mxu0 0.0
      %2878 = vmatpush1.msra.mxu0 0.0
      %2879 = vmatprep.subr.mxu0 0.0
      %2880 = vmatpush1.msra.mxu0 0.0
      %2881 = vmatprep.subr.mxu0 0.0
      %2882 = vmatpush1.msra.mxu0 0.0
      %2883 = vmatprep.subr.mxu0 0.0
      %2884 = vmatpush1.msra.mxu0 0.0
      %2885 = vmatprep.subr.mxu0 0.0
      %2886 = vmatpush1.msra.mxu0 0.0
      %2887 = vmatprep.subr.mxu0 0.0
      %2888 = vmatpush1.msra.mxu0 0.0
      %2889 = vmatprep.subr.mxu0 0.0
      %2890 = vmatpush1.msra.mxu0 0.0
      %2891 = vmatprep.subr.mxu0 0.0
      %2892 = vmatpush1.msra.mxu0 0.0
      %2893 = vmatprep.subr.mxu0 0.0
      %2894 = vmatpush1.msra.mxu0 0.0
      %2895 = vmatprep.subr.mxu0 0.0
      %2896 = vmatpush1.msra.mxu0 0.0
      %2897 = vmatprep.subr.mxu0 0.0
      %2898 = vmatpush1.msra.mxu0 0.0
      %2899 = vmatprep.subr.mxu0 0.0
      %2900 = vmatpush1.msra.mxu0 0.0
      %2901 = vmatprep.subr.mxu0 0.0
      %2902 = vmatpush1.msra.mxu0 0.0
      %2903 = vmatprep.subr.mxu0 0.0
      %2904 = vmatpush1.msra.mxu0 0.0
      %2905 = vmatprep.subr.mxu0 0.0
      %2906 = vmatpush1.msra.mxu0 0.0
      %2907 = vmatprep.subr.mxu0 0.0
      %2908 = vmatpush1.msra.mxu0 0.0
      %2909 = vmatprep.subr.mxu0 0.0
      %2910 = vmatpush1.msra.mxu0 0.0
      %2911 = vmatprep.subr.mxu0 0.0
      %2912 = vmatpush1.msra.mxu0 0.0
      %2913 = vmatprep.subr.mxu0 0.0
      %2914 = vmatpush1.msra.mxu0 0.0
      %2915 = vmatprep.subr.mxu0 0.0
      %2916 = vmatpush1.msra.mxu0 0.0
      %2917 = vmatprep.subr.mxu0 0.0
      %2918 = vmatpush1.msra.mxu0 0.0
      %2919 = vmatprep.subr.mxu0 0.0
      %2920 = vmatpush1.msra.mxu0 0.0
      %2921 = vmatprep.subr.mxu0 0.0
      %2922 = vmatpush1.msra.mxu0 0.0
      %2923 = vmatprep.subr.mxu0 0.0
      %2924 = vmatpush1.msra.mxu0 0.0
      %2925 = vmatprep.subr.mxu0 0.0
      %2926 = vmatpush1.msra.mxu0 0.0
      %2927 = vmatprep.subr.mxu0 0.0
      %2928 = vmatpush1.msra.mxu0 0.0
      %2929 = vmatprep.subr.mxu0 0.0
      %2930 = vmatpush1.msra.mxu0 0.0
      %2931 = vmatprep.subr.mxu0 0.0
      %2932 = vmatpush1.msra.mxu0 0.0
      %2933 = vmatprep.mubr.f32.mxu0 0.0
      %2934 = vmatmul.mubr.f32.gmra.mrb[0].mxu0 %v2342
      %v2935 = vpop.f32.mrb[0].mxu0
      %v2936 = vadd.f32 0.0, %v2935
      %v2937 = vpop.f32.mrb[0].mxu0
      %v2938 = vadd.f32 0.0, %v2937
      %2939 = vmatprep.mubr.f32.mxu0 0.0
      %2940 = vmatmul.mubr.f32.gmra.mrb[0].mxu0 %v2345
      %v2941 = vpop.f32.mrb[0].mxu0
      %v2942 = vadd.f32 0.0, %v2941
      %v2943 = vpop.f32.mrb[0].mxu0
      %v2944 = vadd.f32 0.0, %v2943
      %2945 = vmatprep.mubr.f32.mxu0 0.0
      %2946 = vmatmul.mubr.f32.gmra.mrb[0].mxu0 %v2348
      %v2947 = vpop.f32.mrb[0].mxu0
      %v2948 = vadd.f32 0.0, %v2947
      %v2949 = vpop.f32.mrb[0].mxu0
      %v2950 = vadd.f32 0.0, %v2949
      %2951 = vmatprep.mubr.f32.mxu0 0.0
      %2952 = vmatmul.mubr.f32.gmra.mrb[0].mxu0 %v2351
      %v2953 = vpop.f32.mrb[0].mxu0
      %v2954 = vadd.f32 0.0, %v2953
      %v2955 = vpop.f32.mrb[0].mxu0
      %v2956 = vadd.f32 0.0, %v2955
      %2957 = vmatprep.mubr.f32.mxu0 0.0
      %2958 = vmatmul.mubr.f32.gmra.mrb[0].mxu0 %v2354
      %v2959 = vpop.f32.mrb[0].mxu0
      %v2960 = vadd.f32 0.0, %v2959
      %v2961 = vpop.f32.mrb[0].mxu0
      %v2962 = vadd.f32 0.0, %v2961
      %2963 = vmatprep.mubr.f32.mxu0 0.0
      %2964 = vmatmul.mubr.f32.gmra.mrb[0].mxu0 %v2357
      %v2965 = vpop.f32.mrb[0].mxu0
      %v2966 = vadd.f32 0.0, %v2965
      %v2967 = vpop.f32.mrb[0].mxu0
      %v2968 = vadd.f32 0.0, %v2967
      %2969 = vmatprep.mubr.f32.mxu0 0.0
      %2970 = vmatmul.mubr.f32.gmra.mrb[0].mxu0 %v2360
      %v2971 = vpop.f32.mrb[0].mxu0
      %v2972 = vadd.f32 0.0, %v2971
      %v2973 = vpop.f32.mrb[0].mxu0
      %v2974 = vadd.f32 0.0, %v2973
      %2975 = vmatprep.mubr.f32.mxu0 0.0
      %2976 = vmatmul.mubr.f32.gmra.mrb[0].mxu0 %v2363
      %v2977 = vpop.f32.mrb[0].mxu0
      %v2978 = vadd.f32 0.0, %v2977
      %v2979 = vpop.f32.mrb[0].mxu0
      %v2980 = vadd.f32 0.0, %v2979
      %2981 = vdwg.mxu0
      %v2982 = vmul.f32 %v2817, %v2936
      %v2983 = vmul.f32 %v2819, %v2938
      %v2984 = vmul.f32 %v2823, %v2942
      %v2985 = vmul.f32 %v2825, %v2944
      %v2986 = vmul.f32 %v2829, %v2948
      %v2987 = vmul.f32 %v2831, %v2950
      %v2988 = vmul.f32 %v2835, %v2954
      %v2989 = vmul.f32 %v2837, %v2956
      %v2990 = vmul.f32 %v2841, %v2960
      %v2991 = vmul.f32 %v2843, %v2962
      %v2992 = vmul.f32 %v2847, %v2966
      %v2993 = vmul.f32 %v2849, %v2968
      %v2994 = vmul.f32 %v2853, %v2972
      %v2995 = vmul.f32 %v2855, %v2974
      %v2996 = vmul.f32 %v2859, %v2978
      %v2997 = vmul.f32 %v2861, %v2980
      %v2999 = vsel %vm1372, %v1707, 0
      %v3002 = vsel %vm1372, %v1708, 0
      %3004 = vmatprep.subr.mxu0 %v1706
      %3005 = vmatpush1.msra.mxu0 %v1705
      %3006 = vmatprep.subr.mxu0 %v3002
      %3007 = vmatpush1.msra.mxu0 %v2999
      %3008 = vmatprep.subr.mxu0 0.0
      %3009 = vmatpush1.msra.mxu0 0.0
      %3010 = vmatprep.subr.mxu0 0.0
      %3011 = vmatpush1.msra.mxu0 0.0
      %3012 = vmatprep.subr.mxu0 0.0
      %3013 = vmatpush1.msra.mxu0 0.0
      %3014 = vmatprep.subr.mxu0 0.0
      %3015 = vmatpush1.msra.mxu0 0.0
      %3016 = vmatprep.subr.mxu0 0.0
      %3017 = vmatpush1.msra.mxu0 0.0
      %3018 = vmatprep.subr.mxu0 0.0
      %3019 = vmatpush1.msra.mxu0 0.0
      %3020 = vmatprep.subr.mxu0 0.0
      %3021 = vmatpush1.msra.mxu0 0.0
      %3022 = vmatprep.subr.mxu0 0.0
      %3023 = vmatpush1.msra.mxu0 0.0
      %3024 = vmatprep.subr.mxu0 0.0
      %3025 = vmatpush1.msra.mxu0 0.0
      %3026 = vmatprep.subr.mxu0 0.0
      %3027 = vmatpush1.msra.mxu0 0.0
      %3028 = vmatprep.subr.mxu0 0.0
      %3029 = vmatpush1.msra.mxu0 0.0
      %3030 = vmatprep.subr.mxu0 0.0
      %3031 = vmatpush1.msra.mxu0 0.0
      %3032 = vmatprep.subr.mxu0 0.0
      %3033 = vmatpush1.msra.mxu0 0.0
      %3034 = vmatprep.subr.mxu0 0.0
      %3035 = vmatpush1.msra.mxu0 0.0
      %3036 = vmatprep.subr.mxu0 0.0
      %3037 = vmatpush1.msra.mxu0 0.0
      %3038 = vmatprep.subr.mxu0 0.0
      %3039 = vmatpush1.msra.mxu0 0.0
      %3040 = vmatprep.subr.mxu0 0.0
      %3041 = vmatpush1.msra.mxu0 0.0
      %3042 = vmatprep.subr.mxu0 0.0
      %3043 = vmatpush1.msra.mxu0 0.0
      %3044 = vmatprep.subr.mxu0 0.0
      %3045 = vmatpush1.msra.mxu0 0.0
      %3046 = vmatprep.subr.mxu0 0.0
      %3047 = vmatpush1.msra.mxu0 0.0
      %3048 = vmatprep.subr.mxu0 0.0
      %3049 = vmatpush1.msra.mxu0 0.0
      %3050 = vmatprep.subr.mxu0 0.0
      %3051 = vmatpush1.msra.mxu0 0.0
      %3052 = vmatprep.subr.mxu0 0.0
      %3053 = vmatpush1.msra.mxu0 0.0
      %3054 = vmatprep.subr.mxu0 0.0
      %3055 = vmatpush1.msra.mxu0 0.0
      %3056 = vmatprep.subr.mxu0 0.0
      %3057 = vmatpush1.msra.mxu0 0.0
      %3058 = vmatprep.subr.mxu0 0.0
      %3059 = vmatpush1.msra.mxu0 0.0
      %3060 = vmatprep.subr.mxu0 0.0
      %3061 = vmatpush1.msra.mxu0 0.0
      %3062 = vmatprep.subr.mxu0 0.0
      %3063 = vmatpush1.msra.mxu0 0.0
      %3064 = vmatprep.subr.mxu0 0.0
      %3065 = vmatpush1.msra.mxu0 0.0
      %3066 = vmatprep.subr.mxu0 0.0
      %3067 = vmatpush1.msra.mxu0 0.0
      %3068 = vmatprep.mubr.f32.mxu0 0.0
      %3069 = vmatmul.mubr.f32.gmra.mrb[0].mxu0 %v2342
      %v3070 = vpop.f32.mrb[0].mxu0
      %v3071 = vadd.f32 0.0, %v3070
      %v3072 = vpop.f32.mrb[0].mxu0
      %v3073 = vadd.f32 0.0, %v3072
      %3074 = vmatprep.mubr.f32.mxu0 0.0
      %3075 = vmatmul.mubr.f32.gmra.mrb[0].mxu0 %v2345
      %v3076 = vpop.f32.mrb[0].mxu0
      %v3077 = vadd.f32 0.0, %v3076
      %v3078 = vpop.f32.mrb[0].mxu0
      %v3079 = vadd.f32 0.0, %v3078
      %3080 = vmatprep.mubr.f32.mxu0 0.0
      %3081 = vmatmul.mubr.f32.gmra.mrb[0].mxu0 %v2348
      %v3082 = vpop.f32.mrb[0].mxu0
      %v3083 = vadd.f32 0.0, %v3082
      %v3084 = vpop.f32.mrb[0].mxu0
      %v3085 = vadd.f32 0.0, %v3084
      %3086 = vmatprep.mubr.f32.mxu0 0.0
      %3087 = vmatmul.mubr.f32.gmra.mrb[0].mxu0 %v2351
      %v3088 = vpop.f32.mrb[0].mxu0
      %v3089 = vadd.f32 0.0, %v3088
      %v3090 = vpop.f32.mrb[0].mxu0
      %v3091 = vadd.f32 0.0, %v3090
      %3092 = vmatprep.mubr.f32.mxu0 0.0
      %3093 = vmatmul.mubr.f32.gmra.mrb[0].mxu0 %v2354
      %v3094 = vpop.f32.mrb[0].mxu0
      %v3095 = vadd.f32 0.0, %v3094
      %v3096 = vpop.f32.mrb[0].mxu0
      %v3097 = vadd.f32 0.0, %v3096
      %3098 = vmatprep.mubr.f32.mxu0 0.0
      %3099 = vmatmul.mubr.f32.gmra.mrb[0].mxu0 %v2357
      %v3100 = vpop.f32.mrb[0].mxu0
      %v3101 = vadd.f32 0.0, %v3100
      %v3102 = vpop.f32.mrb[0].mxu0
      %v3103 = vadd.f32 0.0, %v3102
      %3104 = vmatprep.mubr.f32.mxu0 0.0
      %3105 = vmatmul.mubr.f32.gmra.mrb[0].mxu0 %v2360
      %v3106 = vpop.f32.mrb[0].mxu0
      %v3107 = vadd.f32 0.0, %v3106
      %v3108 = vpop.f32.mrb[0].mxu0
      %v3109 = vadd.f32 0.0, %v3108
      %3110 = vmatprep.mubr.f32.mxu0 0.0
      %3111 = vmatmul.mubr.f32.gmra.mrb[0].mxu0 %v2363
      %v3112 = vpop.f32.mrb[0].mxu0
      %v3113 = vadd.f32 0.0, %v3112
      %v3114 = vpop.f32.mrb[0].mxu0
      %v3115 = vadd.f32 0.0, %v3114
      %3116 = vdwg.mxu0
      %vm3117 = vcmp.lt.s32.totalorder %v1734, 1
      %vm3118 = vcmp.lt.s32.totalorder %v1735, 1
      %vm3119 = vcmp.lt.s32.totalorder %v1736, 1
      %vm3120 = vcmp.lt.s32.totalorder %v1737, 1
      %vm3121 = vcmp.lt.s32.totalorder %v1738, 1
      %vm3122 = vcmp.lt.s32.totalorder %v1739, 1
      %vm3123 = vcmp.lt.s32.totalorder %v1740, 1
      %vm3124 = vcmp.lt.s32.totalorder %v1741, 1
      %v3125 = vsel %vm3117, 1.0, 0.0
      %v3126 = vsel %vm3118, 1.0, 0.0
      %v3127 = vsel %vm3119, 1.0, 0.0
      %v3128 = vsel %vm3120, 1.0, 0.0
      %v3129 = vsel %vm3121, 1.0, 0.0
      %v3130 = vsel %vm3122, 1.0, 0.0
      %v3131 = vsel %vm3123, 1.0, 0.0
      %v3132 = vsel %vm3124, 1.0, 0.0
      %3133 = vmatprep.subr.mxu0 %v2983
      %3134 = vmatpush1.msra.mxu0 %v2982
      %3135 = vmatprep.subr.mxu0 %v2985
      %3136 = vmatpush1.msra.mxu0 %v2984
      %3137 = vmatprep.subr.mxu0 %v2987
      %3138 = vmatpush1.msra.mxu0 %v2986
      %3139 = vmatprep.subr.mxu0 %v2989
      %3140 = vmatpush1.msra.mxu0 %v2988
      %3141 = vmatprep.subr.mxu0 %v2991
      %3142 = vmatpush1.msra.mxu0 %v2990
      %3143 = vmatprep.subr.mxu0 %v2993
      %3144 = vmatpush1.msra.mxu0 %v2992
      %3145 = vmatprep.subr.mxu0 %v2995
      %3146 = vmatpush1.msra.mxu0 %v2994
      %3147 = vmatprep.subr.mxu0 %v2997
      %3148 = vmatpush1.msra.mxu0 %v2996
      %3149 = vmatprep.subr.mxu0 0.0
      %3150 = vmatpush1.msra.mxu0 0.0
      %3151 = vmatprep.subr.mxu0 0.0
      %3152 = vmatpush1.msra.mxu0 0.0
      %3153 = vmatprep.subr.mxu0 0.0
      %3154 = vmatpush1.msra.mxu0 0.0
      %3155 = vmatprep.subr.mxu0 0.0
      %3156 = vmatpush1.msra.mxu0 0.0
      %3157 = vmatprep.subr.mxu0 0.0
      %3158 = vmatpush1.msra.mxu0 0.0
      %3159 = vmatprep.subr.mxu0 0.0
      %3160 = vmatpush1.msra.mxu0 0.0
      %3161 = vmatprep.subr.mxu0 0.0
      %3162 = vmatpush1.msra.mxu0 0.0
      %3163 = vmatprep.subr.mxu0 0.0
      %3164 = vmatpush1.msra.mxu0 0.0
      %3165 = vmatprep.subr.mxu0 0.0
      %3166 = vmatpush1.msra.mxu0 0.0
      %3167 = vmatprep.subr.mxu0 0.0
      %3168 = vmatpush1.msra.mxu0 0.0
      %3169 = vmatprep.subr.mxu0 0.0
      %3170 = vmatpush1.msra.mxu0 0.0
      %3171 = vmatprep.subr.mxu0 0.0
      %3172 = vmatpush1.msra.mxu0 0.0
      %3173 = vmatprep.subr.mxu0 0.0
      %3174 = vmatpush1.msra.mxu0 0.0
      %3175 = vmatprep.subr.mxu0 0.0
      %3176 = vmatpush1.msra.mxu0 0.0
      %3177 = vmatprep.subr.mxu0 0.0
      %3178 = vmatpush1.msra.mxu0 0.0
      %3179 = vmatprep.subr.mxu0 0.0
      %3180 = vmatpush1.msra.mxu0 0.0
      %3181 = vmatprep.subr.mxu0 0.0
      %3182 = vmatpush1.msra.mxu0 0.0
      %3183 = vmatprep.subr.mxu0 0.0
      %3184 = vmatpush1.msra.mxu0 0.0
      %3185 = vmatprep.subr.mxu0 0.0
      %3186 = vmatpush1.msra.mxu0 0.0
      %3187 = vmatprep.subr.mxu0 0.0
      %3188 = vmatpush1.msra.mxu0 0.0
      %3189 = vmatprep.subr.mxu0 0.0
      %3190 = vmatpush1.msra.mxu0 0.0
      %3191 = vmatprep.subr.mxu0 0.0
      %3192 = vmatpush1.msra.mxu0 0.0
      %3193 = vmatprep.subr.mxu0 0.0
      %3194 = vmatpush1.msra.mxu0 0.0
      %3195 = vmatprep.subr.mxu0 0.0
      %3196 = vmatpush1.msra.mxu0 0.0
      %3197 = vmatprep.mubr.f32.mxu0 0.0
      %3198 = vmatmul.mubr.f32.gmra.mrb[0].mxu0 %v1770
      %v3199 = vpop.f32.mrb[0].mxu0
      %v3200 = vadd.f32 0.0, %v3199
      %v3201 = vpop.f32.mrb[0].mxu0
      %v3202 = vadd.f32 0.0, %v3201
      %3203 = vmatprep.mubr.f32.mxu0 0.0
      %3204 = vmatmul.mubr.f32.gmra.mrb[0].mxu0 %v1773
      %v3205 = vpop.f32.mrb[0].mxu0
      %v3206 = vadd.f32 0.0, %v3205
      %v3207 = vpop.f32.mrb[0].mxu0
      %v3208 = vadd.f32 0.0, %v3207
      %3209 = vmatprep.mubr.f32.mxu0 0.0
      %3210 = vmatmul.mubr.f32.gmra.mrb[0].mxu0 %v1776
      %v3211 = vpop.f32.mrb[0].mxu0
      %v3212 = vadd.f32 0.0, %v3211
      %v3213 = vpop.f32.mrb[0].mxu0
      %v3214 = vadd.f32 0.0, %v3213
      %3215 = vmatprep.mubr.f32.mxu0 0.0
      %3216 = vmatmul.mubr.f32.gmra.mrb[0].mxu0 %v1779
      %v3217 = vpop.f32.mrb[0].mxu0
      %v3218 = vadd.f32 0.0, %v3217
      %v3219 = vpop.f32.mrb[0].mxu0
      %v3220 = vadd.f32 0.0, %v3219
      %3221 = vmatprep.mubr.f32.mxu0 0.0
      %3222 = vmatmul.mubr.f32.gmra.mrb[0].mxu0 %v1782
      %v3223 = vpop.f32.mrb[0].mxu0
      %v3224 = vadd.f32 0.0, %v3223
      %v3225 = vpop.f32.mrb[0].mxu0
      %v3226 = vadd.f32 0.0, %v3225
      %3227 = vmatprep.mubr.f32.mxu0 0.0
      %3228 = vmatmul.mubr.f32.gmra.mrb[0].mxu0 %v1785
      %v3229 = vpop.f32.mrb[0].mxu0
      %v3230 = vadd.f32 0.0, %v3229
      %v3231 = vpop.f32.mrb[0].mxu0
      %v3232 = vadd.f32 0.0, %v3231
      %3233 = vmatprep.mubr.f32.mxu0 0.0
      %3234 = vmatmul.mubr.f32.gmra.mrb[0].mxu0 %v1788
      %v3235 = vpop.f32.mrb[0].mxu0
      %v3236 = vadd.f32 0.0, %v3235
      %v3237 = vpop.f32.mrb[0].mxu0
      %v3238 = vadd.f32 0.0, %v3237
      %3239 = vmatprep.mubr.f32.mxu0 0.0
      %3240 = vmatmul.mubr.f32.gmra.mrb[0].mxu0 %v1791
      %v3241 = vpop.f32.mrb[0].mxu0
      %v3242 = vadd.f32 0.0, %v3241
      %v3243 = vpop.f32.mrb[0].mxu0
      %v3244 = vadd.f32 0.0, %v3243
      %3245 = vdwg.mxu0
      %v3246 = vmul.f32 %v2681, %v3200
      %v3247 = vmul.f32 %v2683, %v3202
      %v3248 = vmul.f32 %v2685, %v3206
      %v3249 = vmul.f32 %v2687, %v3208
      %v3250 = vmul.f32 %v2689, %v3212
      %v3251 = vmul.f32 %v2691, %v3214
      %v3252 = vmul.f32 %v2693, %v3218
      %v3253 = vmul.f32 %v2695, %v3220
      %v3254 = vmul.f32 %v2697, %v3224
      %v3255 = vmul.f32 %v2699, %v3226
      %v3256 = vmul.f32 %v2701, %v3230
      %v3257 = vmul.f32 %v2703, %v3232
      %v3258 = vmul.f32 %v2705, %v3236
      %v3259 = vmul.f32 %v2707, %v3238
      %v3260 = vmul.f32 %v2709, %v3242
      %v3261 = vmul.f32 %v2711, %v3244
      %v3262 = vadd.f32 %v2982, %v3246
      %v3263 = vadd.f32 %v2983, %v3247
      %v3264 = vadd.f32 %v2984, %v3248
      %v3265 = vadd.f32 %v2985, %v3249
      %v3266 = vadd.f32 %v2986, %v3250
      %v3267 = vadd.f32 %v2987, %v3251
      %v3268 = vadd.f32 %v2988, %v3252
      %v3269 = vadd.f32 %v2989, %v3253
      %v3270 = vadd.f32 %v2990, %v3254
      %v3271 = vadd.f32 %v2991, %v3255
      %v3272 = vadd.f32 %v2992, %v3256
      %v3273 = vadd.f32 %v2993, %v3257
      %v3274 = vadd.f32 %v2994, %v3258
      %v3275 = vadd.f32 %v2995, %v3259
      %v3276 = vadd.f32 %v2996, %v3260
      %v3277 = vadd.f32 %v2997, %v3261
      %3278 = vmatprep.subr.mxu0 %v2683
      %3279 = vmatpush1.msra.mxu0 %v2681
      %3280 = vmatprep.subr.mxu0 %v2687
      %3281 = vmatpush1.msra.mxu0 %v2685
      %3282 = vmatprep.subr.mxu0 %v2691
      %3283 = vmatpush1.msra.mxu0 %v2689
      %3284 = vmatprep.subr.mxu0 %v2695
      %3285 = vmatpush1.msra.mxu0 %v2693
      %3286 = vmatprep.subr.mxu0 %v2699
      %3287 = vmatpush1.msra.mxu0 %v2697
      %3288 = vmatprep.subr.mxu0 %v2703
      %3289 = vmatpush1.msra.mxu0 %v2701
      %3290 = vmatprep.subr.mxu0 %v2707
      %3291 = vmatpush1.msra.mxu0 %v2705
      %3292 = vmatprep.subr.mxu0 %v2711
      %3293 = vmatpush1.msra.mxu0 %v2709
      %3294 = vmatprep.subr.mxu0 0.0
      %3295 = vmatpush1.msra.mxu0 0.0
      %3296 = vmatprep.subr.mxu0 0.0
      %3297 = vmatpush1.msra.mxu0 0.0
      %3298 = vmatprep.subr.mxu0 0.0
      %3299 = vmatpush1.msra.mxu0 0.0
      %3300 = vmatprep.subr.mxu0 0.0
      %3301 = vmatpush1.msra.mxu0 0.0
      %3302 = vmatprep.subr.mxu0 0.0
      %3303 = vmatpush1.msra.mxu0 0.0
      %3304 = vmatprep.subr.mxu0 0.0
      %3305 = vmatpush1.msra.mxu0 0.0
      %3306 = vmatprep.subr.mxu0 0.0
      %3307 = vmatpush1.msra.mxu0 0.0
      %3308 = vmatprep.subr.mxu0 0.0
      %3309 = vmatpush1.msra.mxu0 0.0
      %3310 = vmatprep.subr.mxu0 0.0
      %3311 = vmatpush1.msra.mxu0 0.0
      %3312 = vmatprep.subr.mxu0 0.0
      %3313 = vmatpush1.msra.mxu0 0.0
      %3314 = vmatprep.subr.mxu0 0.0
      %3315 = vmatpush1.msra.mxu0 0.0
      %3316 = vmatprep.subr.mxu0 0.0
      %3317 = vmatpush1.msra.mxu0 0.0
      %3318 = vmatprep.subr.mxu0 0.0
      %3319 = vmatpush1.msra.mxu0 0.0
      %3320 = vmatprep.subr.mxu0 0.0
      %3321 = vmatpush1.msra.mxu0 0.0
      %3322 = vmatprep.subr.mxu0 0.0
      %3323 = vmatpush1.msra.mxu0 0.0
      %3324 = vmatprep.subr.mxu0 0.0
      %3325 = vmatpush1.msra.mxu0 0.0
      %3326 = vmatprep.subr.mxu0 0.0
      %3327 = vmatpush1.msra.mxu0 0.0
      %3328 = vmatprep.subr.mxu0 0.0
      %3329 = vmatpush1.msra.mxu0 0.0
      %3330 = vmatprep.subr.mxu0 0.0
      %3331 = vmatpush1.msra.mxu0 0.0
      %3332 = vmatprep.subr.mxu0 0.0
      %3333 = vmatpush1.msra.mxu0 0.0
      %3334 = vmatprep.subr.mxu0 0.0
      %3335 = vmatpush1.msra.mxu0 0.0
      %3336 = vmatprep.subr.mxu0 0.0
      %3337 = vmatpush1.msra.mxu0 0.0
      %3338 = vmatprep.subr.mxu0 0.0
      %3339 = vmatpush1.msra.mxu0 0.0
      %3340 = vmatprep.subr.mxu0 0.0
      %3341 = vmatpush1.msra.mxu0 0.0
      %3342 = vmatprep.mubr.f32.mxu0 0.0
      %3343 = vmatmul.mubr.f32.gmra.mrb[0].mxu0 %v1770
      %v3344 = vpop.f32.mrb[0].mxu0
      %v3345 = vadd.f32 %v3125, %v3344
      %v3346 = vpop.f32.mrb[0].mxu0
      %v3347 = vadd.f32 %v3125, %v3346
      %3348 = vmatprep.mubr.f32.mxu0 0.0
      %3349 = vmatmul.mubr.f32.gmra.mrb[0].mxu0 %v1773
      %v3350 = vpop.f32.mrb[0].mxu0
      %v3351 = vadd.f32 %v3126, %v3350
      %v3352 = vpop.f32.mrb[0].mxu0
      %v3353 = vadd.f32 %v3126, %v3352
      %3354 = vmatprep.mubr.f32.mxu0 0.0
      %3355 = vmatmul.mubr.f32.gmra.mrb[0].mxu0 %v1776
      %v3356 = vpop.f32.mrb[0].mxu0
      %v3357 = vadd.f32 %v3127, %v3356
      %v3358 = vpop.f32.mrb[0].mxu0
      %v3359 = vadd.f32 %v3127, %v3358
      %3360 = vmatprep.mubr.f32.mxu0 0.0
      %3361 = vmatmul.mubr.f32.gmra.mrb[0].mxu0 %v1779
      %v3362 = vpop.f32.mrb[0].mxu0
      %v3363 = vadd.f32 %v3128, %v3362
      %v3364 = vpop.f32.mrb[0].mxu0
      %v3365 = vadd.f32 %v3128, %v3364
      %3366 = vmatprep.mubr.f32.mxu0 0.0
      %3367 = vmatmul.mubr.f32.gmra.mrb[0].mxu0 %v1782
      %v3368 = vpop.f32.mrb[0].mxu0
      %v3369 = vadd.f32 %v3129, %v3368
      %v3370 = vpop.f32.mrb[0].mxu0
      %v3371 = vadd.f32 %v3129, %v3370
      %3372 = vmatprep.mubr.f32.mxu0 0.0
      %3373 = vmatmul.mubr.f32.gmra.mrb[0].mxu0 %v1785
      %v3374 = vpop.f32.mrb[0].mxu0
      %v3375 = vadd.f32 %v3130, %v3374
      %v3376 = vpop.f32.mrb[0].mxu0
      %v3377 = vadd.f32 %v3130, %v3376
      %3378 = vmatprep.mubr.f32.mxu0 0.0
      %3379 = vmatmul.mubr.f32.gmra.mrb[0].mxu0 %v1788
      %v3380 = vpop.f32.mrb[0].mxu0
      %v3381 = vadd.f32 %v3131, %v3380
      %v3382 = vpop.f32.mrb[0].mxu0
      %v3383 = vadd.f32 %v3131, %v3382
      %3384 = vmatprep.mubr.f32.mxu0 0.0
      %3385 = vmatmul.mubr.f32.gmra.mrb[0].mxu0 %v1791
      %v3386 = vpop.f32.mrb[0].mxu0
      %v3387 = vadd.f32 %v3132, %v3386
      %v3388 = vpop.f32.mrb[0].mxu0
      %v3389 = vadd.f32 %v3132, %v3388
      %3390 = vdwg.mxu0
      %v3391 = vmul.f32 %v2681, %v3345
      %v3392 = vmul.f32 %v2683, %v3347
      %v3393 = vmul.f32 %v2685, %v3351
      %v3394 = vmul.f32 %v2687, %v3353
      %v3395 = vmul.f32 %v2689, %v3357
      %v3396 = vmul.f32 %v2691, %v3359
      %v3397 = vmul.f32 %v2693, %v3363
      %v3398 = vmul.f32 %v2695, %v3365
      %v3399 = vmul.f32 %v2697, %v3369
      %v3400 = vmul.f32 %v2699, %v3371
      %v3401 = vmul.f32 %v2701, %v3375
      %v3402 = vmul.f32 %v2703, %v3377
      %v3403 = vmul.f32 %v2705, %v3381
      %v3404 = vmul.f32 %v2707, %v3383
      %v3405 = vmul.f32 %v2709, %v3387
      %v3406 = vmul.f32 %v2711, %v3389
      %vm3407 = vcmp.lt.s32.totalorder %v1734, 2
      %vm3408 = vcmp.lt.s32.totalorder %v1735, 2
      %vm3409 = vcmp.lt.s32.totalorder %v1736, 2
      %vm3410 = vcmp.lt.s32.totalorder %v1737, 2
      %vm3411 = vcmp.lt.s32.totalorder %v1738, 2
      %vm3412 = vcmp.lt.s32.totalorder %v1739, 2
      %vm3413 = vcmp.lt.s32.totalorder %v1740, 2
      %vm3414 = vcmp.lt.s32.totalorder %v1741, 2
      %v3415 = vsel %vm3407, 1.0, 0.0
      %v3416 = vsel %vm3408, 1.0, 0.0
      %v3417 = vsel %vm3409, 1.0, 0.0
      %v3418 = vsel %vm3410, 1.0, 0.0
      %v3419 = vsel %vm3411, 1.0, 0.0
      %v3420 = vsel %vm3412, 1.0, 0.0
      %v3421 = vsel %vm3413, 1.0, 0.0
      %v3422 = vsel %vm3414, 1.0, 0.0
      %3423 = vmatprep.subr.mxu0 %v3263
      %3424 = vmatpush1.msra.mxu0 %v3262
      %3425 = vmatprep.subr.mxu0 %v3265
      %3426 = vmatpush1.msra.mxu0 %v3264
      %3427 = vmatprep.subr.mxu0 %v3267
      %3428 = vmatpush1.msra.mxu0 %v3266
      %3429 = vmatprep.subr.mxu0 %v3269
      %3430 = vmatpush1.msra.mxu0 %v3268
      %3431 = vmatprep.subr.mxu0 %v3271
      %3432 = vmatpush1.msra.mxu0 %v3270
      %3433 = vmatprep.subr.mxu0 %v3273
      %3434 = vmatpush1.msra.mxu0 %v3272
      %3435 = vmatprep.subr.mxu0 %v3275
      %3436 = vmatpush1.msra.mxu0 %v3274
      %3437 = vmatprep.subr.mxu0 %v3277
      %3438 = vmatpush1.msra.mxu0 %v3276
      %3439 = vmatprep.subr.mxu0 0.0
      %3440 = vmatpush1.msra.mxu0 0.0
      %3441 = vmatprep.subr.mxu0 0.0
      %3442 = vmatpush1.msra.mxu0 0.0
      %3443 = vmatprep.subr.mxu0 0.0
      %3444 = vmatpush1.msra.mxu0 0.0
      %3445 = vmatprep.subr.mxu0 0.0
      %3446 = vmatpush1.msra.mxu0 0.0
      %3447 = vmatprep.subr.mxu0 0.0
      %3448 = vmatpush1.msra.mxu0 0.0
      %3449 = vmatprep.subr.mxu0 0.0
      %3450 = vmatpush1.msra.mxu0 0.0
      %3451 = vmatprep.subr.mxu0 0.0
      %3452 = vmatpush1.msra.mxu0 0.0
      %3453 = vmatprep.subr.mxu0 0.0
      %3454 = vmatpush1.msra.mxu0 0.0
      %3455 = vmatprep.subr.mxu0 0.0
      %3456 = vmatpush1.msra.mxu0 0.0
      %3457 = vmatprep.subr.mxu0 0.0
      %3458 = vmatpush1.msra.mxu0 0.0
      %3459 = vmatprep.subr.mxu0 0.0
      %3460 = vmatpush1.msra.mxu0 0.0
      %3461 = vmatprep.subr.mxu0 0.0
      %3462 = vmatpush1.msra.mxu0 0.0
      %3463 = vmatprep.subr.mxu0 0.0
      %3464 = vmatpush1.msra.mxu0 0.0
      %3465 = vmatprep.subr.mxu0 0.0
      %3466 = vmatpush1.msra.mxu0 0.0
      %3467 = vmatprep.subr.mxu0 0.0
      %3468 = vmatpush1.msra.mxu0 0.0
      %3469 = vmatprep.subr.mxu0 0.0
      %3470 = vmatpush1.msra.mxu0 0.0
      %3471 = vmatprep.subr.mxu0 0.0
      %3472 = vmatpush1.msra.mxu0 0.0
      %3473 = vmatprep.subr.mxu0 0.0
      %3474 = vmatpush1.msra.mxu0 0.0
      %3475 = vmatprep.subr.mxu0 0.0
      %3476 = vmatpush1.msra.mxu0 0.0
      %3477 = vmatprep.subr.mxu0 0.0
      %3478 = vmatpush1.msra.mxu0 0.0
      %3479 = vmatprep.subr.mxu0 0.0
      %3480 = vmatpush1.msra.mxu0 0.0
      %3481 = vmatprep.subr.mxu0 0.0
      %3482 = vmatpush1.msra.mxu0 0.0
      %3483 = vmatprep.subr.mxu0 0.0
      %3484 = vmatpush1.msra.mxu0 0.0
      %3485 = vmatprep.subr.mxu0 0.0
      %3486 = vmatpush1.msra.mxu0 0.0
      %3487 = vmatprep.mubr.f32.mxu0 0.0
      %3488 = vmatmul.mubr.f32.gmra.mrb[0].mxu0 %v1943
      %v3489 = vpop.f32.mrb[0].mxu0
      %v3490 = vadd.f32 0.0, %v3489
      %v3491 = vpop.f32.mrb[0].mxu0
      %v3492 = vadd.f32 0.0, %v3491
      %3493 = vmatprep.mubr.f32.mxu0 0.0
      %3494 = vmatmul.mubr.f32.gmra.mrb[0].mxu0 %v1946
      %v3495 = vpop.f32.mrb[0].mxu0
      %v3496 = vadd.f32 0.0, %v3495
      %v3497 = vpop.f32.mrb[0].mxu0
      %v3498 = vadd.f32 0.0, %v3497
      %3499 = vmatprep.mubr.f32.mxu0 0.0
      %3500 = vmatmul.mubr.f32.gmra.mrb[0].mxu0 %v1949
      %v3501 = vpop.f32.mrb[0].mxu0
      %v3502 = vadd.f32 0.0, %v3501
      %v3503 = vpop.f32.mrb[0].mxu0
      %v3504 = vadd.f32 0.0, %v3503
      %3505 = vmatprep.mubr.f32.mxu0 0.0
      %3506 = vmatmul.mubr.f32.gmra.mrb[0].mxu0 %v1952
      %v3507 = vpop.f32.mrb[0].mxu0
      %v3508 = vadd.f32 0.0, %v3507
      %v3509 = vpop.f32.mrb[0].mxu0
      %v3510 = vadd.f32 0.0, %v3509
      %3511 = vmatprep.mubr.f32.mxu0 0.0
      %3512 = vmatmul.mubr.f32.gmra.mrb[0].mxu0 %v1955
      %v3513 = vpop.f32.mrb[0].mxu0
      %v3514 = vadd.f32 0.0, %v3513
      %v3515 = vpop.f32.mrb[0].mxu0
      %v3516 = vadd.f32 0.0, %v3515
      %3517 = vmatprep.mubr.f32.mxu0 0.0
      %3518 = vmatmul.mubr.f32.gmra.mrb[0].mxu0 %v1958
      %v3519 = vpop.f32.mrb[0].mxu0
      %v3520 = vadd.f32 0.0, %v3519
      %v3521 = vpop.f32.mrb[0].mxu0
      %v3522 = vadd.f32 0.0, %v3521
      %3523 = vmatprep.mubr.f32.mxu0 0.0
      %3524 = vmatmul.mubr.f32.gmra.mrb[0].mxu0 %v1961
      %v3525 = vpop.f32.mrb[0].mxu0
      %v3526 = vadd.f32 0.0, %v3525
      %v3527 = vpop.f32.mrb[0].mxu0
      %v3528 = vadd.f32 0.0, %v3527
      %3529 = vmatprep.mubr.f32.mxu0 0.0
      %3530 = vmatmul.mubr.f32.gmra.mrb[0].mxu0 %v1964
      %v3531 = vpop.f32.mrb[0].mxu0
      %v3532 = vadd.f32 0.0, %v3531
      %v3533 = vpop.f32.mrb[0].mxu0
      %v3534 = vadd.f32 0.0, %v3533
      %3535 = vdwg.mxu0
      %v3536 = vmul.f32 %v3391, %v3490
      %v3537 = vmul.f32 %v3392, %v3492
      %v3538 = vmul.f32 %v3393, %v3496
      %v3539 = vmul.f32 %v3394, %v3498
      %v3540 = vmul.f32 %v3395, %v3502
      %v3541 = vmul.f32 %v3396, %v3504
      %v3542 = vmul.f32 %v3397, %v3508
      %v3543 = vmul.f32 %v3398, %v3510
      %v3544 = vmul.f32 %v3399, %v3514
      %v3545 = vmul.f32 %v3400, %v3516
      %v3546 = vmul.f32 %v3401, %v3520
      %v3547 = vmul.f32 %v3402, %v3522
      %v3548 = vmul.f32 %v3403, %v3526
      %v3549 = vmul.f32 %v3404, %v3528
      %v3550 = vmul.f32 %v3405, %v3532
      %v3551 = vmul.f32 %v3406, %v3534
      %v3552 = vadd.f32 %v3262, %v3536
      %v3553 = vadd.f32 %v3263, %v3537
      %v3554 = vadd.f32 %v3264, %v3538
      %v3555 = vadd.f32 %v3265, %v3539
      %v3556 = vadd.f32 %v3266, %v3540
      %v3557 = vadd.f32 %v3267, %v3541
      %v3558 = vadd.f32 %v3268, %v3542
      %v3559 = vadd.f32 %v3269, %v3543
      %v3560 = vadd.f32 %v3270, %v3544
      %v3561 = vadd.f32 %v3271, %v3545
      %v3562 = vadd.f32 %v3272, %v3546
      %v3563 = vadd.f32 %v3273, %v3547
      %v3564 = vadd.f32 %v3274, %v3548
      %v3565 = vadd.f32 %v3275, %v3549
      %v3566 = vadd.f32 %v3276, %v3550
      %v3567 = vadd.f32 %v3277, %v3551
      %3568 = vmatprep.subr.mxu0 %v3392
      %3569 = vmatpush1.msra.mxu0 %v3391
      %3570 = vmatprep.subr.mxu0 %v3394
      %3571 = vmatpush1.msra.mxu0 %v3393
      %3572 = vmatprep.subr.mxu0 %v3396
      %3573 = vmatpush1.msra.mxu0 %v3395
      %3574 = vmatprep.subr.mxu0 %v3398
      %3575 = vmatpush1.msra.mxu0 %v3397
      %3576 = vmatprep.subr.mxu0 %v3400
      %3577 = vmatpush1.msra.mxu0 %v3399
      %3578 = vmatprep.subr.mxu0 %v3402
      %3579 = vmatpush1.msra.mxu0 %v3401
      %3580 = vmatprep.subr.mxu0 %v3404
      %3581 = vmatpush1.msra.mxu0 %v3403
      %3582 = vmatprep.subr.mxu0 %v3406
      %3583 = vmatpush1.msra.mxu0 %v3405
      %3584 = vmatprep.subr.mxu0 0.0
      %3585 = vmatpush1.msra.mxu0 0.0
      %3586 = vmatprep.subr.mxu0 0.0
      %3587 = vmatpush1.msra.mxu0 0.0
      %3588 = vmatprep.subr.mxu0 0.0
      %3589 = vmatpush1.msra.mxu0 0.0
      %3590 = vmatprep.subr.mxu0 0.0
      %3591 = vmatpush1.msra.mxu0 0.0
      %3592 = vmatprep.subr.mxu0 0.0
      %3593 = vmatpush1.msra.mxu0 0.0
      %3594 = vmatprep.subr.mxu0 0.0
      %3595 = vmatpush1.msra.mxu0 0.0
      %3596 = vmatprep.subr.mxu0 0.0
      %3597 = vmatpush1.msra.mxu0 0.0
      %3598 = vmatprep.subr.mxu0 0.0
      %3599 = vmatpush1.msra.mxu0 0.0
      %3600 = vmatprep.subr.mxu0 0.0
      %3601 = vmatpush1.msra.mxu0 0.0
      %3602 = vmatprep.subr.mxu0 0.0
      %3603 = vmatpush1.msra.mxu0 0.0
      %3604 = vmatprep.subr.mxu0 0.0
      %3605 = vmatpush1.msra.mxu0 0.0
      %3606 = vmatprep.subr.mxu0 0.0
      %3607 = vmatpush1.msra.mxu0 0.0
      %3608 = vmatprep.subr.mxu0 0.0
      %3609 = vmatpush1.msra.mxu0 0.0
      %3610 = vmatprep.subr.mxu0 0.0
      %3611 = vmatpush1.msra.mxu0 0.0
      %3612 = vmatprep.subr.mxu0 0.0
      %3613 = vmatpush1.msra.mxu0 0.0
      %3614 = vmatprep.subr.mxu0 0.0
      %3615 = vmatpush1.msra.mxu0 0.0
      %3616 = vmatprep.subr.mxu0 0.0
      %3617 = vmatpush1.msra.mxu0 0.0
      %3618 = vmatprep.subr.mxu0 0.0
      %3619 = vmatpush1.msra.mxu0 0.0
      %3620 = vmatprep.subr.mxu0 0.0
      %3621 = vmatpush1.msra.mxu0 0.0
      %3622 = vmatprep.subr.mxu0 0.0
      %3623 = vmatpush1.msra.mxu0 0.0
      %3624 = vmatprep.subr.mxu0 0.0
      %3625 = vmatpush1.msra.mxu0 0.0
      %3626 = vmatprep.subr.mxu0 0.0
      %3627 = vmatpush1.msra.mxu0 0.0
      %3628 = vmatprep.subr.mxu0 0.0
      %3629 = vmatpush1.msra.mxu0 0.0
      %3630 = vmatprep.subr.mxu0 0.0
      %3631 = vmatpush1.msra.mxu0 0.0
      %3632 = vmatprep.mubr.f32.mxu0 0.0
      %3633 = vmatmul.mubr.f32.gmra.mrb[0].mxu0 %v1943
      %v3634 = vpop.f32.mrb[0].mxu0
      %v3635 = vadd.f32 %v3415, %v3634
      %v3636 = vpop.f32.mrb[0].mxu0
      %v3637 = vadd.f32 %v3415, %v3636
      %3638 = vmatprep.mubr.f32.mxu0 0.0
      %3639 = vmatmul.mubr.f32.gmra.mrb[0].mxu0 %v1946
      %v3640 = vpop.f32.mrb[0].mxu0
      %v3641 = vadd.f32 %v3416, %v3640
      %v3642 = vpop.f32.mrb[0].mxu0
      %v3643 = vadd.f32 %v3416, %v3642
      %3644 = vmatprep.mubr.f32.mxu0 0.0
      %3645 = vmatmul.mubr.f32.gmra.mrb[0].mxu0 %v1949
      %v3646 = vpop.f32.mrb[0].mxu0
      %v3647 = vadd.f32 %v3417, %v3646
      %v3648 = vpop.f32.mrb[0].mxu0
      %v3649 = vadd.f32 %v3417, %v3648
      %3650 = vmatprep.mubr.f32.mxu0 0.0
      %3651 = vmatmul.mubr.f32.gmra.mrb[0].mxu0 %v1952
      %v3652 = vpop.f32.mrb[0].mxu0
      %v3653 = vadd.f32 %v3418, %v3652
      %v3654 = vpop.f32.mrb[0].mxu0
      %v3655 = vadd.f32 %v3418, %v3654
      %3656 = vmatprep.mubr.f32.mxu0 0.0
      %3657 = vmatmul.mubr.f32.gmra.mrb[0].mxu0 %v1955
      %v3658 = vpop.f32.mrb[0].mxu0
      %v3659 = vadd.f32 %v3419, %v3658
      %v3660 = vpop.f32.mrb[0].mxu0
      %v3661 = vadd.f32 %v3419, %v3660
      %3662 = vmatprep.mubr.f32.mxu0 0.0
      %3663 = vmatmul.mubr.f32.gmra.mrb[0].mxu0 %v1958
      %v3664 = vpop.f32.mrb[0].mxu0
      %v3665 = vadd.f32 %v3420, %v3664
      %v3666 = vpop.f32.mrb[0].mxu0
      %v3667 = vadd.f32 %v3420, %v3666
      %3668 = vmatprep.mubr.f32.mxu0 0.0
      %3669 = vmatmul.mubr.f32.gmra.mrb[0].mxu0 %v1961
      %v3670 = vpop.f32.mrb[0].mxu0
      %v3671 = vadd.f32 %v3421, %v3670
      %v3672 = vpop.f32.mrb[0].mxu0
      %v3673 = vadd.f32 %v3421, %v3672
      %3674 = vmatprep.mubr.f32.mxu0 0.0
      %3675 = vmatmul.mubr.f32.gmra.mrb[0].mxu0 %v1964
      %v3676 = vpop.f32.mrb[0].mxu0
      %v3677 = vadd.f32 %v3422, %v3676
      %v3678 = vpop.f32.mrb[0].mxu0
      %v3679 = vadd.f32 %v3422, %v3678
      %3680 = vdwg.mxu0
      %v3681 = vmul.f32 %v3391, %v3635
      %v3682 = vmul.f32 %v3392, %v3637
      %v3683 = vmul.f32 %v3393, %v3641
      %v3684 = vmul.f32 %v3394, %v3643
      %v3685 = vmul.f32 %v3395, %v3647
      %v3686 = vmul.f32 %v3396, %v3649
      %v3687 = vmul.f32 %v3397, %v3653
      %v3688 = vmul.f32 %v3398, %v3655
      %v3689 = vmul.f32 %v3399, %v3659
      %v3690 = vmul.f32 %v3400, %v3661
      %v3691 = vmul.f32 %v3401, %v3665
      %v3692 = vmul.f32 %v3402, %v3667
      %v3693 = vmul.f32 %v3403, %v3671
      %v3694 = vmul.f32 %v3404, %v3673
      %v3695 = vmul.f32 %v3405, %v3677
      %v3696 = vmul.f32 %v3406, %v3679
      %v3697 = vsub.s32 %v1734, 4
      %v3698 = vsub.s32 %v1735, 4
      %v3699 = vsub.s32 %v1736, 4
      %v3700 = vsub.s32 %v1737, 4
      %v3701 = vsub.s32 %v1738, 4
      %v3702 = vsub.s32 %v1739, 4
      %v3703 = vsub.s32 %v1740, 4
      %v3704 = vsub.s32 %v1741, 4
      %vm3705 = vcmp.eq.s32.totalorder %v1743, %v3697
      %vm3706 = vcmp.eq.s32.totalorder %v1743, %v3698
      %vm3707 = vcmp.eq.s32.totalorder %v1743, %v3699
      %vm3708 = vcmp.eq.s32.totalorder %v1743, %v3700
      %vm3709 = vcmp.eq.s32.totalorder %v1743, %v3701
      %vm3710 = vcmp.eq.s32.totalorder %v1743, %v3702
      %vm3711 = vcmp.eq.s32.totalorder %v1743, %v3703
      %vm3712 = vcmp.eq.s32.totalorder %v1743, %v3704
      %v3713 = vsel %vm3705, 1.0, 0.0
      %v3714 = vsel %vm3706, 1.0, 0.0
      %v3715 = vsel %vm3707, 1.0, 0.0
      %v3716 = vsel %vm3708, 1.0, 0.0
      %v3717 = vsel %vm3709, 1.0, 0.0
      %v3718 = vsel %vm3710, 1.0, 0.0
      %v3719 = vsel %vm3711, 1.0, 0.0
      %v3720 = vsel %vm3712, 1.0, 0.0
      %vm3721 = vcmp.lt.s32.totalorder %v1734, 4
      %vm3722 = vcmp.lt.s32.totalorder %v1735, 4
      %vm3723 = vcmp.lt.s32.totalorder %v1736, 4
      %vm3724 = vcmp.lt.s32.totalorder %v1737, 4
      %vm3725 = vcmp.lt.s32.totalorder %v1738, 4
      %vm3726 = vcmp.lt.s32.totalorder %v1739, 4
      %vm3727 = vcmp.lt.s32.totalorder %v1740, 4
      %vm3728 = vcmp.lt.s32.totalorder %v1741, 4
      %v3729 = vsel %vm3721, 1.0, 0.0
      %v3730 = vsel %vm3722, 1.0, 0.0
      %v3731 = vsel %vm3723, 1.0, 0.0
      %v3732 = vsel %vm3724, 1.0, 0.0
      %v3733 = vsel %vm3725, 1.0, 0.0
      %v3734 = vsel %vm3726, 1.0, 0.0
      %v3735 = vsel %vm3727, 1.0, 0.0
      %v3736 = vsel %vm3728, 1.0, 0.0
      %v3738 = vsel %vm1768, %v3713, 0
      %v3741 = vsel %vm1768, %v3714, 0
      %v3744 = vsel %vm1768, %v3715, 0
      %v3747 = vsel %vm1768, %v3716, 0
      %v3750 = vsel %vm1768, %v3717, 0
      %v3753 = vsel %vm1768, %v3718, 0
      %v3756 = vsel %vm1768, %v3719, 0
      %v3759 = vsel %vm1768, %v3720, 0
      %3761 = vmatprep.subr.mxu0 %v3553
      %3762 = vmatpush1.msra.mxu0 %v3552
      %3763 = vmatprep.subr.mxu0 %v3555
      %3764 = vmatpush1.msra.mxu0 %v3554
      %3765 = vmatprep.subr.mxu0 %v3557
      %3766 = vmatpush1.msra.mxu0 %v3556
      %3767 = vmatprep.subr.mxu0 %v3559
      %3768 = vmatpush1.msra.mxu0 %v3558
      %3769 = vmatprep.subr.mxu0 %v3561
      %3770 = vmatpush1.msra.mxu0 %v3560
      %3771 = vmatprep.subr.mxu0 %v3563
      %3772 = vmatpush1.msra.mxu0 %v3562
      %3773 = vmatprep.subr.mxu0 %v3565
      %3774 = vmatpush1.msra.mxu0 %v3564
      %3775 = vmatprep.subr.mxu0 %v3567
      %3776 = vmatpush1.msra.mxu0 %v3566
      %3777 = vmatprep.subr.mxu0 0.0
      %3778 = vmatpush1.msra.mxu0 0.0
      %3779 = vmatprep.subr.mxu0 0.0
      %3780 = vmatpush1.msra.mxu0 0.0
      %3781 = vmatprep.subr.mxu0 0.0
      %3782 = vmatpush1.msra.mxu0 0.0
      %3783 = vmatprep.subr.mxu0 0.0
      %3784 = vmatpush1.msra.mxu0 0.0
      %3785 = vmatprep.subr.mxu0 0.0
      %3786 = vmatpush1.msra.mxu0 0.0
      %3787 = vmatprep.subr.mxu0 0.0
      %3788 = vmatpush1.msra.mxu0 0.0
      %3789 = vmatprep.subr.mxu0 0.0
      %3790 = vmatpush1.msra.mxu0 0.0
      %3791 = vmatprep.subr.mxu0 0.0
      %3792 = vmatpush1.msra.mxu0 0.0
      %3793 = vmatprep.subr.mxu0 0.0
      %3794 = vmatpush1.msra.mxu0 0.0
      %3795 = vmatprep.subr.mxu0 0.0
      %3796 = vmatpush1.msra.mxu0 0.0
      %3797 = vmatprep.subr.mxu0 0.0
      %3798 = vmatpush1.msra.mxu0 0.0
      %3799 = vmatprep.subr.mxu0 0.0
      %3800 = vmatpush1.msra.mxu0 0.0
      %3801 = vmatprep.subr.mxu0 0.0
      %3802 = vmatpush1.msra.mxu0 0.0
      %3803 = vmatprep.subr.mxu0 0.0
      %3804 = vmatpush1.msra.mxu0 0.0
      %3805 = vmatprep.subr.mxu0 0.0
      %3806 = vmatpush1.msra.mxu0 0.0
      %3807 = vmatprep.subr.mxu0 0.0
      %3808 = vmatpush1.msra.mxu0 0.0
      %3809 = vmatprep.subr.mxu0 0.0
      %3810 = vmatpush1.msra.mxu0 0.0
      %3811 = vmatprep.subr.mxu0 0.0
      %3812 = vmatpush1.msra.mxu0 0.0
      %3813 = vmatprep.subr.mxu0 0.0
      %3814 = vmatpush1.msra.mxu0 0.0
      %3815 = vmatprep.subr.mxu0 0.0
      %3816 = vmatpush1.msra.mxu0 0.0
      %3817 = vmatprep.subr.mxu0 0.0
      %3818 = vmatpush1.msra.mxu0 0.0
      %3819 = vmatprep.subr.mxu0 0.0
      %3820 = vmatpush1.msra.mxu0 0.0
      %3821 = vmatprep.subr.mxu0 0.0
      %3822 = vmatpush1.msra.mxu0 0.0
      %3823 = vmatprep.subr.mxu0 0.0
      %3824 = vmatpush1.msra.mxu0 0.0
      %3825 = vmatprep.mubr.f32.mxu0 0.0
      %3826 = vmatmul.mubr.f32.gmra.mrb[0].mxu0 %v3738
      %v3827 = vpop.f32.mrb[0].mxu0
      %v3828 = vadd.f32 0.0, %v3827
      %v3829 = vpop.f32.mrb[0].mxu0
      %v3830 = vadd.f32 0.0, %v3829
      %3831 = vmatprep.mubr.f32.mxu0 0.0
      %3832 = vmatmul.mubr.f32.gmra.mrb[0].mxu0 %v3741
      %v3833 = vpop.f32.mrb[0].mxu0
      %v3834 = vadd.f32 0.0, %v3833
      %v3835 = vpop.f32.mrb[0].mxu0
      %v3836 = vadd.f32 0.0, %v3835
      %3837 = vmatprep.mubr.f32.mxu0 0.0
      %3838 = vmatmul.mubr.f32.gmra.mrb[0].mxu0 %v3744
      %v3839 = vpop.f32.mrb[0].mxu0
      %v3840 = vadd.f32 0.0, %v3839
      %v3841 = vpop.f32.mrb[0].mxu0
      %v3842 = vadd.f32 0.0, %v3841
      %3843 = vmatprep.mubr.f32.mxu0 0.0
      %3844 = vmatmul.mubr.f32.gmra.mrb[0].mxu0 %v3747
      %v3845 = vpop.f32.mrb[0].mxu0
      %v3846 = vadd.f32 0.0, %v3845
      %v3847 = vpop.f32.mrb[0].mxu0
      %v3848 = vadd.f32 0.0, %v3847
      %3849 = vmatprep.mubr.f32.mxu0 0.0
      %3850 = vmatmul.mubr.f32.gmra.mrb[0].mxu0 %v3750
      %v3851 = vpop.f32.mrb[0].mxu0
      %v3852 = vadd.f32 0.0, %v3851
      %v3853 = vpop.f32.mrb[0].mxu0
      %v3854 = vadd.f32 0.0, %v3853
      %3855 = vmatprep.mubr.f32.mxu0 0.0
      %3856 = vmatmul.mubr.f32.gmra.mrb[0].mxu0 %v3753
      %v3857 = vpop.f32.mrb[0].mxu0
      %v3858 = vadd.f32 0.0, %v3857
      %v3859 = vpop.f32.mrb[0].mxu0
      %v3860 = vadd.f32 0.0, %v3859
      %3861 = vmatprep.mubr.f32.mxu0 0.0
      %3862 = vmatmul.mubr.f32.gmra.mrb[0].mxu0 %v3756
      %v3863 = vpop.f32.mrb[0].mxu0
      %v3864 = vadd.f32 0.0, %v3863
      %v3865 = vpop.f32.mrb[0].mxu0
      %v3866 = vadd.f32 0.0, %v3865
      %3867 = vmatprep.mubr.f32.mxu0 0.0
      %3868 = vmatmul.mubr.f32.gmra.mrb[0].mxu0 %v3759
      %v3869 = vpop.f32.mrb[0].mxu0
      %v3870 = vadd.f32 0.0, %v3869
      %v3871 = vpop.f32.mrb[0].mxu0
      %v3872 = vadd.f32 0.0, %v3871
      %3873 = vdwg.mxu0
      %v3874 = vmul.f32 %v3681, %v3828
      %v3875 = vmul.f32 %v3682, %v3830
      %v3876 = vmul.f32 %v3683, %v3834
      %v3877 = vmul.f32 %v3684, %v3836
      %v3878 = vmul.f32 %v3685, %v3840
      %v3879 = vmul.f32 %v3686, %v3842
      %v3880 = vmul.f32 %v3687, %v3846
      %v3881 = vmul.f32 %v3688, %v3848
      %v3882 = vmul.f32 %v3689, %v3852
      %v3883 = vmul.f32 %v3690, %v3854
      %v3884 = vmul.f32 %v3691, %v3858
      %v3885 = vmul.f32 %v3692, %v3860
      %v3886 = vmul.f32 %v3693, %v3864
      %v3887 = vmul.f32 %v3694, %v3866
      %v3888 = vmul.f32 %v3695, %v3870
      %v3889 = vmul.f32 %v3696, %v3872
      %v3890 = vadd.f32 %v3552, %v3874
      %v3891 = vadd.f32 %v3553, %v3875
      %v3892 = vadd.f32 %v3554, %v3876
      %v3893 = vadd.f32 %v3555, %v3877
      %v3894 = vadd.f32 %v3556, %v3878
      %v3895 = vadd.f32 %v3557, %v3879
      %v3896 = vadd.f32 %v3558, %v3880
      %v3897 = vadd.f32 %v3559, %v3881
      %v3898 = vadd.f32 %v3560, %v3882
      %v3899 = vadd.f32 %v3561, %v3883
      %v3900 = vadd.f32 %v3562, %v3884
      %v3901 = vadd.f32 %v3563, %v3885
      %v3902 = vadd.f32 %v3564, %v3886
      %v3903 = vadd.f32 %v3565, %v3887
      %v3904 = vadd.f32 %v3566, %v3888
      %v3905 = vadd.f32 %v3567, %v3889
      %3906 = vmatprep.subr.mxu0 %v3682
      %3907 = vmatpush1.msra.mxu0 %v3681
      %3908 = vmatprep.subr.mxu0 %v3684
      %3909 = vmatpush1.msra.mxu0 %v3683
      %3910 = vmatprep.subr.mxu0 %v3686
      %3911 = vmatpush1.msra.mxu0 %v3685
      %3912 = vmatprep.subr.mxu0 %v3688
      %3913 = vmatpush1.msra.mxu0 %v3687
      %3914 = vmatprep.subr.mxu0 %v3690
      %3915 = vmatpush1.msra.mxu0 %v3689
      %3916 = vmatprep.subr.mxu0 %v3692
      %3917 = vmatpush1.msra.mxu0 %v3691
      %3918 = vmatprep.subr.mxu0 %v3694
      %3919 = vmatpush1.msra.mxu0 %v3693
      %3920 = vmatprep.subr.mxu0 %v3696
      %3921 = vmatpush1.msra.mxu0 %v3695
      %3922 = vmatprep.subr.mxu0 0.0
      %3923 = vmatpush1.msra.mxu0 0.0
      %3924 = vmatprep.subr.mxu0 0.0
      %3925 = vmatpush1.msra.mxu0 0.0
      %3926 = vmatprep.subr.mxu0 0.0
      %3927 = vmatpush1.msra.mxu0 0.0
      %3928 = vmatprep.subr.mxu0 0.0
      %3929 = vmatpush1.msra.mxu0 0.0
      %3930 = vmatprep.subr.mxu0 0.0
      %3931 = vmatpush1.msra.mxu0 0.0
      %3932 = vmatprep.subr.mxu0 0.0
      %3933 = vmatpush1.msra.mxu0 0.0
      %3934 = vmatprep.subr.mxu0 0.0
      %3935 = vmatpush1.msra.mxu0 0.0
      %3936 = vmatprep.subr.mxu0 0.0
      %3937 = vmatpush1.msra.mxu0 0.0
      %3938 = vmatprep.subr.mxu0 0.0
      %3939 = vmatpush1.msra.mxu0 0.0
      %3940 = vmatprep.subr.mxu0 0.0
      %3941 = vmatpush1.msra.mxu0 0.0
      %3942 = vmatprep.subr.mxu0 0.0
      %3943 = vmatpush1.msra.mxu0 0.0
      %3944 = vmatprep.subr.mxu0 0.0
      %3945 = vmatpush1.msra.mxu0 0.0
      %3946 = vmatprep.subr.mxu0 0.0
      %3947 = vmatpush1.msra.mxu0 0.0
      %3948 = vmatprep.subr.mxu0 0.0
      %3949 = vmatpush1.msra.mxu0 0.0
      %3950 = vmatprep.subr.mxu0 0.0
      %3951 = vmatpush1.msra.mxu0 0.0
      %3952 = vmatprep.subr.mxu0 0.0
      %3953 = vmatpush1.msra.mxu0 0.0
      %3954 = vmatprep.subr.mxu0 0.0
      %3955 = vmatpush1.msra.mxu0 0.0
      %3956 = vmatprep.subr.mxu0 0.0
      %3957 = vmatpush1.msra.mxu0 0.0
      %3958 = vmatprep.subr.mxu0 0.0
      %3959 = vmatpush1.msra.mxu0 0.0
      %3960 = vmatprep.subr.mxu0 0.0
      %3961 = vmatpush1.msra.mxu0 0.0
      %3962 = vmatprep.subr.mxu0 0.0
      %3963 = vmatpush1.msra.mxu0 0.0
      %3964 = vmatprep.subr.mxu0 0.0
      %3965 = vmatpush1.msra.mxu0 0.0
      %3966 = vmatprep.subr.mxu0 0.0
      %3967 = vmatpush1.msra.mxu0 0.0
      %3968 = vmatprep.subr.mxu0 0.0
      %3969 = vmatpush1.msra.mxu0 0.0
      %3970 = vmatprep.mubr.f32.mxu0 0.0
      %3971 = vmatmul.mubr.f32.gmra.mrb[0].mxu0 %v3738
      %v3972 = vpop.f32.mrb[0].mxu0
      %v3973 = vadd.f32 %v3729, %v3972
      %v3974 = vpop.f32.mrb[0].mxu0
      %v3975 = vadd.f32 %v3729, %v3974
      %3976 = vmatprep.mubr.f32.mxu0 0.0
      %3977 = vmatmul.mubr.f32.gmra.mrb[0].mxu0 %v3741
      %v3978 = vpop.f32.mrb[0].mxu0
      %v3979 = vadd.f32 %v3730, %v3978
      %v3980 = vpop.f32.mrb[0].mxu0
      %v3981 = vadd.f32 %v3730, %v3980
      %3982 = vmatprep.mubr.f32.mxu0 0.0
      %3983 = vmatmul.mubr.f32.gmra.mrb[0].mxu0 %v3744
      %v3984 = vpop.f32.mrb[0].mxu0
      %v3985 = vadd.f32 %v3731, %v3984
      %v3986 = vpop.f32.mrb[0].mxu0
      %v3987 = vadd.f32 %v3731, %v3986
      %3988 = vmatprep.mubr.f32.mxu0 0.0
      %3989 = vmatmul.mubr.f32.gmra.mrb[0].mxu0 %v3747
      %v3990 = vpop.f32.mrb[0].mxu0
      %v3991 = vadd.f32 %v3732, %v3990
      %v3992 = vpop.f32.mrb[0].mxu0
      %v3993 = vadd.f32 %v3732, %v3992
      %3994 = vmatprep.mubr.f32.mxu0 0.0
      %3995 = vmatmul.mubr.f32.gmra.mrb[0].mxu0 %v3750
      %v3996 = vpop.f32.mrb[0].mxu0
      %v3997 = vadd.f32 %v3733, %v3996
      %v3998 = vpop.f32.mrb[0].mxu0
      %v3999 = vadd.f32 %v3733, %v3998
      %4000 = vmatprep.mubr.f32.mxu0 0.0
      %4001 = vmatmul.mubr.f32.gmra.mrb[0].mxu0 %v3753
      %v4002 = vpop.f32.mrb[0].mxu0
      %v4003 = vadd.f32 %v3734, %v4002
      %v4004 = vpop.f32.mrb[0].mxu0
      %v4005 = vadd.f32 %v3734, %v4004
      %4006 = vmatprep.mubr.f32.mxu0 0.0
      %4007 = vmatmul.mubr.f32.gmra.mrb[0].mxu0 %v3756
      %v4008 = vpop.f32.mrb[0].mxu0
      %v4009 = vadd.f32 %v3735, %v4008
      %v4010 = vpop.f32.mrb[0].mxu0
      %v4011 = vadd.f32 %v3735, %v4010
      %4012 = vmatprep.mubr.f32.mxu0 0.0
      %4013 = vmatmul.mubr.f32.gmra.mrb[0].mxu0 %v3759
      %v4014 = vpop.f32.mrb[0].mxu0
      %v4015 = vadd.f32 %v3736, %v4014
      %v4016 = vpop.f32.mrb[0].mxu0
      %v4017 = vadd.f32 %v3736, %v4016
      %4018 = vdwg.mxu0
      %v4019 = vmul.f32 %v3681, %v3973
      %v4020 = vmul.f32 %v3682, %v3975
      %v4021 = vmul.f32 %v3683, %v3979
      %v4022 = vmul.f32 %v3684, %v3981
      %v4023 = vmul.f32 %v3685, %v3985
      %v4024 = vmul.f32 %v3686, %v3987
      %v4025 = vmul.f32 %v3687, %v3991
      %v4026 = vmul.f32 %v3688, %v3993
      %v4027 = vmul.f32 %v3689, %v3997
      %v4028 = vmul.f32 %v3690, %v3999
      %v4029 = vmul.f32 %v3691, %v4003
      %v4030 = vmul.f32 %v3692, %v4005
      %v4031 = vmul.f32 %v3693, %v4009
      %v4032 = vmul.f32 %v3694, %v4011
      %v4033 = vmul.f32 %v3695, %v4015
      %v4034 = vmul.f32 %v3696, %v4017
      %v4035 = vsub.s32 %v1734, 8
      %v4036 = vsub.s32 %v1736, 8
      %v4037 = vsub.s32 %v1737, 8
      %v4038 = vsub.s32 %v1738, 8
      %v4039 = vsub.s32 %v1739, 8
      %v4040 = vsub.s32 %v1740, 8
      %v4041 = vsub.s32 %v1741, 8
      %vm4042 = vcmp.eq.s32.totalorder %v1743, %v4035
      %vm4043 = vcmp.eq.s32.totalorder %v1743, %v1734
      %vm4044 = vcmp.eq.s32.totalorder %v1743, %v4036
      %vm4045 = vcmp.eq.s32.totalorder %v1743, %v4037
      %vm4046 = vcmp.eq.s32.totalorder %v1743, %v4038
      %vm4047 = vcmp.eq.s32.totalorder %v1743, %v4039
      %vm4048 = vcmp.eq.s32.totalorder %v1743, %v4040
      %vm4049 = vcmp.eq.s32.totalorder %v1743, %v4041
      %v4050 = vsel %vm4042, 1.0, 0.0
      %v4051 = vsel %vm4043, 1.0, 0.0
      %v4052 = vsel %vm4044, 1.0, 0.0
      %v4053 = vsel %vm4045, 1.0, 0.0
      %v4054 = vsel %vm4046, 1.0, 0.0
      %v4055 = vsel %vm4047, 1.0, 0.0
      %v4056 = vsel %vm4048, 1.0, 0.0
      %v4057 = vsel %vm4049, 1.0, 0.0
      %vm4058 = vcmp.lt.s32.totalorder %v1734, 8
      %vm4059 = vcmp.lt.s32.totalorder %v1735, 8
      %vm4060 = vcmp.lt.s32.totalorder %v1736, 8
      %vm4061 = vcmp.lt.s32.totalorder %v1737, 8
      %vm4062 = vcmp.lt.s32.totalorder %v1738, 8
      %vm4063 = vcmp.lt.s32.totalorder %v1739, 8
      %vm4064 = vcmp.lt.s32.totalorder %v1740, 8
      %vm4065 = vcmp.lt.s32.totalorder %v1741, 8
      %v4066 = vsel %vm4058, 1.0, 0.0
      %v4067 = vsel %vm4059, 1.0, 0.0
      %v4068 = vsel %vm4060, 1.0, 0.0
      %v4069 = vsel %vm4061, 1.0, 0.0
      %v4070 = vsel %vm4062, 1.0, 0.0
      %v4071 = vsel %vm4063, 1.0, 0.0
      %v4072 = vsel %vm4064, 1.0, 0.0
      %v4073 = vsel %vm4065, 1.0, 0.0
      %v4075 = vsel %vm1768, %v4050, 0
      %v4078 = vsel %vm1768, %v4051, 0
      %v4081 = vsel %vm1768, %v4052, 0
      %v4084 = vsel %vm1768, %v4053, 0
      %v4087 = vsel %vm1768, %v4054, 0
      %v4090 = vsel %vm1768, %v4055, 0
      %v4093 = vsel %vm1768, %v4056, 0
      %v4096 = vsel %vm1768, %v4057, 0
      %4098 = vmatprep.subr.mxu0 %v3891
      %4099 = vmatpush1.msra.mxu0 %v3890
      %4100 = vmatprep.subr.mxu0 %v3893
      %4101 = vmatpush1.msra.mxu0 %v3892
      %4102 = vmatprep.subr.mxu0 %v3895
      %4103 = vmatpush1.msra.mxu0 %v3894
      %4104 = vmatprep.subr.mxu0 %v3897
      %4105 = vmatpush1.msra.mxu0 %v3896
      %4106 = vmatprep.subr.mxu0 %v3899
      %4107 = vmatpush1.msra.mxu0 %v3898
      %4108 = vmatprep.subr.mxu0 %v3901
      %4109 = vmatpush1.msra.mxu0 %v3900
      %4110 = vmatprep.subr.mxu0 %v3903
      %4111 = vmatpush1.msra.mxu0 %v3902
      %4112 = vmatprep.subr.mxu0 %v3905
      %4113 = vmatpush1.msra.mxu0 %v3904
      %4114 = vmatprep.subr.mxu0 0.0
      %4115 = vmatpush1.msra.mxu0 0.0
      %4116 = vmatprep.subr.mxu0 0.0
      %4117 = vmatpush1.msra.mxu0 0.0
      %4118 = vmatprep.subr.mxu0 0.0
      %4119 = vmatpush1.msra.mxu0 0.0
      %4120 = vmatprep.subr.mxu0 0.0
      %4121 = vmatpush1.msra.mxu0 0.0
      %4122 = vmatprep.subr.mxu0 0.0
      %4123 = vmatpush1.msra.mxu0 0.0
      %4124 = vmatprep.subr.mxu0 0.0
      %4125 = vmatpush1.msra.mxu0 0.0
      %4126 = vmatprep.subr.mxu0 0.0
      %4127 = vmatpush1.msra.mxu0 0.0
      %4128 = vmatprep.subr.mxu0 0.0
      %4129 = vmatpush1.msra.mxu0 0.0
      %4130 = vmatprep.subr.mxu0 0.0
      %4131 = vmatpush1.msra.mxu0 0.0
      %4132 = vmatprep.subr.mxu0 0.0
      %4133 = vmatpush1.msra.mxu0 0.0
      %4134 = vmatprep.subr.mxu0 0.0
      %4135 = vmatpush1.msra.mxu0 0.0
      %4136 = vmatprep.subr.mxu0 0.0
      %4137 = vmatpush1.msra.mxu0 0.0
      %4138 = vmatprep.subr.mxu0 0.0
      %4139 = vmatpush1.msra.mxu0 0.0
      %4140 = vmatprep.subr.mxu0 0.0
      %4141 = vmatpush1.msra.mxu0 0.0
      %4142 = vmatprep.subr.mxu0 0.0
      %4143 = vmatpush1.msra.mxu0 0.0
      %4144 = vmatprep.subr.mxu0 0.0
      %4145 = vmatpush1.msra.mxu0 0.0
      %4146 = vmatprep.subr.mxu0 0.0
      %4147 = vmatpush1.msra.mxu0 0.0
      %4148 = vmatprep.subr.mxu0 0.0
      %4149 = vmatpush1.msra.mxu0 0.0
      %4150 = vmatprep.subr.mxu0 0.0
      %4151 = vmatpush1.msra.mxu0 0.0
      %4152 = vmatprep.subr.mxu0 0.0
      %4153 = vmatpush1.msra.mxu0 0.0
      %4154 = vmatprep.subr.mxu0 0.0
      %4155 = vmatpush1.msra.mxu0 0.0
      %4156 = vmatprep.subr.mxu0 0.0
      %4157 = vmatpush1.msra.mxu0 0.0
      %4158 = vmatprep.subr.mxu0 0.0
      %4159 = vmatpush1.msra.mxu0 0.0
      %4160 = vmatprep.subr.mxu0 0.0
      %4161 = vmatpush1.msra.mxu0 0.0
      %4162 = vmatprep.mubr.f32.mxu0 0.0
      %4163 = vmatmul.mubr.f32.gmra.mrb[0].mxu0 %v4075
      %v4164 = vpop.f32.mrb[0].mxu0
      %v4165 = vadd.f32 0.0, %v4164
      %v4166 = vpop.f32.mrb[0].mxu0
      %v4167 = vadd.f32 0.0, %v4166
      %4168 = vmatprep.mubr.f32.mxu0 0.0
      %4169 = vmatmul.mubr.f32.gmra.mrb[0].mxu0 %v4078
      %v4170 = vpop.f32.mrb[0].mxu0
      %v4171 = vadd.f32 0.0, %v4170
      %v4172 = vpop.f32.mrb[0].mxu0
      %v4173 = vadd.f32 0.0, %v4172
      %4174 = vmatprep.mubr.f32.mxu0 0.0
      %4175 = vmatmul.mubr.f32.gmra.mrb[0].mxu0 %v4081
      %v4176 = vpop.f32.mrb[0].mxu0
      %v4177 = vadd.f32 0.0, %v4176
      %v4178 = vpop.f32.mrb[0].mxu0
      %v4179 = vadd.f32 0.0, %v4178
      %4180 = vmatprep.mubr.f32.mxu0 0.0
      %4181 = vmatmul.mubr.f32.gmra.mrb[0].mxu0 %v4084
      %v4182 = vpop.f32.mrb[0].mxu0
      %v4183 = vadd.f32 0.0, %v4182
      %v4184 = vpop.f32.mrb[0].mxu0
      %v4185 = vadd.f32 0.0, %v4184
      %4186 = vmatprep.mubr.f32.mxu0 0.0
      %4187 = vmatmul.mubr.f32.gmra.mrb[0].mxu0 %v4087
      %v4188 = vpop.f32.mrb[0].mxu0
      %v4189 = vadd.f32 0.0, %v4188
      %v4190 = vpop.f32.mrb[0].mxu0
      %v4191 = vadd.f32 0.0, %v4190
      %4192 = vmatprep.mubr.f32.mxu0 0.0
      %4193 = vmatmul.mubr.f32.gmra.mrb[0].mxu0 %v4090
      %v4194 = vpop.f32.mrb[0].mxu0
      %v4195 = vadd.f32 0.0, %v4194
      %v4196 = vpop.f32.mrb[0].mxu0
      %v4197 = vadd.f32 0.0, %v4196
      %4198 = vmatprep.mubr.f32.mxu0 0.0
      %4199 = vmatmul.mubr.f32.gmra.mrb[0].mxu0 %v4093
      %v4200 = vpop.f32.mrb[0].mxu0
      %v4201 = vadd.f32 0.0, %v4200
      %v4202 = vpop.f32.mrb[0].mxu0
      %v4203 = vadd.f32 0.0, %v4202
      %4204 = vmatprep.mubr.f32.mxu0 0.0
      %4205 = vmatmul.mubr.f32.gmra.mrb[0].mxu0 %v4096
      %v4206 = vpop.f32.mrb[0].mxu0
      %v4207 = vadd.f32 0.0, %v4206
      %v4208 = vpop.f32.mrb[0].mxu0
      %v4209 = vadd.f32 0.0, %v4208
      %4210 = vdwg.mxu0
      %v4211 = vmul.f32 %v4019, %v4165
      %v4212 = vmul.f32 %v4020, %v4167
      %v4213 = vmul.f32 %v4021, %v4171
      %v4214 = vmul.f32 %v4022, %v4173
      %v4215 = vmul.f32 %v4023, %v4177
      %v4216 = vmul.f32 %v4024, %v4179
      %v4217 = vmul.f32 %v4025, %v4183
      %v4218 = vmul.f32 %v4026, %v4185
      %v4219 = vmul.f32 %v4027, %v4189
      %v4220 = vmul.f32 %v4028, %v4191
      %v4221 = vmul.f32 %v4029, %v4195
      %v4222 = vmul.f32 %v4030, %v4197
      %v4223 = vmul.f32 %v4031, %v4201
      %v4224 = vmul.f32 %v4032, %v4203
      %v4225 = vmul.f32 %v4033, %v4207
      %v4226 = vmul.f32 %v4034, %v4209
      %v4227 = vadd.f32 %v3890, %v4211
      %v4228 = vadd.f32 %v3891, %v4212
      %v4229 = vadd.f32 %v3892, %v4213
      %v4230 = vadd.f32 %v3893, %v4214
      %v4231 = vadd.f32 %v3894, %v4215
      %v4232 = vadd.f32 %v3895, %v4216
      %v4233 = vadd.f32 %v3896, %v4217
      %v4234 = vadd.f32 %v3897, %v4218
      %v4235 = vadd.f32 %v3898, %v4219
      %v4236 = vadd.f32 %v3899, %v4220
      %v4237 = vadd.f32 %v3900, %v4221
      %v4238 = vadd.f32 %v3901, %v4222
      %v4239 = vadd.f32 %v3902, %v4223
      %v4240 = vadd.f32 %v3903, %v4224
      %v4241 = vadd.f32 %v3904, %v4225
      %v4242 = vadd.f32 %v3905, %v4226
      %4243 = vmatprep.subr.mxu0 %v4020
      %4244 = vmatpush1.msra.mxu0 %v4019
      %4245 = vmatprep.subr.mxu0 %v4022
      %4246 = vmatpush1.msra.mxu0 %v4021
      %4247 = vmatprep.subr.mxu0 %v4024
      %4248 = vmatpush1.msra.mxu0 %v4023
      %4249 = vmatprep.subr.mxu0 %v4026
      %4250 = vmatpush1.msra.mxu0 %v4025
      %4251 = vmatprep.subr.mxu0 %v4028
      %4252 = vmatpush1.msra.mxu0 %v4027
      %4253 = vmatprep.subr.mxu0 %v4030
      %4254 = vmatpush1.msra.mxu0 %v4029
      %4255 = vmatprep.subr.mxu0 %v4032
      %4256 = vmatpush1.msra.mxu0 %v4031
      %4257 = vmatprep.subr.mxu0 %v4034
      %4258 = vmatpush1.msra.mxu0 %v4033
      %4259 = vmatprep.subr.mxu0 0.0
      %4260 = vmatpush1.msra.mxu0 0.0
      %4261 = vmatprep.subr.mxu0 0.0
      %4262 = vmatpush1.msra.mxu0 0.0
      %4263 = vmatprep.subr.mxu0 0.0
      %4264 = vmatpush1.msra.mxu0 0.0
      %4265 = vmatprep.subr.mxu0 0.0
      %4266 = vmatpush1.msra.mxu0 0.0
      %4267 = vmatprep.subr.mxu0 0.0
      %4268 = vmatpush1.msra.mxu0 0.0
      %4269 = vmatprep.subr.mxu0 0.0
      %4270 = vmatpush1.msra.mxu0 0.0
      %4271 = vmatprep.subr.mxu0 0.0
      %4272 = vmatpush1.msra.mxu0 0.0
      %4273 = vmatprep.subr.mxu0 0.0
      %4274 = vmatpush1.msra.mxu0 0.0
      %4275 = vmatprep.subr.mxu0 0.0
      %4276 = vmatpush1.msra.mxu0 0.0
      %4277 = vmatprep.subr.mxu0 0.0
      %4278 = vmatpush1.msra.mxu0 0.0
      %4279 = vmatprep.subr.mxu0 0.0
      %4280 = vmatpush1.msra.mxu0 0.0
      %4281 = vmatprep.subr.mxu0 0.0
      %4282 = vmatpush1.msra.mxu0 0.0
      %4283 = vmatprep.subr.mxu0 0.0
      %4284 = vmatpush1.msra.mxu0 0.0
      %4285 = vmatprep.subr.mxu0 0.0
      %4286 = vmatpush1.msra.mxu0 0.0
      %4287 = vmatprep.subr.mxu0 0.0
      %4288 = vmatpush1.msra.mxu0 0.0
      %4289 = vmatprep.subr.mxu0 0.0
      %4290 = vmatpush1.msra.mxu0 0.0
      %4291 = vmatprep.subr.mxu0 0.0
      %4292 = vmatpush1.msra.mxu0 0.0
      %4293 = vmatprep.subr.mxu0 0.0
      %4294 = vmatpush1.msra.mxu0 0.0
      %4295 = vmatprep.subr.mxu0 0.0
      %4296 = vmatpush1.msra.mxu0 0.0
      %4297 = vmatprep.subr.mxu0 0.0
      %4298 = vmatpush1.msra.mxu0 0.0
      %4299 = vmatprep.subr.mxu0 0.0
      %4300 = vmatpush1.msra.mxu0 0.0
      %4301 = vmatprep.subr.mxu0 0.0
      %4302 = vmatpush1.msra.mxu0 0.0
      %4303 = vmatprep.subr.mxu0 0.0
      %4304 = vmatpush1.msra.mxu0 0.0
      %4305 = vmatprep.subr.mxu0 0.0
      %4306 = vmatpush1.msra.mxu0 0.0
      %4307 = vmatprep.mubr.f32.mxu0 0.0
      %4308 = vmatmul.mubr.f32.gmra.mrb[0].mxu0 %v4075
      %v4309 = vpop.f32.mrb[0].mxu0
      %v4310 = vadd.f32 %v4066, %v4309
      %v4311 = vpop.f32.mrb[0].mxu0
      %v4312 = vadd.f32 %v4066, %v4311
      %4313 = vmatprep.mubr.f32.mxu0 0.0
      %4314 = vmatmul.mubr.f32.gmra.mrb[0].mxu0 %v4078
      %v4315 = vpop.f32.mrb[0].mxu0
      %v4316 = vadd.f32 %v4067, %v4315
      %v4317 = vpop.f32.mrb[0].mxu0
      %v4318 = vadd.f32 %v4067, %v4317
      %4319 = vmatprep.mubr.f32.mxu0 0.0
      %4320 = vmatmul.mubr.f32.gmra.mrb[0].mxu0 %v4081
      %v4321 = vpop.f32.mrb[0].mxu0
      %v4322 = vadd.f32 %v4068, %v4321
      %v4323 = vpop.f32.mrb[0].mxu0
      %v4324 = vadd.f32 %v4068, %v4323
      %4325 = vmatprep.mubr.f32.mxu0 0.0
      %4326 = vmatmul.mubr.f32.gmra.mrb[0].mxu0 %v4084
      %v4327 = vpop.f32.mrb[0].mxu0
      %v4328 = vadd.f32 %v4069, %v4327
      %v4329 = vpop.f32.mrb[0].mxu0
      %v4330 = vadd.f32 %v4069, %v4329
      %4331 = vmatprep.mubr.f32.mxu0 0.0
      %4332 = vmatmul.mubr.f32.gmra.mrb[0].mxu0 %v4087
      %v4333 = vpop.f32.mrb[0].mxu0
      %v4334 = vadd.f32 %v4070, %v4333
      %v4335 = vpop.f32.mrb[0].mxu0
      %v4336 = vadd.f32 %v4070, %v4335
      %4337 = vmatprep.mubr.f32.mxu0 0.0
      %4338 = vmatmul.mubr.f32.gmra.mrb[0].mxu0 %v4090
      %v4339 = vpop.f32.mrb[0].mxu0
      %v4340 = vadd.f32 %v4071, %v4339
      %v4341 = vpop.f32.mrb[0].mxu0
      %v4342 = vadd.f32 %v4071, %v4341
      %4343 = vmatprep.mubr.f32.mxu0 0.0
      %4344 = vmatmul.mubr.f32.gmra.mrb[0].mxu0 %v4093
      %v4345 = vpop.f32.mrb[0].mxu0
      %v4346 = vadd.f32 %v4072, %v4345
      %v4347 = vpop.f32.mrb[0].mxu0
      %v4348 = vadd.f32 %v4072, %v4347
      %4349 = vmatprep.mubr.f32.mxu0 0.0
      %4350 = vmatmul.mubr.f32.gmra.mrb[0].mxu0 %v4096
      %v4351 = vpop.f32.mrb[0].mxu0
      %v4352 = vadd.f32 %v4073, %v4351
      %v4353 = vpop.f32.mrb[0].mxu0
      %v4354 = vadd.f32 %v4073, %v4353
      %4355 = vdwg.mxu0
      %v4356 = vmul.f32 %v4019, %v4310
      %v4357 = vmul.f32 %v4020, %v4312
      %v4358 = vmul.f32 %v4021, %v4316
      %v4359 = vmul.f32 %v4022, %v4318
      %v4360 = vmul.f32 %v4023, %v4322
      %v4361 = vmul.f32 %v4024, %v4324
      %v4362 = vmul.f32 %v4025, %v4328
      %v4363 = vmul.f32 %v4026, %v4330
      %v4364 = vmul.f32 %v4027, %v4334
      %v4365 = vmul.f32 %v4028, %v4336
      %v4366 = vmul.f32 %v4029, %v4340
      %v4367 = vmul.f32 %v4030, %v4342
      %v4368 = vmul.f32 %v4031, %v4346
      %v4369 = vmul.f32 %v4032, %v4348
      %v4370 = vmul.f32 %v4033, %v4352
      %v4371 = vmul.f32 %v4034, %v4354
      %v4372 = vsub.s32 %v1734, 16
      %v4373 = vsub.s32 %v1735, 16
      %v4374 = vsub.s32 %v1737, 16
      %v4375 = vsub.s32 %v1738, 16
      %v4376 = vsub.s32 %v1739, 16
      %v4377 = vsub.s32 %v1740, 16
      %v4378 = vsub.s32 %v1741, 16
      %vm4379 = vcmp.eq.s32.totalorder %v1743, %v4372
      %vm4380 = vcmp.eq.s32.totalorder %v1743, %v4373
      %vm4381 = vcmp.eq.s32.totalorder %v1743, %v4374
      %vm4382 = vcmp.eq.s32.totalorder %v1743, %v4375
      %vm4383 = vcmp.eq.s32.totalorder %v1743, %v4376
      %vm4384 = vcmp.eq.s32.totalorder %v1743, %v4377
      %vm4385 = vcmp.eq.s32.totalorder %v1743, %v4378
      %v4386 = vsel %vm4379, 1.0, 0.0
      %v4387 = vsel %vm4380, 1.0, 0.0
      %v4388 = vsel %vm4381, 1.0, 0.0
      %v4389 = vsel %vm4382, 1.0, 0.0
      %v4390 = vsel %vm4383, 1.0, 0.0
      %v4391 = vsel %vm4384, 1.0, 0.0
      %v4392 = vsel %vm4385, 1.0, 0.0
      %vm4393 = vcmp.lt.s32.totalorder %v1734, 16
      %vm4394 = vcmp.lt.s32.totalorder %v1735, 16
      %vm4395 = vcmp.lt.s32.totalorder %v1736, 16
      %vm4396 = vcmp.lt.s32.totalorder %v1737, 16
      %vm4397 = vcmp.lt.s32.totalorder %v1738, 16
      %vm4398 = vcmp.lt.s32.totalorder %v1739, 16
      %vm4399 = vcmp.lt.s32.totalorder %v1740, 16
      %vm4400 = vcmp.lt.s32.totalorder %v1741, 16
      %v4401 = vsel %vm4393, 1.0, 0.0
      %v4402 = vsel %vm4394, 1.0, 0.0
      %v4403 = vsel %vm4395, 1.0, 0.0
      %v4404 = vsel %vm4396, 1.0, 0.0
      %v4405 = vsel %vm4397, 1.0, 0.0
      %v4406 = vsel %vm4398, 1.0, 0.0
      %v4407 = vsel %vm4399, 1.0, 0.0
      %v4408 = vsel %vm4400, 1.0, 0.0
      %v4410 = vsel %vm1768, %v4386, 0
      %v4413 = vsel %vm1768, %v4387, 0
      %v4416 = vsel %vm1768, %v4388, 0
      %v4419 = vsel %vm1768, %v4389, 0
      %v4422 = vsel %vm1768, %v4390, 0
      %v4425 = vsel %vm1768, %v4391, 0
      %v4428 = vsel %vm1768, %v4392, 0
      %4430 = vmatprep.subr.mxu0 %v4228
      %4431 = vmatpush1.msra.mxu0 %v4227
      %4432 = vmatprep.subr.mxu0 %v4230
      %4433 = vmatpush1.msra.mxu0 %v4229
      %4434 = vmatprep.subr.mxu0 %v4232
      %4435 = vmatpush1.msra.mxu0 %v4231
      %4436 = vmatprep.subr.mxu0 %v4234
      %4437 = vmatpush1.msra.mxu0 %v4233
      %4438 = vmatprep.subr.mxu0 %v4236
      %4439 = vmatpush1.msra.mxu0 %v4235
      %4440 = vmatprep.subr.mxu0 %v4238
      %4441 = vmatpush1.msra.mxu0 %v4237
      %4442 = vmatprep.subr.mxu0 %v4240
      %4443 = vmatpush1.msra.mxu0 %v4239
      %4444 = vmatprep.subr.mxu0 %v4242
      %4445 = vmatpush1.msra.mxu0 %v4241
      %4446 = vmatprep.subr.mxu0 0.0
      %4447 = vmatpush1.msra.mxu0 0.0
      %4448 = vmatprep.subr.mxu0 0.0
      %4449 = vmatpush1.msra.mxu0 0.0
      %4450 = vmatprep.subr.mxu0 0.0
      %4451 = vmatpush1.msra.mxu0 0.0
      %4452 = vmatprep.subr.mxu0 0.0
      %4453 = vmatpush1.msra.mxu0 0.0
      %4454 = vmatprep.subr.mxu0 0.0
      %4455 = vmatpush1.msra.mxu0 0.0
      %4456 = vmatprep.subr.mxu0 0.0
      %4457 = vmatpush1.msra.mxu0 0.0
      %4458 = vmatprep.subr.mxu0 0.0
      %4459 = vmatpush1.msra.mxu0 0.0
      %4460 = vmatprep.subr.mxu0 0.0
      %4461 = vmatpush1.msra.mxu0 0.0
      %4462 = vmatprep.subr.mxu0 0.0
      %4463 = vmatpush1.msra.mxu0 0.0
      %4464 = vmatprep.subr.mxu0 0.0
      %4465 = vmatpush1.msra.mxu0 0.0
      %4466 = vmatprep.subr.mxu0 0.0
      %4467 = vmatpush1.msra.mxu0 0.0
      %4468 = vmatprep.subr.mxu0 0.0
      %4469 = vmatpush1.msra.mxu0 0.0
      %4470 = vmatprep.subr.mxu0 0.0
      %4471 = vmatpush1.msra.mxu0 0.0
      %4472 = vmatprep.subr.mxu0 0.0
      %4473 = vmatpush1.msra.mxu0 0.0
      %4474 = vmatprep.subr.mxu0 0.0
      %4475 = vmatpush1.msra.mxu0 0.0
      %4476 = vmatprep.subr.mxu0 0.0
      %4477 = vmatpush1.msra.mxu0 0.0
      %4478 = vmatprep.subr.mxu0 0.0
      %4479 = vmatpush1.msra.mxu0 0.0
      %4480 = vmatprep.subr.mxu0 0.0
      %4481 = vmatpush1.msra.mxu0 0.0
      %4482 = vmatprep.subr.mxu0 0.0
      %4483 = vmatpush1.msra.mxu0 0.0
      %4484 = vmatprep.subr.mxu0 0.0
      %4485 = vmatpush1.msra.mxu0 0.0
      %4486 = vmatprep.subr.mxu0 0.0
      %4487 = vmatpush1.msra.mxu0 0.0
      %4488 = vmatprep.subr.mxu0 0.0
      %4489 = vmatpush1.msra.mxu0 0.0
      %4490 = vmatprep.subr.mxu0 0.0
      %4491 = vmatpush1.msra.mxu0 0.0
      %4492 = vmatprep.subr.mxu0 0.0
      %4493 = vmatpush1.msra.mxu0 0.0
      %4494 = vmatprep.mubr.f32.mxu0 0.0
      %4495 = vmatmul.mubr.f32.gmra.mrb[0].mxu0 %v4410
      %v4496 = vpop.f32.mrb[0].mxu0
      %v4497 = vadd.f32 0.0, %v4496
      %v4498 = vpop.f32.mrb[0].mxu0
      %v4499 = vadd.f32 0.0, %v4498
      %4500 = vmatprep.mubr.f32.mxu0 0.0
      %4501 = vmatmul.mubr.f32.gmra.mrb[0].mxu0 %v4413
      %v4502 = vpop.f32.mrb[0].mxu0
      %v4503 = vadd.f32 0.0, %v4502
      %v4504 = vpop.f32.mrb[0].mxu0
      %v4505 = vadd.f32 0.0, %v4504
      %4506 = vmatprep.mubr.f32.mxu0 0.0
      %4507 = vmatmul.mubr.f32.gmra.mrb[0].mxu0 %v4078
      %v4508 = vpop.f32.mrb[0].mxu0
      %v4509 = vadd.f32 0.0, %v4508
      %v4510 = vpop.f32.mrb[0].mxu0
      %v4511 = vadd.f32 0.0, %v4510
      %4512 = vmatprep.mubr.f32.mxu0 0.0
      %4513 = vmatmul.mubr.f32.gmra.mrb[0].mxu0 %v4416
      %v4514 = vpop.f32.mrb[0].mxu0
      %v4515 = vadd.f32 0.0, %v4514
      %v4516 = vpop.f32.mrb[0].mxu0
      %v4517 = vadd.f32 0.0, %v4516
      %4518 = vmatprep.mubr.f32.mxu0 0.0
      %4519 = vmatmul.mubr.f32.gmra.mrb[0].mxu0 %v4419
      %v4520 = vpop.f32.mrb[0].mxu0
      %v4521 = vadd.f32 0.0, %v4520
      %v4522 = vpop.f32.mrb[0].mxu0
      %v4523 = vadd.f32 0.0, %v4522
      %4524 = vmatprep.mubr.f32.mxu0 0.0
      %4525 = vmatmul.mubr.f32.gmra.mrb[0].mxu0 %v4422
      %v4526 = vpop.f32.mrb[0].mxu0
      %v4527 = vadd.f32 0.0, %v4526
      %v4528 = vpop.f32.mrb[0].mxu0
      %v4529 = vadd.f32 0.0, %v4528
      %4530 = vmatprep.mubr.f32.mxu0 0.0
      %4531 = vmatmul.mubr.f32.gmra.mrb[0].mxu0 %v4425
      %v4532 = vpop.f32.mrb[0].mxu0
      %v4533 = vadd.f32 0.0, %v4532
      %v4534 = vpop.f32.mrb[0].mxu0
      %v4535 = vadd.f32 0.0, %v4534
      %4536 = vmatprep.mubr.f32.mxu0 0.0
      %4537 = vmatmul.mubr.f32.gmra.mrb[0].mxu0 %v4428
      %v4538 = vpop.f32.mrb[0].mxu0
      %v4539 = vadd.f32 0.0, %v4538
      %v4540 = vpop.f32.mrb[0].mxu0
      %v4541 = vadd.f32 0.0, %v4540
      %4542 = vdwg.mxu0
      %v4543 = vmul.f32 %v4356, %v4497
      %v4544 = vmul.f32 %v4357, %v4499
      %v4545 = vmul.f32 %v4358, %v4503
      %v4546 = vmul.f32 %v4359, %v4505
      %v4547 = vmul.f32 %v4360, %v4509
      %v4548 = vmul.f32 %v4361, %v4511
      %v4549 = vmul.f32 %v4362, %v4515
      %v4550 = vmul.f32 %v4363, %v4517
      %v4551 = vmul.f32 %v4364, %v4521
      %v4552 = vmul.f32 %v4365, %v4523
      %v4553 = vmul.f32 %v4366, %v4527
      %v4554 = vmul.f32 %v4367, %v4529
      %v4555 = vmul.f32 %v4368, %v4533
      %v4556 = vmul.f32 %v4369, %v4535
      %v4557 = vmul.f32 %v4370, %v4539
      %v4558 = vmul.f32 %v4371, %v4541
      %v4559 = vadd.f32 %v4227, %v4543
      %v4560 = vadd.f32 %v4228, %v4544
      %v4561 = vadd.f32 %v4229, %v4545
      %v4562 = vadd.f32 %v4230, %v4546
      %v4563 = vadd.f32 %v4231, %v4547
      %v4564 = vadd.f32 %v4232, %v4548
      %v4565 = vadd.f32 %v4233, %v4549
      %v4566 = vadd.f32 %v4234, %v4550
      %v4567 = vadd.f32 %v4235, %v4551
      %v4568 = vadd.f32 %v4236, %v4552
      %v4569 = vadd.f32 %v4237, %v4553
      %v4570 = vadd.f32 %v4238, %v4554
      %v4571 = vadd.f32 %v4239, %v4555
      %v4572 = vadd.f32 %v4240, %v4556
      %v4573 = vadd.f32 %v4241, %v4557
      %v4574 = vadd.f32 %v4242, %v4558
      %4575 = vmatprep.subr.mxu0 %v4357
      %4576 = vmatpush1.msra.mxu0 %v4356
      %4577 = vmatprep.subr.mxu0 %v4359
      %4578 = vmatpush1.msra.mxu0 %v4358
      %4579 = vmatprep.subr.mxu0 %v4361
      %4580 = vmatpush1.msra.mxu0 %v4360
      %4581 = vmatprep.subr.mxu0 %v4363
      %4582 = vmatpush1.msra.mxu0 %v4362
      %4583 = vmatprep.subr.mxu0 %v4365
      %4584 = vmatpush1.msra.mxu0 %v4364
      %4585 = vmatprep.subr.mxu0 %v4367
      %4586 = vmatpush1.msra.mxu0 %v4366
      %4587 = vmatprep.subr.mxu0 %v4369
      %4588 = vmatpush1.msra.mxu0 %v4368
      %4589 = vmatprep.subr.mxu0 %v4371
      %4590 = vmatpush1.msra.mxu0 %v4370
      %4591 = vmatprep.subr.mxu0 0.0
      %4592 = vmatpush1.msra.mxu0 0.0
      %4593 = vmatprep.subr.mxu0 0.0
      %4594 = vmatpush1.msra.mxu0 0.0
      %4595 = vmatprep.subr.mxu0 0.0
      %4596 = vmatpush1.msra.mxu0 0.0
      %4597 = vmatprep.subr.mxu0 0.0
      %4598 = vmatpush1.msra.mxu0 0.0
      %4599 = vmatprep.subr.mxu0 0.0
      %4600 = vmatpush1.msra.mxu0 0.0
      %4601 = vmatprep.subr.mxu0 0.0
      %4602 = vmatpush1.msra.mxu0 0.0
      %4603 = vmatprep.subr.mxu0 0.0
      %4604 = vmatpush1.msra.mxu0 0.0
      %4605 = vmatprep.subr.mxu0 0.0
      %4606 = vmatpush1.msra.mxu0 0.0
      %4607 = vmatprep.subr.mxu0 0.0
      %4608 = vmatpush1.msra.mxu0 0.0
      %4609 = vmatprep.subr.mxu0 0.0
      %4610 = vmatpush1.msra.mxu0 0.0
      %4611 = vmatprep.subr.mxu0 0.0
      %4612 = vmatpush1.msra.mxu0 0.0
      %4613 = vmatprep.subr.mxu0 0.0
      %4614 = vmatpush1.msra.mxu0 0.0
      %4615 = vmatprep.subr.mxu0 0.0
      %4616 = vmatpush1.msra.mxu0 0.0
      %4617 = vmatprep.subr.mxu0 0.0
      %4618 = vmatpush1.msra.mxu0 0.0
      %4619 = vmatprep.subr.mxu0 0.0
      %4620 = vmatpush1.msra.mxu0 0.0
      %4621 = vmatprep.subr.mxu0 0.0
      %4622 = vmatpush1.msra.mxu0 0.0
      %4623 = vmatprep.subr.mxu0 0.0
      %4624 = vmatpush1.msra.mxu0 0.0
      %4625 = vmatprep.subr.mxu0 0.0
      %4626 = vmatpush1.msra.mxu0 0.0
      %4627 = vmatprep.subr.mxu0 0.0
      %4628 = vmatpush1.msra.mxu0 0.0
      %4629 = vmatprep.subr.mxu0 0.0
      %4630 = vmatpush1.msra.mxu0 0.0
      %4631 = vmatprep.subr.mxu0 0.0
      %4632 = vmatpush1.msra.mxu0 0.0
      %4633 = vmatprep.subr.mxu0 0.0
      %4634 = vmatpush1.msra.mxu0 0.0
      %4635 = vmatprep.subr.mxu0 0.0
      %4636 = vmatpush1.msra.mxu0 0.0
      %4637 = vmatprep.subr.mxu0 0.0
      %4638 = vmatpush1.msra.mxu0 0.0
      %4639 = vmatprep.mubr.f32.mxu0 0.0
      %4640 = vmatmul.mubr.f32.gmra.mrb[0].mxu0 %v4410
      %v4641 = vpop.f32.mrb[0].mxu0
      %v4642 = vadd.f32 %v4401, %v4641
      %v4643 = vpop.f32.mrb[0].mxu0
      %v4644 = vadd.f32 %v4401, %v4643
      %4645 = vmatprep.mubr.f32.mxu0 0.0
      %4646 = vmatmul.mubr.f32.gmra.mrb[0].mxu0 %v4413
      %v4647 = vpop.f32.mrb[0].mxu0
      %v4648 = vadd.f32 %v4402, %v4647
      %v4649 = vpop.f32.mrb[0].mxu0
      %v4650 = vadd.f32 %v4402, %v4649
      %4651 = vmatprep.mubr.f32.mxu0 0.0
      %4652 = vmatmul.mubr.f32.gmra.mrb[0].mxu0 %v4078
      %v4653 = vpop.f32.mrb[0].mxu0
      %v4654 = vadd.f32 %v4403, %v4653
      %v4655 = vpop.f32.mrb[0].mxu0
      %v4656 = vadd.f32 %v4403, %v4655
      %4657 = vmatprep.mubr.f32.mxu0 0.0
      %4658 = vmatmul.mubr.f32.gmra.mrb[0].mxu0 %v4416
      %v4659 = vpop.f32.mrb[0].mxu0
      %v4660 = vadd.f32 %v4404, %v4659
      %v4661 = vpop.f32.mrb[0].mxu0
      %v4662 = vadd.f32 %v4404, %v4661
      %4663 = vmatprep.mubr.f32.mxu0 0.0
      %4664 = vmatmul.mubr.f32.gmra.mrb[0].mxu0 %v4419
      %v4665 = vpop.f32.mrb[0].mxu0
      %v4666 = vadd.f32 %v4405, %v4665
      %v4667 = vpop.f32.mrb[0].mxu0
      %v4668 = vadd.f32 %v4405, %v4667
      %4669 = vmatprep.mubr.f32.mxu0 0.0
      %4670 = vmatmul.mubr.f32.gmra.mrb[0].mxu0 %v4422
      %v4671 = vpop.f32.mrb[0].mxu0
      %v4672 = vadd.f32 %v4406, %v4671
      %v4673 = vpop.f32.mrb[0].mxu0
      %v4674 = vadd.f32 %v4406, %v4673
      %4675 = vmatprep.mubr.f32.mxu0 0.0
      %4676 = vmatmul.mubr.f32.gmra.mrb[0].mxu0 %v4425
      %v4677 = vpop.f32.mrb[0].mxu0
      %v4678 = vadd.f32 %v4407, %v4677
      %v4679 = vpop.f32.mrb[0].mxu0
      %v4680 = vadd.f32 %v4407, %v4679
      %4681 = vmatprep.mubr.f32.mxu0 0.0
      %4682 = vmatmul.mubr.f32.gmra.mrb[0].mxu0 %v4428
      %v4683 = vpop.f32.mrb[0].mxu0
      %v4684 = vadd.f32 %v4408, %v4683
      %v4685 = vpop.f32.mrb[0].mxu0
      %v4686 = vadd.f32 %v4408, %v4685
      %4687 = vdwg.mxu0
      %v4688 = vmul.f32 %v4356, %v4642
      %v4689 = vmul.f32 %v4357, %v4644
      %v4690 = vmul.f32 %v4358, %v4648
      %v4691 = vmul.f32 %v4359, %v4650
      %v4692 = vmul.f32 %v4360, %v4654
      %v4693 = vmul.f32 %v4361, %v4656
      %v4694 = vmul.f32 %v4362, %v4660
      %v4695 = vmul.f32 %v4363, %v4662
      %v4696 = vmul.f32 %v4364, %v4666
      %v4697 = vmul.f32 %v4365, %v4668
      %v4698 = vmul.f32 %v4366, %v4672
      %v4699 = vmul.f32 %v4367, %v4674
      %v4700 = vmul.f32 %v4368, %v4678
      %v4701 = vmul.f32 %v4369, %v4680
      %v4702 = vmul.f32 %v4370, %v4684
      %v4703 = vmul.f32 %v4371, %v4686
      %v4704 = vsub.s32 %v1734, 32
      %v4705 = vsub.s32 %v1735, 32
      %v4706 = vsub.s32 %v1736, 32
      %v4707 = vsub.s32 %v1737, 32
      %v4708 = vsub.s32 %v1739, 32
      %v4709 = vsub.s32 %v1740, 32
      %v4710 = vsub.s32 %v1741, 32
      %vm4711 = vcmp.eq.s32.totalorder %v1743, %v4704
      %vm4712 = vcmp.eq.s32.totalorder %v1743, %v4705
      %vm4713 = vcmp.eq.s32.totalorder %v1743, %v4706
      %vm4714 = vcmp.eq.s32.totalorder %v1743, %v4707
      %vm4715 = vcmp.eq.s32.totalorder %v1743, %v4708
      %vm4716 = vcmp.eq.s32.totalorder %v1743, %v4709
      %vm4717 = vcmp.eq.s32.totalorder %v1743, %v4710
      %v4718 = vsel %vm4711, 1.0, 0.0
      %v4719 = vsel %vm4712, 1.0, 0.0
      %v4720 = vsel %vm4713, 1.0, 0.0
      %v4721 = vsel %vm4714, 1.0, 0.0
      %v4722 = vsel %vm4715, 1.0, 0.0
      %v4723 = vsel %vm4716, 1.0, 0.0
      %v4724 = vsel %vm4717, 1.0, 0.0
      %v4726 = vsel %vm1768, %v4718, 0
      %v4729 = vsel %vm1768, %v4719, 0
      %v4732 = vsel %vm1768, %v4720, 0
      %v4735 = vsel %vm1768, %v4721, 0
      %v4738 = vsel %vm1768, %v4722, 0
      %v4741 = vsel %vm1768, %v4723, 0
      %v4744 = vsel %vm1768, %v4724, 0
      %4746 = vmatprep.subr.mxu0 %v4560
      %4747 = vmatpush1.msra.mxu0 %v4559
      %4748 = vmatprep.subr.mxu0 %v4562
      %4749 = vmatpush1.msra.mxu0 %v4561
      %4750 = vmatprep.subr.mxu0 %v4564
      %4751 = vmatpush1.msra.mxu0 %v4563
      %4752 = vmatprep.subr.mxu0 %v4566
      %4753 = vmatpush1.msra.mxu0 %v4565
      %4754 = vmatprep.subr.mxu0 %v4568
      %4755 = vmatpush1.msra.mxu0 %v4567
      %4756 = vmatprep.subr.mxu0 %v4570
      %4757 = vmatpush1.msra.mxu0 %v4569
      %4758 = vmatprep.subr.mxu0 %v4572
      %4759 = vmatpush1.msra.mxu0 %v4571
      %4760 = vmatprep.subr.mxu0 %v4574
      %4761 = vmatpush1.msra.mxu0 %v4573
      %4762 = vmatprep.subr.mxu0 0.0
      %4763 = vmatpush1.msra.mxu0 0.0
      %4764 = vmatprep.subr.mxu0 0.0
      %4765 = vmatpush1.msra.mxu0 0.0
      %4766 = vmatprep.subr.mxu0 0.0
      %4767 = vmatpush1.msra.mxu0 0.0
      %4768 = vmatprep.subr.mxu0 0.0
      %4769 = vmatpush1.msra.mxu0 0.0
      %4770 = vmatprep.subr.mxu0 0.0
      %4771 = vmatpush1.msra.mxu0 0.0
      %4772 = vmatprep.subr.mxu0 0.0
      %4773 = vmatpush1.msra.mxu0 0.0
      %4774 = vmatprep.subr.mxu0 0.0
      %4775 = vmatpush1.msra.mxu0 0.0
      %4776 = vmatprep.subr.mxu0 0.0
      %4777 = vmatpush1.msra.mxu0 0.0
      %4778 = vmatprep.subr.mxu0 0.0
      %4779 = vmatpush1.msra.mxu0 0.0
      %4780 = vmatprep.subr.mxu0 0.0
      %4781 = vmatpush1.msra.mxu0 0.0
      %4782 = vmatprep.subr.mxu0 0.0
      %4783 = vmatpush1.msra.mxu0 0.0
      %4784 = vmatprep.subr.mxu0 0.0
      %4785 = vmatpush1.msra.mxu0 0.0
      %4786 = vmatprep.subr.mxu0 0.0
      %4787 = vmatpush1.msra.mxu0 0.0
      %4788 = vmatprep.subr.mxu0 0.0
      %4789 = vmatpush1.msra.mxu0 0.0
      %4790 = vmatprep.subr.mxu0 0.0
      %4791 = vmatpush1.msra.mxu0 0.0
      %4792 = vmatprep.subr.mxu0 0.0
      %4793 = vmatpush1.msra.mxu0 0.0
      %4794 = vmatprep.subr.mxu0 0.0
      %4795 = vmatpush1.msra.mxu0 0.0
      %4796 = vmatprep.subr.mxu0 0.0
      %4797 = vmatpush1.msra.mxu0 0.0
      %4798 = vmatprep.subr.mxu0 0.0
      %4799 = vmatpush1.msra.mxu0 0.0
      %4800 = vmatprep.subr.mxu0 0.0
      %4801 = vmatpush1.msra.mxu0 0.0
      %4802 = vmatprep.subr.mxu0 0.0
      %4803 = vmatpush1.msra.mxu0 0.0
      %4804 = vmatprep.subr.mxu0 0.0
      %4805 = vmatpush1.msra.mxu0 0.0
      %4806 = vmatprep.subr.mxu0 0.0
      %4807 = vmatpush1.msra.mxu0 0.0
      %4808 = vmatprep.subr.mxu0 0.0
      %4809 = vmatpush1.msra.mxu0 0.0
      %4810 = vmatprep.mubr.f32.mxu0 0.0
      %4811 = vmatmul.mubr.f32.gmra.mrb[0].mxu0 %v4726
      %v4812 = vpop.f32.mrb[0].mxu0
      %v4813 = vadd.f32 0.0, %v4812
      %v4814 = vpop.f32.mrb[0].mxu0
      %v4815 = vadd.f32 0.0, %v4814
      %4816 = vmatprep.mubr.f32.mxu0 0.0
      %4817 = vmatmul.mubr.f32.gmra.mrb[0].mxu0 %v4729
      %v4818 = vpop.f32.mrb[0].mxu0
      %v4819 = vadd.f32 0.0, %v4818
      %v4820 = vpop.f32.mrb[0].mxu0
      %v4821 = vadd.f32 0.0, %v4820
      %4822 = vmatprep.mubr.f32.mxu0 0.0
      %4823 = vmatmul.mubr.f32.gmra.mrb[0].mxu0 %v4732
      %v4824 = vpop.f32.mrb[0].mxu0
      %v4825 = vadd.f32 0.0, %v4824
      %v4826 = vpop.f32.mrb[0].mxu0
      %v4827 = vadd.f32 0.0, %v4826
      %4828 = vmatprep.mubr.f32.mxu0 0.0
      %4829 = vmatmul.mubr.f32.gmra.mrb[0].mxu0 %v4735
      %v4830 = vpop.f32.mrb[0].mxu0
      %v4831 = vadd.f32 0.0, %v4830
      %v4832 = vpop.f32.mrb[0].mxu0
      %v4833 = vadd.f32 0.0, %v4832
      %4834 = vmatprep.mubr.f32.mxu0 0.0
      %4835 = vmatmul.mubr.f32.gmra.mrb[0].mxu0 %v4078
      %v4836 = vpop.f32.mrb[0].mxu0
      %v4837 = vadd.f32 0.0, %v4836
      %v4838 = vpop.f32.mrb[0].mxu0
      %v4839 = vadd.f32 0.0, %v4838
      %4840 = vmatprep.mubr.f32.mxu0 0.0
      %4841 = vmatmul.mubr.f32.gmra.mrb[0].mxu0 %v4738
      %v4842 = vpop.f32.mrb[0].mxu0
      %v4843 = vadd.f32 0.0, %v4842
      %v4844 = vpop.f32.mrb[0].mxu0
      %v4845 = vadd.f32 0.0, %v4844
      %4846 = vmatprep.mubr.f32.mxu0 0.0
      %4847 = vmatmul.mubr.f32.gmra.mrb[0].mxu0 %v4741
      %v4848 = vpop.f32.mrb[0].mxu0
      %v4849 = vadd.f32 0.0, %v4848
      %v4850 = vpop.f32.mrb[0].mxu0
      %v4851 = vadd.f32 0.0, %v4850
      %4852 = vmatprep.mubr.f32.mxu0 0.0
      %4853 = vmatmul.mubr.f32.gmra.mrb[0].mxu0 %v4744
      %v4854 = vpop.f32.mrb[0].mxu0
      %v4855 = vadd.f32 0.0, %v4854
      %v4856 = vpop.f32.mrb[0].mxu0
      %v4857 = vadd.f32 0.0, %v4856
      %4858 = vdwg.mxu0
      %v4859 = vmul.f32 %v4688, %v4813
      %v4860 = vmul.f32 %v4689, %v4815
      %v4861 = vmul.f32 %v4690, %v4819
      %v4862 = vmul.f32 %v4691, %v4821
      %v4863 = vmul.f32 %v4692, %v4825
      %v4864 = vmul.f32 %v4693, %v4827
      %v4865 = vmul.f32 %v4694, %v4831
      %v4866 = vmul.f32 %v4695, %v4833
      %v4867 = vmul.f32 %v4696, %v4837
      %v4868 = vmul.f32 %v4697, %v4839
      %v4869 = vmul.f32 %v4698, %v4843
      %v4870 = vmul.f32 %v4699, %v4845
      %v4871 = vmul.f32 %v4700, %v4849
      %v4872 = vmul.f32 %v4701, %v4851
      %v4873 = vmul.f32 %v4702, %v4855
      %v4874 = vmul.f32 %v4703, %v4857
      %v4875 = vadd.f32 %v4559, %v4859
      %v4876 = vadd.f32 %v4560, %v4860
      %v4877 = vadd.f32 %v4561, %v4861
      %v4878 = vadd.f32 %v4562, %v4862
      %v4879 = vadd.f32 %v4563, %v4863
      %v4880 = vadd.f32 %v4564, %v4864
      %v4881 = vadd.f32 %v4565, %v4865
      %v4882 = vadd.f32 %v4566, %v4866
      %v4883 = vadd.f32 %v4567, %v4867
      %v4884 = vadd.f32 %v4568, %v4868
      %v4885 = vadd.f32 %v4569, %v4869
      %v4886 = vadd.f32 %v4570, %v4870
      %v4887 = vadd.f32 %v4571, %v4871
      %v4888 = vadd.f32 %v4572, %v4872
      %v4889 = vadd.f32 %v4573, %v4873
      %v4890 = vadd.f32 %v4574, %v4874
      %v4891 = vmul.f32 %v4875, %v3071
      %v4892 = vmul.f32 %v4876, %v3073
      %v4893 = vmul.f32 %v4877, %v3077
      %v4894 = vmul.f32 %v4878, %v3079
      %v4895 = vmul.f32 %v4879, %v3083
      %v4896 = vmul.f32 %v4880, %v3085
      %v4897 = vmul.f32 %v4881, %v3089
      %v4898 = vmul.f32 %v4882, %v3091
      %v4899 = vmul.f32 %v4883, %v3095
      %v4900 = vmul.f32 %v4884, %v3097
      %v4901 = vmul.f32 %v4885, %v3101
      %v4902 = vmul.f32 %v4886, %v3103
      %v4903 = vmul.f32 %v4887, %v3107
      %v4904 = vmul.f32 %v4888, %v3109
      %v4905 = vmul.f32 %v4889, %v3113
      %v4906 = vmul.f32 %v4890, %v3115
      %v4908 = vlaneseq
      %v4909 = vshrl.u32 %v4908, 7
      %v4910 = vsub.s32 0, %v4909
      %v4911 = vrot.slane %v1716, %v4910
      %v4913 = vmul.f32 %v2326, %v4911
      %v4914 = vmul.f32 %v2327, %v4911
      %v4915 = vmul.f32 %v2328, %v4911
      %v4916 = vmul.f32 %v2329, %v4911
      %v4917 = vmul.f32 %v2330, %v4911
      %v4918 = vmul.f32 %v2331, %v4911
      %v4919 = vmul.f32 %v2332, %v4911
      %v4920 = vmul.f32 %v2333, %v4911
      %v4922 = vsel %vm1768, %v4892, 0
      %v4925 = vsel %vm1768, %v4894, 0
      %v4928 = vsel %vm1768, %v4896, 0
      %v4931 = vsel %vm1768, %v4898, 0
      %v4934 = vsel %vm1768, %v4900, 0
      %v4937 = vsel %vm1768, %v4902, 0
      %v4940 = vsel %vm1768, %v4904, 0
      %v4943 = vsel %vm1768, %v4906, 0
      %4945 = vmatprep.subr.mxu0 0.0
      %4946 = vmatpush1.msra.mxu0 %v1039
      %4947 = vmatprep.subr.mxu0 0.0
      %4948 = vmatpush1.msra.mxu0 %v1040
      %4949 = vmatprep.subr.mxu0 0.0
      %4950 = vmatpush1.msra.mxu0 %v1041
      %4951 = vmatprep.subr.mxu0 0.0
      %4952 = vmatpush1.msra.mxu0 %v1042
      %4953 = vmatprep.subr.mxu0 0.0
      %4954 = vmatpush1.msra.mxu0 %v1043
      %4955 = vmatprep.subr.mxu0 0.0
      %4956 = vmatpush1.msra.mxu0 %v1044
      %4957 = vmatprep.subr.mxu0 0.0
      %4958 = vmatpush1.msra.mxu0 %v1045
      %4959 = vmatprep.subr.mxu0 0.0
      %4960 = vmatpush1.msra.mxu0 %v1046
      %4961 = vmatprep.subr.mxu0 0.0
      %4962 = vmatpush1.msra.mxu0 %v1047
      %4963 = vmatprep.subr.mxu0 0.0
      %4964 = vmatpush1.msra.mxu0 %v1048
      %4965 = vmatprep.subr.mxu0 0.0
      %4966 = vmatpush1.msra.mxu0 %v1049
      %4967 = vmatprep.subr.mxu0 0.0
      %4968 = vmatpush1.msra.mxu0 %v1050
      %4969 = vmatprep.subr.mxu0 0.0
      %4970 = vmatpush1.msra.mxu0 %v1051
      %4971 = vmatprep.subr.mxu0 0.0
      %4972 = vmatpush1.msra.mxu0 %v1052
      %4973 = vmatprep.subr.mxu0 0.0
      %4974 = vmatpush1.msra.mxu0 %v1053
      %4975 = vmatprep.subr.mxu0 0.0
      %4976 = vmatpush1.msra.mxu0 %v1054
      %4977 = vmatprep.subr.mxu0 0.0
      %4978 = vmatpush1.msra.mxu0 %v1055
      %4979 = vmatprep.subr.mxu0 0.0
      %4980 = vmatpush1.msra.mxu0 %v1056
      %4981 = vmatprep.subr.mxu0 0.0
      %4982 = vmatpush1.msra.mxu0 %v1057
      %4983 = vmatprep.subr.mxu0 0.0
      %4984 = vmatpush1.msra.mxu0 %v1058
      %4985 = vmatprep.subr.mxu0 0.0
      %4986 = vmatpush1.msra.mxu0 %v1059
      %4987 = vmatprep.subr.mxu0 0.0
      %4988 = vmatpush1.msra.mxu0 %v1060
      %4989 = vmatprep.subr.mxu0 0.0
      %4990 = vmatpush1.msra.mxu0 %v1061
      %4991 = vmatprep.subr.mxu0 0.0
      %4992 = vmatpush1.msra.mxu0 %v1062
      %4993 = vmatprep.subr.mxu0 0.0
      %4994 = vmatpush1.msra.mxu0 0.0
      %4995 = vmatprep.subr.mxu0 0.0
      %4996 = vmatpush1.msra.mxu0 0.0
      %4997 = vmatprep.subr.mxu0 0.0
      %4998 = vmatpush1.msra.mxu0 0.0
      %4999 = vmatprep.subr.mxu0 0.0
      %5000 = vmatpush1.msra.mxu0 0.0
      %5001 = vmatprep.subr.mxu0 0.0
      %5002 = vmatpush1.msra.mxu0 0.0
      %5003 = vmatprep.subr.mxu0 0.0
      %5004 = vmatpush1.msra.mxu0 0.0
      %5005 = vmatprep.subr.mxu0 0.0
      %5006 = vmatpush1.msra.mxu0 0.0
      %5007 = vmatprep.subr.mxu0 0.0
      %5008 = vmatpush1.msra.mxu0 0.0
      %5009 = vmatprep.mubr.f32.mxu0 %v4922
      %5010 = vmatmul.mubr.f32.gmra.mrb[0].mxu0 %v4891
      %v5011 = vpop.f32.mrb[0].mxu0
      %v5012 = vadd.f32 %v4913, %v5011
      %v5013 = vpop.f32.mrb[0].mxu0
      %5014 = vmatprep.mubr.f32.mxu0 %v4925
      %5015 = vmatmul.mubr.f32.gmra.mrb[0].mxu0 %v4893
      %v5016 = vpop.f32.mrb[0].mxu0
      %v5017 = vadd.f32 %v4914, %v5016
      %v5018 = vpop.f32.mrb[0].mxu0
      %5019 = vmatprep.mubr.f32.mxu0 %v4928
      %5020 = vmatmul.mubr.f32.gmra.mrb[0].mxu0 %v4895
      %v5021 = vpop.f32.mrb[0].mxu0
      %v5022 = vadd.f32 %v4915, %v5021
      %v5023 = vpop.f32.mrb[0].mxu0
      %5024 = vmatprep.mubr.f32.mxu0 %v4931
      %5025 = vmatmul.mubr.f32.gmra.mrb[0].mxu0 %v4897
      %v5026 = vpop.f32.mrb[0].mxu0
      %v5027 = vadd.f32 %v4916, %v5026
      %v5028 = vpop.f32.mrb[0].mxu0
      %5029 = vmatprep.mubr.f32.mxu0 %v4934
      %5030 = vmatmul.mubr.f32.gmra.mrb[0].mxu0 %v4899
      %v5031 = vpop.f32.mrb[0].mxu0
      %v5032 = vadd.f32 %v4917, %v5031
      %v5033 = vpop.f32.mrb[0].mxu0
      %5034 = vmatprep.mubr.f32.mxu0 %v4937
      %5035 = vmatmul.mubr.f32.gmra.mrb[0].mxu0 %v4901
      %v5036 = vpop.f32.mrb[0].mxu0
      %v5037 = vadd.f32 %v4918, %v5036
      %v5038 = vpop.f32.mrb[0].mxu0
      %5039 = vmatprep.mubr.f32.mxu0 %v4940
      %5040 = vmatmul.mubr.f32.gmra.mrb[0].mxu0 %v4903
      %v5041 = vpop.f32.mrb[0].mxu0
      %v5042 = vadd.f32 %v4919, %v5041
      %v5043 = vpop.f32.mrb[0].mxu0
      %5044 = vmatprep.mubr.f32.mxu0 %v4943
      %5045 = vmatmul.mubr.f32.gmra.mrb[0].mxu0 %v4905
      %v5046 = vpop.f32.mrb[0].mxu0
      %v5047 = vadd.f32 %v4920, %v5046
      %v5048 = vpop.f32.mrb[0].mxu0
      %5049 = vdwg.mxu0
      %v5050 = vxor.u32 %v1661, 2147483648
      %v5051 = vxor.u32 %v1666, 2147483648
      %v5052 = vxor.u32 %v1671, 2147483648
      %v5053 = vxor.u32 %v1676, 2147483648
      %v5054 = vxor.u32 %v1681, 2147483648
      %v5055 = vxor.u32 %v1686, 2147483648
      %v5056 = vxor.u32 %v1691, 2147483648
      %v5057 = vxor.u32 %v1696, 2147483648
      %v5058 = vmul.f32 %v5050, 1.442695
      %v5059 = vpow.pop %v5058
      %v5060 = vmul.f32 %v5051, 1.442695
      %v5061 = vpow.pop %v5060
      %v5062 = vmul.f32 %v5052, 1.442695
      %v5063 = vpow.pop %v5062
      %v5064 = vmul.f32 %v5053, 1.442695
      %v5065 = vpow.pop %v5064
      %v5066 = vmul.f32 %v5054, 1.442695
      %v5067 = vpow.pop %v5066
      %v5068 = vmul.f32 %v5055, 1.442695
      %v5069 = vpow.pop %v5068
      %v5070 = vmul.f32 %v5056, 1.442695
      %v5071 = vpow.pop %v5070
      %v5072 = vmul.f32 %v5057, 1.442695
      %v5073 = vpow.pop %v5072
      %v5074 = vadd.f32 %v5059, 1.0
      %v5075 = vadd.f32 %v5061, 1.0
      %v5076 = vadd.f32 %v5063, 1.0
      %v5077 = vadd.f32 %v5065, 1.0
      %v5078 = vadd.f32 %v5067, 1.0
      %v5079 = vadd.f32 %v5069, 1.0
      %v5080 = vadd.f32 %v5071, 1.0
      %v5081 = vadd.f32 %v5073, 1.0
      %v5082 = vrcp.pop %v5074
      %v5083 = vmul.f32 1.0, %v5082
      %v5084 = vrcp.pop %v5075
      %v5085 = vmul.f32 1.0, %v5084
      %v5086 = vrcp.pop %v5076
      %v5087 = vmul.f32 1.0, %v5086
      %v5088 = vrcp.pop %v5077
      %v5089 = vmul.f32 1.0, %v5088
      %v5090 = vrcp.pop %v5078
      %v5091 = vmul.f32 1.0, %v5090
      %v5092 = vrcp.pop %v5079
      %v5093 = vmul.f32 1.0, %v5092
      %v5094 = vrcp.pop %v5080
      %v5095 = vmul.f32 1.0, %v5094
      %v5096 = vrcp.pop %v5081
      %v5097 = vmul.f32 1.0, %v5096
      %v5098 = vmul.f32 %v1661, %v5083
      %v5099 = vmul.f32 %v1666, %v5085
      %v5100 = vmul.f32 %v1671, %v5087
      %v5101 = vmul.f32 %v1676, %v5089
      %v5102 = vmul.f32 %v1681, %v5091
      %v5103 = vmul.f32 %v1686, %v5093
      %v5104 = vmul.f32 %v1691, %v5095
      %v5105 = vmul.f32 %v1696, %v5097
      %v5106 = vmul.f32 %v5012, %v5098
      %v5107 = vmul.f32 %v5017, %v5099
      %v5108 = vmul.f32 %v5022, %v5100
      %v5109 = vmul.f32 %v5027, %v5101
      %v5110 = vmul.f32 %v5032, %v5102
      %v5111 = vmul.f32 %v5037, %v5103
      %v5112 = vmul.f32 %v5042, %v5104
      %v5113 = vmul.f32 %v5047, %v5105
      %v5115 = vsel %vm2340, %v5106, 0
      %v5118 = vsel %vm2340, %v5107, 0
      %v5121 = vsel %vm2340, %v5108, 0
      %v5124 = vsel %vm2340, %v5109, 0
      %v5127 = vsel %vm2340, %v5110, 0
      %v5130 = vsel %vm2340, %v5111, 0
      %v5133 = vsel %vm2340, %v5112, 0
      %v5136 = vsel %vm2340, %v5113, 0
      %v5139 = vsel %vm1372, %v1718, 0
      %5141 = vmatprep.subr.mxu0 0.0
      %5142 = vmatpush1.msra.mxu0 %v1717
      %5143 = vmatprep.subr.mxu0 0.0
      %5144 = vmatpush1.msra.mxu0 %v5139
      %5145 = vmatprep.subr.mxu0 0.0
      %5146 = vmatpush1.msra.mxu0 0.0
      %5147 = vmatprep.subr.mxu0 0.0
      %5148 = vmatpush1.msra.mxu0 0.0
      %5149 = vmatprep.subr.mxu0 0.0
      %5150 = vmatpush1.msra.mxu0 0.0
      %5151 = vmatprep.subr.mxu0 0.0
      %5152 = vmatpush1.msra.mxu0 0.0
      %5153 = vmatprep.subr.mxu0 0.0
      %5154 = vmatpush1.msra.mxu0 0.0
      %5155 = vmatprep.subr.mxu0 0.0
      %5156 = vmatpush1.msra.mxu0 0.0
      %5157 = vmatprep.subr.mxu0 0.0
      %5158 = vmatpush1.msra.mxu0 0.0
      %5159 = vmatprep.subr.mxu0 0.0
      %5160 = vmatpush1.msra.mxu0 0.0
      %5161 = vmatprep.subr.mxu0 0.0
      %5162 = vmatpush1.msra.mxu0 0.0
      %5163 = vmatprep.subr.mxu0 0.0
      %5164 = vmatpush1.msra.mxu0 0.0
      %5165 = vmatprep.subr.mxu0 0.0
      %5166 = vmatpush1.msra.mxu0 0.0
      %5167 = vmatprep.subr.mxu0 0.0
      %5168 = vmatpush1.msra.mxu0 0.0
      %5169 = vmatprep.subr.mxu0 0.0
      %5170 = vmatpush1.msra.mxu0 0.0
      %5171 = vmatprep.subr.mxu0 0.0
      %5172 = vmatpush1.msra.mxu0 0.0
      %5173 = vmatprep.subr.mxu0 0.0
      %5174 = vmatpush1.msra.mxu0 0.0
      %5175 = vmatprep.subr.mxu0 0.0
      %5176 = vmatpush1.msra.mxu0 0.0
      %5177 = vmatprep.subr.mxu0 0.0
      %5178 = vmatpush1.msra.mxu0 0.0
      %5179 = vmatprep.subr.mxu0 0.0
      %5180 = vmatpush1.msra.mxu0 0.0
      %5181 = vmatprep.subr.mxu0 0.0
      %5182 = vmatpush1.msra.mxu0 0.0
      %5183 = vmatprep.subr.mxu0 0.0
      %5184 = vmatpush1.msra.mxu0 0.0
      %5185 = vmatprep.subr.mxu0 0.0
      %5186 = vmatpush1.msra.mxu0 0.0
      %5187 = vmatprep.subr.mxu0 0.0
      %5188 = vmatpush1.msra.mxu0 0.0
      %5189 = vmatprep.subr.mxu0 0.0
      %5190 = vmatpush1.msra.mxu0 0.0
      %5191 = vmatprep.subr.mxu0 0.0
      %5192 = vmatpush1.msra.mxu0 0.0
      %5193 = vmatprep.subr.mxu0 0.0
      %5194 = vmatpush1.msra.mxu0 0.0
      %5195 = vmatprep.subr.mxu0 0.0
      %5196 = vmatpush1.msra.mxu0 0.0
      %5197 = vmatprep.subr.mxu0 0.0
      %5198 = vmatpush1.msra.mxu0 0.0
      %5199 = vmatprep.subr.mxu0 0.0
      %5200 = vmatpush1.msra.mxu0 0.0
      %5201 = vmatprep.subr.mxu0 0.0
      %5202 = vmatpush1.msra.mxu0 0.0
      %5203 = vmatprep.subr.mxu0 0.0
      %5204 = vmatpush1.msra.mxu0 0.0
      %5205 = vmatprep.mubr.f32.mxu0 0.0
      %5206 = vmatmul.mubr.f32.gmra.mrb[0].mxu0 %v5115
      %v5207 = vpop.f32.mrb[0].mxu0
      %v5208 = vadd.f32 0.0, %v5207
      %v5209 = vpop.f32.mrb[0].mxu0
      %5210 = vmatprep.mubr.f32.mxu0 0.0
      %5211 = vmatmul.mubr.f32.gmra.mrb[0].mxu0 %v5118
      %v5212 = vpop.f32.mrb[0].mxu0
      %v5213 = vadd.f32 0.0, %v5212
      %v5214 = vpop.f32.mrb[0].mxu0
      %5215 = vmatprep.mubr.f32.mxu0 0.0
      %5216 = vmatmul.mubr.f32.gmra.mrb[0].mxu0 %v5121
      %v5217 = vpop.f32.mrb[0].mxu0
      %v5218 = vadd.f32 0.0, %v5217
      %v5219 = vpop.f32.mrb[0].mxu0
      %5220 = vmatprep.mubr.f32.mxu0 0.0
      %5221 = vmatmul.mubr.f32.gmra.mrb[0].mxu0 %v5124
      %v5222 = vpop.f32.mrb[0].mxu0
      %v5223 = vadd.f32 0.0, %v5222
      %v5224 = vpop.f32.mrb[0].mxu0
      %5225 = vmatprep.mubr.f32.mxu0 0.0
      %5226 = vmatmul.mubr.f32.gmra.mrb[0].mxu0 %v5127
      %v5227 = vpop.f32.mrb[0].mxu0
      %v5228 = vadd.f32 0.0, %v5227
      %v5229 = vpop.f32.mrb[0].mxu0
      %5230 = vmatprep.mubr.f32.mxu0 0.0
      %5231 = vmatmul.mubr.f32.gmra.mrb[0].mxu0 %v5130
      %v5232 = vpop.f32.mrb[0].mxu0
      %v5233 = vadd.f32 0.0, %v5232
      %v5234 = vpop.f32.mrb[0].mxu0
      %5235 = vmatprep.mubr.f32.mxu0 0.0
      %5236 = vmatmul.mubr.f32.gmra.mrb[0].mxu0 %v5133
      %v5237 = vpop.f32.mrb[0].mxu0
      %v5238 = vadd.f32 0.0, %v5237
      %v5239 = vpop.f32.mrb[0].mxu0
      %5240 = vmatprep.mubr.f32.mxu0 0.0
      %5241 = vmatmul.mubr.f32.gmra.mrb[0].mxu0 %v5136
      %v5242 = vpop.f32.mrb[0].mxu0
      %v5243 = vadd.f32 0.0, %v5242
      %v5244 = vpop.f32.mrb[0].mxu0
      %5245 = vdwg.mxu0
      %vm5246 = vcmask 48128
      %v5247 = vsel %vm5246, %v5208, 0.0
      %5248 = vadd.xlane.f32.xlu0 %v5247
      %v5249 = vpop.xlane.xlu0 %5248
      %v5250 = vsel %vm5246, %v5213, 0.0
      %5251 = vadd.xlane.f32.xlu0 %v5250
      %v5252 = vpop.xlane.xlu0 %5251
      %v5253 = vsel %vm5246, %v5218, 0.0
      %5254 = vadd.xlane.f32.xlu0 %v5253
      %v5255 = vpop.xlane.xlu0 %5254
      %v5256 = vsel %vm5246, %v5223, 0.0
      %5257 = vadd.xlane.f32.xlu0 %v5256
      %v5258 = vpop.xlane.xlu0 %5257
      %v5259 = vsel %vm5246, %v5228, 0.0
      %5260 = vadd.xlane.f32.xlu0 %v5259
      %v5261 = vpop.xlane.xlu0 %5260
      %v5262 = vsel %vm5246, %v5233, 0.0
      %5263 = vadd.xlane.f32.xlu0 %v5262
      %v5264 = vpop.xlane.xlu0 %5263
      %v5265 = vsel %vm5246, %v5238, 0.0
      %5266 = vadd.xlane.f32.xlu0 %v5265
      %v5267 = vpop.xlane.xlu0 %5266
      %v5268 = vsel %vm5246, %v5243, 0.0
      %5269 = vadd.xlane.f32.xlu0 %v5268
      %v5270 = vpop.xlane.xlu0 %5269
      %v5271 = vrcp.pop 6.0
      %v5272 = vmul.f32 %v5249, %v5271
      %v5273 = vmul.f32 %v5252, %v5271
      %v5274 = vmul.f32 %v5255, %v5271
      %v5275 = vmul.f32 %v5258, %v5271
      %v5276 = vmul.f32 %v5261, %v5271
      %v5277 = vmul.f32 %v5264, %v5271
      %v5278 = vmul.f32 %v5267, %v5271
      %v5279 = vmul.f32 %v5270, %v5271
      %v5280 = vsub.f32 %v5208, %v5272
      %v5281 = vsub.f32 %v5213, %v5273
      %v5282 = vsub.f32 %v5218, %v5274
      %v5283 = vsub.f32 %v5223, %v5275
      %v5284 = vsub.f32 %v5228, %v5276
      %v5285 = vsub.f32 %v5233, %v5277
      %v5286 = vsub.f32 %v5238, %v5278
      %v5287 = vsub.f32 %v5243, %v5279
      %v5288 = vmul.f32 %v5280, %v5280
      %v5289 = vmul.f32 %v5281, %v5281
      %v5290 = vmul.f32 %v5282, %v5282
      %v5291 = vmul.f32 %v5283, %v5283
      %v5292 = vmul.f32 %v5284, %v5284
      %v5293 = vmul.f32 %v5285, %v5285
      %v5294 = vmul.f32 %v5286, %v5286
      %v5295 = vmul.f32 %v5287, %v5287
      %v5296 = vsel %vm5246, %v5288, 0.0
      %5297 = vadd.xlane.f32.xlu0 %v5296
      %v5298 = vpop.xlane.xlu0 %5297
      %v5299 = vsel %vm5246, %v5289, 0.0
      %5300 = vadd.xlane.f32.xlu0 %v5299
      %v5301 = vpop.xlane.xlu0 %5300
      %v5302 = vsel %vm5246, %v5290, 0.0
      %5303 = vadd.xlane.f32.xlu0 %v5302
      %v5304 = vpop.xlane.xlu0 %5303
      %v5305 = vsel %vm5246, %v5291, 0.0
      %5306 = vadd.xlane.f32.xlu0 %v5305
      %v5307 = vpop.xlane.xlu0 %5306
      %v5308 = vsel %vm5246, %v5292, 0.0
      %5309 = vadd.xlane.f32.xlu0 %v5308
      %v5310 = vpop.xlane.xlu0 %5309
      %v5311 = vsel %vm5246, %v5293, 0.0
      %5312 = vadd.xlane.f32.xlu0 %v5311
      %v5313 = vpop.xlane.xlu0 %5312
      %v5314 = vsel %vm5246, %v5294, 0.0
      %5315 = vadd.xlane.f32.xlu0 %v5314
      %v5316 = vpop.xlane.xlu0 %5315
      %v5317 = vsel %vm5246, %v5295, 0.0
      %5318 = vadd.xlane.f32.xlu0 %v5317
      %v5319 = vpop.xlane.xlu0 %5318
      %v5320 = vmul.f32 %v5298, %v5271
      %v5321 = vmul.f32 %v5301, %v5271
      %v5322 = vmul.f32 %v5304, %v5271
      %v5323 = vmul.f32 %v5307, %v5271
      %v5324 = vmul.f32 %v5310, %v5271
      %v5325 = vmul.f32 %v5313, %v5271
      %v5326 = vmul.f32 %v5316, %v5271
      %v5327 = vmul.f32 %v5319, %v5271
      %v5328 = vadd.f32 %v5320, 1e-05
      %v5329 = vadd.f32 %v5321, 1e-05
      %v5330 = vadd.f32 %v5322, 1e-05
      %v5331 = vadd.f32 %v5323, 1e-05
      %v5332 = vadd.f32 %v5324, 1e-05
      %v5333 = vadd.f32 %v5325, 1e-05
      %v5334 = vadd.f32 %v5326, 1e-05
      %v5335 = vadd.f32 %v5327, 1e-05
      %v5336 = vrsqrt.pop %v5328
      %v5337 = vrsqrt.pop %v5329
      %v5338 = vrsqrt.pop %v5330
      %v5339 = vrsqrt.pop %v5331
      %v5340 = vrsqrt.pop %v5332
      %v5341 = vrsqrt.pop %v5333
      %v5342 = vrsqrt.pop %v5334
      %v5343 = vrsqrt.pop %v5335
      %v5344 = vmul.f32 %v5280, %v5336
      %v5345 = vmul.f32 %v5281, %v5337
      %v5346 = vmul.f32 %v5282, %v5338
      %v5347 = vmul.f32 %v5283, %v5339
      %v5348 = vmul.f32 %v5284, %v5340
      %v5349 = vmul.f32 %v5285, %v5341
      %v5350 = vmul.f32 %v5286, %v5342
      %v5351 = vmul.f32 %v5287, %v5343
      %v5353 = vlaneseq
      %v5354 = vshrl.u32 %v5353, 7
      %v5355 = vsub.s32 0, %v5354
      %v5356 = vrot.slane %v1719, %v5355
      %v5358 = vmul.f32 %v5344, %v5356
      %v5359 = vmul.f32 %v5345, %v5356
      %v5360 = vmul.f32 %v5346, %v5356
      %v5361 = vmul.f32 %v5347, %v5356
      %v5362 = vmul.f32 %v5348, %v5356
      %v5363 = vmul.f32 %v5349, %v5356
      %v5364 = vmul.f32 %v5350, %v5356
      %v5365 = vmul.f32 %v5351, %v5356
      %v5367 = vlaneseq
      %v5368 = vshrl.u32 %v5367, 7
      %v5369 = vsub.s32 0, %v5368
      %v5370 = vrot.slane %v1720, %v5369
      %v5372 = vadd.f32 %v5358, %v5370
      %v5373 = vadd.f32 %v5359, %v5370
      %v5374 = vadd.f32 %v5360, %v5370
      %v5375 = vadd.f32 %v5361, %v5370
      %v5376 = vadd.f32 %v5362, %v5370
      %v5377 = vadd.f32 %v5363, %v5370
      %v5378 = vadd.f32 %v5364, %v5370
      %v5379 = vadd.f32 %v5365, %v5370
      %v5380 = vmax.f32 %v5372, 0.0
      %v5381 = vmax.f32 %v5373, 0.0
      %v5382 = vmax.f32 %v5374, 0.0
      %v5383 = vmax.f32 %v5375, 0.0
      %v5384 = vmax.f32 %v5376, 0.0
      %v5385 = vmax.f32 %v5377, 0.0
      %v5386 = vmax.f32 %v5378, 0.0
      %v5387 = vmax.f32 %v5379, 0.0
      %v5388 = vld [vmem:[%s41] sm:$0x3f]
      %v5390 = vsel %vm5246, %v5380, 0
      %v5393 = vsel %vm5246, %v5381, 0
      %v5396 = vsel %vm5246, %v5382, 0
      %v5399 = vsel %vm5246, %v5383, 0
      %v5402 = vsel %vm5246, %v5384, 0
      %v5405 = vsel %vm5246, %v5385, 0
      %v5408 = vsel %vm5246, %v5386, 0
      %v5411 = vsel %vm5246, %v5387, 0
      %vm5413 = vcmask 1045504
      %v5415 = vsel %vm5413, %v5388, 0
      %5417 = vmatprep.subr.mxu0 0.0
      %5418 = vmatpush1.msra.mxu0 %v5415
      %5419 = vmatprep.subr.mxu0 0.0
      %5420 = vmatpush1.msra.mxu0 0.0
      %5421 = vmatprep.subr.mxu0 0.0
      %5422 = vmatpush1.msra.mxu0 0.0
      %5423 = vmatprep.subr.mxu0 0.0
      %5424 = vmatpush1.msra.mxu0 0.0
      %5425 = vmatprep.subr.mxu0 0.0
      %5426 = vmatpush1.msra.mxu0 0.0
      %5427 = vmatprep.subr.mxu0 0.0
      %5428 = vmatpush1.msra.mxu0 0.0
      %5429 = vmatprep.subr.mxu0 0.0
      %5430 = vmatpush1.msra.mxu0 0.0
      %5431 = vmatprep.subr.mxu0 0.0
      %5432 = vmatpush1.msra.mxu0 0.0
      %5433 = vmatprep.subr.mxu0 0.0
      %5434 = vmatpush1.msra.mxu0 0.0
      %5435 = vmatprep.subr.mxu0 0.0
      %5436 = vmatpush1.msra.mxu0 0.0
      %5437 = vmatprep.subr.mxu0 0.0
      %5438 = vmatpush1.msra.mxu0 0.0
      %5439 = vmatprep.subr.mxu0 0.0
      %5440 = vmatpush1.msra.mxu0 0.0
      %5441 = vmatprep.subr.mxu0 0.0
      %5442 = vmatpush1.msra.mxu0 0.0
      %5443 = vmatprep.subr.mxu0 0.0
      %5444 = vmatpush1.msra.mxu0 0.0
      %5445 = vmatprep.subr.mxu0 0.0
      %5446 = vmatpush1.msra.mxu0 0.0
      %5447 = vmatprep.subr.mxu0 0.0
      %5448 = vmatpush1.msra.mxu0 0.0
      %5449 = vmatprep.subr.mxu0 0.0
      %5450 = vmatpush1.msra.mxu0 0.0
      %5451 = vmatprep.subr.mxu0 0.0
      %5452 = vmatpush1.msra.mxu0 0.0
      %5453 = vmatprep.subr.mxu0 0.0
      %5454 = vmatpush1.msra.mxu0 0.0
      %5455 = vmatprep.subr.mxu0 0.0
      %5456 = vmatpush1.msra.mxu0 0.0
      %5457 = vmatprep.subr.mxu0 0.0
      %5458 = vmatpush1.msra.mxu0 0.0
      %5459 = vmatprep.subr.mxu0 0.0
      %5460 = vmatpush1.msra.mxu0 0.0
      %5461 = vmatprep.subr.mxu0 0.0
      %5462 = vmatpush1.msra.mxu0 0.0
      %5463 = vmatprep.subr.mxu0 0.0
      %5464 = vmatpush1.msra.mxu0 0.0
      %5465 = vmatprep.subr.mxu0 0.0
      %5466 = vmatpush1.msra.mxu0 0.0
      %5467 = vmatprep.subr.mxu0 0.0
      %5468 = vmatpush1.msra.mxu0 0.0
      %5469 = vmatprep.subr.mxu0 0.0
      %5470 = vmatpush1.msra.mxu0 0.0
      %5471 = vmatprep.subr.mxu0 0.0
      %5472 = vmatpush1.msra.mxu0 0.0
      %5473 = vmatprep.subr.mxu0 0.0
      %5474 = vmatpush1.msra.mxu0 0.0
      %5475 = vmatprep.subr.mxu0 0.0
      %5476 = vmatpush1.msra.mxu0 0.0
      %5477 = vmatprep.subr.mxu0 0.0
      %5478 = vmatpush1.msra.mxu0 0.0
      %5479 = vmatprep.subr.mxu0 0.0
      %5480 = vmatpush1.msra.mxu0 0.0
      %5481 = vmatprep.mubr.f32.mxu0 0.0
      %5482 = vmatmul.mubr.f32.gmra.mrb[0].mxu0 %v5390
      %v5483 = vpop.f32.mrb[0].mxu0
      %v5484 = vadd.f32 0.0, %v5483
      %v5485 = vpop.f32.mrb[0].mxu0
      %5486 = vmatprep.mubr.f32.mxu0 0.0
      %5487 = vmatmul.mubr.f32.gmra.mrb[0].mxu0 %v5393
      %v5488 = vpop.f32.mrb[0].mxu0
      %v5489 = vadd.f32 0.0, %v5488
      %v5490 = vpop.f32.mrb[0].mxu0
      %5491 = vmatprep.mubr.f32.mxu0 0.0
      %5492 = vmatmul.mubr.f32.gmra.mrb[0].mxu0 %v5396
      %v5493 = vpop.f32.mrb[0].mxu0
      %v5494 = vadd.f32 0.0, %v5493
      %v5495 = vpop.f32.mrb[0].mxu0
      %5496 = vmatprep.mubr.f32.mxu0 0.0
      %5497 = vmatmul.mubr.f32.gmra.mrb[0].mxu0 %v5399
      %v5498 = vpop.f32.mrb[0].mxu0
      %v5499 = vadd.f32 0.0, %v5498
      %v5500 = vpop.f32.mrb[0].mxu0
      %5501 = vmatprep.mubr.f32.mxu0 0.0
      %5502 = vmatmul.mubr.f32.gmra.mrb[0].mxu0 %v5402
      %v5503 = vpop.f32.mrb[0].mxu0
      %v5504 = vadd.f32 0.0, %v5503
      %v5505 = vpop.f32.mrb[0].mxu0
      %5506 = vmatprep.mubr.f32.mxu0 0.0
      %5507 = vmatmul.mubr.f32.gmra.mrb[0].mxu0 %v5405
      %v5508 = vpop.f32.mrb[0].mxu0
      %v5509 = vadd.f32 0.0, %v5508
      %v5510 = vpop.f32.mrb[0].mxu0
      %5511 = vmatprep.mubr.f32.mxu0 0.0
      %5512 = vmatmul.mubr.f32.gmra.mrb[0].mxu0 %v5408
      %v5513 = vpop.f32.mrb[0].mxu0
      %v5514 = vadd.f32 0.0, %v5513
      %v5515 = vpop.f32.mrb[0].mxu0
      %5516 = vmatprep.mubr.f32.mxu0 0.0
      %5517 = vmatmul.mubr.f32.gmra.mrb[0].mxu0 %v5411
      %v5518 = vpop.f32.mrb[0].mxu0
      %v5519 = vadd.f32 0.0, %v5518
      %v5520 = vpop.f32.mrb[0].mxu0
      %5521 = vdwg.mxu0
      %v5522 = vld [vmem:[%s43] sm:$0x3f]
      %v5524 = vsel %vm5413, %v5522, 0
      %5526 = vmatprep.subr.mxu0 0.0
      %5527 = vmatpush1.msra.mxu0 %v5524
      %5528 = vmatprep.subr.mxu0 0.0
      %5529 = vmatpush1.msra.mxu0 0.0
      %5530 = vmatprep.subr.mxu0 0.0
      %5531 = vmatpush1.msra.mxu0 0.0
      %5532 = vmatprep.subr.mxu0 0.0
      %5533 = vmatpush1.msra.mxu0 0.0
      %5534 = vmatprep.subr.mxu0 0.0
      %5535 = vmatpush1.msra.mxu0 0.0
      %5536 = vmatprep.subr.mxu0 0.0
      %5537 = vmatpush1.msra.mxu0 0.0
      %5538 = vmatprep.subr.mxu0 0.0
      %5539 = vmatpush1.msra.mxu0 0.0
      %5540 = vmatprep.subr.mxu0 0.0
      %5541 = vmatpush1.msra.mxu0 0.0
      %5542 = vmatprep.subr.mxu0 0.0
      %5543 = vmatpush1.msra.mxu0 0.0
      %5544 = vmatprep.subr.mxu0 0.0
      %5545 = vmatpush1.msra.mxu0 0.0
      %5546 = vmatprep.subr.mxu0 0.0
      %5547 = vmatpush1.msra.mxu0 0.0
      %5548 = vmatprep.subr.mxu0 0.0
      %5549 = vmatpush1.msra.mxu0 0.0
      %5550 = vmatprep.subr.mxu0 0.0
      %5551 = vmatpush1.msra.mxu0 0.0
      %5552 = vmatprep.subr.mxu0 0.0
      %5553 = vmatpush1.msra.mxu0 0.0
      %5554 = vmatprep.subr.mxu0 0.0
      %5555 = vmatpush1.msra.mxu0 0.0
      %5556 = vmatprep.subr.mxu0 0.0
      %5557 = vmatpush1.msra.mxu0 0.0
      %5558 = vmatprep.subr.mxu0 0.0
      %5559 = vmatpush1.msra.mxu0 0.0
      %5560 = vmatprep.subr.mxu0 0.0
      %5561 = vmatpush1.msra.mxu0 0.0
      %5562 = vmatprep.subr.mxu0 0.0
      %5563 = vmatpush1.msra.mxu0 0.0
      %5564 = vmatprep.subr.mxu0 0.0
      %5565 = vmatpush1.msra.mxu0 0.0
      %5566 = vmatprep.subr.mxu0 0.0
      %5567 = vmatpush1.msra.mxu0 0.0
      %5568 = vmatprep.subr.mxu0 0.0
      %5569 = vmatpush1.msra.mxu0 0.0
      %5570 = vmatprep.subr.mxu0 0.0
      %5571 = vmatpush1.msra.mxu0 0.0
      %5572 = vmatprep.subr.mxu0 0.0
      %5573 = vmatpush1.msra.mxu0 0.0
      %5574 = vmatprep.subr.mxu0 0.0
      %5575 = vmatpush1.msra.mxu0 0.0
      %5576 = vmatprep.subr.mxu0 0.0
      %5577 = vmatpush1.msra.mxu0 0.0
      %5578 = vmatprep.subr.mxu0 0.0
      %5579 = vmatpush1.msra.mxu0 0.0
      %5580 = vmatprep.subr.mxu0 0.0
      %5581 = vmatpush1.msra.mxu0 0.0
      %5582 = vmatprep.subr.mxu0 0.0
      %5583 = vmatpush1.msra.mxu0 0.0
      %5584 = vmatprep.subr.mxu0 0.0
      %5585 = vmatpush1.msra.mxu0 0.0
      %5586 = vmatprep.subr.mxu0 0.0
      %5587 = vmatpush1.msra.mxu0 0.0
      %5588 = vmatprep.subr.mxu0 0.0
      %5589 = vmatpush1.msra.mxu0 0.0
      %5590 = vmatprep.mubr.f32.mxu0 0.0
      %5591 = vmatmul.mubr.f32.gmra.mrb[0].mxu0 %v5390
      %v5592 = vpop.f32.mrb[0].mxu0
      %v5593 = vadd.f32 0.0, %v5592
      %v5594 = vpop.f32.mrb[0].mxu0
      %5595 = vmatprep.mubr.f32.mxu0 0.0
      %5596 = vmatmul.mubr.f32.gmra.mrb[0].mxu0 %v5393
      %v5597 = vpop.f32.mrb[0].mxu0
      %v5598 = vadd.f32 0.0, %v5597
      %v5599 = vpop.f32.mrb[0].mxu0
      %5600 = vmatprep.mubr.f32.mxu0 0.0
      %5601 = vmatmul.mubr.f32.gmra.mrb[0].mxu0 %v5396
      %v5602 = vpop.f32.mrb[0].mxu0
      %v5603 = vadd.f32 0.0, %v5602
      %v5604 = vpop.f32.mrb[0].mxu0
      %5605 = vmatprep.mubr.f32.mxu0 0.0
      %5606 = vmatmul.mubr.f32.gmra.mrb[0].mxu0 %v5399
      %v5607 = vpop.f32.mrb[0].mxu0
      %v5608 = vadd.f32 0.0, %v5607
      %v5609 = vpop.f32.mrb[0].mxu0
      %5610 = vmatprep.mubr.f32.mxu0 0.0
      %5611 = vmatmul.mubr.f32.gmra.mrb[0].mxu0 %v5402
      %v5612 = vpop.f32.mrb[0].mxu0
      %v5613 = vadd.f32 0.0, %v5612
      %v5614 = vpop.f32.mrb[0].mxu0
      %5615 = vmatprep.mubr.f32.mxu0 0.0
      %5616 = vmatmul.mubr.f32.gmra.mrb[0].mxu0 %v5405
      %v5617 = vpop.f32.mrb[0].mxu0
      %v5618 = vadd.f32 0.0, %v5617
      %v5619 = vpop.f32.mrb[0].mxu0
      %5620 = vmatprep.mubr.f32.mxu0 0.0
      %5621 = vmatmul.mubr.f32.gmra.mrb[0].mxu0 %v5408
      %v5622 = vpop.f32.mrb[0].mxu0
      %v5623 = vadd.f32 0.0, %v5622
      %v5624 = vpop.f32.mrb[0].mxu0
      %5625 = vmatprep.mubr.f32.mxu0 0.0
      %5626 = vmatmul.mubr.f32.gmra.mrb[0].mxu0 %v5411
      %v5627 = vpop.f32.mrb[0].mxu0
      %v5628 = vadd.f32 0.0, %v5627
      %v5629 = vpop.f32.mrb[0].mxu0
      %5630 = vdwg.mxu0
      %v5631 = vld [vmem:[%s45] sm:$0xf]
      %v5632 = vld [vmem:[%s47] sm:$0x1]
      %v5633 = vld [vmem:[%s49] sm:$0xff]
      %v5634 = vld [vmem:[%s49 + $0x8] sm:$0xff]
      %v5635 = vld [vmem:[%s49 + $0x10] sm:$0xf]
      %v5636 = vld [vmem:[%s49 + $0x18] sm:$0xf]
      %v5637 = vld [vmem:[%s51] sm:$0xff]
      %v5638 = vld [vmem:[%s51 + $0x8] sm:$0xff]
      %v5639 = vld [vmem:[%s51 + $0x10] sm:$0xf]
      %v5640 = vld [vmem:[%s51 + $0x18] sm:$0xf]
      %v5641 = vld [vmem:[%s53] sm:$0xff]
      %v5642 = vld [vmem:[%s53 + $0x8] sm:$0xf]
      %v5643 = vld [vmem:[%s55] sm:$0x1]
      %v5644 = vld [vmem:[%s57] sm:$0xff]
      %v5645 = vld [vmem:[%s57 + $0x8] sm:$0xff]
      %v5646 = vld [vmem:[%s57 + $0x10] sm:$0xf]
      %v5647 = vld [vmem:[%s57 + $0x18] sm:$0xf]
      %v5648 = vld [vmem:[%s59] sm:$0x1]
      %v5649 = vld [vmem:[%s61] sm:$0xff]
      %v5650 = vld [vmem:[%s61 + $0x8] sm:$0xf]
      %v5651 = vld [vmem:[%s63] sm:$0x1]
      %v5652 = vld [vmem:[%s65] sm:$0x1]
      %v5653 = vlaneseq
      %v5654 = vshrl.u32 %v5653, 7
      %v5655 = vsub.s32 3, %v5654
      %v5656 = vrot.slane %v5631, %v5655
      %v5657 = vmul.f32 %v5656, %v5484
      %v5658 = vmul.f32 %v5656, %v5489
      %v5659 = vmul.f32 %v5656, %v5494
      %v5660 = vmul.f32 %v5656, %v5499
      %v5661 = vmul.f32 %v5656, %v5504
      %v5662 = vmul.f32 %v5656, %v5509
      %v5663 = vmul.f32 %v5656, %v5514
      %v5664 = vmul.f32 %v5656, %v5519
      %5665 = vmatprep.subr.mxu0 0.0
      %5666 = vmatpush1.msra.mxu0 %v5484
      %5667 = vmatprep.subr.mxu0 0.0
      %5668 = vmatpush1.msra.mxu0 %v5489
      %5669 = vmatprep.subr.mxu0 0.0
      %5670 = vmatpush1.msra.mxu0 %v5494
      %5671 = vmatprep.subr.mxu0 0.0
      %5672 = vmatpush1.msra.mxu0 %v5499
      %5673 = vmatprep.subr.mxu0 0.0
      %5674 = vmatpush1.msra.mxu0 %v5504
      %5675 = vmatprep.subr.mxu0 0.0
      %5676 = vmatpush1.msra.mxu0 %v5509
      %5677 = vmatprep.subr.mxu0 0.0
      %5678 = vmatpush1.msra.mxu0 %v5514
      %5679 = vmatprep.subr.mxu0 0.0
      %5680 = vmatpush1.msra.mxu0 %v5519
      %5681 = vmatprep.subr.mxu0 0.0
      %5682 = vmatpush1.msra.mxu0 0.0
      %5683 = vmatprep.subr.mxu0 0.0
      %5684 = vmatpush1.msra.mxu0 0.0
      %5685 = vmatprep.subr.mxu0 0.0
      %5686 = vmatpush1.msra.mxu0 0.0
      %5687 = vmatprep.subr.mxu0 0.0
      %5688 = vmatpush1.msra.mxu0 0.0
      %5689 = vmatprep.subr.mxu0 0.0
      %5690 = vmatpush1.msra.mxu0 0.0
      %5691 = vmatprep.subr.mxu0 0.0
      %5692 = vmatpush1.msra.mxu0 0.0
      %5693 = vmatprep.subr.mxu0 0.0
      %5694 = vmatpush1.msra.mxu0 0.0
      %5695 = vmatprep.subr.mxu0 0.0
      %5696 = vmatpush1.msra.mxu0 0.0
      %5697 = vmatprep.subr.mxu0 0.0
      %5698 = vmatpush1.msra.mxu0 0.0
      %5699 = vmatprep.subr.mxu0 0.0
      %5700 = vmatpush1.msra.mxu0 0.0
      %5701 = vmatprep.subr.mxu0 0.0
      %5702 = vmatpush1.msra.mxu0 0.0
      %5703 = vmatprep.subr.mxu0 0.0
      %5704 = vmatpush1.msra.mxu0 0.0
      %5705 = vmatprep.subr.mxu0 0.0
      %5706 = vmatpush1.msra.mxu0 0.0
      %5707 = vmatprep.subr.mxu0 0.0
      %5708 = vmatpush1.msra.mxu0 0.0
      %5709 = vmatprep.subr.mxu0 0.0
      %5710 = vmatpush1.msra.mxu0 0.0
      %5711 = vmatprep.subr.mxu0 0.0
      %5712 = vmatpush1.msra.mxu0 0.0
      %5713 = vmatprep.subr.mxu0 0.0
      %5714 = vmatpush1.msra.mxu0 0.0
      %5715 = vmatprep.subr.mxu0 0.0
      %5716 = vmatpush1.msra.mxu0 0.0
      %5717 = vmatprep.subr.mxu0 0.0
      %5718 = vmatpush1.msra.mxu0 0.0
      %5719 = vmatprep.subr.mxu0 0.0
      %5720 = vmatpush1.msra.mxu0 0.0
      %5721 = vmatprep.subr.mxu0 0.0
      %5722 = vmatpush1.msra.mxu0 0.0
      %5723 = vmatprep.subr.mxu0 0.0
      %5724 = vmatpush1.msra.mxu0 0.0
      %5725 = vmatprep.subr.mxu0 0.0
      %5726 = vmatpush1.msra.mxu0 0.0
      %5727 = vmatprep.subr.mxu0 0.0
      %5728 = vmatpush1.msra.mxu0 0.0
      %5729 = vmatprep.mubr.f32.mxu0 0.0
      %5730 = vmatmul.mubr.f32.gmra.mrb[0].mxu0 %v1770
      %v5731 = vpop.f32.mrb[0].mxu0
      %v5732 = vadd.f32 0.0, %v5731
      %v5733 = vpop.f32.mrb[0].mxu0
      %5734 = vmatprep.mubr.f32.mxu0 0.0
      %5735 = vmatmul.mubr.f32.gmra.mrb[0].mxu0 %v1773
      %v5736 = vpop.f32.mrb[0].mxu0
      %v5737 = vadd.f32 0.0, %v5736
      %v5738 = vpop.f32.mrb[0].mxu0
      %5739 = vmatprep.mubr.f32.mxu0 0.0
      %5740 = vmatmul.mubr.f32.gmra.mrb[0].mxu0 %v1776
      %v5741 = vpop.f32.mrb[0].mxu0
      %v5742 = vadd.f32 0.0, %v5741
      %v5743 = vpop.f32.mrb[0].mxu0
      %5744 = vmatprep.mubr.f32.mxu0 0.0
      %5745 = vmatmul.mubr.f32.gmra.mrb[0].mxu0 %v1779
      %v5746 = vpop.f32.mrb[0].mxu0
      %v5747 = vadd.f32 0.0, %v5746
      %v5748 = vpop.f32.mrb[0].mxu0
      %5749 = vmatprep.mubr.f32.mxu0 0.0
      %5750 = vmatmul.mubr.f32.gmra.mrb[0].mxu0 %v1782
      %v5751 = vpop.f32.mrb[0].mxu0
      %v5752 = vadd.f32 0.0, %v5751
      %v5753 = vpop.f32.mrb[0].mxu0
      %5754 = vmatprep.mubr.f32.mxu0 0.0
      %5755 = vmatmul.mubr.f32.gmra.mrb[0].mxu0 %v1785
      %v5756 = vpop.f32.mrb[0].mxu0
      %v5757 = vadd.f32 0.0, %v5756
      %v5758 = vpop.f32.mrb[0].mxu0
      %5759 = vmatprep.mubr.f32.mxu0 0.0
      %5760 = vmatmul.mubr.f32.gmra.mrb[0].mxu0 %v1788
      %v5761 = vpop.f32.mrb[0].mxu0
      %v5762 = vadd.f32 0.0, %v5761
      %v5763 = vpop.f32.mrb[0].mxu0
      %5764 = vmatprep.mubr.f32.mxu0 0.0
      %5765 = vmatmul.mubr.f32.gmra.mrb[0].mxu0 %v1791
      %v5766 = vpop.f32.mrb[0].mxu0
      %v5767 = vadd.f32 0.0, %v5766
      %v5768 = vpop.f32.mrb[0].mxu0
      %5769 = vdwg.mxu0
      %v5770 = vlaneseq
      %v5771 = vshrl.u32 %v5770, 7
      %v5772 = vsub.s32 2, %v5771
      %v5773 = vrot.slane %v5631, %v5772
      %v5774 = vmul.f32 %v5773, %v5732
      %v5775 = vmul.f32 %v5773, %v5737
      %v5776 = vmul.f32 %v5773, %v5742
      %v5777 = vmul.f32 %v5773, %v5747
      %v5778 = vmul.f32 %v5773, %v5752
      %v5779 = vmul.f32 %v5773, %v5757
      %v5780 = vmul.f32 %v5773, %v5762
      %v5781 = vmul.f32 %v5773, %v5767
      %v5782 = vadd.f32 %v5657, %v5774
      %v5783 = vadd.f32 %v5658, %v5775
      %v5784 = vadd.f32 %v5659, %v5776
      %v5785 = vadd.f32 %v5660, %v5777
      %v5786 = vadd.f32 %v5661, %v5778
      %v5787 = vadd.f32 %v5662, %v5779
      %v5788 = vadd.f32 %v5663, %v5780
      %v5789 = vadd.f32 %v5664, %v5781
      %5790 = vmatprep.subr.mxu0 0.0
      %5791 = vmatpush1.msra.mxu0 %v5484
      %5792 = vmatprep.subr.mxu0 0.0
      %5793 = vmatpush1.msra.mxu0 %v5489
      %5794 = vmatprep.subr.mxu0 0.0
      %5795 = vmatpush1.msra.mxu0 %v5494
      %5796 = vmatprep.subr.mxu0 0.0
      %5797 = vmatpush1.msra.mxu0 %v5499
      %5798 = vmatprep.subr.mxu0 0.0
      %5799 = vmatpush1.msra.mxu0 %v5504
      %5800 = vmatprep.subr.mxu0 0.0
      %5801 = vmatpush1.msra.mxu0 %v5509
      %5802 = vmatprep.subr.mxu0 0.0
      %5803 = vmatpush1.msra.mxu0 %v5514
      %5804 = vmatprep.subr.mxu0 0.0
      %5805 = vmatpush1.msra.mxu0 %v5519
      %5806 = vmatprep.subr.mxu0 0.0
      %5807 = vmatpush1.msra.mxu0 0.0
      %5808 = vmatprep.subr.mxu0 0.0
      %5809 = vmatpush1.msra.mxu0 0.0
      %5810 = vmatprep.subr.mxu0 0.0
      %5811 = vmatpush1.msra.mxu0 0.0
      %5812 = vmatprep.subr.mxu0 0.0
      %5813 = vmatpush1.msra.mxu0 0.0
      %5814 = vmatprep.subr.mxu0 0.0
      %5815 = vmatpush1.msra.mxu0 0.0
      %5816 = vmatprep.subr.mxu0 0.0
      %5817 = vmatpush1.msra.mxu0 0.0
      %5818 = vmatprep.subr.mxu0 0.0
      %5819 = vmatpush1.msra.mxu0 0.0
      %5820 = vmatprep.subr.mxu0 0.0
      %5821 = vmatpush1.msra.mxu0 0.0
      %5822 = vmatprep.subr.mxu0 0.0
      %5823 = vmatpush1.msra.mxu0 0.0
      %5824 = vmatprep.subr.mxu0 0.0
      %5825 = vmatpush1.msra.mxu0 0.0
      %5826 = vmatprep.subr.mxu0 0.0
      %5827 = vmatpush1.msra.mxu0 0.0
      %5828 = vmatprep.subr.mxu0 0.0
      %5829 = vmatpush1.msra.mxu0 0.0
      %5830 = vmatprep.subr.mxu0 0.0
      %5831 = vmatpush1.msra.mxu0 0.0
      %5832 = vmatprep.subr.mxu0 0.0
      %5833 = vmatpush1.msra.mxu0 0.0
      %5834 = vmatprep.subr.mxu0 0.0
      %5835 = vmatpush1.msra.mxu0 0.0
      %5836 = vmatprep.subr.mxu0 0.0
      %5837 = vmatpush1.msra.mxu0 0.0
      %5838 = vmatprep.subr.mxu0 0.0
      %5839 = vmatpush1.msra.mxu0 0.0
      %5840 = vmatprep.subr.mxu0 0.0
      %5841 = vmatpush1.msra.mxu0 0.0
      %5842 = vmatprep.subr.mxu0 0.0
      %5843 = vmatpush1.msra.mxu0 0.0
      %5844 = vmatprep.subr.mxu0 0.0
      %5845 = vmatpush1.msra.mxu0 0.0
      %5846 = vmatprep.subr.mxu0 0.0
      %5847 = vmatpush1.msra.mxu0 0.0
      %5848 = vmatprep.subr.mxu0 0.0
      %5849 = vmatpush1.msra.mxu0 0.0
      %5850 = vmatprep.subr.mxu0 0.0
      %5851 = vmatpush1.msra.mxu0 0.0
      %5852 = vmatprep.subr.mxu0 0.0
      %5853 = vmatpush1.msra.mxu0 0.0
      %5854 = vmatprep.mubr.f32.mxu0 0.0
      %5855 = vmatmul.mubr.f32.gmra.mrb[0].mxu0 %v1943
      %v5856 = vpop.f32.mrb[0].mxu0
      %v5857 = vadd.f32 0.0, %v5856
      %v5858 = vpop.f32.mrb[0].mxu0
      %5859 = vmatprep.mubr.f32.mxu0 0.0
      %5860 = vmatmul.mubr.f32.gmra.mrb[0].mxu0 %v1946
      %v5861 = vpop.f32.mrb[0].mxu0
      %v5862 = vadd.f32 0.0, %v5861
      %v5863 = vpop.f32.mrb[0].mxu0
      %5864 = vmatprep.mubr.f32.mxu0 0.0
      %5865 = vmatmul.mubr.f32.gmra.mrb[0].mxu0 %v1949
      %v5866 = vpop.f32.mrb[0].mxu0
      %v5867 = vadd.f32 0.0, %v5866
      %v5868 = vpop.f32.mrb[0].mxu0
      %5869 = vmatprep.mubr.f32.mxu0 0.0
      %5870 = vmatmul.mubr.f32.gmra.mrb[0].mxu0 %v1952
      %v5871 = vpop.f32.mrb[0].mxu0
      %v5872 = vadd.f32 0.0, %v5871
      %v5873 = vpop.f32.mrb[0].mxu0
      %5874 = vmatprep.mubr.f32.mxu0 0.0
      %5875 = vmatmul.mubr.f32.gmra.mrb[0].mxu0 %v1955
      %v5876 = vpop.f32.mrb[0].mxu0
      %v5877 = vadd.f32 0.0, %v5876
      %v5878 = vpop.f32.mrb[0].mxu0
      %5879 = vmatprep.mubr.f32.mxu0 0.0
      %5880 = vmatmul.mubr.f32.gmra.mrb[0].mxu0 %v1958
      %v5881 = vpop.f32.mrb[0].mxu0
      %v5882 = vadd.f32 0.0, %v5881
      %v5883 = vpop.f32.mrb[0].mxu0
      %5884 = vmatprep.mubr.f32.mxu0 0.0
      %5885 = vmatmul.mubr.f32.gmra.mrb[0].mxu0 %v1961
      %v5886 = vpop.f32.mrb[0].mxu0
      %v5887 = vadd.f32 0.0, %v5886
      %v5888 = vpop.f32.mrb[0].mxu0
      %5889 = vmatprep.mubr.f32.mxu0 0.0
      %5890 = vmatmul.mubr.f32.gmra.mrb[0].mxu0 %v1964
      %v5891 = vpop.f32.mrb[0].mxu0
      %v5892 = vadd.f32 0.0, %v5891
      %v5893 = vpop.f32.mrb[0].mxu0
      %5894 = vdwg.mxu0
      %v5895 = vlaneseq
      %v5896 = vshrl.u32 %v5895, 7
      %v5897 = vsub.s32 1, %v5896
      %v5898 = vrot.slane %v5631, %v5897
      %v5899 = vmul.f32 %v5898, %v5857
      %v5900 = vmul.f32 %v5898, %v5862
      %v5901 = vmul.f32 %v5898, %v5867
      %v5902 = vmul.f32 %v5898, %v5872
      %v5903 = vmul.f32 %v5898, %v5877
      %v5904 = vmul.f32 %v5898, %v5882
      %v5905 = vmul.f32 %v5898, %v5887
      %v5906 = vmul.f32 %v5898, %v5892
      %v5907 = vadd.f32 %v5782, %v5899
      %v5908 = vadd.f32 %v5783, %v5900
      %v5909 = vadd.f32 %v5784, %v5901
      %v5910 = vadd.f32 %v5785, %v5902
      %v5911 = vadd.f32 %v5786, %v5903
      %v5912 = vadd.f32 %v5787, %v5904
      %v5913 = vadd.f32 %v5788, %v5905
      %v5914 = vadd.f32 %v5789, %v5906
      %5915 = vmatprep.subr.mxu0 0.0
      %5916 = vmatpush1.msra.mxu0 %v5484
      %5917 = vmatprep.subr.mxu0 0.0
      %5918 = vmatpush1.msra.mxu0 %v5489
      %5919 = vmatprep.subr.mxu0 0.0
      %5920 = vmatpush1.msra.mxu0 %v5494
      %5921 = vmatprep.subr.mxu0 0.0
      %5922 = vmatpush1.msra.mxu0 %v5499
      %5923 = vmatprep.subr.mxu0 0.0
      %5924 = vmatpush1.msra.mxu0 %v5504
      %5925 = vmatprep.subr.mxu0 0.0
      %5926 = vmatpush1.msra.mxu0 %v5509
      %5927 = vmatprep.subr.mxu0 0.0
      %5928 = vmatpush1.msra.mxu0 %v5514
      %5929 = vmatprep.subr.mxu0 0.0
      %5930 = vmatpush1.msra.mxu0 %v5519
      %5931 = vmatprep.subr.mxu0 0.0
      %5932 = vmatpush1.msra.mxu0 0.0
      %5933 = vmatprep.subr.mxu0 0.0
      %5934 = vmatpush1.msra.mxu0 0.0
      %5935 = vmatprep.subr.mxu0 0.0
      %5936 = vmatpush1.msra.mxu0 0.0
      %5937 = vmatprep.subr.mxu0 0.0
      %5938 = vmatpush1.msra.mxu0 0.0
      %5939 = vmatprep.subr.mxu0 0.0
      %5940 = vmatpush1.msra.mxu0 0.0
      %5941 = vmatprep.subr.mxu0 0.0
      %5942 = vmatpush1.msra.mxu0 0.0
      %5943 = vmatprep.subr.mxu0 0.0
      %5944 = vmatpush1.msra.mxu0 0.0
      %5945 = vmatprep.subr.mxu0 0.0
      %5946 = vmatpush1.msra.mxu0 0.0
      %5947 = vmatprep.subr.mxu0 0.0
      %5948 = vmatpush1.msra.mxu0 0.0
      %5949 = vmatprep.subr.mxu0 0.0
      %5950 = vmatpush1.msra.mxu0 0.0
      %5951 = vmatprep.subr.mxu0 0.0
      %5952 = vmatpush1.msra.mxu0 0.0
      %5953 = vmatprep.subr.mxu0 0.0
      %5954 = vmatpush1.msra.mxu0 0.0
      %5955 = vmatprep.subr.mxu0 0.0
      %5956 = vmatpush1.msra.mxu0 0.0
      %5957 = vmatprep.subr.mxu0 0.0
      %5958 = vmatpush1.msra.mxu0 0.0
      %5959 = vmatprep.subr.mxu0 0.0
      %5960 = vmatpush1.msra.mxu0 0.0
      %5961 = vmatprep.subr.mxu0 0.0
      %5962 = vmatpush1.msra.mxu0 0.0
      %5963 = vmatprep.subr.mxu0 0.0
      %5964 = vmatpush1.msra.mxu0 0.0
      %5965 = vmatprep.subr.mxu0 0.0
      %5966 = vmatpush1.msra.mxu0 0.0
      %5967 = vmatprep.subr.mxu0 0.0
      %5968 = vmatpush1.msra.mxu0 0.0
      %5969 = vmatprep.subr.mxu0 0.0
      %5970 = vmatpush1.msra.mxu0 0.0
      %5971 = vmatprep.subr.mxu0 0.0
      %5972 = vmatpush1.msra.mxu0 0.0
      %5973 = vmatprep.subr.mxu0 0.0
      %5974 = vmatpush1.msra.mxu0 0.0
      %5975 = vmatprep.subr.mxu0 0.0
      %5976 = vmatpush1.msra.mxu0 0.0
      %5977 = vmatprep.subr.mxu0 0.0
      %5978 = vmatpush1.msra.mxu0 0.0
      %5979 = vmatprep.mubr.f32.mxu0 0.0
      %5980 = vmatmul.mubr.f32.gmra.mrb[0].mxu0 %v2116
      %v5981 = vpop.f32.mrb[0].mxu0
      %v5982 = vadd.f32 0.0, %v5981
      %v5983 = vpop.f32.mrb[0].mxu0
      %5984 = vmatprep.mubr.f32.mxu0 0.0
      %5985 = vmatmul.mubr.f32.gmra.mrb[0].mxu0 %v2119
      %v5986 = vpop.f32.mrb[0].mxu0
      %v5987 = vadd.f32 0.0, %v5986
      %v5988 = vpop.f32.mrb[0].mxu0
      %5989 = vmatprep.mubr.f32.mxu0 0.0
      %5990 = vmatmul.mubr.f32.gmra.mrb[0].mxu0 %v2122
      %v5991 = vpop.f32.mrb[0].mxu0
      %v5992 = vadd.f32 0.0, %v5991
      %v5993 = vpop.f32.mrb[0].mxu0
      %5994 = vmatprep.mubr.f32.mxu0 0.0
      %5995 = vmatmul.mubr.f32.gmra.mrb[0].mxu0 %v2125
      %v5996 = vpop.f32.mrb[0].mxu0
      %v5997 = vadd.f32 0.0, %v5996
      %v5998 = vpop.f32.mrb[0].mxu0
      %5999 = vmatprep.mubr.f32.mxu0 0.0
      %6000 = vmatmul.mubr.f32.gmra.mrb[0].mxu0 %v2128
      %v6001 = vpop.f32.mrb[0].mxu0
      %v6002 = vadd.f32 0.0, %v6001
      %v6003 = vpop.f32.mrb[0].mxu0
      %6004 = vmatprep.mubr.f32.mxu0 0.0
      %6005 = vmatmul.mubr.f32.gmra.mrb[0].mxu0 %v2131
      %v6006 = vpop.f32.mrb[0].mxu0
      %v6007 = vadd.f32 0.0, %v6006
      %v6008 = vpop.f32.mrb[0].mxu0
      %6009 = vmatprep.mubr.f32.mxu0 0.0
      %6010 = vmatmul.mubr.f32.gmra.mrb[0].mxu0 %v2134
      %v6011 = vpop.f32.mrb[0].mxu0
      %v6012 = vadd.f32 0.0, %v6011
      %v6013 = vpop.f32.mrb[0].mxu0
      %6014 = vmatprep.mubr.f32.mxu0 0.0
      %6015 = vmatmul.mubr.f32.gmra.mrb[0].mxu0 %v2137
      %v6016 = vpop.f32.mrb[0].mxu0
      %v6017 = vadd.f32 0.0, %v6016
      %v6018 = vpop.f32.mrb[0].mxu0
      %6019 = vdwg.mxu0
      %v6020 = vlaneseq
      %v6021 = vshrl.u32 %v6020, 7
      %v6022 = vsub.s32 0, %v6021
      %v6023 = vrot.slane %v5631, %v6022
      %v6024 = vmul.f32 %v6023, %v5982
      %v6025 = vmul.f32 %v6023, %v5987
      %v6026 = vmul.f32 %v6023, %v5992
      %v6027 = vmul.f32 %v6023, %v5997
      %v6028 = vmul.f32 %v6023, %v6002
      %v6029 = vmul.f32 %v6023, %v6007
      %v6030 = vmul.f32 %v6023, %v6012
      %v6031 = vmul.f32 %v6023, %v6017
      %v6032 = vadd.f32 %v5907, %v6024
      %v6033 = vadd.f32 %v5908, %v6025
      %v6034 = vadd.f32 %v5909, %v6026
      %v6035 = vadd.f32 %v5910, %v6027
      %v6036 = vadd.f32 %v5911, %v6028
      %v6037 = vadd.f32 %v5912, %v6029
      %v6038 = vadd.f32 %v5913, %v6030
      %v6039 = vadd.f32 %v5914, %v6031
      %v6041 = vlaneseq
      %v6042 = vshrl.u32 %v6041, 7
      %v6043 = vsub.s32 0, %v6042
      %v6044 = vrot.slane %v5632, %v6043
      %v6046 = vadd.f32 %v6032, %v6044
      %v6047 = vadd.f32 %v6033, %v6044
      %v6048 = vadd.f32 %v6034, %v6044
      %v6049 = vadd.f32 %v6035, %v6044
      %v6050 = vadd.f32 %v6036, %v6044
      %v6051 = vadd.f32 %v6037, %v6044
      %v6052 = vadd.f32 %v6038, %v6044
      %v6053 = vadd.f32 %v6039, %v6044
      %v6054 = vxor.u32 %v6046, 2147483648
      %v6055 = vxor.u32 %v6047, 2147483648
      %v6056 = vxor.u32 %v6048, 2147483648
      %v6057 = vxor.u32 %v6049, 2147483648
      %v6058 = vxor.u32 %v6050, 2147483648
      %v6059 = vxor.u32 %v6051, 2147483648
      %v6060 = vxor.u32 %v6052, 2147483648
      %v6061 = vxor.u32 %v6053, 2147483648
      %v6062 = vmul.f32 %v6054, 1.442695
      %v6063 = vpow.pop %v6062
      %v6064 = vmul.f32 %v6055, 1.442695
      %v6065 = vpow.pop %v6064
      %v6066 = vmul.f32 %v6056, 1.442695
      %v6067 = vpow.pop %v6066
      %v6068 = vmul.f32 %v6057, 1.442695
      %v6069 = vpow.pop %v6068
      %v6070 = vmul.f32 %v6058, 1.442695
      %v6071 = vpow.pop %v6070
      %v6072 = vmul.f32 %v6059, 1.442695
      %v6073 = vpow.pop %v6072
      %v6074 = vmul.f32 %v6060, 1.442695
      %v6075 = vpow.pop %v6074
      %v6076 = vmul.f32 %v6061, 1.442695
      %v6077 = vpow.pop %v6076
      %v6078 = vadd.f32 %v6063, 1.0
      %v6079 = vadd.f32 %v6065, 1.0
      %v6080 = vadd.f32 %v6067, 1.0
      %v6081 = vadd.f32 %v6069, 1.0
      %v6082 = vadd.f32 %v6071, 1.0
      %v6083 = vadd.f32 %v6073, 1.0
      %v6084 = vadd.f32 %v6075, 1.0
      %v6085 = vadd.f32 %v6077, 1.0
      %v6086 = vrcp.pop %v6078
      %v6087 = vmul.f32 1.0, %v6086
      %v6088 = vrcp.pop %v6079
      %v6089 = vmul.f32 1.0, %v6088
      %v6090 = vrcp.pop %v6080
      %v6091 = vmul.f32 1.0, %v6090
      %v6092 = vrcp.pop %v6081
      %v6093 = vmul.f32 1.0, %v6092
      %v6094 = vrcp.pop %v6082
      %v6095 = vmul.f32 1.0, %v6094
      %v6096 = vrcp.pop %v6083
      %v6097 = vmul.f32 1.0, %v6096
      %v6098 = vrcp.pop %v6084
      %v6099 = vmul.f32 1.0, %v6098
      %v6100 = vrcp.pop %v6085
      %v6101 = vmul.f32 1.0, %v6100
      %v6102 = vmul.f32 %v6046, %v6087
      %v6103 = vmul.f32 %v6047, %v6089
      %v6104 = vmul.f32 %v6048, %v6091
      %v6105 = vmul.f32 %v6049, %v6093
      %v6106 = vmul.f32 %v6050, %v6095
      %v6107 = vmul.f32 %v6051, %v6097
      %v6108 = vmul.f32 %v6052, %v6099
      %v6109 = vmul.f32 %v6053, %v6101
      %v6111 = vlaneseq
      %v6112 = vshrl.u32 %v6111, 7
      %v6113 = vsub.s32 0, %v6112
      %v6114 = vrot.slane %v5643, %v6113
      %v6117 = vsel %vm2340, %v6102, 0
      %v6120 = vsel %vm2340, %v6103, 0
      %v6123 = vsel %vm2340, %v6104, 0
      %v6126 = vsel %vm2340, %v6105, 0
      %v6129 = vsel %vm2340, %v6106, 0
      %v6132 = vsel %vm2340, %v6107, 0
      %v6135 = vsel %vm2340, %v6108, 0
      %v6138 = vsel %vm2340, %v6109, 0
      %v6141 = vsel %vm1372, %v5642, 0
      %6143 = vmatprep.subr.mxu0 0.0
      %6144 = vmatpush1.msra.mxu0 %v5641
      %6145 = vmatprep.subr.mxu0 0.0
      %6146 = vmatpush1.msra.mxu0 %v6141
      %6147 = vmatprep.subr.mxu0 0.0
      %6148 = vmatpush1.msra.mxu0 0.0
      %6149 = vmatprep.subr.mxu0 0.0
      %6150 = vmatpush1.msra.mxu0 0.0
      %6151 = vmatprep.subr.mxu0 0.0
      %6152 = vmatpush1.msra.mxu0 0.0
      %6153 = vmatprep.subr.mxu0 0.0
      %6154 = vmatpush1.msra.mxu0 0.0
      %6155 = vmatprep.subr.mxu0 0.0
      %6156 = vmatpush1.msra.mxu0 0.0
      %6157 = vmatprep.subr.mxu0 0.0
      %6158 = vmatpush1.msra.mxu0 0.0
      %6159 = vmatprep.subr.mxu0 0.0
      %6160 = vmatpush1.msra.mxu0 0.0
      %6161 = vmatprep.subr.mxu0 0.0
      %6162 = vmatpush1.msra.mxu0 0.0
      %6163 = vmatprep.subr.mxu0 0.0
      %6164 = vmatpush1.msra.mxu0 0.0
      %6165 = vmatprep.subr.mxu0 0.0
      %6166 = vmatpush1.msra.mxu0 0.0
      %6167 = vmatprep.subr.mxu0 0.0
      %6168 = vmatpush1.msra.mxu0 0.0
      %6169 = vmatprep.subr.mxu0 0.0
      %6170 = vmatpush1.msra.mxu0 0.0
      %6171 = vmatprep.subr.mxu0 0.0
      %6172 = vmatpush1.msra.mxu0 0.0
      %6173 = vmatprep.subr.mxu0 0.0
      %6174 = vmatpush1.msra.mxu0 0.0
      %6175 = vmatprep.subr.mxu0 0.0
      %6176 = vmatpush1.msra.mxu0 0.0
      %6177 = vmatprep.subr.mxu0 0.0
      %6178 = vmatpush1.msra.mxu0 0.0
      %6179 = vmatprep.subr.mxu0 0.0
      %6180 = vmatpush1.msra.mxu0 0.0
      %6181 = vmatprep.subr.mxu0 0.0
      %6182 = vmatpush1.msra.mxu0 0.0
      %6183 = vmatprep.subr.mxu0 0.0
      %6184 = vmatpush1.msra.mxu0 0.0
      %6185 = vmatprep.subr.mxu0 0.0
      %6186 = vmatpush1.msra.mxu0 0.0
      %6187 = vmatprep.subr.mxu0 0.0
      %6188 = vmatpush1.msra.mxu0 0.0
      %6189 = vmatprep.subr.mxu0 0.0
      %6190 = vmatpush1.msra.mxu0 0.0
      %6191 = vmatprep.subr.mxu0 0.0
      %6192 = vmatpush1.msra.mxu0 0.0
      %6193 = vmatprep.subr.mxu0 0.0
      %6194 = vmatpush1.msra.mxu0 0.0
      %6195 = vmatprep.subr.mxu0 0.0
      %6196 = vmatpush1.msra.mxu0 0.0
      %6197 = vmatprep.subr.mxu0 0.0
      %6198 = vmatpush1.msra.mxu0 0.0
      %6199 = vmatprep.subr.mxu0 0.0
      %6200 = vmatpush1.msra.mxu0 0.0
      %6201 = vmatprep.subr.mxu0 0.0
      %6202 = vmatpush1.msra.mxu0 0.0
      %6203 = vmatprep.subr.mxu0 0.0
      %6204 = vmatpush1.msra.mxu0 0.0
      %6205 = vmatprep.subr.mxu0 0.0
      %6206 = vmatpush1.msra.mxu0 0.0
      %6207 = vmatprep.mubr.f32.mxu0 0.0
      %6208 = vmatmul.mubr.f32.gmra.mrb[0].mxu0 %v6117
      %v6209 = vpop.f32.mrb[0].mxu0
      %v6210 = vadd.f32 %v6114, %v6209
      %v6211 = vpop.f32.mrb[0].mxu0
      %6212 = vmatprep.mubr.f32.mxu0 0.0
      %6213 = vmatmul.mubr.f32.gmra.mrb[0].mxu0 %v6120
      %v6214 = vpop.f32.mrb[0].mxu0
      %v6215 = vadd.f32 %v6114, %v6214
      %v6216 = vpop.f32.mrb[0].mxu0
      %6217 = vmatprep.mubr.f32.mxu0 0.0
      %6218 = vmatmul.mubr.f32.gmra.mrb[0].mxu0 %v6123
      %v6219 = vpop.f32.mrb[0].mxu0
      %v6220 = vadd.f32 %v6114, %v6219
      %v6221 = vpop.f32.mrb[0].mxu0
      %6222 = vmatprep.mubr.f32.mxu0 0.0
      %6223 = vmatmul.mubr.f32.gmra.mrb[0].mxu0 %v6126
      %v6224 = vpop.f32.mrb[0].mxu0
      %v6225 = vadd.f32 %v6114, %v6224
      %v6226 = vpop.f32.mrb[0].mxu0
      %6227 = vmatprep.mubr.f32.mxu0 0.0
      %6228 = vmatmul.mubr.f32.gmra.mrb[0].mxu0 %v6129
      %v6229 = vpop.f32.mrb[0].mxu0
      %v6230 = vadd.f32 %v6114, %v6229
      %v6231 = vpop.f32.mrb[0].mxu0
      %6232 = vmatprep.mubr.f32.mxu0 0.0
      %6233 = vmatmul.mubr.f32.gmra.mrb[0].mxu0 %v6132
      %v6234 = vpop.f32.mrb[0].mxu0
      %v6235 = vadd.f32 %v6114, %v6234
      %v6236 = vpop.f32.mrb[0].mxu0
      %6237 = vmatprep.mubr.f32.mxu0 0.0
      %6238 = vmatmul.mubr.f32.gmra.mrb[0].mxu0 %v6135
      %v6239 = vpop.f32.mrb[0].mxu0
      %v6240 = vadd.f32 %v6114, %v6239
      %v6241 = vpop.f32.mrb[0].mxu0
      %6242 = vmatprep.mubr.f32.mxu0 0.0
      %6243 = vmatmul.mubr.f32.gmra.mrb[0].mxu0 %v6138
      %v6244 = vpop.f32.mrb[0].mxu0
      %v6245 = vadd.f32 %v6114, %v6244
      %v6246 = vpop.f32.mrb[0].mxu0
      %6247 = vdwg.mxu0
      %vm6248 = vcmp.gt.f32.partialorder %v6210, 30.0
      %vm6249 = vcmp.gt.f32.partialorder %v6215, 30.0
      %vm6250 = vcmp.gt.f32.partialorder %v6220, 30.0
      %vm6251 = vcmp.gt.f32.partialorder %v6225, 30.0
      %vm6252 = vcmp.gt.f32.partialorder %v6230, 30.0
      %vm6253 = vcmp.gt.f32.partialorder %v6235, 30.0
      %vm6254 = vcmp.gt.f32.partialorder %v6240, 30.0
      %vm6255 = vcmp.gt.f32.partialorder %v6245, 30.0
      %v6256 = vmin.f32 %v6210, 30.0
      %v6257 = vmin.f32 %v6215, 30.0
      %v6258 = vmin.f32 %v6220, 30.0
      %v6259 = vmin.f32 %v6225, 30.0
      %v6260 = vmin.f32 %v6230, 30.0
      %v6261 = vmin.f32 %v6235, 30.0
      %v6262 = vmin.f32 %v6240, 30.0
      %v6263 = vmin.f32 %v6245, 30.0
      %v6264 = vmul.f32 %v6256, 1.442695
      %v6265 = vpow.pop %v6264
      %v6266 = vmul.f32 %v6257, 1.442695
      %v6267 = vpow.pop %v6266
      %v6268 = vmul.f32 %v6258, 1.442695
      %v6269 = vpow.pop %v6268
      %v6270 = vmul.f32 %v6259, 1.442695
      %v6271 = vpow.pop %v6270
      %v6272 = vmul.f32 %v6260, 1.442695
      %v6273 = vpow.pop %v6272
      %v6274 = vmul.f32 %v6261, 1.442695
      %v6275 = vpow.pop %v6274
      %v6276 = vmul.f32 %v6262, 1.442695
      %v6277 = vpow.pop %v6276
      %v6278 = vmul.f32 %v6263, 1.442695
      %v6279 = vpow.pop %v6278
      %v6280 = vadd.f32 %v6265, 1.0
      %v6281 = vadd.f32 %v6267, 1.0
      %v6282 = vadd.f32 %v6269, 1.0
      %v6283 = vadd.f32 %v6271, 1.0
      %v6284 = vadd.f32 %v6273, 1.0
      %v6285 = vadd.f32 %v6275, 1.0
      %v6286 = vadd.f32 %v6277, 1.0
      %v6287 = vadd.f32 %v6279, 1.0
      %v6288 = vlog2.pop %v6280
      %v6289 = vmul.f32 %v6288, 0.6931472
      %v6290 = vlog2.pop %v6281
      %v6291 = vmul.f32 %v6290, 0.6931472
      %v6292 = vlog2.pop %v6282
      %v6293 = vmul.f32 %v6292, 0.6931472
      %v6294 = vlog2.pop %v6283
      %v6295 = vmul.f32 %v6294, 0.6931472
      %v6296 = vlog2.pop %v6284
      %v6297 = vmul.f32 %v6296, 0.6931472
      %v6298 = vlog2.pop %v6285
      %v6299 = vmul.f32 %v6298, 0.6931472
      %v6300 = vlog2.pop %v6286
      %v6301 = vmul.f32 %v6300, 0.6931472
      %v6302 = vlog2.pop %v6287
      %v6303 = vmul.f32 %v6302, 0.6931472
      %v6304 = vsel %vm6248, %v6210, %v6289
      %v6305 = vsel %vm6249, %v6215, %v6291
      %v6306 = vsel %vm6250, %v6220, %v6293
      %v6307 = vsel %vm6251, %v6225, %v6295
      %v6308 = vsel %vm6252, %v6230, %v6297
      %v6309 = vsel %vm6253, %v6235, %v6299
      %v6310 = vsel %vm6254, %v6240, %v6301
      %v6311 = vsel %vm6255, %v6245, %v6303
      %v6313 = vsel %vm2340, %v6304, 0
      %v6316 = vsel %vm2340, %v6305, 0
      %v6319 = vsel %vm2340, %v6306, 0
      %v6322 = vsel %vm2340, %v6307, 0
      %v6325 = vsel %vm2340, %v6308, 0
      %v6328 = vsel %vm2340, %v6309, 0
      %v6331 = vsel %vm2340, %v6310, 0
      %v6334 = vsel %vm2340, %v6311, 0
      %v6337 = vsel %vm1372, %v5646, 0
      %v6340 = vsel %vm1372, %v5647, 0
      %6342 = vmatprep.subr.mxu0 %v5645
      %6343 = vmatpush1.msra.mxu0 %v5644
      %6344 = vmatprep.subr.mxu0 %v6340
      %6345 = vmatpush1.msra.mxu0 %v6337
      %6346 = vmatprep.subr.mxu0 0.0
      %6347 = vmatpush1.msra.mxu0 0.0
      %6348 = vmatprep.subr.mxu0 0.0
      %6349 = vmatpush1.msra.mxu0 0.0
      %6350 = vmatprep.subr.mxu0 0.0
      %6351 = vmatpush1.msra.mxu0 0.0
      %6352 = vmatprep.subr.mxu0 0.0
      %6353 = vmatpush1.msra.mxu0 0.0
      %6354 = vmatprep.subr.mxu0 0.0
      %6355 = vmatpush1.msra.mxu0 0.0
      %6356 = vmatprep.subr.mxu0 0.0
      %6357 = vmatpush1.msra.mxu0 0.0
      %6358 = vmatprep.subr.mxu0 0.0
      %6359 = vmatpush1.msra.mxu0 0.0
      %6360 = vmatprep.subr.mxu0 0.0
      %6361 = vmatpush1.msra.mxu0 0.0
      %6362 = vmatprep.subr.mxu0 0.0
      %6363 = vmatpush1.msra.mxu0 0.0
      %6364 = vmatprep.subr.mxu0 0.0
      %6365 = vmatpush1.msra.mxu0 0.0
      %6366 = vmatprep.subr.mxu0 0.0
      %6367 = vmatpush1.msra.mxu0 0.0
      %6368 = vmatprep.subr.mxu0 0.0
      %6369 = vmatpush1.msra.mxu0 0.0
      %6370 = vmatprep.subr.mxu0 0.0
      %6371 = vmatpush1.msra.mxu0 0.0
      %6372 = vmatprep.subr.mxu0 0.0
      %6373 = vmatpush1.msra.mxu0 0.0
      %6374 = vmatprep.subr.mxu0 0.0
      %6375 = vmatpush1.msra.mxu0 0.0
      %6376 = vmatprep.subr.mxu0 0.0
      %6377 = vmatpush1.msra.mxu0 0.0
      %6378 = vmatprep.subr.mxu0 0.0
      %6379 = vmatpush1.msra.mxu0 0.0
      %6380 = vmatprep.subr.mxu0 0.0
      %6381 = vmatpush1.msra.mxu0 0.0
      %6382 = vmatprep.subr.mxu0 0.0
      %6383 = vmatpush1.msra.mxu0 0.0
      %6384 = vmatprep.subr.mxu0 0.0
      %6385 = vmatpush1.msra.mxu0 0.0
      %6386 = vmatprep.subr.mxu0 0.0
      %6387 = vmatpush1.msra.mxu0 0.0
      %6388 = vmatprep.subr.mxu0 0.0
      %6389 = vmatpush1.msra.mxu0 0.0
      %6390 = vmatprep.subr.mxu0 0.0
      %6391 = vmatpush1.msra.mxu0 0.0
      %6392 = vmatprep.subr.mxu0 0.0
      %6393 = vmatpush1.msra.mxu0 0.0
      %6394 = vmatprep.subr.mxu0 0.0
      %6395 = vmatpush1.msra.mxu0 0.0
      %6396 = vmatprep.subr.mxu0 0.0
      %6397 = vmatpush1.msra.mxu0 0.0
      %6398 = vmatprep.subr.mxu0 0.0
      %6399 = vmatpush1.msra.mxu0 0.0
      %6400 = vmatprep.subr.mxu0 0.0
      %6401 = vmatpush1.msra.mxu0 0.0
      %6402 = vmatprep.subr.mxu0 0.0
      %6403 = vmatpush1.msra.mxu0 0.0
      %6404 = vmatprep.subr.mxu0 0.0
      %6405 = vmatpush1.msra.mxu0 0.0
      %6406 = vmatprep.mubr.f32.mxu0 0.0
      %6407 = vmatmul.mubr.f32.gmra.mrb[0].mxu0 %v6313
      %v6408 = vpop.f32.mrb[0].mxu0
      %v6409 = vadd.f32 0.0, %v6408
      %v6410 = vpop.f32.mrb[0].mxu0
      %v6411 = vadd.f32 0.0, %v6410
      %6412 = vmatprep.mubr.f32.mxu0 0.0
      %6413 = vmatmul.mubr.f32.gmra.mrb[0].mxu0 %v6316
      %v6414 = vpop.f32.mrb[0].mxu0
      %v6415 = vadd.f32 0.0, %v6414
      %v6416 = vpop.f32.mrb[0].mxu0
      %v6417 = vadd.f32 0.0, %v6416
      %6418 = vmatprep.mubr.f32.mxu0 0.0
      %6419 = vmatmul.mubr.f32.gmra.mrb[0].mxu0 %v6319
      %v6420 = vpop.f32.mrb[0].mxu0
      %v6421 = vadd.f32 0.0, %v6420
      %v6422 = vpop.f32.mrb[0].mxu0
      %v6423 = vadd.f32 0.0, %v6422
      %6424 = vmatprep.mubr.f32.mxu0 0.0
      %6425 = vmatmul.mubr.f32.gmra.mrb[0].mxu0 %v6322
      %v6426 = vpop.f32.mrb[0].mxu0
      %v6427 = vadd.f32 0.0, %v6426
      %v6428 = vpop.f32.mrb[0].mxu0
      %v6429 = vadd.f32 0.0, %v6428
      %6430 = vmatprep.mubr.f32.mxu0 0.0
      %6431 = vmatmul.mubr.f32.gmra.mrb[0].mxu0 %v6325
      %v6432 = vpop.f32.mrb[0].mxu0
      %v6433 = vadd.f32 0.0, %v6432
      %v6434 = vpop.f32.mrb[0].mxu0
      %v6435 = vadd.f32 0.0, %v6434
      %6436 = vmatprep.mubr.f32.mxu0 0.0
      %6437 = vmatmul.mubr.f32.gmra.mrb[0].mxu0 %v6328
      %v6438 = vpop.f32.mrb[0].mxu0
      %v6439 = vadd.f32 0.0, %v6438
      %v6440 = vpop.f32.mrb[0].mxu0
      %v6441 = vadd.f32 0.0, %v6440
      %6442 = vmatprep.mubr.f32.mxu0 0.0
      %6443 = vmatmul.mubr.f32.gmra.mrb[0].mxu0 %v6331
      %v6444 = vpop.f32.mrb[0].mxu0
      %v6445 = vadd.f32 0.0, %v6444
      %v6446 = vpop.f32.mrb[0].mxu0
      %v6447 = vadd.f32 0.0, %v6446
      %6448 = vmatprep.mubr.f32.mxu0 0.0
      %6449 = vmatmul.mubr.f32.gmra.mrb[0].mxu0 %v6334
      %v6450 = vpop.f32.mrb[0].mxu0
      %v6451 = vadd.f32 0.0, %v6450
      %v6452 = vpop.f32.mrb[0].mxu0
      %v6453 = vadd.f32 0.0, %v6452
      %6454 = vdwg.mxu0
      %v6455 = vmul.f32 %v6409, 1.442695
      %v6456 = vpow.pop %v6455
      %v6457 = vmul.f32 %v6411, 1.442695
      %v6458 = vpow.pop %v6457
      %v6459 = vmul.f32 %v6415, 1.442695
      %v6460 = vpow.pop %v6459
      %v6461 = vmul.f32 %v6417, 1.442695
      %v6462 = vpow.pop %v6461
      %v6463 = vmul.f32 %v6421, 1.442695
      %v6464 = vpow.pop %v6463
      %v6465 = vmul.f32 %v6423, 1.442695
      %v6466 = vpow.pop %v6465
      %v6467 = vmul.f32 %v6427, 1.442695
      %v6468 = vpow.pop %v6467
      %v6469 = vmul.f32 %v6429, 1.442695
      %v6470 = vpow.pop %v6469
      %v6471 = vmul.f32 %v6433, 1.442695
      %v6472 = vpow.pop %v6471
      %v6473 = vmul.f32 %v6435, 1.442695
      %v6474 = vpow.pop %v6473
      %v6475 = vmul.f32 %v6439, 1.442695
      %v6476 = vpow.pop %v6475
      %v6477 = vmul.f32 %v6441, 1.442695
      %v6478 = vpow.pop %v6477
      %v6479 = vmul.f32 %v6445, 1.442695
      %v6480 = vpow.pop %v6479
      %v6481 = vmul.f32 %v6447, 1.442695
      %v6482 = vpow.pop %v6481
      %v6483 = vmul.f32 %v6451, 1.442695
      %v6484 = vpow.pop %v6483
      %v6485 = vmul.f32 %v6453, 1.442695
      %v6486 = vpow.pop %v6485
      %v6487 = vmul.f32 %v6304, %v6102
      %v6488 = vmul.f32 %v6305, %v6103
      %v6489 = vmul.f32 %v6306, %v6104
      %v6490 = vmul.f32 %v6307, %v6105
      %v6491 = vmul.f32 %v6308, %v6106
      %v6492 = vmul.f32 %v6309, %v6107
      %v6493 = vmul.f32 %v6310, %v6108
      %v6494 = vmul.f32 %v6311, %v6109
      %v6496 = vsel %vm2340, %v6487, 0
      %v6499 = vsel %vm2340, %v6488, 0
      %v6502 = vsel %vm2340, %v6489, 0
      %v6505 = vsel %vm2340, %v6490, 0
      %v6508 = vsel %vm2340, %v6491, 0
      %v6511 = vsel %vm2340, %v6492, 0
      %v6514 = vsel %vm2340, %v6493, 0
      %v6517 = vsel %vm2340, %v6494, 0
      %6519 = vmatprep.subr.mxu0 %v1036
      %6520 = vmatpush1.msra.mxu0 %v1035
      %6521 = vmatprep.subr.mxu0 %v2748
      %6522 = vmatpush1.msra.mxu0 %v2745
      %6523 = vmatprep.subr.mxu0 0.0
      %6524 = vmatpush1.msra.mxu0 0.0
      %6525 = vmatprep.subr.mxu0 0.0
      %6526 = vmatpush1.msra.mxu0 0.0
      %6527 = vmatprep.subr.mxu0 0.0
      %6528 = vmatpush1.msra.mxu0 0.0
      %6529 = vmatprep.subr.mxu0 0.0
      %6530 = vmatpush1.msra.mxu0 0.0
      %6531 = vmatprep.subr.mxu0 0.0
      %6532 = vmatpush1.msra.mxu0 0.0
      %6533 = vmatprep.subr.mxu0 0.0
      %6534 = vmatpush1.msra.mxu0 0.0
      %6535 = vmatprep.subr.mxu0 0.0
      %6536 = vmatpush1.msra.mxu0 0.0
      %6537 = vmatprep.subr.mxu0 0.0
      %6538 = vmatpush1.msra.mxu0 0.0
      %6539 = vmatprep.subr.mxu0 0.0
      %6540 = vmatpush1.msra.mxu0 0.0
      %6541 = vmatprep.subr.mxu0 0.0
      %6542 = vmatpush1.msra.mxu0 0.0
      %6543 = vmatprep.subr.mxu0 0.0
      %6544 = vmatpush1.msra.mxu0 0.0
      %6545 = vmatprep.subr.mxu0 0.0
      %6546 = vmatpush1.msra.mxu0 0.0
      %6547 = vmatprep.subr.mxu0 0.0
      %6548 = vmatpush1.msra.mxu0 0.0
      %6549 = vmatprep.subr.mxu0 0.0
      %6550 = vmatpush1.msra.mxu0 0.0
      %6551 = vmatprep.subr.mxu0 0.0
      %6552 = vmatpush1.msra.mxu0 0.0
      %6553 = vmatprep.subr.mxu0 0.0
      %6554 = vmatpush1.msra.mxu0 0.0
      %6555 = vmatprep.subr.mxu0 0.0
      %6556 = vmatpush1.msra.mxu0 0.0
      %6557 = vmatprep.subr.mxu0 0.0
      %6558 = vmatpush1.msra.mxu0 0.0
      %6559 = vmatprep.subr.mxu0 0.0
      %6560 = vmatpush1.msra.mxu0 0.0
      %6561 = vmatprep.subr.mxu0 0.0
      %6562 = vmatpush1.msra.mxu0 0.0
      %6563 = vmatprep.subr.mxu0 0.0
      %6564 = vmatpush1.msra.mxu0 0.0
      %6565 = vmatprep.subr.mxu0 0.0
      %6566 = vmatpush1.msra.mxu0 0.0
      %6567 = vmatprep.subr.mxu0 0.0
      %6568 = vmatpush1.msra.mxu0 0.0
      %6569 = vmatprep.subr.mxu0 0.0
      %6570 = vmatpush1.msra.mxu0 0.0
      %6571 = vmatprep.subr.mxu0 0.0
      %6572 = vmatpush1.msra.mxu0 0.0
      %6573 = vmatprep.subr.mxu0 0.0
      %6574 = vmatpush1.msra.mxu0 0.0
      %6575 = vmatprep.subr.mxu0 0.0
      %6576 = vmatpush1.msra.mxu0 0.0
      %6577 = vmatprep.subr.mxu0 0.0
      %6578 = vmatpush1.msra.mxu0 0.0
      %6579 = vmatprep.subr.mxu0 0.0
      %6580 = vmatpush1.msra.mxu0 0.0
      %6581 = vmatprep.subr.mxu0 0.0
      %6582 = vmatpush1.msra.mxu0 0.0
      %6583 = vmatprep.mubr.f32.mxu0 0.0
      %6584 = vmatmul.mubr.f32.gmra.mrb[0].mxu0 %v6496
      %v6585 = vpop.f32.mrb[0].mxu0
      %v6586 = vadd.f32 0.0, %v6585
      %v6587 = vpop.f32.mrb[0].mxu0
      %v6588 = vadd.f32 0.0, %v6587
      %6589 = vmatprep.mubr.f32.mxu0 0.0
      %6590 = vmatmul.mubr.f32.gmra.mrb[0].mxu0 %v6499
      %v6591 = vpop.f32.mrb[0].mxu0
      %v6592 = vadd.f32 0.0, %v6591
      %v6593 = vpop.f32.mrb[0].mxu0
      %v6594 = vadd.f32 0.0, %v6593
      %6595 = vmatprep.mubr.f32.mxu0 0.0
      %6596 = vmatmul.mubr.f32.gmra.mrb[0].mxu0 %v6502
      %v6597 = vpop.f32.mrb[0].mxu0
      %v6598 = vadd.f32 0.0, %v6597
      %v6599 = vpop.f32.mrb[0].mxu0
      %v6600 = vadd.f32 0.0, %v6599
      %6601 = vmatprep.mubr.f32.mxu0 0.0
      %6602 = vmatmul.mubr.f32.gmra.mrb[0].mxu0 %v6505
      %v6603 = vpop.f32.mrb[0].mxu0
      %v6604 = vadd.f32 0.0, %v6603
      %v6605 = vpop.f32.mrb[0].mxu0
      %v6606 = vadd.f32 0.0, %v6605
      %6607 = vmatprep.mubr.f32.mxu0 0.0
      %6608 = vmatmul.mubr.f32.gmra.mrb[0].mxu0 %v6508
      %v6609 = vpop.f32.mrb[0].mxu0
      %v6610 = vadd.f32 0.0, %v6609
      %v6611 = vpop.f32.mrb[0].mxu0
      %v6612 = vadd.f32 0.0, %v6611
      %6613 = vmatprep.mubr.f32.mxu0 0.0
      %6614 = vmatmul.mubr.f32.gmra.mrb[0].mxu0 %v6511
      %v6615 = vpop.f32.mrb[0].mxu0
      %v6616 = vadd.f32 0.0, %v6615
      %v6617 = vpop.f32.mrb[0].mxu0
      %v6618 = vadd.f32 0.0, %v6617
      %6619 = vmatprep.mubr.f32.mxu0 0.0
      %6620 = vmatmul.mubr.f32.gmra.mrb[0].mxu0 %v6514
      %v6621 = vpop.f32.mrb[0].mxu0
      %v6622 = vadd.f32 0.0, %v6621
      %v6623 = vpop.f32.mrb[0].mxu0
      %v6624 = vadd.f32 0.0, %v6623
      %6625 = vmatprep.mubr.f32.mxu0 0.0
      %6626 = vmatmul.mubr.f32.gmra.mrb[0].mxu0 %v6517
      %v6627 = vpop.f32.mrb[0].mxu0
      %v6628 = vadd.f32 0.0, %v6627
      %v6629 = vpop.f32.mrb[0].mxu0
      %v6630 = vadd.f32 0.0, %v6629
      %6631 = vdwg.mxu0
      %v6633 = vsel %vm1372, %v5635, 0
      %v6636 = vsel %vm1372, %v5636, 0
      %6638 = vmatprep.subr.mxu0 %v5634
      %6639 = vmatpush1.msra.mxu0 %v5633
      %6640 = vmatprep.subr.mxu0 %v6636
      %6641 = vmatpush1.msra.mxu0 %v6633
      %6642 = vmatprep.subr.mxu0 0.0
      %6643 = vmatpush1.msra.mxu0 0.0
      %6644 = vmatprep.subr.mxu0 0.0
      %6645 = vmatpush1.msra.mxu0 0.0
      %6646 = vmatprep.subr.mxu0 0.0
      %6647 = vmatpush1.msra.mxu0 0.0
      %6648 = vmatprep.subr.mxu0 0.0
      %6649 = vmatpush1.msra.mxu0 0.0
      %6650 = vmatprep.subr.mxu0 0.0
      %6651 = vmatpush1.msra.mxu0 0.0
      %6652 = vmatprep.subr.mxu0 0.0
      %6653 = vmatpush1.msra.mxu0 0.0
      %6654 = vmatprep.subr.mxu0 0.0
      %6655 = vmatpush1.msra.mxu0 0.0
      %6656 = vmatprep.subr.mxu0 0.0
      %6657 = vmatpush1.msra.mxu0 0.0
      %6658 = vmatprep.subr.mxu0 0.0
      %6659 = vmatpush1.msra.mxu0 0.0
      %6660 = vmatprep.subr.mxu0 0.0
      %6661 = vmatpush1.msra.mxu0 0.0
      %6662 = vmatprep.subr.mxu0 0.0
      %6663 = vmatpush1.msra.mxu0 0.0
      %6664 = vmatprep.subr.mxu0 0.0
      %6665 = vmatpush1.msra.mxu0 0.0
      %6666 = vmatprep.subr.mxu0 0.0
      %6667 = vmatpush1.msra.mxu0 0.0
      %6668 = vmatprep.subr.mxu0 0.0
      %6669 = vmatpush1.msra.mxu0 0.0
      %6670 = vmatprep.subr.mxu0 0.0
      %6671 = vmatpush1.msra.mxu0 0.0
      %6672 = vmatprep.subr.mxu0 0.0
      %6673 = vmatpush1.msra.mxu0 0.0
      %6674 = vmatprep.subr.mxu0 0.0
      %6675 = vmatpush1.msra.mxu0 0.0
      %6676 = vmatprep.subr.mxu0 0.0
      %6677 = vmatpush1.msra.mxu0 0.0
      %6678 = vmatprep.subr.mxu0 0.0
      %6679 = vmatpush1.msra.mxu0 0.0
      %6680 = vmatprep.subr.mxu0 0.0
      %6681 = vmatpush1.msra.mxu0 0.0
      %6682 = vmatprep.subr.mxu0 0.0
      %6683 = vmatpush1.msra.mxu0 0.0
      %6684 = vmatprep.subr.mxu0 0.0
      %6685 = vmatpush1.msra.mxu0 0.0
      %6686 = vmatprep.subr.mxu0 0.0
      %6687 = vmatpush1.msra.mxu0 0.0
      %6688 = vmatprep.subr.mxu0 0.0
      %6689 = vmatpush1.msra.mxu0 0.0
      %6690 = vmatprep.subr.mxu0 0.0
      %6691 = vmatpush1.msra.mxu0 0.0
      %6692 = vmatprep.subr.mxu0 0.0
      %6693 = vmatpush1.msra.mxu0 0.0
      %6694 = vmatprep.subr.mxu0 0.0
      %6695 = vmatpush1.msra.mxu0 0.0
      %6696 = vmatprep.subr.mxu0 0.0
      %6697 = vmatpush1.msra.mxu0 0.0
      %6698 = vmatprep.subr.mxu0 0.0
      %6699 = vmatpush1.msra.mxu0 0.0
      %6700 = vmatprep.subr.mxu0 0.0
      %6701 = vmatpush1.msra.mxu0 0.0
      %6702 = vmatprep.mubr.f32.mxu0 0.0
      %6703 = vmatmul.mubr.f32.gmra.mrb[0].mxu0 %v6117
      %v6704 = vpop.f32.mrb[0].mxu0
      %v6705 = vadd.f32 0.0, %v6704
      %v6706 = vpop.f32.mrb[0].mxu0
      %v6707 = vadd.f32 0.0, %v6706
      %6708 = vmatprep.mubr.f32.mxu0 0.0
      %6709 = vmatmul.mubr.f32.gmra.mrb[0].mxu0 %v6120
      %v6710 = vpop.f32.mrb[0].mxu0
      %v6711 = vadd.f32 0.0, %v6710
      %v6712 = vpop.f32.mrb[0].mxu0
      %v6713 = vadd.f32 0.0, %v6712
      %6714 = vmatprep.mubr.f32.mxu0 0.0
      %6715 = vmatmul.mubr.f32.gmra.mrb[0].mxu0 %v6123
      %v6716 = vpop.f32.mrb[0].mxu0
      %v6717 = vadd.f32 0.0, %v6716
      %v6718 = vpop.f32.mrb[0].mxu0
      %v6719 = vadd.f32 0.0, %v6718
      %6720 = vmatprep.mubr.f32.mxu0 0.0
      %6721 = vmatmul.mubr.f32.gmra.mrb[0].mxu0 %v6126
      %v6722 = vpop.f32.mrb[0].mxu0
      %v6723 = vadd.f32 0.0, %v6722
      %v6724 = vpop.f32.mrb[0].mxu0
      %v6725 = vadd.f32 0.0, %v6724
      %6726 = vmatprep.mubr.f32.mxu0 0.0
      %6727 = vmatmul.mubr.f32.gmra.mrb[0].mxu0 %v6129
      %v6728 = vpop.f32.mrb[0].mxu0
      %v6729 = vadd.f32 0.0, %v6728
      %v6730 = vpop.f32.mrb[0].mxu0
      %v6731 = vadd.f32 0.0, %v6730
      %6732 = vmatprep.mubr.f32.mxu0 0.0
      %6733 = vmatmul.mubr.f32.gmra.mrb[0].mxu0 %v6132
      %v6734 = vpop.f32.mrb[0].mxu0
      %v6735 = vadd.f32 0.0, %v6734
      %v6736 = vpop.f32.mrb[0].mxu0
      %v6737 = vadd.f32 0.0, %v6736
      %6738 = vmatprep.mubr.f32.mxu0 0.0
      %6739 = vmatmul.mubr.f32.gmra.mrb[0].mxu0 %v6135
      %v6740 = vpop.f32.mrb[0].mxu0
      %v6741 = vadd.f32 0.0, %v6740
      %v6742 = vpop.f32.mrb[0].mxu0
      %v6743 = vadd.f32 0.0, %v6742
      %6744 = vmatprep.mubr.f32.mxu0 0.0
      %6745 = vmatmul.mubr.f32.gmra.mrb[0].mxu0 %v6138
      %v6746 = vpop.f32.mrb[0].mxu0
      %v6747 = vadd.f32 0.0, %v6746
      %v6748 = vpop.f32.mrb[0].mxu0
      %v6749 = vadd.f32 0.0, %v6748
      %6750 = vdwg.mxu0
      %v6751 = vmul.f32 %v6586, %v6705
      %v6752 = vmul.f32 %v6588, %v6707
      %v6753 = vmul.f32 %v6592, %v6711
      %v6754 = vmul.f32 %v6594, %v6713
      %v6755 = vmul.f32 %v6598, %v6717
      %v6756 = vmul.f32 %v6600, %v6719
      %v6757 = vmul.f32 %v6604, %v6723
      %v6758 = vmul.f32 %v6606, %v6725
      %v6759 = vmul.f32 %v6610, %v6729
      %v6760 = vmul.f32 %v6612, %v6731
      %v6761 = vmul.f32 %v6616, %v6735
      %v6762 = vmul.f32 %v6618, %v6737
      %v6763 = vmul.f32 %v6622, %v6741
      %v6764 = vmul.f32 %v6624, %v6743
      %v6765 = vmul.f32 %v6628, %v6747
      %v6766 = vmul.f32 %v6630, %v6749
      %v6768 = vsel %vm1372, %v5639, 0
      %v6771 = vsel %vm1372, %v5640, 0
      %6773 = vmatprep.subr.mxu0 %v5638
      %6774 = vmatpush1.msra.mxu0 %v5637
      %6775 = vmatprep.subr.mxu0 %v6771
      %6776 = vmatpush1.msra.mxu0 %v6768
      %6777 = vmatprep.subr.mxu0 0.0
      %6778 = vmatpush1.msra.mxu0 0.0
      %6779 = vmatprep.subr.mxu0 0.0
      %6780 = vmatpush1.msra.mxu0 0.0
      %6781 = vmatprep.subr.mxu0 0.0
      %6782 = vmatpush1.msra.mxu0 0.0
      %6783 = vmatprep.subr.mxu0 0.0
      %6784 = vmatpush1.msra.mxu0 0.0
      %6785 = vmatprep.subr.mxu0 0.0
      %6786 = vmatpush1.msra.mxu0 0.0
      %6787 = vmatprep.subr.mxu0 0.0
      %6788 = vmatpush1.msra.mxu0 0.0
      %6789 = vmatprep.subr.mxu0 0.0
      %6790 = vmatpush1.msra.mxu0 0.0
      %6791 = vmatprep.subr.mxu0 0.0
      %6792 = vmatpush1.msra.mxu0 0.0
      %6793 = vmatprep.subr.mxu0 0.0
      %6794 = vmatpush1.msra.mxu0 0.0
      %6795 = vmatprep.subr.mxu0 0.0
      %6796 = vmatpush1.msra.mxu0 0.0
      %6797 = vmatprep.subr.mxu0 0.0
      %6798 = vmatpush1.msra.mxu0 0.0
      %6799 = vmatprep.subr.mxu0 0.0
      %6800 = vmatpush1.msra.mxu0 0.0
      %6801 = vmatprep.subr.mxu0 0.0
      %6802 = vmatpush1.msra.mxu0 0.0
      %6803 = vmatprep.subr.mxu0 0.0
      %6804 = vmatpush1.msra.mxu0 0.0
      %6805 = vmatprep.subr.mxu0 0.0
      %6806 = vmatpush1.msra.mxu0 0.0
      %6807 = vmatprep.subr.mxu0 0.0
      %6808 = vmatpush1.msra.mxu0 0.0
      %6809 = vmatprep.subr.mxu0 0.0
      %6810 = vmatpush1.msra.mxu0 0.0
      %6811 = vmatprep.subr.mxu0 0.0
      %6812 = vmatpush1.msra.mxu0 0.0
      %6813 = vmatprep.subr.mxu0 0.0
      %6814 = vmatpush1.msra.mxu0 0.0
      %6815 = vmatprep.subr.mxu0 0.0
      %6816 = vmatpush1.msra.mxu0 0.0
      %6817 = vmatprep.subr.mxu0 0.0
      %6818 = vmatpush1.msra.mxu0 0.0
      %6819 = vmatprep.subr.mxu0 0.0
      %6820 = vmatpush1.msra.mxu0 0.0
      %6821 = vmatprep.subr.mxu0 0.0
      %6822 = vmatpush1.msra.mxu0 0.0
      %6823 = vmatprep.subr.mxu0 0.0
      %6824 = vmatpush1.msra.mxu0 0.0
      %6825 = vmatprep.subr.mxu0 0.0
      %6826 = vmatpush1.msra.mxu0 0.0
      %6827 = vmatprep.subr.mxu0 0.0
      %6828 = vmatpush1.msra.mxu0 0.0
      %6829 = vmatprep.subr.mxu0 0.0
      %6830 = vmatpush1.msra.mxu0 0.0
      %6831 = vmatprep.subr.mxu0 0.0
      %6832 = vmatpush1.msra.mxu0 0.0
      %6833 = vmatprep.subr.mxu0 0.0
      %6834 = vmatpush1.msra.mxu0 0.0
      %6835 = vmatprep.subr.mxu0 0.0
      %6836 = vmatpush1.msra.mxu0 0.0
      %6837 = vmatprep.mubr.f32.mxu0 0.0
      %6838 = vmatmul.mubr.f32.gmra.mrb[0].mxu0 %v6117
      %v6839 = vpop.f32.mrb[0].mxu0
      %v6840 = vadd.f32 0.0, %v6839
      %v6841 = vpop.f32.mrb[0].mxu0
      %v6842 = vadd.f32 0.0, %v6841
      %6843 = vmatprep.mubr.f32.mxu0 0.0
      %6844 = vmatmul.mubr.f32.gmra.mrb[0].mxu0 %v6120
      %v6845 = vpop.f32.mrb[0].mxu0
      %v6846 = vadd.f32 0.0, %v6845
      %v6847 = vpop.f32.mrb[0].mxu0
      %v6848 = vadd.f32 0.0, %v6847
      %6849 = vmatprep.mubr.f32.mxu0 0.0
      %6850 = vmatmul.mubr.f32.gmra.mrb[0].mxu0 %v6123
      %v6851 = vpop.f32.mrb[0].mxu0
      %v6852 = vadd.f32 0.0, %v6851
      %v6853 = vpop.f32.mrb[0].mxu0
      %v6854 = vadd.f32 0.0, %v6853
      %6855 = vmatprep.mubr.f32.mxu0 0.0
      %6856 = vmatmul.mubr.f32.gmra.mrb[0].mxu0 %v6126
      %v6857 = vpop.f32.mrb[0].mxu0
      %v6858 = vadd.f32 0.0, %v6857
      %v6859 = vpop.f32.mrb[0].mxu0
      %v6860 = vadd.f32 0.0, %v6859
      %6861 = vmatprep.mubr.f32.mxu0 0.0
      %6862 = vmatmul.mubr.f32.gmra.mrb[0].mxu0 %v6129
      %v6863 = vpop.f32.mrb[0].mxu0
      %v6864 = vadd.f32 0.0, %v6863
      %v6865 = vpop.f32.mrb[0].mxu0
      %v6866 = vadd.f32 0.0, %v6865
      %6867 = vmatprep.mubr.f32.mxu0 0.0
      %6868 = vmatmul.mubr.f32.gmra.mrb[0].mxu0 %v6132
      %v6869 = vpop.f32.mrb[0].mxu0
      %v6870 = vadd.f32 0.0, %v6869
      %v6871 = vpop.f32.mrb[0].mxu0
      %v6872 = vadd.f32 0.0, %v6871
      %6873 = vmatprep.mubr.f32.mxu0 0.0
      %6874 = vmatmul.mubr.f32.gmra.mrb[0].mxu0 %v6135
      %v6875 = vpop.f32.mrb[0].mxu0
      %v6876 = vadd.f32 0.0, %v6875
      %v6877 = vpop.f32.mrb[0].mxu0
      %v6878 = vadd.f32 0.0, %v6877
      %6879 = vmatprep.mubr.f32.mxu0 0.0
      %6880 = vmatmul.mubr.f32.gmra.mrb[0].mxu0 %v6138
      %v6881 = vpop.f32.mrb[0].mxu0
      %v6882 = vadd.f32 0.0, %v6881
      %v6883 = vpop.f32.mrb[0].mxu0
      %v6884 = vadd.f32 0.0, %v6883
      %6885 = vdwg.mxu0
      %6886 = vmatprep.subr.mxu0 %v6752
      %6887 = vmatpush1.msra.mxu0 %v6751
      %6888 = vmatprep.subr.mxu0 %v6754
      %6889 = vmatpush1.msra.mxu0 %v6753
      %6890 = vmatprep.subr.mxu0 %v6756
      %6891 = vmatpush1.msra.mxu0 %v6755
      %6892 = vmatprep.subr.mxu0 %v6758
      %6893 = vmatpush1.msra.mxu0 %v6757
      %6894 = vmatprep.subr.mxu0 %v6760
      %6895 = vmatpush1.msra.mxu0 %v6759
      %6896 = vmatprep.subr.mxu0 %v6762
      %6897 = vmatpush1.msra.mxu0 %v6761
      %6898 = vmatprep.subr.mxu0 %v6764
      %6899 = vmatpush1.msra.mxu0 %v6763
      %6900 = vmatprep.subr.mxu0 %v6766
      %6901 = vmatpush1.msra.mxu0 %v6765
      %6902 = vmatprep.subr.mxu0 0.0
      %6903 = vmatpush1.msra.mxu0 0.0
      %6904 = vmatprep.subr.mxu0 0.0
      %6905 = vmatpush1.msra.mxu0 0.0
      %6906 = vmatprep.subr.mxu0 0.0
      %6907 = vmatpush1.msra.mxu0 0.0
      %6908 = vmatprep.subr.mxu0 0.0
      %6909 = vmatpush1.msra.mxu0 0.0
      %6910 = vmatprep.subr.mxu0 0.0
      %6911 = vmatpush1.msra.mxu0 0.0
      %6912 = vmatprep.subr.mxu0 0.0
      %6913 = vmatpush1.msra.mxu0 0.0
      %6914 = vmatprep.subr.mxu0 0.0
      %6915 = vmatpush1.msra.mxu0 0.0
      %6916 = vmatprep.subr.mxu0 0.0
      %6917 = vmatpush1.msra.mxu0 0.0
      %6918 = vmatprep.subr.mxu0 0.0
      %6919 = vmatpush1.msra.mxu0 0.0
      %6920 = vmatprep.subr.mxu0 0.0
      %6921 = vmatpush1.msra.mxu0 0.0
      %6922 = vmatprep.subr.mxu0 0.0
      %6923 = vmatpush1.msra.mxu0 0.0
      %6924 = vmatprep.subr.mxu0 0.0
      %6925 = vmatpush1.msra.mxu0 0.0
      %6926 = vmatprep.subr.mxu0 0.0
      %6927 = vmatpush1.msra.mxu0 0.0
      %6928 = vmatprep.subr.mxu0 0.0
      %6929 = vmatpush1.msra.mxu0 0.0
      %6930 = vmatprep.subr.mxu0 0.0
      %6931 = vmatpush1.msra.mxu0 0.0
      %6932 = vmatprep.subr.mxu0 0.0
      %6933 = vmatpush1.msra.mxu0 0.0
      %6934 = vmatprep.subr.mxu0 0.0
      %6935 = vmatpush1.msra.mxu0 0.0
      %6936 = vmatprep.subr.mxu0 0.0
      %6937 = vmatpush1.msra.mxu0 0.0
      %6938 = vmatprep.subr.mxu0 0.0
      %6939 = vmatpush1.msra.mxu0 0.0
      %6940 = vmatprep.subr.mxu0 0.0
      %6941 = vmatpush1.msra.mxu0 0.0
      %6942 = vmatprep.subr.mxu0 0.0
      %6943 = vmatpush1.msra.mxu0 0.0
      %6944 = vmatprep.subr.mxu0 0.0
      %6945 = vmatpush1.msra.mxu0 0.0
      %6946 = vmatprep.subr.mxu0 0.0
      %6947 = vmatpush1.msra.mxu0 0.0
      %6948 = vmatprep.subr.mxu0 0.0
      %6949 = vmatpush1.msra.mxu0 0.0
      %6950 = vmatprep.mubr.f32.mxu0 0.0
      %6951 = vmatmul.mubr.f32.gmra.mrb[0].mxu0 %v1770
      %v6952 = vpop.f32.mrb[0].mxu0
      %v6953 = vadd.f32 0.0, %v6952
      %v6954 = vpop.f32.mrb[0].mxu0
      %v6955 = vadd.f32 0.0, %v6954
      %6956 = vmatprep.mubr.f32.mxu0 0.0
      %6957 = vmatmul.mubr.f32.gmra.mrb[0].mxu0 %v1773
      %v6958 = vpop.f32.mrb[0].mxu0
      %v6959 = vadd.f32 0.0, %v6958
      %v6960 = vpop.f32.mrb[0].mxu0
      %v6961 = vadd.f32 0.0, %v6960
      %6962 = vmatprep.mubr.f32.mxu0 0.0
      %6963 = vmatmul.mubr.f32.gmra.mrb[0].mxu0 %v1776
      %v6964 = vpop.f32.mrb[0].mxu0
      %v6965 = vadd.f32 0.0, %v6964
      %v6966 = vpop.f32.mrb[0].mxu0
      %v6967 = vadd.f32 0.0, %v6966
      %6968 = vmatprep.mubr.f32.mxu0 0.0
      %6969 = vmatmul.mubr.f32.gmra.mrb[0].mxu0 %v1779
      %v6970 = vpop.f32.mrb[0].mxu0
      %v6971 = vadd.f32 0.0, %v6970
      %v6972 = vpop.f32.mrb[0].mxu0
      %v6973 = vadd.f32 0.0, %v6972
      %6974 = vmatprep.mubr.f32.mxu0 0.0
      %6975 = vmatmul.mubr.f32.gmra.mrb[0].mxu0 %v1782
      %v6976 = vpop.f32.mrb[0].mxu0
      %v6977 = vadd.f32 0.0, %v6976
      %v6978 = vpop.f32.mrb[0].mxu0
      %v6979 = vadd.f32 0.0, %v6978
      %6980 = vmatprep.mubr.f32.mxu0 0.0
      %6981 = vmatmul.mubr.f32.gmra.mrb[0].mxu0 %v1785
      %v6982 = vpop.f32.mrb[0].mxu0
      %v6983 = vadd.f32 0.0, %v6982
      %v6984 = vpop.f32.mrb[0].mxu0
      %v6985 = vadd.f32 0.0, %v6984
      %6986 = vmatprep.mubr.f32.mxu0 0.0
      %6987 = vmatmul.mubr.f32.gmra.mrb[0].mxu0 %v1788
      %v6988 = vpop.f32.mrb[0].mxu0
      %v6989 = vadd.f32 0.0, %v6988
      %v6990 = vpop.f32.mrb[0].mxu0
      %v6991 = vadd.f32 0.0, %v6990
      %6992 = vmatprep.mubr.f32.mxu0 0.0
      %6993 = vmatmul.mubr.f32.gmra.mrb[0].mxu0 %v1791
      %v6994 = vpop.f32.mrb[0].mxu0
      %v6995 = vadd.f32 0.0, %v6994
      %v6996 = vpop.f32.mrb[0].mxu0
      %v6997 = vadd.f32 0.0, %v6996
      %6998 = vdwg.mxu0
      %v6999 = vmul.f32 %v6456, %v6953
      %v7000 = vmul.f32 %v6458, %v6955
      %v7001 = vmul.f32 %v6460, %v6959
      %v7002 = vmul.f32 %v6462, %v6961
      %v7003 = vmul.f32 %v6464, %v6965
      %v7004 = vmul.f32 %v6466, %v6967
      %v7005 = vmul.f32 %v6468, %v6971
      %v7006 = vmul.f32 %v6470, %v6973
      %v7007 = vmul.f32 %v6472, %v6977
      %v7008 = vmul.f32 %v6474, %v6979
      %v7009 = vmul.f32 %v6476, %v6983
      %v7010 = vmul.f32 %v6478, %v6985
      %v7011 = vmul.f32 %v6480, %v6989
      %v7012 = vmul.f32 %v6482, %v6991
      %v7013 = vmul.f32 %v6484, %v6995
      %v7014 = vmul.f32 %v6486, %v6997
      %v7015 = vadd.f32 %v6751, %v6999
      %v7016 = vadd.f32 %v6752, %v7000
      %v7017 = vadd.f32 %v6753, %v7001
      %v7018 = vadd.f32 %v6754, %v7002
      %v7019 = vadd.f32 %v6755, %v7003
      %v7020 = vadd.f32 %v6756, %v7004
      %v7021 = vadd.f32 %v6757, %v7005
      %v7022 = vadd.f32 %v6758, %v7006
      %v7023 = vadd.f32 %v6759, %v7007
      %v7024 = vadd.f32 %v6760, %v7008
      %v7025 = vadd.f32 %v6761, %v7009
      %v7026 = vadd.f32 %v6762, %v7010
      %v7027 = vadd.f32 %v6763, %v7011
      %v7028 = vadd.f32 %v6764, %v7012
      %v7029 = vadd.f32 %v6765, %v7013
      %v7030 = vadd.f32 %v6766, %v7014
      %7031 = vmatprep.subr.mxu0 %v6458
      %7032 = vmatpush1.msra.mxu0 %v6456
      %7033 = vmatprep.subr.mxu0 %v6462
      %7034 = vmatpush1.msra.mxu0 %v6460
      %7035 = vmatprep.subr.mxu0 %v6466
      %7036 = vmatpush1.msra.mxu0 %v6464
      %7037 = vmatprep.subr.mxu0 %v6470
      %7038 = vmatpush1.msra.mxu0 %v6468
      %7039 = vmatprep.subr.mxu0 %v6474
      %7040 = vmatpush1.msra.mxu0 %v6472
      %7041 = vmatprep.subr.mxu0 %v6478
      %7042 = vmatpush1.msra.mxu0 %v6476
      %7043 = vmatprep.subr.mxu0 %v6482
      %7044 = vmatpush1.msra.mxu0 %v6480
      %7045 = vmatprep.subr.mxu0 %v6486
      %7046 = vmatpush1.msra.mxu0 %v6484
      %7047 = vmatprep.subr.mxu0 0.0
      %7048 = vmatpush1.msra.mxu0 0.0
      %7049 = vmatprep.subr.mxu0 0.0
      %7050 = vmatpush1.msra.mxu0 0.0
      %7051 = vmatprep.subr.mxu0 0.0
      %7052 = vmatpush1.msra.mxu0 0.0
      %7053 = vmatprep.subr.mxu0 0.0
      %7054 = vmatpush1.msra.mxu0 0.0
      %7055 = vmatprep.subr.mxu0 0.0
      %7056 = vmatpush1.msra.mxu0 0.0
      %7057 = vmatprep.subr.mxu0 0.0
      %7058 = vmatpush1.msra.mxu0 0.0
      %7059 = vmatprep.subr.mxu0 0.0
      %7060 = vmatpush1.msra.mxu0 0.0
      %7061 = vmatprep.subr.mxu0 0.0
      %7062 = vmatpush1.msra.mxu0 0.0
      %7063 = vmatprep.subr.mxu0 0.0
      %7064 = vmatpush1.msra.mxu0 0.0
      %7065 = vmatprep.subr.mxu0 0.0
      %7066 = vmatpush1.msra.mxu0 0.0
      %7067 = vmatprep.subr.mxu0 0.0
      %7068 = vmatpush1.msra.mxu0 0.0
      %7069 = vmatprep.subr.mxu0 0.0
      %7070 = vmatpush1.msra.mxu0 0.0
      %7071 = vmatprep.subr.mxu0 0.0
      %7072 = vmatpush1.msra.mxu0 0.0
      %7073 = vmatprep.subr.mxu0 0.0
      %7074 = vmatpush1.msra.mxu0 0.0
      %7075 = vmatprep.subr.mxu0 0.0
      %7076 = vmatpush1.msra.mxu0 0.0
      %7077 = vmatprep.subr.mxu0 0.0
      %7078 = vmatpush1.msra.mxu0 0.0
      %7079 = vmatprep.subr.mxu0 0.0
      %7080 = vmatpush1.msra.mxu0 0.0
      %7081 = vmatprep.subr.mxu0 0.0
      %7082 = vmatpush1.msra.mxu0 0.0
      %7083 = vmatprep.subr.mxu0 0.0
      %7084 = vmatpush1.msra.mxu0 0.0
      %7085 = vmatprep.subr.mxu0 0.0
      %7086 = vmatpush1.msra.mxu0 0.0
      %7087 = vmatprep.subr.mxu0 0.0
      %7088 = vmatpush1.msra.mxu0 0.0
      %7089 = vmatprep.subr.mxu0 0.0
      %7090 = vmatpush1.msra.mxu0 0.0
      %7091 = vmatprep.subr.mxu0 0.0
      %7092 = vmatpush1.msra.mxu0 0.0
      %7093 = vmatprep.subr.mxu0 0.0
      %7094 = vmatpush1.msra.mxu0 0.0
      %7095 = vmatprep.mubr.f32.mxu0 0.0
      %7096 = vmatmul.mubr.f32.gmra.mrb[0].mxu0 %v1770
      %v7097 = vpop.f32.mrb[0].mxu0
      %v7098 = vadd.f32 %v3125, %v7097
      %v7099 = vpop.f32.mrb[0].mxu0
      %v7100 = vadd.f32 %v3125, %v7099
      %7101 = vmatprep.mubr.f32.mxu0 0.0
      %7102 = vmatmul.mubr.f32.gmra.mrb[0].mxu0 %v1773
      %v7103 = vpop.f32.mrb[0].mxu0
      %v7104 = vadd.f32 %v3126, %v7103
      %v7105 = vpop.f32.mrb[0].mxu0
      %v7106 = vadd.f32 %v3126, %v7105
      %7107 = vmatprep.mubr.f32.mxu0 0.0
      %7108 = vmatmul.mubr.f32.gmra.mrb[0].mxu0 %v1776
      %v7109 = vpop.f32.mrb[0].mxu0
      %v7110 = vadd.f32 %v3127, %v7109
      %v7111 = vpop.f32.mrb[0].mxu0
      %v7112 = vadd.f32 %v3127, %v7111
      %7113 = vmatprep.mubr.f32.mxu0 0.0
      %7114 = vmatmul.mubr.f32.gmra.mrb[0].mxu0 %v1779
      %v7115 = vpop.f32.mrb[0].mxu0
      %v7116 = vadd.f32 %v3128, %v7115
      %v7117 = vpop.f32.mrb[0].mxu0
      %v7118 = vadd.f32 %v3128, %v7117
      %7119 = vmatprep.mubr.f32.mxu0 0.0
      %7120 = vmatmul.mubr.f32.gmra.mrb[0].mxu0 %v1782
      %v7121 = vpop.f32.mrb[0].mxu0
      %v7122 = vadd.f32 %v3129, %v7121
      %v7123 = vpop.f32.mrb[0].mxu0
      %v7124 = vadd.f32 %v3129, %v7123
      %7125 = vmatprep.mubr.f32.mxu0 0.0
      %7126 = vmatmul.mubr.f32.gmra.mrb[0].mxu0 %v1785
      %v7127 = vpop.f32.mrb[0].mxu0
      %v7128 = vadd.f32 %v3130, %v7127
      %v7129 = vpop.f32.mrb[0].mxu0
      %v7130 = vadd.f32 %v3130, %v7129
      %7131 = vmatprep.mubr.f32.mxu0 0.0
      %7132 = vmatmul.mubr.f32.gmra.mrb[0].mxu0 %v1788
      %v7133 = vpop.f32.mrb[0].mxu0
      %v7134 = vadd.f32 %v3131, %v7133
      %v7135 = vpop.f32.mrb[0].mxu0
      %v7136 = vadd.f32 %v3131, %v7135
      %7137 = vmatprep.mubr.f32.mxu0 0.0
      %7138 = vmatmul.mubr.f32.gmra.mrb[0].mxu0 %v1791
      %v7139 = vpop.f32.mrb[0].mxu0
      %v7140 = vadd.f32 %v3132, %v7139
      %v7141 = vpop.f32.mrb[0].mxu0
      %v7142 = vadd.f32 %v3132, %v7141
      %7143 = vdwg.mxu0
      %v7144 = vmul.f32 %v6456, %v7098
      %v7145 = vmul.f32 %v6458, %v7100
      %v7146 = vmul.f32 %v6460, %v7104
      %v7147 = vmul.f32 %v6462, %v7106
      %v7148 = vmul.f32 %v6464, %v7110
      %v7149 = vmul.f32 %v6466, %v7112
      %v7150 = vmul.f32 %v6468, %v7116
      %v7151 = vmul.f32 %v6470, %v7118
      %v7152 = vmul.f32 %v6472, %v7122
      %v7153 = vmul.f32 %v6474, %v7124
      %v7154 = vmul.f32 %v6476, %v7128
      %v7155 = vmul.f32 %v6478, %v7130
      %v7156 = vmul.f32 %v6480, %v7134
      %v7157 = vmul.f32 %v6482, %v7136
      %v7158 = vmul.f32 %v6484, %v7140
      %v7159 = vmul.f32 %v6486, %v7142
      %7160 = vmatprep.subr.mxu0 %v7016
      %7161 = vmatpush1.msra.mxu0 %v7015
      %7162 = vmatprep.subr.mxu0 %v7018
      %7163 = vmatpush1.msra.mxu0 %v7017
      %7164 = vmatprep.subr.mxu0 %v7020
      %7165 = vmatpush1.msra.mxu0 %v7019
      %7166 = vmatprep.subr.mxu0 %v7022
      %7167 = vmatpush1.msra.mxu0 %v7021
      %7168 = vmatprep.subr.mxu0 %v7024
      %7169 = vmatpush1.msra.mxu0 %v7023
      %7170 = vmatprep.subr.mxu0 %v7026
      %7171 = vmatpush1.msra.mxu0 %v7025
      %7172 = vmatprep.subr.mxu0 %v7028
      %7173 = vmatpush1.msra.mxu0 %v7027
      %7174 = vmatprep.subr.mxu0 %v7030
      %7175 = vmatpush1.msra.mxu0 %v7029
      %7176 = vmatprep.subr.mxu0 0.0
      %7177 = vmatpush1.msra.mxu0 0.0
      %7178 = vmatprep.subr.mxu0 0.0
      %7179 = vmatpush1.msra.mxu0 0.0
      %7180 = vmatprep.subr.mxu0 0.0
      %7181 = vmatpush1.msra.mxu0 0.0
      %7182 = vmatprep.subr.mxu0 0.0
      %7183 = vmatpush1.msra.mxu0 0.0
      %7184 = vmatprep.subr.mxu0 0.0
      %7185 = vmatpush1.msra.mxu0 0.0
      %7186 = vmatprep.subr.mxu0 0.0
      %7187 = vmatpush1.msra.mxu0 0.0
      %7188 = vmatprep.subr.mxu0 0.0
      %7189 = vmatpush1.msra.mxu0 0.0
      %7190 = vmatprep.subr.mxu0 0.0
      %7191 = vmatpush1.msra.mxu0 0.0
      %7192 = vmatprep.subr.mxu0 0.0
      %7193 = vmatpush1.msra.mxu0 0.0
      %7194 = vmatprep.subr.mxu0 0.0
      %7195 = vmatpush1.msra.mxu0 0.0
      %7196 = vmatprep.subr.mxu0 0.0
      %7197 = vmatpush1.msra.mxu0 0.0
      %7198 = vmatprep.subr.mxu0 0.0
      %7199 = vmatpush1.msra.mxu0 0.0
      %7200 = vmatprep.subr.mxu0 0.0
      %7201 = vmatpush1.msra.mxu0 0.0
      %7202 = vmatprep.subr.mxu0 0.0
      %7203 = vmatpush1.msra.mxu0 0.0
      %7204 = vmatprep.subr.mxu0 0.0
      %7205 = vmatpush1.msra.mxu0 0.0
      %7206 = vmatprep.subr.mxu0 0.0
      %7207 = vmatpush1.msra.mxu0 0.0
      %7208 = vmatprep.subr.mxu0 0.0
      %7209 = vmatpush1.msra.mxu0 0.0
      %7210 = vmatprep.subr.mxu0 0.0
      %7211 = vmatpush1.msra.mxu0 0.0
      %7212 = vmatprep.subr.mxu0 0.0
      %7213 = vmatpush1.msra.mxu0 0.0
      %7214 = vmatprep.subr.mxu0 0.0
      %7215 = vmatpush1.msra.mxu0 0.0
      %7216 = vmatprep.subr.mxu0 0.0
      %7217 = vmatpush1.msra.mxu0 0.0
      %7218 = vmatprep.subr.mxu0 0.0
      %7219 = vmatpush1.msra.mxu0 0.0
      %7220 = vmatprep.subr.mxu0 0.0
      %7221 = vmatpush1.msra.mxu0 0.0
      %7222 = vmatprep.subr.mxu0 0.0
      %7223 = vmatpush1.msra.mxu0 0.0
      %7224 = vmatprep.mubr.f32.mxu0 0.0
      %7225 = vmatmul.mubr.f32.gmra.mrb[0].mxu0 %v1943
      %v7226 = vpop.f32.mrb[0].mxu0
      %v7227 = vadd.f32 0.0, %v7226
      %v7228 = vpop.f32.mrb[0].mxu0
      %v7229 = vadd.f32 0.0, %v7228
      %7230 = vmatprep.mubr.f32.mxu0 0.0
      %7231 = vmatmul.mubr.f32.gmra.mrb[0].mxu0 %v1946
      %v7232 = vpop.f32.mrb[0].mxu0
      %v7233 = vadd.f32 0.0, %v7232
      %v7234 = vpop.f32.mrb[0].mxu0
      %v7235 = vadd.f32 0.0, %v7234
      %7236 = vmatprep.mubr.f32.mxu0 0.0
      %7237 = vmatmul.mubr.f32.gmra.mrb[0].mxu0 %v1949
      %v7238 = vpop.f32.mrb[0].mxu0
      %v7239 = vadd.f32 0.0, %v7238
      %v7240 = vpop.f32.mrb[0].mxu0
      %v7241 = vadd.f32 0.0, %v7240
      %7242 = vmatprep.mubr.f32.mxu0 0.0
      %7243 = vmatmul.mubr.f32.gmra.mrb[0].mxu0 %v1952
      %v7244 = vpop.f32.mrb[0].mxu0
      %v7245 = vadd.f32 0.0, %v7244
      %v7246 = vpop.f32.mrb[0].mxu0
      %v7247 = vadd.f32 0.0, %v7246
      %7248 = vmatprep.mubr.f32.mxu0 0.0
      %7249 = vmatmul.mubr.f32.gmra.mrb[0].mxu0 %v1955
      %v7250 = vpop.f32.mrb[0].mxu0
      %v7251 = vadd.f32 0.0, %v7250
      %v7252 = vpop.f32.mrb[0].mxu0
      %v7253 = vadd.f32 0.0, %v7252
      %7254 = vmatprep.mubr.f32.mxu0 0.0
      %7255 = vmatmul.mubr.f32.gmra.mrb[0].mxu0 %v1958
      %v7256 = vpop.f32.mrb[0].mxu0
      %v7257 = vadd.f32 0.0, %v7256
      %v7258 = vpop.f32.mrb[0].mxu0
      %v7259 = vadd.f32 0.0, %v7258
      %7260 = vmatprep.mubr.f32.mxu0 0.0
      %7261 = vmatmul.mubr.f32.gmra.mrb[0].mxu0 %v1961
      %v7262 = vpop.f32.mrb[0].mxu0
      %v7263 = vadd.f32 0.0, %v7262
      %v7264 = vpop.f32.mrb[0].mxu0
      %v7265 = vadd.f32 0.0, %v7264
      %7266 = vmatprep.mubr.f32.mxu0 0.0
      %7267 = vmatmul.mubr.f32.gmra.mrb[0].mxu0 %v1964
      %v7268 = vpop.f32.mrb[0].mxu0
      %v7269 = vadd.f32 0.0, %v7268
      %v7270 = vpop.f32.mrb[0].mxu0
      %v7271 = vadd.f32 0.0, %v7270
      %7272 = vdwg.mxu0
      %v7273 = vmul.f32 %v7144, %v7227
      %v7274 = vmul.f32 %v7145, %v7229
      %v7275 = vmul.f32 %v7146, %v7233
      %v7276 = vmul.f32 %v7147, %v7235
      %v7277 = vmul.f32 %v7148, %v7239
      %v7278 = vmul.f32 %v7149, %v7241
      %v7279 = vmul.f32 %v7150, %v7245
      %v7280 = vmul.f32 %v7151, %v7247
      %v7281 = vmul.f32 %v7152, %v7251
      %v7282 = vmul.f32 %v7153, %v7253
      %v7283 = vmul.f32 %v7154, %v7257
      %v7284 = vmul.f32 %v7155, %v7259
      %v7285 = vmul.f32 %v7156, %v7263
      %v7286 = vmul.f32 %v7157, %v7265
      %v7287 = vmul.f32 %v7158, %v7269
      %v7288 = vmul.f32 %v7159, %v7271
      %v7289 = vadd.f32 %v7015, %v7273
      %v7290 = vadd.f32 %v7016, %v7274
      %v7291 = vadd.f32 %v7017, %v7275
      %v7292 = vadd.f32 %v7018, %v7276
      %v7293 = vadd.f32 %v7019, %v7277
      %v7294 = vadd.f32 %v7020, %v7278
      %v7295 = vadd.f32 %v7021, %v7279
      %v7296 = vadd.f32 %v7022, %v7280
      %v7297 = vadd.f32 %v7023, %v7281
      %v7298 = vadd.f32 %v7024, %v7282
      %v7299 = vadd.f32 %v7025, %v7283
      %v7300 = vadd.f32 %v7026, %v7284
      %v7301 = vadd.f32 %v7027, %v7285
      %v7302 = vadd.f32 %v7028, %v7286
      %v7303 = vadd.f32 %v7029, %v7287
      %v7304 = vadd.f32 %v7030, %v7288
      %7305 = vmatprep.subr.mxu0 %v7145
      %7306 = vmatpush1.msra.mxu0 %v7144
      %7307 = vmatprep.subr.mxu0 %v7147
      %7308 = vmatpush1.msra.mxu0 %v7146
      %7309 = vmatprep.subr.mxu0 %v7149
      %7310 = vmatpush1.msra.mxu0 %v7148
      %7311 = vmatprep.subr.mxu0 %v7151
      %7312 = vmatpush1.msra.mxu0 %v7150
      %7313 = vmatprep.subr.mxu0 %v7153
      %7314 = vmatpush1.msra.mxu0 %v7152
      %7315 = vmatprep.subr.mxu0 %v7155
      %7316 = vmatpush1.msra.mxu0 %v7154
      %7317 = vmatprep.subr.mxu0 %v7157
      %7318 = vmatpush1.msra.mxu0 %v7156
      %7319 = vmatprep.subr.mxu0 %v7159
      %7320 = vmatpush1.msra.mxu0 %v7158
      %7321 = vmatprep.subr.mxu0 0.0
      %7322 = vmatpush1.msra.mxu0 0.0
      %7323 = vmatprep.subr.mxu0 0.0
      %7324 = vmatpush1.msra.mxu0 0.0
      %7325 = vmatprep.subr.mxu0 0.0
      %7326 = vmatpush1.msra.mxu0 0.0
      %7327 = vmatprep.subr.mxu0 0.0
      %7328 = vmatpush1.msra.mxu0 0.0
      %7329 = vmatprep.subr.mxu0 0.0
      %7330 = vmatpush1.msra.mxu0 0.0
      %7331 = vmatprep.subr.mxu0 0.0
      %7332 = vmatpush1.msra.mxu0 0.0
      %7333 = vmatprep.subr.mxu0 0.0
      %7334 = vmatpush1.msra.mxu0 0.0
      %7335 = vmatprep.subr.mxu0 0.0
      %7336 = vmatpush1.msra.mxu0 0.0
      %7337 = vmatprep.subr.mxu0 0.0
      %7338 = vmatpush1.msra.mxu0 0.0
      %7339 = vmatprep.subr.mxu0 0.0
      %7340 = vmatpush1.msra.mxu0 0.0
      %7341 = vmatprep.subr.mxu0 0.0
      %7342 = vmatpush1.msra.mxu0 0.0
      %7343 = vmatprep.subr.mxu0 0.0
      %7344 = vmatpush1.msra.mxu0 0.0
      %7345 = vmatprep.subr.mxu0 0.0
      %7346 = vmatpush1.msra.mxu0 0.0
      %7347 = vmatprep.subr.mxu0 0.0
      %7348 = vmatpush1.msra.mxu0 0.0
      %7349 = vmatprep.subr.mxu0 0.0
      %7350 = vmatpush1.msra.mxu0 0.0
      %7351 = vmatprep.subr.mxu0 0.0
      %7352 = vmatpush1.msra.mxu0 0.0
      %7353 = vmatprep.subr.mxu0 0.0
      %7354 = vmatpush1.msra.mxu0 0.0
      %7355 = vmatprep.subr.mxu0 0.0
      %7356 = vmatpush1.msra.mxu0 0.0
      %7357 = vmatprep.subr.mxu0 0.0
      %7358 = vmatpush1.msra.mxu0 0.0
      %7359 = vmatprep.subr.mxu0 0.0
      %7360 = vmatpush1.msra.mxu0 0.0
      %7361 = vmatprep.subr.mxu0 0.0
      %7362 = vmatpush1.msra.mxu0 0.0
      %7363 = vmatprep.subr.mxu0 0.0
      %7364 = vmatpush1.msra.mxu0 0.0
      %7365 = vmatprep.subr.mxu0 0.0
      %7366 = vmatpush1.msra.mxu0 0.0
      %7367 = vmatprep.subr.mxu0 0.0
      %7368 = vmatpush1.msra.mxu0 0.0
      %7369 = vmatprep.mubr.f32.mxu0 0.0
      %7370 = vmatmul.mubr.f32.gmra.mrb[0].mxu0 %v1943
      %v7371 = vpop.f32.mrb[0].mxu0
      %v7372 = vadd.f32 %v3415, %v7371
      %v7373 = vpop.f32.mrb[0].mxu0
      %v7374 = vadd.f32 %v3415, %v7373
      %7375 = vmatprep.mubr.f32.mxu0 0.0
      %7376 = vmatmul.mubr.f32.gmra.mrb[0].mxu0 %v1946
      %v7377 = vpop.f32.mrb[0].mxu0
      %v7378 = vadd.f32 %v3416, %v7377
      %v7379 = vpop.f32.mrb[0].mxu0
      %v7380 = vadd.f32 %v3416, %v7379
      %7381 = vmatprep.mubr.f32.mxu0 0.0
      %7382 = vmatmul.mubr.f32.gmra.mrb[0].mxu0 %v1949
      %v7383 = vpop.f32.mrb[0].mxu0
      %v7384 = vadd.f32 %v3417, %v7383
      %v7385 = vpop.f32.mrb[0].mxu0
      %v7386 = vadd.f32 %v3417, %v7385
      %7387 = vmatprep.mubr.f32.mxu0 0.0
      %7388 = vmatmul.mubr.f32.gmra.mrb[0].mxu0 %v1952
      %v7389 = vpop.f32.mrb[0].mxu0
      %v7390 = vadd.f32 %v3418, %v7389
      %v7391 = vpop.f32.mrb[0].mxu0
      %v7392 = vadd.f32 %v3418, %v7391
      %7393 = vmatprep.mubr.f32.mxu0 0.0
      %7394 = vmatmul.mubr.f32.gmra.mrb[0].mxu0 %v1955
      %v7395 = vpop.f32.mrb[0].mxu0
      %v7396 = vadd.f32 %v3419, %v7395
      %v7397 = vpop.f32.mrb[0].mxu0
      %v7398 = vadd.f32 %v3419, %v7397
      %7399 = vmatprep.mubr.f32.mxu0 0.0
      %7400 = vmatmul.mubr.f32.gmra.mrb[0].mxu0 %v1958
      %v7401 = vpop.f32.mrb[0].mxu0
      %v7402 = vadd.f32 %v3420, %v7401
      %v7403 = vpop.f32.mrb[0].mxu0
      %v7404 = vadd.f32 %v3420, %v7403
      %7405 = vmatprep.mubr.f32.mxu0 0.0
      %7406 = vmatmul.mubr.f32.gmra.mrb[0].mxu0 %v1961
      %v7407 = vpop.f32.mrb[0].mxu0
      %v7408 = vadd.f32 %v3421, %v7407
      %v7409 = vpop.f32.mrb[0].mxu0
      %v7410 = vadd.f32 %v3421, %v7409
      %7411 = vmatprep.mubr.f32.mxu0 0.0
      %7412 = vmatmul.mubr.f32.gmra.mrb[0].mxu0 %v1964
      %v7413 = vpop.f32.mrb[0].mxu0
      %v7414 = vadd.f32 %v3422, %v7413
      %v7415 = vpop.f32.mrb[0].mxu0
      %v7416 = vadd.f32 %v3422, %v7415
      %7417 = vdwg.mxu0
      %v7418 = vmul.f32 %v7144, %v7372
      %v7419 = vmul.f32 %v7145, %v7374
      %v7420 = vmul.f32 %v7146, %v7378
      %v7421 = vmul.f32 %v7147, %v7380
      %v7422 = vmul.f32 %v7148, %v7384
      %v7423 = vmul.f32 %v7149, %v7386
      %v7424 = vmul.f32 %v7150, %v7390
      %v7425 = vmul.f32 %v7151, %v7392
      %v7426 = vmul.f32 %v7152, %v7396
      %v7427 = vmul.f32 %v7153, %v7398
      %v7428 = vmul.f32 %v7154, %v7402
      %v7429 = vmul.f32 %v7155, %v7404
      %v7430 = vmul.f32 %v7156, %v7408
      %v7431 = vmul.f32 %v7157, %v7410
      %v7432 = vmul.f32 %v7158, %v7414
      %v7433 = vmul.f32 %v7159, %v7416
      %7434 = vmatprep.subr.mxu0 %v7290
      %7435 = vmatpush1.msra.mxu0 %v7289
      %7436 = vmatprep.subr.mxu0 %v7292
      %7437 = vmatpush1.msra.mxu0 %v7291
      %7438 = vmatprep.subr.mxu0 %v7294
      %7439 = vmatpush1.msra.mxu0 %v7293
      %7440 = vmatprep.subr.mxu0 %v7296
      %7441 = vmatpush1.msra.mxu0 %v7295
      %7442 = vmatprep.subr.mxu0 %v7298
      %7443 = vmatpush1.msra.mxu0 %v7297
      %7444 = vmatprep.subr.mxu0 %v7300
      %7445 = vmatpush1.msra.mxu0 %v7299
      %7446 = vmatprep.subr.mxu0 %v7302
      %7447 = vmatpush1.msra.mxu0 %v7301
      %7448 = vmatprep.subr.mxu0 %v7304
      %7449 = vmatpush1.msra.mxu0 %v7303
      %7450 = vmatprep.subr.mxu0 0.0
      %7451 = vmatpush1.msra.mxu0 0.0
      %7452 = vmatprep.subr.mxu0 0.0
      %7453 = vmatpush1.msra.mxu0 0.0
      %7454 = vmatprep.subr.mxu0 0.0
      %7455 = vmatpush1.msra.mxu0 0.0
      %7456 = vmatprep.subr.mxu0 0.0
      %7457 = vmatpush1.msra.mxu0 0.0
      %7458 = vmatprep.subr.mxu0 0.0
      %7459 = vmatpush1.msra.mxu0 0.0
      %7460 = vmatprep.subr.mxu0 0.0
      %7461 = vmatpush1.msra.mxu0 0.0
      %7462 = vmatprep.subr.mxu0 0.0
      %7463 = vmatpush1.msra.mxu0 0.0
      %7464 = vmatprep.subr.mxu0 0.0
      %7465 = vmatpush1.msra.mxu0 0.0
      %7466 = vmatprep.subr.mxu0 0.0
      %7467 = vmatpush1.msra.mxu0 0.0
      %7468 = vmatprep.subr.mxu0 0.0
      %7469 = vmatpush1.msra.mxu0 0.0
      %7470 = vmatprep.subr.mxu0 0.0
      %7471 = vmatpush1.msra.mxu0 0.0
      %7472 = vmatprep.subr.mxu0 0.0
      %7473 = vmatpush1.msra.mxu0 0.0
      %7474 = vmatprep.subr.mxu0 0.0
      %7475 = vmatpush1.msra.mxu0 0.0
      %7476 = vmatprep.subr.mxu0 0.0
      %7477 = vmatpush1.msra.mxu0 0.0
      %7478 = vmatprep.subr.mxu0 0.0
      %7479 = vmatpush1.msra.mxu0 0.0
      %7480 = vmatprep.subr.mxu0 0.0
      %7481 = vmatpush1.msra.mxu0 0.0
      %7482 = vmatprep.subr.mxu0 0.0
      %7483 = vmatpush1.msra.mxu0 0.0
      %7484 = vmatprep.subr.mxu0 0.0
      %7485 = vmatpush1.msra.mxu0 0.0
      %7486 = vmatprep.subr.mxu0 0.0
      %7487 = vmatpush1.msra.mxu0 0.0
      %7488 = vmatprep.subr.mxu0 0.0
      %7489 = vmatpush1.msra.mxu0 0.0
      %7490 = vmatprep.subr.mxu0 0.0
      %7491 = vmatpush1.msra.mxu0 0.0
      %7492 = vmatprep.subr.mxu0 0.0
      %7493 = vmatpush1.msra.mxu0 0.0
      %7494 = vmatprep.subr.mxu0 0.0
      %7495 = vmatpush1.msra.mxu0 0.0
      %7496 = vmatprep.subr.mxu0 0.0
      %7497 = vmatpush1.msra.mxu0 0.0
      %7498 = vmatprep.mubr.f32.mxu0 0.0
      %7499 = vmatmul.mubr.f32.gmra.mrb[0].mxu0 %v3738
      %v7500 = vpop.f32.mrb[0].mxu0
      %v7501 = vadd.f32 0.0, %v7500
      %v7502 = vpop.f32.mrb[0].mxu0
      %v7503 = vadd.f32 0.0, %v7502
      %7504 = vmatprep.mubr.f32.mxu0 0.0
      %7505 = vmatmul.mubr.f32.gmra.mrb[0].mxu0 %v3741
      %v7506 = vpop.f32.mrb[0].mxu0
      %v7507 = vadd.f32 0.0, %v7506
      %v7508 = vpop.f32.mrb[0].mxu0
      %v7509 = vadd.f32 0.0, %v7508
      %7510 = vmatprep.mubr.f32.mxu0 0.0
      %7511 = vmatmul.mubr.f32.gmra.mrb[0].mxu0 %v3744
      %v7512 = vpop.f32.mrb[0].mxu0
      %v7513 = vadd.f32 0.0, %v7512
      %v7514 = vpop.f32.mrb[0].mxu0
      %v7515 = vadd.f32 0.0, %v7514
      %7516 = vmatprep.mubr.f32.mxu0 0.0
      %7517 = vmatmul.mubr.f32.gmra.mrb[0].mxu0 %v3747
      %v7518 = vpop.f32.mrb[0].mxu0
      %v7519 = vadd.f32 0.0, %v7518
      %v7520 = vpop.f32.mrb[0].mxu0
      %v7521 = vadd.f32 0.0, %v7520
      %7522 = vmatprep.mubr.f32.mxu0 0.0
      %7523 = vmatmul.mubr.f32.gmra.mrb[0].mxu0 %v3750
      %v7524 = vpop.f32.mrb[0].mxu0
      %v7525 = vadd.f32 0.0, %v7524
      %v7526 = vpop.f32.mrb[0].mxu0
      %v7527 = vadd.f32 0.0, %v7526
      %7528 = vmatprep.mubr.f32.mxu0 0.0
      %7529 = vmatmul.mubr.f32.gmra.mrb[0].mxu0 %v3753
      %v7530 = vpop.f32.mrb[0].mxu0
      %v7531 = vadd.f32 0.0, %v7530
      %v7532 = vpop.f32.mrb[0].mxu0
      %v7533 = vadd.f32 0.0, %v7532
      %7534 = vmatprep.mubr.f32.mxu0 0.0
      %7535 = vmatmul.mubr.f32.gmra.mrb[0].mxu0 %v3756
      %v7536 = vpop.f32.mrb[0].mxu0
      %v7537 = vadd.f32 0.0, %v7536
      %v7538 = vpop.f32.mrb[0].mxu0
      %v7539 = vadd.f32 0.0, %v7538
      %7540 = vmatprep.mubr.f32.mxu0 0.0
      %7541 = vmatmul.mubr.f32.gmra.mrb[0].mxu0 %v3759
      %v7542 = vpop.f32.mrb[0].mxu0
      %v7543 = vadd.f32 0.0, %v7542
      %v7544 = vpop.f32.mrb[0].mxu0
      %v7545 = vadd.f32 0.0, %v7544
      %7546 = vdwg.mxu0
      %v7547 = vmul.f32 %v7418, %v7501
      %v7548 = vmul.f32 %v7419, %v7503
      %v7549 = vmul.f32 %v7420, %v7507
      %v7550 = vmul.f32 %v7421, %v7509
      %v7551 = vmul.f32 %v7422, %v7513
      %v7552 = vmul.f32 %v7423, %v7515
      %v7553 = vmul.f32 %v7424, %v7519
      %v7554 = vmul.f32 %v7425, %v7521
      %v7555 = vmul.f32 %v7426, %v7525
      %v7556 = vmul.f32 %v7427, %v7527
      %v7557 = vmul.f32 %v7428, %v7531
      %v7558 = vmul.f32 %v7429, %v7533
      %v7559 = vmul.f32 %v7430, %v7537
      %v7560 = vmul.f32 %v7431, %v7539
      %v7561 = vmul.f32 %v7432, %v7543
      %v7562 = vmul.f32 %v7433, %v7545
      %v7563 = vadd.f32 %v7289, %v7547
      %v7564 = vadd.f32 %v7290, %v7548
      %v7565 = vadd.f32 %v7291, %v7549
      %v7566 = vadd.f32 %v7292, %v7550
      %v7567 = vadd.f32 %v7293, %v7551
      %v7568 = vadd.f32 %v7294, %v7552
      %v7569 = vadd.f32 %v7295, %v7553
      %v7570 = vadd.f32 %v7296, %v7554
      %v7571 = vadd.f32 %v7297, %v7555
      %v7572 = vadd.f32 %v7298, %v7556
      %v7573 = vadd.f32 %v7299, %v7557
      %v7574 = vadd.f32 %v7300, %v7558
      %v7575 = vadd.f32 %v7301, %v7559
      %v7576 = vadd.f32 %v7302, %v7560
      %v7577 = vadd.f32 %v7303, %v7561
      %v7578 = vadd.f32 %v7304, %v7562
      %7579 = vmatprep.subr.mxu0 %v7419
      %7580 = vmatpush1.msra.mxu0 %v7418
      %7581 = vmatprep.subr.mxu0 %v7421
      %7582 = vmatpush1.msra.mxu0 %v7420
      %7583 = vmatprep.subr.mxu0 %v7423
      %7584 = vmatpush1.msra.mxu0 %v7422
      %7585 = vmatprep.subr.mxu0 %v7425
      %7586 = vmatpush1.msra.mxu0 %v7424
      %7587 = vmatprep.subr.mxu0 %v7427
      %7588 = vmatpush1.msra.mxu0 %v7426
      %7589 = vmatprep.subr.mxu0 %v7429
      %7590 = vmatpush1.msra.mxu0 %v7428
      %7591 = vmatprep.subr.mxu0 %v7431
      %7592 = vmatpush1.msra.mxu0 %v7430
      %7593 = vmatprep.subr.mxu0 %v7433
      %7594 = vmatpush1.msra.mxu0 %v7432
      %7595 = vmatprep.subr.mxu0 0.0
      %7596 = vmatpush1.msra.mxu0 0.0
      %7597 = vmatprep.subr.mxu0 0.0
      %7598 = vmatpush1.msra.mxu0 0.0
      %7599 = vmatprep.subr.mxu0 0.0
      %7600 = vmatpush1.msra.mxu0 0.0
      %7601 = vmatprep.subr.mxu0 0.0
      %7602 = vmatpush1.msra.mxu0 0.0
      %7603 = vmatprep.subr.mxu0 0.0
      %7604 = vmatpush1.msra.mxu0 0.0
      %7605 = vmatprep.subr.mxu0 0.0
      %7606 = vmatpush1.msra.mxu0 0.0
      %7607 = vmatprep.subr.mxu0 0.0
      %7608 = vmatpush1.msra.mxu0 0.0
      %7609 = vmatprep.subr.mxu0 0.0
      %7610 = vmatpush1.msra.mxu0 0.0
      %7611 = vmatprep.subr.mxu0 0.0
      %7612 = vmatpush1.msra.mxu0 0.0
      %7613 = vmatprep.subr.mxu0 0.0
      %7614 = vmatpush1.msra.mxu0 0.0
      %7615 = vmatprep.subr.mxu0 0.0
      %7616 = vmatpush1.msra.mxu0 0.0
      %7617 = vmatprep.subr.mxu0 0.0
      %7618 = vmatpush1.msra.mxu0 0.0
      %7619 = vmatprep.subr.mxu0 0.0
      %7620 = vmatpush1.msra.mxu0 0.0
      %7621 = vmatprep.subr.mxu0 0.0
      %7622 = vmatpush1.msra.mxu0 0.0
      %7623 = vmatprep.subr.mxu0 0.0
      %7624 = vmatpush1.msra.mxu0 0.0
      %7625 = vmatprep.subr.mxu0 0.0
      %7626 = vmatpush1.msra.mxu0 0.0
      %7627 = vmatprep.subr.mxu0 0.0
      %7628 = vmatpush1.msra.mxu0 0.0
      %7629 = vmatprep.subr.mxu0 0.0
      %7630 = vmatpush1.msra.mxu0 0.0
      %7631 = vmatprep.subr.mxu0 0.0
      %7632 = vmatpush1.msra.mxu0 0.0
      %7633 = vmatprep.subr.mxu0 0.0
      %7634 = vmatpush1.msra.mxu0 0.0
      %7635 = vmatprep.subr.mxu0 0.0
      %7636 = vmatpush1.msra.mxu0 0.0
      %7637 = vmatprep.subr.mxu0 0.0
      %7638 = vmatpush1.msra.mxu0 0.0
      %7639 = vmatprep.subr.mxu0 0.0
      %7640 = vmatpush1.msra.mxu0 0.0
      %7641 = vmatprep.subr.mxu0 0.0
      %7642 = vmatpush1.msra.mxu0 0.0
      %7643 = vmatprep.mubr.f32.mxu0 0.0
      %7644 = vmatmul.mubr.f32.gmra.mrb[0].mxu0 %v3738
      %v7645 = vpop.f32.mrb[0].mxu0
      %v7646 = vadd.f32 %v3729, %v7645
      %v7647 = vpop.f32.mrb[0].mxu0
      %v7648 = vadd.f32 %v3729, %v7647
      %7649 = vmatprep.mubr.f32.mxu0 0.0
      %7650 = vmatmul.mubr.f32.gmra.mrb[0].mxu0 %v3741
      %v7651 = vpop.f32.mrb[0].mxu0
      %v7652 = vadd.f32 %v3730, %v7651
      %v7653 = vpop.f32.mrb[0].mxu0
      %v7654 = vadd.f32 %v3730, %v7653
      %7655 = vmatprep.mubr.f32.mxu0 0.0
      %7656 = vmatmul.mubr.f32.gmra.mrb[0].mxu0 %v3744
      %v7657 = vpop.f32.mrb[0].mxu0
      %v7658 = vadd.f32 %v3731, %v7657
      %v7659 = vpop.f32.mrb[0].mxu0
      %v7660 = vadd.f32 %v3731, %v7659
      %7661 = vmatprep.mubr.f32.mxu0 0.0
      %7662 = vmatmul.mubr.f32.gmra.mrb[0].mxu0 %v3747
      %v7663 = vpop.f32.mrb[0].mxu0
      %v7664 = vadd.f32 %v3732, %v7663
      %v7665 = vpop.f32.mrb[0].mxu0
      %v7666 = vadd.f32 %v3732, %v7665
      %7667 = vmatprep.mubr.f32.mxu0 0.0
      %7668 = vmatmul.mubr.f32.gmra.mrb[0].mxu0 %v3750
      %v7669 = vpop.f32.mrb[0].mxu0
      %v7670 = vadd.f32 %v3733, %v7669
      %v7671 = vpop.f32.mrb[0].mxu0
      %v7672 = vadd.f32 %v3733, %v7671
      %7673 = vmatprep.mubr.f32.mxu0 0.0
      %7674 = vmatmul.mubr.f32.gmra.mrb[0].mxu0 %v3753
      %v7675 = vpop.f32.mrb[0].mxu0
      %v7676 = vadd.f32 %v3734, %v7675
      %v7677 = vpop.f32.mrb[0].mxu0
      %v7678 = vadd.f32 %v3734, %v7677
      %7679 = vmatprep.mubr.f32.mxu0 0.0
      %7680 = vmatmul.mubr.f32.gmra.mrb[0].mxu0 %v3756
      %v7681 = vpop.f32.mrb[0].mxu0
      %v7682 = vadd.f32 %v3735, %v7681
      %v7683 = vpop.f32.mrb[0].mxu0
      %v7684 = vadd.f32 %v3735, %v7683
      %7685 = vmatprep.mubr.f32.mxu0 0.0
      %7686 = vmatmul.mubr.f32.gmra.mrb[0].mxu0 %v3759
      %v7687 = vpop.f32.mrb[0].mxu0
      %v7688 = vadd.f32 %v3736, %v7687
      %v7689 = vpop.f32.mrb[0].mxu0
      %v7690 = vadd.f32 %v3736, %v7689
      %7691 = vdwg.mxu0
      %v7692 = vmul.f32 %v7418, %v7646
      %v7693 = vmul.f32 %v7419, %v7648
      %v7694 = vmul.f32 %v7420, %v7652
      %v7695 = vmul.f32 %v7421, %v7654
      %v7696 = vmul.f32 %v7422, %v7658
      %v7697 = vmul.f32 %v7423, %v7660
      %v7698 = vmul.f32 %v7424, %v7664
      %v7699 = vmul.f32 %v7425, %v7666
      %v7700 = vmul.f32 %v7426, %v7670
      %v7701 = vmul.f32 %v7427, %v7672
      %v7702 = vmul.f32 %v7428, %v7676
      %v7703 = vmul.f32 %v7429, %v7678
      %v7704 = vmul.f32 %v7430, %v7682
      %v7705 = vmul.f32 %v7431, %v7684
      %v7706 = vmul.f32 %v7432, %v7688
      %v7707 = vmul.f32 %v7433, %v7690
      %7708 = vmatprep.subr.mxu0 %v7564
      %7709 = vmatpush1.msra.mxu0 %v7563
      %7710 = vmatprep.subr.mxu0 %v7566
      %7711 = vmatpush1.msra.mxu0 %v7565
      %7712 = vmatprep.subr.mxu0 %v7568
      %7713 = vmatpush1.msra.mxu0 %v7567
      %7714 = vmatprep.subr.mxu0 %v7570
      %7715 = vmatpush1.msra.mxu0 %v7569
      %7716 = vmatprep.subr.mxu0 %v7572
      %7717 = vmatpush1.msra.mxu0 %v7571
      %7718 = vmatprep.subr.mxu0 %v7574
      %7719 = vmatpush1.msra.mxu0 %v7573
      %7720 = vmatprep.subr.mxu0 %v7576
      %7721 = vmatpush1.msra.mxu0 %v7575
      %7722 = vmatprep.subr.mxu0 %v7578
      %7723 = vmatpush1.msra.mxu0 %v7577
      %7724 = vmatprep.subr.mxu0 0.0
      %7725 = vmatpush1.msra.mxu0 0.0
      %7726 = vmatprep.subr.mxu0 0.0
      %7727 = vmatpush1.msra.mxu0 0.0
      %7728 = vmatprep.subr.mxu0 0.0
      %7729 = vmatpush1.msra.mxu0 0.0
      %7730 = vmatprep.subr.mxu0 0.0
      %7731 = vmatpush1.msra.mxu0 0.0
      %7732 = vmatprep.subr.mxu0 0.0
      %7733 = vmatpush1.msra.mxu0 0.0
      %7734 = vmatprep.subr.mxu0 0.0
      %7735 = vmatpush1.msra.mxu0 0.0
      %7736 = vmatprep.subr.mxu0 0.0
      %7737 = vmatpush1.msra.mxu0 0.0
      %7738 = vmatprep.subr.mxu0 0.0
      %7739 = vmatpush1.msra.mxu0 0.0
      %7740 = vmatprep.subr.mxu0 0.0
      %7741 = vmatpush1.msra.mxu0 0.0
      %7742 = vmatprep.subr.mxu0 0.0
      %7743 = vmatpush1.msra.mxu0 0.0
      %7744 = vmatprep.subr.mxu0 0.0
      %7745 = vmatpush1.msra.mxu0 0.0
      %7746 = vmatprep.subr.mxu0 0.0
      %7747 = vmatpush1.msra.mxu0 0.0
      %7748 = vmatprep.subr.mxu0 0.0
      %7749 = vmatpush1.msra.mxu0 0.0
      %7750 = vmatprep.subr.mxu0 0.0
      %7751 = vmatpush1.msra.mxu0 0.0
      %7752 = vmatprep.subr.mxu0 0.0
      %7753 = vmatpush1.msra.mxu0 0.0
      %7754 = vmatprep.subr.mxu0 0.0
      %7755 = vmatpush1.msra.mxu0 0.0
      %7756 = vmatprep.subr.mxu0 0.0
      %7757 = vmatpush1.msra.mxu0 0.0
      %7758 = vmatprep.subr.mxu0 0.0
      %7759 = vmatpush1.msra.mxu0 0.0
      %7760 = vmatprep.subr.mxu0 0.0
      %7761 = vmatpush1.msra.mxu0 0.0
      %7762 = vmatprep.subr.mxu0 0.0
      %7763 = vmatpush1.msra.mxu0 0.0
      %7764 = vmatprep.subr.mxu0 0.0
      %7765 = vmatpush1.msra.mxu0 0.0
      %7766 = vmatprep.subr.mxu0 0.0
      %7767 = vmatpush1.msra.mxu0 0.0
      %7768 = vmatprep.subr.mxu0 0.0
      %7769 = vmatpush1.msra.mxu0 0.0
      %7770 = vmatprep.subr.mxu0 0.0
      %7771 = vmatpush1.msra.mxu0 0.0
      %7772 = vmatprep.mubr.f32.mxu0 0.0
      %7773 = vmatmul.mubr.f32.gmra.mrb[0].mxu0 %v4075
      %v7774 = vpop.f32.mrb[0].mxu0
      %v7775 = vadd.f32 0.0, %v7774
      %v7776 = vpop.f32.mrb[0].mxu0
      %v7777 = vadd.f32 0.0, %v7776
      %7778 = vmatprep.mubr.f32.mxu0 0.0
      %7779 = vmatmul.mubr.f32.gmra.mrb[0].mxu0 %v4078
      %v7780 = vpop.f32.mrb[0].mxu0
      %v7781 = vadd.f32 0.0, %v7780
      %v7782 = vpop.f32.mrb[0].mxu0
      %v7783 = vadd.f32 0.0, %v7782
      %7784 = vmatprep.mubr.f32.mxu0 0.0
      %7785 = vmatmul.mubr.f32.gmra.mrb[0].mxu0 %v4081
      %v7786 = vpop.f32.mrb[0].mxu0
      %v7787 = vadd.f32 0.0, %v7786
      %v7788 = vpop.f32.mrb[0].mxu0
      %v7789 = vadd.f32 0.0, %v7788
      %7790 = vmatprep.mubr.f32.mxu0 0.0
      %7791 = vmatmul.mubr.f32.gmra.mrb[0].mxu0 %v4084
      %v7792 = vpop.f32.mrb[0].mxu0
      %v7793 = vadd.f32 0.0, %v7792
      %v7794 = vpop.f32.mrb[0].mxu0
      %v7795 = vadd.f32 0.0, %v7794
      %7796 = vmatprep.mubr.f32.mxu0 0.0
      %7797 = vmatmul.mubr.f32.gmra.mrb[0].mxu0 %v4087
      %v7798 = vpop.f32.mrb[0].mxu0
      %v7799 = vadd.f32 0.0, %v7798
      %v7800 = vpop.f32.mrb[0].mxu0
      %v7801 = vadd.f32 0.0, %v7800
      %7802 = vmatprep.mubr.f32.mxu0 0.0
      %7803 = vmatmul.mubr.f32.gmra.mrb[0].mxu0 %v4090
      %v7804 = vpop.f32.mrb[0].mxu0
      %v7805 = vadd.f32 0.0, %v7804
      %v7806 = vpop.f32.mrb[0].mxu0
      %v7807 = vadd.f32 0.0, %v7806
      %7808 = vmatprep.mubr.f32.mxu0 0.0
      %7809 = vmatmul.mubr.f32.gmra.mrb[0].mxu0 %v4093
      %v7810 = vpop.f32.mrb[0].mxu0
      %v7811 = vadd.f32 0.0, %v7810
      %v7812 = vpop.f32.mrb[0].mxu0
      %v7813 = vadd.f32 0.0, %v7812
      %7814 = vmatprep.mubr.f32.mxu0 0.0
      %7815 = vmatmul.mubr.f32.gmra.mrb[0].mxu0 %v4096
      %v7816 = vpop.f32.mrb[0].mxu0
      %v7817 = vadd.f32 0.0, %v7816
      %v7818 = vpop.f32.mrb[0].mxu0
      %v7819 = vadd.f32 0.0, %v7818
      %7820 = vdwg.mxu0
      %v7821 = vmul.f32 %v7692, %v7775
      %v7822 = vmul.f32 %v7693, %v7777
      %v7823 = vmul.f32 %v7694, %v7781
      %v7824 = vmul.f32 %v7695, %v7783
      %v7825 = vmul.f32 %v7696, %v7787
      %v7826 = vmul.f32 %v7697, %v7789
      %v7827 = vmul.f32 %v7698, %v7793
      %v7828 = vmul.f32 %v7699, %v7795
      %v7829 = vmul.f32 %v7700, %v7799
      %v7830 = vmul.f32 %v7701, %v7801
      %v7831 = vmul.f32 %v7702, %v7805
      %v7832 = vmul.f32 %v7703, %v7807
      %v7833 = vmul.f32 %v7704, %v7811
      %v7834 = vmul.f32 %v7705, %v7813
      %v7835 = vmul.f32 %v7706, %v7817
      %v7836 = vmul.f32 %v7707, %v7819
      %v7837 = vadd.f32 %v7563, %v7821
      %v7838 = vadd.f32 %v7564, %v7822
      %v7839 = vadd.f32 %v7565, %v7823
      %v7840 = vadd.f32 %v7566, %v7824
      %v7841 = vadd.f32 %v7567, %v7825
      %v7842 = vadd.f32 %v7568, %v7826
      %v7843 = vadd.f32 %v7569, %v7827
      %v7844 = vadd.f32 %v7570, %v7828
      %v7845 = vadd.f32 %v7571, %v7829
      %v7846 = vadd.f32 %v7572, %v7830
      %v7847 = vadd.f32 %v7573, %v7831
      %v7848 = vadd.f32 %v7574, %v7832
      %v7849 = vadd.f32 %v7575, %v7833
      %v7850 = vadd.f32 %v7576, %v7834
      %v7851 = vadd.f32 %v7577, %v7835
      %v7852 = vadd.f32 %v7578, %v7836
      %7853 = vmatprep.subr.mxu0 %v7693
      %7854 = vmatpush1.msra.mxu0 %v7692
      %7855 = vmatprep.subr.mxu0 %v7695
      %7856 = vmatpush1.msra.mxu0 %v7694
      %7857 = vmatprep.subr.mxu0 %v7697
      %7858 = vmatpush1.msra.mxu0 %v7696
      %7859 = vmatprep.subr.mxu0 %v7699
      %7860 = vmatpush1.msra.mxu0 %v7698
      %7861 = vmatprep.subr.mxu0 %v7701
      %7862 = vmatpush1.msra.mxu0 %v7700
      %7863 = vmatprep.subr.mxu0 %v7703
      %7864 = vmatpush1.msra.mxu0 %v7702
      %7865 = vmatprep.subr.mxu0 %v7705
      %7866 = vmatpush1.msra.mxu0 %v7704
      %7867 = vmatprep.subr.mxu0 %v7707
      %7868 = vmatpush1.msra.mxu0 %v7706
      %7869 = vmatprep.subr.mxu0 0.0
      %7870 = vmatpush1.msra.mxu0 0.0
      %7871 = vmatprep.subr.mxu0 0.0
      %7872 = vmatpush1.msra.mxu0 0.0
      %7873 = vmatprep.subr.mxu0 0.0
      %7874 = vmatpush1.msra.mxu0 0.0
      %7875 = vmatprep.subr.mxu0 0.0
      %7876 = vmatpush1.msra.mxu0 0.0
      %7877 = vmatprep.subr.mxu0 0.0
      %7878 = vmatpush1.msra.mxu0 0.0
      %7879 = vmatprep.subr.mxu0 0.0
      %7880 = vmatpush1.msra.mxu0 0.0
      %7881 = vmatprep.subr.mxu0 0.0
      %7882 = vmatpush1.msra.mxu0 0.0
      %7883 = vmatprep.subr.mxu0 0.0
      %7884 = vmatpush1.msra.mxu0 0.0
      %7885 = vmatprep.subr.mxu0 0.0
      %7886 = vmatpush1.msra.mxu0 0.0
      %7887 = vmatprep.subr.mxu0 0.0
      %7888 = vmatpush1.msra.mxu0 0.0
      %7889 = vmatprep.subr.mxu0 0.0
      %7890 = vmatpush1.msra.mxu0 0.0
      %7891 = vmatprep.subr.mxu0 0.0
      %7892 = vmatpush1.msra.mxu0 0.0
      %7893 = vmatprep.subr.mxu0 0.0
      %7894 = vmatpush1.msra.mxu0 0.0
      %7895 = vmatprep.subr.mxu0 0.0
      %7896 = vmatpush1.msra.mxu0 0.0
      %7897 = vmatprep.subr.mxu0 0.0
      %7898 = vmatpush1.msra.mxu0 0.0
      %7899 = vmatprep.subr.mxu0 0.0
      %7900 = vmatpush1.msra.mxu0 0.0
      %7901 = vmatprep.subr.mxu0 0.0
      %7902 = vmatpush1.msra.mxu0 0.0
      %7903 = vmatprep.subr.mxu0 0.0
      %7904 = vmatpush1.msra.mxu0 0.0
      %7905 = vmatprep.subr.mxu0 0.0
      %7906 = vmatpush1.msra.mxu0 0.0
      %7907 = vmatprep.subr.mxu0 0.0
      %7908 = vmatpush1.msra.mxu0 0.0
      %7909 = vmatprep.subr.mxu0 0.0
      %7910 = vmatpush1.msra.mxu0 0.0
      %7911 = vmatprep.subr.mxu0 0.0
      %7912 = vmatpush1.msra.mxu0 0.0
      %7913 = vmatprep.subr.mxu0 0.0
      %7914 = vmatpush1.msra.mxu0 0.0
      %7915 = vmatprep.subr.mxu0 0.0
      %7916 = vmatpush1.msra.mxu0 0.0
      %7917 = vmatprep.mubr.f32.mxu0 0.0
      %7918 = vmatmul.mubr.f32.gmra.mrb[0].mxu0 %v4075
      %v7919 = vpop.f32.mrb[0].mxu0
      %v7920 = vadd.f32 %v4066, %v7919
      %v7921 = vpop.f32.mrb[0].mxu0
      %v7922 = vadd.f32 %v4066, %v7921
      %7923 = vmatprep.mubr.f32.mxu0 0.0
      %7924 = vmatmul.mubr.f32.gmra.mrb[0].mxu0 %v4078
      %v7925 = vpop.f32.mrb[0].mxu0
      %v7926 = vadd.f32 %v4067, %v7925
      %v7927 = vpop.f32.mrb[0].mxu0
      %v7928 = vadd.f32 %v4067, %v7927
      %7929 = vmatprep.mubr.f32.mxu0 0.0
      %7930 = vmatmul.mubr.f32.gmra.mrb[0].mxu0 %v4081
      %v7931 = vpop.f32.mrb[0].mxu0
      %v7932 = vadd.f32 %v4068, %v7931
      %v7933 = vpop.f32.mrb[0].mxu0
      %v7934 = vadd.f32 %v4068, %v7933
      %7935 = vmatprep.mubr.f32.mxu0 0.0
      %7936 = vmatmul.mubr.f32.gmra.mrb[0].mxu0 %v4084
      %v7937 = vpop.f32.mrb[0].mxu0
      %v7938 = vadd.f32 %v4069, %v7937
      %v7939 = vpop.f32.mrb[0].mxu0
      %v7940 = vadd.f32 %v4069, %v7939
      %7941 = vmatprep.mubr.f32.mxu0 0.0
      %7942 = vmatmul.mubr.f32.gmra.mrb[0].mxu0 %v4087
      %v7943 = vpop.f32.mrb[0].mxu0
      %v7944 = vadd.f32 %v4070, %v7943
      %v7945 = vpop.f32.mrb[0].mxu0
      %v7946 = vadd.f32 %v4070, %v7945
      %7947 = vmatprep.mubr.f32.mxu0 0.0
      %7948 = vmatmul.mubr.f32.gmra.mrb[0].mxu0 %v4090
      %v7949 = vpop.f32.mrb[0].mxu0
      %v7950 = vadd.f32 %v4071, %v7949
      %v7951 = vpop.f32.mrb[0].mxu0
      %v7952 = vadd.f32 %v4071, %v7951
      %7953 = vmatprep.mubr.f32.mxu0 0.0
      %7954 = vmatmul.mubr.f32.gmra.mrb[0].mxu0 %v4093
      %v7955 = vpop.f32.mrb[0].mxu0
      %v7956 = vadd.f32 %v4072, %v7955
      %v7957 = vpop.f32.mrb[0].mxu0
      %v7958 = vadd.f32 %v4072, %v7957
      %7959 = vmatprep.mubr.f32.mxu0 0.0
      %7960 = vmatmul.mubr.f32.gmra.mrb[0].mxu0 %v4096
      %v7961 = vpop.f32.mrb[0].mxu0
      %v7962 = vadd.f32 %v4073, %v7961
      %v7963 = vpop.f32.mrb[0].mxu0
      %v7964 = vadd.f32 %v4073, %v7963
      %7965 = vdwg.mxu0
      %v7966 = vmul.f32 %v7692, %v7920
      %v7967 = vmul.f32 %v7693, %v7922
      %v7968 = vmul.f32 %v7694, %v7926
      %v7969 = vmul.f32 %v7695, %v7928
      %v7970 = vmul.f32 %v7696, %v7932
      %v7971 = vmul.f32 %v7697, %v7934
      %v7972 = vmul.f32 %v7698, %v7938
      %v7973 = vmul.f32 %v7699, %v7940
      %v7974 = vmul.f32 %v7700, %v7944
      %v7975 = vmul.f32 %v7701, %v7946
      %v7976 = vmul.f32 %v7702, %v7950
      %v7977 = vmul.f32 %v7703, %v7952
      %v7978 = vmul.f32 %v7704, %v7956
      %v7979 = vmul.f32 %v7705, %v7958
      %v7980 = vmul.f32 %v7706, %v7962
      %v7981 = vmul.f32 %v7707, %v7964
      %7982 = vmatprep.subr.mxu0 %v7838
      %7983 = vmatpush1.msra.mxu0 %v7837
      %7984 = vmatprep.subr.mxu0 %v7840
      %7985 = vmatpush1.msra.mxu0 %v7839
      %7986 = vmatprep.subr.mxu0 %v7842
      %7987 = vmatpush1.msra.mxu0 %v7841
      %7988 = vmatprep.subr.mxu0 %v7844
      %7989 = vmatpush1.msra.mxu0 %v7843
      %7990 = vmatprep.subr.mxu0 %v7846
      %7991 = vmatpush1.msra.mxu0 %v7845
      %7992 = vmatprep.subr.mxu0 %v7848
      %7993 = vmatpush1.msra.mxu0 %v7847
      %7994 = vmatprep.subr.mxu0 %v7850
      %7995 = vmatpush1.msra.mxu0 %v7849
      %7996 = vmatprep.subr.mxu0 %v7852
      %7997 = vmatpush1.msra.mxu0 %v7851
      %7998 = vmatprep.subr.mxu0 0.0
      %7999 = vmatpush1.msra.mxu0 0.0
      %8000 = vmatprep.subr.mxu0 0.0
      %8001 = vmatpush1.msra.mxu0 0.0
      %8002 = vmatprep.subr.mxu0 0.0
      %8003 = vmatpush1.msra.mxu0 0.0
      %8004 = vmatprep.subr.mxu0 0.0
      %8005 = vmatpush1.msra.mxu0 0.0
      %8006 = vmatprep.subr.mxu0 0.0
      %8007 = vmatpush1.msra.mxu0 0.0
      %8008 = vmatprep.subr.mxu0 0.0
      %8009 = vmatpush1.msra.mxu0 0.0
      %8010 = vmatprep.subr.mxu0 0.0
      %8011 = vmatpush1.msra.mxu0 0.0
      %8012 = vmatprep.subr.mxu0 0.0
      %8013 = vmatpush1.msra.mxu0 0.0
      %8014 = vmatprep.subr.mxu0 0.0
      %8015 = vmatpush1.msra.mxu0 0.0
      %8016 = vmatprep.subr.mxu0 0.0
      %8017 = vmatpush1.msra.mxu0 0.0
      %8018 = vmatprep.subr.mxu0 0.0
      %8019 = vmatpush1.msra.mxu0 0.0
      %8020 = vmatprep.subr.mxu0 0.0
      %8021 = vmatpush1.msra.mxu0 0.0
      %8022 = vmatprep.subr.mxu0 0.0
      %8023 = vmatpush1.msra.mxu0 0.0
      %8024 = vmatprep.subr.mxu0 0.0
      %8025 = vmatpush1.msra.mxu0 0.0
      %8026 = vmatprep.subr.mxu0 0.0
      %8027 = vmatpush1.msra.mxu0 0.0
      %8028 = vmatprep.subr.mxu0 0.0
      %8029 = vmatpush1.msra.mxu0 0.0
      %8030 = vmatprep.subr.mxu0 0.0
      %8031 = vmatpush1.msra.mxu0 0.0
      %8032 = vmatprep.subr.mxu0 0.0
      %8033 = vmatpush1.msra.mxu0 0.0
      %8034 = vmatprep.subr.mxu0 0.0
      %8035 = vmatpush1.msra.mxu0 0.0
      %8036 = vmatprep.subr.mxu0 0.0
      %8037 = vmatpush1.msra.mxu0 0.0
      %8038 = vmatprep.subr.mxu0 0.0
      %8039 = vmatpush1.msra.mxu0 0.0
      %8040 = vmatprep.subr.mxu0 0.0
      %8041 = vmatpush1.msra.mxu0 0.0
      %8042 = vmatprep.subr.mxu0 0.0
      %8043 = vmatpush1.msra.mxu0 0.0
      %8044 = vmatprep.subr.mxu0 0.0
      %8045 = vmatpush1.msra.mxu0 0.0
      %8046 = vmatprep.mubr.f32.mxu0 0.0
      %8047 = vmatmul.mubr.f32.gmra.mrb[0].mxu0 %v4410
      %v8048 = vpop.f32.mrb[0].mxu0
      %v8049 = vadd.f32 0.0, %v8048
      %v8050 = vpop.f32.mrb[0].mxu0
      %v8051 = vadd.f32 0.0, %v8050
      %8052 = vmatprep.mubr.f32.mxu0 0.0
      %8053 = vmatmul.mubr.f32.gmra.mrb[0].mxu0 %v4413
      %v8054 = vpop.f32.mrb[0].mxu0
      %v8055 = vadd.f32 0.0, %v8054
      %v8056 = vpop.f32.mrb[0].mxu0
      %v8057 = vadd.f32 0.0, %v8056
      %8058 = vmatprep.mubr.f32.mxu0 0.0
      %8059 = vmatmul.mubr.f32.gmra.mrb[0].mxu0 %v4078
      %v8060 = vpop.f32.mrb[0].mxu0
      %v8061 = vadd.f32 0.0, %v8060
      %v8062 = vpop.f32.mrb[0].mxu0
      %v8063 = vadd.f32 0.0, %v8062
      %8064 = vmatprep.mubr.f32.mxu0 0.0
      %8065 = vmatmul.mubr.f32.gmra.mrb[0].mxu0 %v4416
      %v8066 = vpop.f32.mrb[0].mxu0
      %v8067 = vadd.f32 0.0, %v8066
      %v8068 = vpop.f32.mrb[0].mxu0
      %v8069 = vadd.f32 0.0, %v8068
      %8070 = vmatprep.mubr.f32.mxu0 0.0
      %8071 = vmatmul.mubr.f32.gmra.mrb[0].mxu0 %v4419
      %v8072 = vpop.f32.mrb[0].mxu0
      %v8073 = vadd.f32 0.0, %v8072
      %v8074 = vpop.f32.mrb[0].mxu0
      %v8075 = vadd.f32 0.0, %v8074
      %8076 = vmatprep.mubr.f32.mxu0 0.0
      %8077 = vmatmul.mubr.f32.gmra.mrb[0].mxu0 %v4422
      %v8078 = vpop.f32.mrb[0].mxu0
      %v8079 = vadd.f32 0.0, %v8078
      %v8080 = vpop.f32.mrb[0].mxu0
      %v8081 = vadd.f32 0.0, %v8080
      %8082 = vmatprep.mubr.f32.mxu0 0.0
      %8083 = vmatmul.mubr.f32.gmra.mrb[0].mxu0 %v4425
      %v8084 = vpop.f32.mrb[0].mxu0
      %v8085 = vadd.f32 0.0, %v8084
      %v8086 = vpop.f32.mrb[0].mxu0
      %v8087 = vadd.f32 0.0, %v8086
      %8088 = vmatprep.mubr.f32.mxu0 0.0
      %8089 = vmatmul.mubr.f32.gmra.mrb[0].mxu0 %v4428
      %v8090 = vpop.f32.mrb[0].mxu0
      %v8091 = vadd.f32 0.0, %v8090
      %v8092 = vpop.f32.mrb[0].mxu0
      %v8093 = vadd.f32 0.0, %v8092
      %8094 = vdwg.mxu0
      %v8095 = vmul.f32 %v7966, %v8049
      %v8096 = vmul.f32 %v7967, %v8051
      %v8097 = vmul.f32 %v7968, %v8055
      %v8098 = vmul.f32 %v7969, %v8057
      %v8099 = vmul.f32 %v7970, %v8061
      %v8100 = vmul.f32 %v7971, %v8063
      %v8101 = vmul.f32 %v7972, %v8067
      %v8102 = vmul.f32 %v7973, %v8069
      %v8103 = vmul.f32 %v7974, %v8073
      %v8104 = vmul.f32 %v7975, %v8075
      %v8105 = vmul.f32 %v7976, %v8079
      %v8106 = vmul.f32 %v7977, %v8081
      %v8107 = vmul.f32 %v7978, %v8085
      %v8108 = vmul.f32 %v7979, %v8087
      %v8109 = vmul.f32 %v7980, %v8091
      %v8110 = vmul.f32 %v7981, %v8093
      %v8111 = vadd.f32 %v7837, %v8095
      %v8112 = vadd.f32 %v7838, %v8096
      %v8113 = vadd.f32 %v7839, %v8097
      %v8114 = vadd.f32 %v7840, %v8098
      %v8115 = vadd.f32 %v7841, %v8099
      %v8116 = vadd.f32 %v7842, %v8100
      %v8117 = vadd.f32 %v7843, %v8101
      %v8118 = vadd.f32 %v7844, %v8102
      %v8119 = vadd.f32 %v7845, %v8103
      %v8120 = vadd.f32 %v7846, %v8104
      %v8121 = vadd.f32 %v7847, %v8105
      %v8122 = vadd.f32 %v7848, %v8106
      %v8123 = vadd.f32 %v7849, %v8107
      %v8124 = vadd.f32 %v7850, %v8108
      %v8125 = vadd.f32 %v7851, %v8109
      %v8126 = vadd.f32 %v7852, %v8110
      %8127 = vmatprep.subr.mxu0 %v7967
      %8128 = vmatpush1.msra.mxu0 %v7966
      %8129 = vmatprep.subr.mxu0 %v7969
      %8130 = vmatpush1.msra.mxu0 %v7968
      %8131 = vmatprep.subr.mxu0 %v7971
      %8132 = vmatpush1.msra.mxu0 %v7970
      %8133 = vmatprep.subr.mxu0 %v7973
      %8134 = vmatpush1.msra.mxu0 %v7972
      %8135 = vmatprep.subr.mxu0 %v7975
      %8136 = vmatpush1.msra.mxu0 %v7974
      %8137 = vmatprep.subr.mxu0 %v7977
      %8138 = vmatpush1.msra.mxu0 %v7976
      %8139 = vmatprep.subr.mxu0 %v7979
      %8140 = vmatpush1.msra.mxu0 %v7978
      %8141 = vmatprep.subr.mxu0 %v7981
      %8142 = vmatpush1.msra.mxu0 %v7980
      %8143 = vmatprep.subr.mxu0 0.0
      %8144 = vmatpush1.msra.mxu0 0.0
      %8145 = vmatprep.subr.mxu0 0.0
      %8146 = vmatpush1.msra.mxu0 0.0
      %8147 = vmatprep.subr.mxu0 0.0
      %8148 = vmatpush1.msra.mxu0 0.0
      %8149 = vmatprep.subr.mxu0 0.0
      %8150 = vmatpush1.msra.mxu0 0.0
      %8151 = vmatprep.subr.mxu0 0.0
      %8152 = vmatpush1.msra.mxu0 0.0
      %8153 = vmatprep.subr.mxu0 0.0
      %8154 = vmatpush1.msra.mxu0 0.0
      %8155 = vmatprep.subr.mxu0 0.0
      %8156 = vmatpush1.msra.mxu0 0.0
      %8157 = vmatprep.subr.mxu0 0.0
      %8158 = vmatpush1.msra.mxu0 0.0
      %8159 = vmatprep.subr.mxu0 0.0
      %8160 = vmatpush1.msra.mxu0 0.0
      %8161 = vmatprep.subr.mxu0 0.0
      %8162 = vmatpush1.msra.mxu0 0.0
      %8163 = vmatprep.subr.mxu0 0.0
      %8164 = vmatpush1.msra.mxu0 0.0
      %8165 = vmatprep.subr.mxu0 0.0
      %8166 = vmatpush1.msra.mxu0 0.0
      %8167 = vmatprep.subr.mxu0 0.0
      %8168 = vmatpush1.msra.mxu0 0.0
      %8169 = vmatprep.subr.mxu0 0.0
      %8170 = vmatpush1.msra.mxu0 0.0
      %8171 = vmatprep.subr.mxu0 0.0
      %8172 = vmatpush1.msra.mxu0 0.0
      %8173 = vmatprep.subr.mxu0 0.0
      %8174 = vmatpush1.msra.mxu0 0.0
      %8175 = vmatprep.subr.mxu0 0.0
      %8176 = vmatpush1.msra.mxu0 0.0
      %8177 = vmatprep.subr.mxu0 0.0
      %8178 = vmatpush1.msra.mxu0 0.0
      %8179 = vmatprep.subr.mxu0 0.0
      %8180 = vmatpush1.msra.mxu0 0.0
      %8181 = vmatprep.subr.mxu0 0.0
      %8182 = vmatpush1.msra.mxu0 0.0
      %8183 = vmatprep.subr.mxu0 0.0
      %8184 = vmatpush1.msra.mxu0 0.0
      %8185 = vmatprep.subr.mxu0 0.0
      %8186 = vmatpush1.msra.mxu0 0.0
      %8187 = vmatprep.subr.mxu0 0.0
      %8188 = vmatpush1.msra.mxu0 0.0
      %8189 = vmatprep.subr.mxu0 0.0
      %8190 = vmatpush1.msra.mxu0 0.0
      %8191 = vmatprep.mubr.f32.mxu0 0.0
      %8192 = vmatmul.mubr.f32.gmra.mrb[0].mxu0 %v4410
      %v8193 = vpop.f32.mrb[0].mxu0
      %v8194 = vadd.f32 %v4401, %v8193
      %v8195 = vpop.f32.mrb[0].mxu0
      %v8196 = vadd.f32 %v4401, %v8195
      %8197 = vmatprep.mubr.f32.mxu0 0.0
      %8198 = vmatmul.mubr.f32.gmra.mrb[0].mxu0 %v4413
      %v8199 = vpop.f32.mrb[0].mxu0
      %v8200 = vadd.f32 %v4402, %v8199
      %v8201 = vpop.f32.mrb[0].mxu0
      %v8202 = vadd.f32 %v4402, %v8201
      %8203 = vmatprep.mubr.f32.mxu0 0.0
      %8204 = vmatmul.mubr.f32.gmra.mrb[0].mxu0 %v4078
      %v8205 = vpop.f32.mrb[0].mxu0
      %v8206 = vadd.f32 %v4403, %v8205
      %v8207 = vpop.f32.mrb[0].mxu0
      %v8208 = vadd.f32 %v4403, %v8207
      %8209 = vmatprep.mubr.f32.mxu0 0.0
      %8210 = vmatmul.mubr.f32.gmra.mrb[0].mxu0 %v4416
      %v8211 = vpop.f32.mrb[0].mxu0
      %v8212 = vadd.f32 %v4404, %v8211
      %v8213 = vpop.f32.mrb[0].mxu0
      %v8214 = vadd.f32 %v4404, %v8213
      %8215 = vmatprep.mubr.f32.mxu0 0.0
      %8216 = vmatmul.mubr.f32.gmra.mrb[0].mxu0 %v4419
      %v8217 = vpop.f32.mrb[0].mxu0
      %v8218 = vadd.f32 %v4405, %v8217
      %v8219 = vpop.f32.mrb[0].mxu0
      %v8220 = vadd.f32 %v4405, %v8219
      %8221 = vmatprep.mubr.f32.mxu0 0.0
      %8222 = vmatmul.mubr.f32.gmra.mrb[0].mxu0 %v4422
      %v8223 = vpop.f32.mrb[0].mxu0
      %v8224 = vadd.f32 %v4406, %v8223
      %v8225 = vpop.f32.mrb[0].mxu0
      %v8226 = vadd.f32 %v4406, %v8225
      %8227 = vmatprep.mubr.f32.mxu0 0.0
      %8228 = vmatmul.mubr.f32.gmra.mrb[0].mxu0 %v4425
      %v8229 = vpop.f32.mrb[0].mxu0
      %v8230 = vadd.f32 %v4407, %v8229
      %v8231 = vpop.f32.mrb[0].mxu0
      %v8232 = vadd.f32 %v4407, %v8231
      %8233 = vmatprep.mubr.f32.mxu0 0.0
      %8234 = vmatmul.mubr.f32.gmra.mrb[0].mxu0 %v4428
      %v8235 = vpop.f32.mrb[0].mxu0
      %v8236 = vadd.f32 %v4408, %v8235
      %v8237 = vpop.f32.mrb[0].mxu0
      %v8238 = vadd.f32 %v4408, %v8237
      %8239 = vdwg.mxu0
      %v8240 = vmul.f32 %v7966, %v8194
      %v8241 = vmul.f32 %v7967, %v8196
      %v8242 = vmul.f32 %v7968, %v8200
      %v8243 = vmul.f32 %v7969, %v8202
      %v8244 = vmul.f32 %v7970, %v8206
      %v8245 = vmul.f32 %v7971, %v8208
      %v8246 = vmul.f32 %v7972, %v8212
      %v8247 = vmul.f32 %v7973, %v8214
      %v8248 = vmul.f32 %v7974, %v8218
      %v8249 = vmul.f32 %v7975, %v8220
      %v8250 = vmul.f32 %v7976, %v8224
      %v8251 = vmul.f32 %v7977, %v8226
      %v8252 = vmul.f32 %v7978, %v8230
      %v8253 = vmul.f32 %v7979, %v8232
      %v8254 = vmul.f32 %v7980, %v8236
      %v8255 = vmul.f32 %v7981, %v8238
      %8256 = vmatprep.subr.mxu0 %v8112
      %8257 = vmatpush1.msra.mxu0 %v8111
      %8258 = vmatprep.subr.mxu0 %v8114
      %8259 = vmatpush1.msra.mxu0 %v8113
      %8260 = vmatprep.subr.mxu0 %v8116
      %8261 = vmatpush1.msra.mxu0 %v8115
      %8262 = vmatprep.subr.mxu0 %v8118
      %8263 = vmatpush1.msra.mxu0 %v8117
      %8264 = vmatprep.subr.mxu0 %v8120
      %8265 = vmatpush1.msra.mxu0 %v8119
      %8266 = vmatprep.subr.mxu0 %v8122
      %8267 = vmatpush1.msra.mxu0 %v8121
      %8268 = vmatprep.subr.mxu0 %v8124
      %8269 = vmatpush1.msra.mxu0 %v8123
      %8270 = vmatprep.subr.mxu0 %v8126
      %8271 = vmatpush1.msra.mxu0 %v8125
      %8272 = vmatprep.subr.mxu0 0.0
      %8273 = vmatpush1.msra.mxu0 0.0
      %8274 = vmatprep.subr.mxu0 0.0
      %8275 = vmatpush1.msra.mxu0 0.0
      %8276 = vmatprep.subr.mxu0 0.0
      %8277 = vmatpush1.msra.mxu0 0.0
      %8278 = vmatprep.subr.mxu0 0.0
      %8279 = vmatpush1.msra.mxu0 0.0
      %8280 = vmatprep.subr.mxu0 0.0
      %8281 = vmatpush1.msra.mxu0 0.0
      %8282 = vmatprep.subr.mxu0 0.0
      %8283 = vmatpush1.msra.mxu0 0.0
      %8284 = vmatprep.subr.mxu0 0.0
      %8285 = vmatpush1.msra.mxu0 0.0
      %8286 = vmatprep.subr.mxu0 0.0
      %8287 = vmatpush1.msra.mxu0 0.0
      %8288 = vmatprep.subr.mxu0 0.0
      %8289 = vmatpush1.msra.mxu0 0.0
      %8290 = vmatprep.subr.mxu0 0.0
      %8291 = vmatpush1.msra.mxu0 0.0
      %8292 = vmatprep.subr.mxu0 0.0
      %8293 = vmatpush1.msra.mxu0 0.0
      %8294 = vmatprep.subr.mxu0 0.0
      %8295 = vmatpush1.msra.mxu0 0.0
      %8296 = vmatprep.subr.mxu0 0.0
      %8297 = vmatpush1.msra.mxu0 0.0
      %8298 = vmatprep.subr.mxu0 0.0
      %8299 = vmatpush1.msra.mxu0 0.0
      %8300 = vmatprep.subr.mxu0 0.0
      %8301 = vmatpush1.msra.mxu0 0.0
      %8302 = vmatprep.subr.mxu0 0.0
      %8303 = vmatpush1.msra.mxu0 0.0
      %8304 = vmatprep.subr.mxu0 0.0
      %8305 = vmatpush1.msra.mxu0 0.0
      %8306 = vmatprep.subr.mxu0 0.0
      %8307 = vmatpush1.msra.mxu0 0.0
      %8308 = vmatprep.subr.mxu0 0.0
      %8309 = vmatpush1.msra.mxu0 0.0
      %8310 = vmatprep.subr.mxu0 0.0
      %8311 = vmatpush1.msra.mxu0 0.0
      %8312 = vmatprep.subr.mxu0 0.0
      %8313 = vmatpush1.msra.mxu0 0.0
      %8314 = vmatprep.subr.mxu0 0.0
      %8315 = vmatpush1.msra.mxu0 0.0
      %8316 = vmatprep.subr.mxu0 0.0
      %8317 = vmatpush1.msra.mxu0 0.0
      %8318 = vmatprep.subr.mxu0 0.0
      %8319 = vmatpush1.msra.mxu0 0.0
      %8320 = vmatprep.mubr.f32.mxu0 0.0
      %8321 = vmatmul.mubr.f32.gmra.mrb[0].mxu0 %v4726
      %v8322 = vpop.f32.mrb[0].mxu0
      %v8323 = vadd.f32 0.0, %v8322
      %v8324 = vpop.f32.mrb[0].mxu0
      %v8325 = vadd.f32 0.0, %v8324
      %8326 = vmatprep.mubr.f32.mxu0 0.0
      %8327 = vmatmul.mubr.f32.gmra.mrb[0].mxu0 %v4729
      %v8328 = vpop.f32.mrb[0].mxu0
      %v8329 = vadd.f32 0.0, %v8328
      %v8330 = vpop.f32.mrb[0].mxu0
      %v8331 = vadd.f32 0.0, %v8330
      %8332 = vmatprep.mubr.f32.mxu0 0.0
      %8333 = vmatmul.mubr.f32.gmra.mrb[0].mxu0 %v4732
      %v8334 = vpop.f32.mrb[0].mxu0
      %v8335 = vadd.f32 0.0, %v8334
      %v8336 = vpop.f32.mrb[0].mxu0
      %v8337 = vadd.f32 0.0, %v8336
      %8338 = vmatprep.mubr.f32.mxu0 0.0
      %8339 = vmatmul.mubr.f32.gmra.mrb[0].mxu0 %v4735
      %v8340 = vpop.f32.mrb[0].mxu0
      %v8341 = vadd.f32 0.0, %v8340
      %v8342 = vpop.f32.mrb[0].mxu0
      %v8343 = vadd.f32 0.0, %v8342
      %8344 = vmatprep.mubr.f32.mxu0 0.0
      %8345 = vmatmul.mubr.f32.gmra.mrb[0].mxu0 %v4078
      %v8346 = vpop.f32.mrb[0].mxu0
      %v8347 = vadd.f32 0.0, %v8346
      %v8348 = vpop.f32.mrb[0].mxu0
      %v8349 = vadd.f32 0.0, %v8348
      %8350 = vmatprep.mubr.f32.mxu0 0.0
      %8351 = vmatmul.mubr.f32.gmra.mrb[0].mxu0 %v4738
      %v8352 = vpop.f32.mrb[0].mxu0
      %v8353 = vadd.f32 0.0, %v8352
      %v8354 = vpop.f32.mrb[0].mxu0
      %v8355 = vadd.f32 0.0, %v8354
      %8356 = vmatprep.mubr.f32.mxu0 0.0
      %8357 = vmatmul.mubr.f32.gmra.mrb[0].mxu0 %v4741
      %v8358 = vpop.f32.mrb[0].mxu0
      %v8359 = vadd.f32 0.0, %v8358
      %v8360 = vpop.f32.mrb[0].mxu0
      %v8361 = vadd.f32 0.0, %v8360
      %8362 = vmatprep.mubr.f32.mxu0 0.0
      %8363 = vmatmul.mubr.f32.gmra.mrb[0].mxu0 %v4744
      %v8364 = vpop.f32.mrb[0].mxu0
      %v8365 = vadd.f32 0.0, %v8364
      %v8366 = vpop.f32.mrb[0].mxu0
      %v8367 = vadd.f32 0.0, %v8366
      %8368 = vdwg.mxu0
      %v8369 = vmul.f32 %v8240, %v8323
      %v8370 = vmul.f32 %v8241, %v8325
      %v8371 = vmul.f32 %v8242, %v8329
      %v8372 = vmul.f32 %v8243, %v8331
      %v8373 = vmul.f32 %v8244, %v8335
      %v8374 = vmul.f32 %v8245, %v8337
      %v8375 = vmul.f32 %v8246, %v8341
      %v8376 = vmul.f32 %v8247, %v8343
      %v8377 = vmul.f32 %v8248, %v8347
      %v8378 = vmul.f32 %v8249, %v8349
      %v8379 = vmul.f32 %v8250, %v8353
      %v8380 = vmul.f32 %v8251, %v8355
      %v8381 = vmul.f32 %v8252, %v8359
      %v8382 = vmul.f32 %v8253, %v8361
      %v8383 = vmul.f32 %v8254, %v8365
      %v8384 = vmul.f32 %v8255, %v8367
      %v8385 = vadd.f32 %v8111, %v8369
      %v8386 = vadd.f32 %v8112, %v8370
      %v8387 = vadd.f32 %v8113, %v8371
      %v8388 = vadd.f32 %v8114, %v8372
      %v8389 = vadd.f32 %v8115, %v8373
      %v8390 = vadd.f32 %v8116, %v8374
      %v8391 = vadd.f32 %v8117, %v8375
      %v8392 = vadd.f32 %v8118, %v8376
      %v8393 = vadd.f32 %v8119, %v8377
      %v8394 = vadd.f32 %v8120, %v8378
      %v8395 = vadd.f32 %v8121, %v8379
      %v8396 = vadd.f32 %v8122, %v8380
      %v8397 = vadd.f32 %v8123, %v8381
      %v8398 = vadd.f32 %v8124, %v8382
      %v8399 = vadd.f32 %v8125, %v8383
      %v8400 = vadd.f32 %v8126, %v8384
      %v8401 = vmul.f32 %v8385, %v6840
      %v8402 = vmul.f32 %v8386, %v6842
      %v8403 = vmul.f32 %v8387, %v6846
      %v8404 = vmul.f32 %v8388, %v6848
      %v8405 = vmul.f32 %v8389, %v6852
      %v8406 = vmul.f32 %v8390, %v6854
      %v8407 = vmul.f32 %v8391, %v6858
      %v8408 = vmul.f32 %v8392, %v6860
      %v8409 = vmul.f32 %v8393, %v6864
      %v8410 = vmul.f32 %v8394, %v6866
      %v8411 = vmul.f32 %v8395, %v6870
      %v8412 = vmul.f32 %v8396, %v6872
      %v8413 = vmul.f32 %v8397, %v6876
      %v8414 = vmul.f32 %v8398, %v6878
      %v8415 = vmul.f32 %v8399, %v6882
      %v8416 = vmul.f32 %v8400, %v6884
      %v8418 = vlaneseq
      %v8419 = vshrl.u32 %v8418, 7
      %v8420 = vsub.s32 0, %v8419
      %v8421 = vrot.slane %v5648, %v8420
      %v8423 = vmul.f32 %v6102, %v8421
      %v8424 = vmul.f32 %v6103, %v8421
      %v8425 = vmul.f32 %v6104, %v8421
      %v8426 = vmul.f32 %v6105, %v8421
      %v8427 = vmul.f32 %v6106, %v8421
      %v8428 = vmul.f32 %v6107, %v8421
      %v8429 = vmul.f32 %v6108, %v8421
      %v8430 = vmul.f32 %v6109, %v8421
      %v8432 = vsel %vm1768, %v8402, 0
      %v8435 = vsel %vm1768, %v8404, 0
      %v8438 = vsel %vm1768, %v8406, 0
      %v8441 = vsel %vm1768, %v8408, 0
      %v8444 = vsel %vm1768, %v8410, 0
      %v8447 = vsel %vm1768, %v8412, 0
      %v8450 = vsel %vm1768, %v8414, 0
      %v8453 = vsel %vm1768, %v8416, 0
      %8455 = vmatprep.subr.mxu0 0.0
      %8456 = vmatpush1.msra.mxu0 %v1039
      %8457 = vmatprep.subr.mxu0 0.0
      %8458 = vmatpush1.msra.mxu0 %v1040
      %8459 = vmatprep.subr.mxu0 0.0
      %8460 = vmatpush1.msra.mxu0 %v1041
      %8461 = vmatprep.subr.mxu0 0.0
      %8462 = vmatpush1.msra.mxu0 %v1042
      %8463 = vmatprep.subr.mxu0 0.0
      %8464 = vmatpush1.msra.mxu0 %v1043
      %8465 = vmatprep.subr.mxu0 0.0
      %8466 = vmatpush1.msra.mxu0 %v1044
      %8467 = vmatprep.subr.mxu0 0.0
      %8468 = vmatpush1.msra.mxu0 %v1045
      %8469 = vmatprep.subr.mxu0 0.0
      %8470 = vmatpush1.msra.mxu0 %v1046
      %8471 = vmatprep.subr.mxu0 0.0
      %8472 = vmatpush1.msra.mxu0 %v1047
      %8473 = vmatprep.subr.mxu0 0.0
      %8474 = vmatpush1.msra.mxu0 %v1048
      %8475 = vmatprep.subr.mxu0 0.0
      %8476 = vmatpush1.msra.mxu0 %v1049
      %8477 = vmatprep.subr.mxu0 0.0
      %8478 = vmatpush1.msra.mxu0 %v1050
      %8479 = vmatprep.subr.mxu0 0.0
      %8480 = vmatpush1.msra.mxu0 %v1051
      %8481 = vmatprep.subr.mxu0 0.0
      %8482 = vmatpush1.msra.mxu0 %v1052
      %8483 = vmatprep.subr.mxu0 0.0
      %8484 = vmatpush1.msra.mxu0 %v1053
      %8485 = vmatprep.subr.mxu0 0.0
      %8486 = vmatpush1.msra.mxu0 %v1054
      %8487 = vmatprep.subr.mxu0 0.0
      %8488 = vmatpush1.msra.mxu0 %v1055
      %8489 = vmatprep.subr.mxu0 0.0
      %8490 = vmatpush1.msra.mxu0 %v1056
      %8491 = vmatprep.subr.mxu0 0.0
      %8492 = vmatpush1.msra.mxu0 %v1057
      %8493 = vmatprep.subr.mxu0 0.0
      %8494 = vmatpush1.msra.mxu0 %v1058
      %8495 = vmatprep.subr.mxu0 0.0
      %8496 = vmatpush1.msra.mxu0 %v1059
      %8497 = vmatprep.subr.mxu0 0.0
      %8498 = vmatpush1.msra.mxu0 %v1060
      %8499 = vmatprep.subr.mxu0 0.0
      %8500 = vmatpush1.msra.mxu0 %v1061
      %8501 = vmatprep.subr.mxu0 0.0
      %8502 = vmatpush1.msra.mxu0 %v1062
      %8503 = vmatprep.subr.mxu0 0.0
      %8504 = vmatpush1.msra.mxu0 0.0
      %8505 = vmatprep.subr.mxu0 0.0
      %8506 = vmatpush1.msra.mxu0 0.0
      %8507 = vmatprep.subr.mxu0 0.0
      %8508 = vmatpush1.msra.mxu0 0.0
      %8509 = vmatprep.subr.mxu0 0.0
      %8510 = vmatpush1.msra.mxu0 0.0
      %8511 = vmatprep.subr.mxu0 0.0
      %8512 = vmatpush1.msra.mxu0 0.0
      %8513 = vmatprep.subr.mxu0 0.0
      %8514 = vmatpush1.msra.mxu0 0.0
      %8515 = vmatprep.subr.mxu0 0.0
      %8516 = vmatpush1.msra.mxu0 0.0
      %8517 = vmatprep.subr.mxu0 0.0
      %8518 = vmatpush1.msra.mxu0 0.0
      %8519 = vmatprep.mubr.f32.mxu0 %v8432
      %8520 = vmatmul.mubr.f32.gmra.mrb[0].mxu0 %v8401
      %v8521 = vpop.f32.mrb[0].mxu0
      %v8522 = vadd.f32 %v8423, %v8521
      %v8523 = vpop.f32.mrb[0].mxu0
      %8524 = vmatprep.mubr.f32.mxu0 %v8435
      %8525 = vmatmul.mubr.f32.gmra.mrb[0].mxu0 %v8403
      %v8526 = vpop.f32.mrb[0].mxu0
      %v8527 = vadd.f32 %v8424, %v8526
      %v8528 = vpop.f32.mrb[0].mxu0
      %8529 = vmatprep.mubr.f32.mxu0 %v8438
      %8530 = vmatmul.mubr.f32.gmra.mrb[0].mxu0 %v8405
      %v8531 = vpop.f32.mrb[0].mxu0
      %v8532 = vadd.f32 %v8425, %v8531
      %v8533 = vpop.f32.mrb[0].mxu0
      %8534 = vmatprep.mubr.f32.mxu0 %v8441
      %8535 = vmatmul.mubr.f32.gmra.mrb[0].mxu0 %v8407
      %v8536 = vpop.f32.mrb[0].mxu0
      %v8537 = vadd.f32 %v8426, %v8536
      %v8538 = vpop.f32.mrb[0].mxu0
      %8539 = vmatprep.mubr.f32.mxu0 %v8444
      %8540 = vmatmul.mubr.f32.gmra.mrb[0].mxu0 %v8409
      %v8541 = vpop.f32.mrb[0].mxu0
      %v8542 = vadd.f32 %v8427, %v8541
      %v8543 = vpop.f32.mrb[0].mxu0
      %8544 = vmatprep.mubr.f32.mxu0 %v8447
      %8545 = vmatmul.mubr.f32.gmra.mrb[0].mxu0 %v8411
      %v8546 = vpop.f32.mrb[0].mxu0
      %v8547 = vadd.f32 %v8428, %v8546
      %v8548 = vpop.f32.mrb[0].mxu0
      %8549 = vmatprep.mubr.f32.mxu0 %v8450
      %8550 = vmatmul.mubr.f32.gmra.mrb[0].mxu0 %v8413
      %v8551 = vpop.f32.mrb[0].mxu0
      %v8552 = vadd.f32 %v8429, %v8551
      %v8553 = vpop.f32.mrb[0].mxu0
      %8554 = vmatprep.mubr.f32.mxu0 %v8453
      %8555 = vmatmul.mubr.f32.gmra.mrb[0].mxu0 %v8415
      %v8556 = vpop.f32.mrb[0].mxu0
      %v8557 = vadd.f32 %v8430, %v8556
      %v8558 = vpop.f32.mrb[0].mxu0
      %8559 = vdwg.mxu0
      %v8560 = vxor.u32 %v5593, 2147483648
      %v8561 = vxor.u32 %v5598, 2147483648
      %v8562 = vxor.u32 %v5603, 2147483648
      %v8563 = vxor.u32 %v5608, 2147483648
      %v8564 = vxor.u32 %v5613, 2147483648
      %v8565 = vxor.u32 %v5618, 2147483648
      %v8566 = vxor.u32 %v5623, 2147483648
      %v8567 = vxor.u32 %v5628, 2147483648
      %v8568 = vmul.f32 %v8560, 1.442695
      %v8569 = vpow.pop %v8568
      %v8570 = vmul.f32 %v8561, 1.442695
      %v8571 = vpow.pop %v8570
      %v8572 = vmul.f32 %v8562, 1.442695
      %v8573 = vpow.pop %v8572
      %v8574 = vmul.f32 %v8563, 1.442695
      %v8575 = vpow.pop %v8574
      %v8576 = vmul.f32 %v8564, 1.442695
      %v8577 = vpow.pop %v8576
      %v8578 = vmul.f32 %v8565, 1.442695
      %v8579 = vpow.pop %v8578
      %v8580 = vmul.f32 %v8566, 1.442695
      %v8581 = vpow.pop %v8580
      %v8582 = vmul.f32 %v8567, 1.442695
      %v8583 = vpow.pop %v8582
      %v8584 = vadd.f32 %v8569, 1.0
      %v8585 = vadd.f32 %v8571, 1.0
      %v8586 = vadd.f32 %v8573, 1.0
      %v8587 = vadd.f32 %v8575, 1.0
      %v8588 = vadd.f32 %v8577, 1.0
      %v8589 = vadd.f32 %v8579, 1.0
      %v8590 = vadd.f32 %v8581, 1.0
      %v8591 = vadd.f32 %v8583, 1.0
      %v8592 = vrcp.pop %v8584
      %v8593 = vmul.f32 1.0, %v8592
      %v8594 = vrcp.pop %v8585
      %v8595 = vmul.f32 1.0, %v8594
      %v8596 = vrcp.pop %v8586
      %v8597 = vmul.f32 1.0, %v8596
      %v8598 = vrcp.pop %v8587
      %v8599 = vmul.f32 1.0, %v8598
      %v8600 = vrcp.pop %v8588
      %v8601 = vmul.f32 1.0, %v8600
      %v8602 = vrcp.pop %v8589
      %v8603 = vmul.f32 1.0, %v8602
      %v8604 = vrcp.pop %v8590
      %v8605 = vmul.f32 1.0, %v8604
      %v8606 = vrcp.pop %v8591
      %v8607 = vmul.f32 1.0, %v8606
      %v8608 = vmul.f32 %v5593, %v8593
      %v8609 = vmul.f32 %v5598, %v8595
      %v8610 = vmul.f32 %v5603, %v8597
      %v8611 = vmul.f32 %v5608, %v8599
      %v8612 = vmul.f32 %v5613, %v8601
      %v8613 = vmul.f32 %v5618, %v8603
      %v8614 = vmul.f32 %v5623, %v8605
      %v8615 = vmul.f32 %v5628, %v8607
      %v8616 = vmul.f32 %v8522, %v8608
      %v8617 = vmul.f32 %v8527, %v8609
      %v8618 = vmul.f32 %v8532, %v8610
      %v8619 = vmul.f32 %v8537, %v8611
      %v8620 = vmul.f32 %v8542, %v8612
      %v8621 = vmul.f32 %v8547, %v8613
      %v8622 = vmul.f32 %v8552, %v8614
      %v8623 = vmul.f32 %v8557, %v8615
      %v8625 = vsel %vm2340, %v8616, 0
      %v8628 = vsel %vm2340, %v8617, 0
      %v8631 = vsel %vm2340, %v8618, 0
      %v8634 = vsel %vm2340, %v8619, 0
      %v8637 = vsel %vm2340, %v8620, 0
      %v8640 = vsel %vm2340, %v8621, 0
      %v8643 = vsel %vm2340, %v8622, 0
      %v8646 = vsel %vm2340, %v8623, 0
      %v8649 = vsel %vm1372, %v5650, 0
      %8651 = vmatprep.subr.mxu0 0.0
      %8652 = vmatpush1.msra.mxu0 %v5649
      %8653 = vmatprep.subr.mxu0 0.0
      %8654 = vmatpush1.msra.mxu0 %v8649
      %8655 = vmatprep.subr.mxu0 0.0
      %8656 = vmatpush1.msra.mxu0 0.0
      %8657 = vmatprep.subr.mxu0 0.0
      %8658 = vmatpush1.msra.mxu0 0.0
      %8659 = vmatprep.subr.mxu0 0.0
      %8660 = vmatpush1.msra.mxu0 0.0
      %8661 = vmatprep.subr.mxu0 0.0
      %8662 = vmatpush1.msra.mxu0 0.0
      %8663 = vmatprep.subr.mxu0 0.0
      %8664 = vmatpush1.msra.mxu0 0.0
      %8665 = vmatprep.subr.mxu0 0.0
      %8666 = vmatpush1.msra.mxu0 0.0
      %8667 = vmatprep.subr.mxu0 0.0
      %8668 = vmatpush1.msra.mxu0 0.0
      %8669 = vmatprep.subr.mxu0 0.0
      %8670 = vmatpush1.msra.mxu0 0.0
      %8671 = vmatprep.subr.mxu0 0.0
      %8672 = vmatpush1.msra.mxu0 0.0
      %8673 = vmatprep.subr.mxu0 0.0
      %8674 = vmatpush1.msra.mxu0 0.0
      %8675 = vmatprep.subr.mxu0 0.0
      %8676 = vmatpush1.msra.mxu0 0.0
      %8677 = vmatprep.subr.mxu0 0.0
      %8678 = vmatpush1.msra.mxu0 0.0
      %8679 = vmatprep.subr.mxu0 0.0
      %8680 = vmatpush1.msra.mxu0 0.0
      %8681 = vmatprep.subr.mxu0 0.0
      %8682 = vmatpush1.msra.mxu0 0.0
      %8683 = vmatprep.subr.mxu0 0.0
      %8684 = vmatpush1.msra.mxu0 0.0
      %8685 = vmatprep.subr.mxu0 0.0
      %8686 = vmatpush1.msra.mxu0 0.0
      %8687 = vmatprep.subr.mxu0 0.0
      %8688 = vmatpush1.msra.mxu0 0.0
      %8689 = vmatprep.subr.mxu0 0.0
      %8690 = vmatpush1.msra.mxu0 0.0
      %8691 = vmatprep.subr.mxu0 0.0
      %8692 = vmatpush1.msra.mxu0 0.0
      %8693 = vmatprep.subr.mxu0 0.0
      %8694 = vmatpush1.msra.mxu0 0.0
      %8695 = vmatprep.subr.mxu0 0.0
      %8696 = vmatpush1.msra.mxu0 0.0
      %8697 = vmatprep.subr.mxu0 0.0
      %8698 = vmatpush1.msra.mxu0 0.0
      %8699 = vmatprep.subr.mxu0 0.0
      %8700 = vmatpush1.msra.mxu0 0.0
      %8701 = vmatprep.subr.mxu0 0.0
      %8702 = vmatpush1.msra.mxu0 0.0
      %8703 = vmatprep.subr.mxu0 0.0
      %8704 = vmatpush1.msra.mxu0 0.0
      %8705 = vmatprep.subr.mxu0 0.0
      %8706 = vmatpush1.msra.mxu0 0.0
      %8707 = vmatprep.subr.mxu0 0.0
      %8708 = vmatpush1.msra.mxu0 0.0
      %8709 = vmatprep.subr.mxu0 0.0
      %8710 = vmatpush1.msra.mxu0 0.0
      %8711 = vmatprep.subr.mxu0 0.0
      %8712 = vmatpush1.msra.mxu0 0.0
      %8713 = vmatprep.subr.mxu0 0.0
      %8714 = vmatpush1.msra.mxu0 0.0
      %8715 = vmatprep.mubr.f32.mxu0 0.0
      %8716 = vmatmul.mubr.f32.gmra.mrb[0].mxu0 %v8625
      %v8717 = vpop.f32.mrb[0].mxu0
      %v8718 = vadd.f32 0.0, %v8717
      %v8719 = vpop.f32.mrb[0].mxu0
      %8720 = vmatprep.mubr.f32.mxu0 0.0
      %8721 = vmatmul.mubr.f32.gmra.mrb[0].mxu0 %v8628
      %v8722 = vpop.f32.mrb[0].mxu0
      %v8723 = vadd.f32 0.0, %v8722
      %v8724 = vpop.f32.mrb[0].mxu0
      %8725 = vmatprep.mubr.f32.mxu0 0.0
      %8726 = vmatmul.mubr.f32.gmra.mrb[0].mxu0 %v8631
      %v8727 = vpop.f32.mrb[0].mxu0
      %v8728 = vadd.f32 0.0, %v8727
      %v8729 = vpop.f32.mrb[0].mxu0
      %8730 = vmatprep.mubr.f32.mxu0 0.0
      %8731 = vmatmul.mubr.f32.gmra.mrb[0].mxu0 %v8634
      %v8732 = vpop.f32.mrb[0].mxu0
      %v8733 = vadd.f32 0.0, %v8732
      %v8734 = vpop.f32.mrb[0].mxu0
      %8735 = vmatprep.mubr.f32.mxu0 0.0
      %8736 = vmatmul.mubr.f32.gmra.mrb[0].mxu0 %v8637
      %v8737 = vpop.f32.mrb[0].mxu0
      %v8738 = vadd.f32 0.0, %v8737
      %v8739 = vpop.f32.mrb[0].mxu0
      %8740 = vmatprep.mubr.f32.mxu0 0.0
      %8741 = vmatmul.mubr.f32.gmra.mrb[0].mxu0 %v8640
      %v8742 = vpop.f32.mrb[0].mxu0
      %v8743 = vadd.f32 0.0, %v8742
      %v8744 = vpop.f32.mrb[0].mxu0
      %8745 = vmatprep.mubr.f32.mxu0 0.0
      %8746 = vmatmul.mubr.f32.gmra.mrb[0].mxu0 %v8643
      %v8747 = vpop.f32.mrb[0].mxu0
      %v8748 = vadd.f32 0.0, %v8747
      %v8749 = vpop.f32.mrb[0].mxu0
      %8750 = vmatprep.mubr.f32.mxu0 0.0
      %8751 = vmatmul.mubr.f32.gmra.mrb[0].mxu0 %v8646
      %v8752 = vpop.f32.mrb[0].mxu0
      %v8753 = vadd.f32 0.0, %v8752
      %v8754 = vpop.f32.mrb[0].mxu0
      %8755 = vdwg.mxu0
      %v8756 = vsel %vm1213, %v8718, 0.0
      %8757 = vadd.xlane.f32.xlu0 %v8756
      %v8758 = vpop.xlane.xlu0 %8757
      %v8759 = vsel %vm1213, %v8723, 0.0
      %8760 = vadd.xlane.f32.xlu0 %v8759
      %v8761 = vpop.xlane.xlu0 %8760
      %v8762 = vsel %vm1213, %v8728, 0.0
      %8763 = vadd.xlane.f32.xlu0 %v8762
      %v8764 = vpop.xlane.xlu0 %8763
      %v8765 = vsel %vm1213, %v8733, 0.0
      %8766 = vadd.xlane.f32.xlu0 %v8765
      %v8767 = vpop.xlane.xlu0 %8766
      %v8768 = vsel %vm1213, %v8738, 0.0
      %8769 = vadd.xlane.f32.xlu0 %v8768
      %v8770 = vpop.xlane.xlu0 %8769
      %v8771 = vsel %vm1213, %v8743, 0.0
      %8772 = vadd.xlane.f32.xlu0 %v8771
      %v8773 = vpop.xlane.xlu0 %8772
      %v8774 = vsel %vm1213, %v8748, 0.0
      %8775 = vadd.xlane.f32.xlu0 %v8774
      %v8776 = vpop.xlane.xlu0 %8775
      %v8777 = vsel %vm1213, %v8753, 0.0
      %8778 = vadd.xlane.f32.xlu0 %v8777
      %v8779 = vpop.xlane.xlu0 %8778
      %v8780 = vrcp.pop 2.0
      %v8781 = vmul.f32 %v8758, %v8780
      %v8782 = vmul.f32 %v8761, %v8780
      %v8783 = vmul.f32 %v8764, %v8780
      %v8784 = vmul.f32 %v8767, %v8780
      %v8785 = vmul.f32 %v8770, %v8780
      %v8786 = vmul.f32 %v8773, %v8780
      %v8787 = vmul.f32 %v8776, %v8780
      %v8788 = vmul.f32 %v8779, %v8780
      %v8789 = vsub.f32 %v8718, %v8781
      %v8790 = vsub.f32 %v8723, %v8782
      %v8791 = vsub.f32 %v8728, %v8783
      %v8792 = vsub.f32 %v8733, %v8784
      %v8793 = vsub.f32 %v8738, %v8785
      %v8794 = vsub.f32 %v8743, %v8786
      %v8795 = vsub.f32 %v8748, %v8787
      %v8796 = vsub.f32 %v8753, %v8788
      %v8797 = vmul.f32 %v8789, %v8789
      %v8798 = vmul.f32 %v8790, %v8790
      %v8799 = vmul.f32 %v8791, %v8791
      %v8800 = vmul.f32 %v8792, %v8792
      %v8801 = vmul.f32 %v8793, %v8793
      %v8802 = vmul.f32 %v8794, %v8794
      %v8803 = vmul.f32 %v8795, %v8795
      %v8804 = vmul.f32 %v8796, %v8796
      %v8805 = vsel %vm1213, %v8797, 0.0
      %8806 = vadd.xlane.f32.xlu0 %v8805
      %v8807 = vpop.xlane.xlu0 %8806
      %v8808 = vsel %vm1213, %v8798, 0.0
      %8809 = vadd.xlane.f32.xlu0 %v8808
      %v8810 = vpop.xlane.xlu0 %8809
      %v8811 = vsel %vm1213, %v8799, 0.0
      %8812 = vadd.xlane.f32.xlu0 %v8811
      %v8813 = vpop.xlane.xlu0 %8812
      %v8814 = vsel %vm1213, %v8800, 0.0
      %8815 = vadd.xlane.f32.xlu0 %v8814
      %v8816 = vpop.xlane.xlu0 %8815
      %v8817 = vsel %vm1213, %v8801, 0.0
      %8818 = vadd.xlane.f32.xlu0 %v8817
      %v8819 = vpop.xlane.xlu0 %8818
      %v8820 = vsel %vm1213, %v8802, 0.0
      %8821 = vadd.xlane.f32.xlu0 %v8820
      %v8822 = vpop.xlane.xlu0 %8821
      %v8823 = vsel %vm1213, %v8803, 0.0
      %8824 = vadd.xlane.f32.xlu0 %v8823
      %v8825 = vpop.xlane.xlu0 %8824
      %v8826 = vsel %vm1213, %v8804, 0.0
      %8827 = vadd.xlane.f32.xlu0 %v8826
      %v8828 = vpop.xlane.xlu0 %8827
      %v8829 = vmul.f32 %v8807, %v8780
      %v8830 = vmul.f32 %v8810, %v8780
      %v8831 = vmul.f32 %v8813, %v8780
      %v8832 = vmul.f32 %v8816, %v8780
      %v8833 = vmul.f32 %v8819, %v8780
      %v8834 = vmul.f32 %v8822, %v8780
      %v8835 = vmul.f32 %v8825, %v8780
      %v8836 = vmul.f32 %v8828, %v8780
      %v8837 = vadd.f32 %v8829, 1e-05
      %v8838 = vadd.f32 %v8830, 1e-05
      %v8839 = vadd.f32 %v8831, 1e-05
      %v8840 = vadd.f32 %v8832, 1e-05
      %v8841 = vadd.f32 %v8833, 1e-05
      %v8842 = vadd.f32 %v8834, 1e-05
      %v8843 = vadd.f32 %v8835, 1e-05
      %v8844 = vadd.f32 %v8836, 1e-05
      %v8845 = vrsqrt.pop %v8837
      %v8846 = vrsqrt.pop %v8838
      %v8847 = vrsqrt.pop %v8839
      %v8848 = vrsqrt.pop %v8840
      %v8849 = vrsqrt.pop %v8841
      %v8850 = vrsqrt.pop %v8842
      %v8851 = vrsqrt.pop %v8843
      %v8852 = vrsqrt.pop %v8844
      %v8853 = vmul.f32 %v8789, %v8845
      %v8854 = vmul.f32 %v8790, %v8846
      %v8855 = vmul.f32 %v8791, %v8847
      %v8856 = vmul.f32 %v8792, %v8848
      %v8857 = vmul.f32 %v8793, %v8849
      %v8858 = vmul.f32 %v8794, %v8850
      %v8859 = vmul.f32 %v8795, %v8851
      %v8860 = vmul.f32 %v8796, %v8852
      %v8862 = vlaneseq
      %v8863 = vshrl.u32 %v8862, 7
      %v8864 = vsub.s32 0, %v8863
      %v8865 = vrot.slane %v5651, %v8864
      %v8867 = vmul.f32 %v8853, %v8865
      %v8868 = vmul.f32 %v8854, %v8865
      %v8869 = vmul.f32 %v8855, %v8865
      %v8870 = vmul.f32 %v8856, %v8865
      %v8871 = vmul.f32 %v8857, %v8865
      %v8872 = vmul.f32 %v8858, %v8865
      %v8873 = vmul.f32 %v8859, %v8865
      %v8874 = vmul.f32 %v8860, %v8865
      %v8876 = vlaneseq
      %v8877 = vshrl.u32 %v8876, 7
      %v8878 = vsub.s32 0, %v8877
      %v8879 = vrot.slane %v5652, %v8878
      %v8881 = vadd.f32 %v8867, %v8879
      %v8882 = vadd.f32 %v8868, %v8879
      %v8883 = vadd.f32 %v8869, %v8879
      %v8884 = vadd.f32 %v8870, %v8879
      %v8885 = vadd.f32 %v8871, %v8879
      %v8886 = vadd.f32 %v8872, %v8879
      %v8887 = vadd.f32 %v8873, %v8879
      %v8888 = vadd.f32 %v8874, %v8879
      %v8889 = vmax.f32 %v8881, 0.0
      %v8890 = vmax.f32 %v8882, 0.0
      %v8891 = vmax.f32 %v8883, 0.0
      %v8892 = vmax.f32 %v8884, 0.0
      %v8893 = vmax.f32 %v8885, 0.0
      %v8894 = vmax.f32 %v8886, 0.0
      %v8895 = vmax.f32 %v8887, 0.0
      %v8896 = vmax.f32 %v8888, 0.0
      %8897 = vst.msk [vmem:[%s1034] sm:$0xff] %vm1213, %v8889
      %8898 = vst.msk [vmem:[%s1034 + $0x8] sm:$0xff] %vm1213, %v8890
      %8899 = vst.msk [vmem:[%s1034 + $0x10] sm:$0xff] %vm1213, %v8891
      %8900 = vst.msk [vmem:[%s1034 + $0x18] sm:$0xff] %vm1213, %v8892
      %8901 = vst.msk [vmem:[%s1034 + $0x20] sm:$0xff] %vm1213, %v8893
      %8902 = vst.msk [vmem:[%s1034 + $0x28] sm:$0xff] %vm1213, %v8894
      %8903 = vst.msk [vmem:[%s1034 + $0x30] sm:$0xff] %vm1213, %v8895
      %8904 = vst.msk [vmem:[%s1034 + $0x38] sm:$0xff] %vm1213, %v8896
      %p8905 = scmp.lt.s32.totalorder %s78, 1
      %s8906 = scalar_select %p8905, %s78, 1
      %s8907 = smul.addr %s8906, 8
      %s8908 = smul.addr %s8907, 8
      %s8909 = scalar_lea.vmem %s67, %s8908
      // Predicated region
      $region153: #{up_forward.1} parent=151 // pred_check
        %p8910 = pneg %p799
      $region154: #{up_forward.1} parent=151 // pred_check_branch
        %8912 = sbr.rel (%p8910) target = $region156
      $region155: #{up_forward.1} parent=151 // pred_region
        _
      $region156: #{up_forward.1} parent=151 // pred_fallthru
        _
    $region152: #{up_forward.1} parent=5 // pred_fallthru
      _
    %p8913 = scmp.le.s32.totalorder 2, %s73
    // Predicated region
    $region157: #{up_forward.1} parent=5 // pred_check
      %p8914 = pneg %p8913
    $region158: #{up_forward.1} parent=5 // pred_check_branch
      %8916 = sbr.rel (%p8914) target = $region160
    $region159: #{up_forward.1} parent=5 // pred_region
      %s8917 = ssub.s32 %s73, 2
      // Predicated region
      $region161: #{up_forward.1} parent=159 // pred_check
        %p8918 = pneg %p805
      $region162: #{up_forward.1} parent=159 // pred_check_branch
        %8920 = sbr.rel (%p8918) target = $region164
      $region163: #{up_forward.1} parent=159 // pred_region
        %p8921 = scmp.lt.s32.totalorder %s79, 1
        %s8922 = scalar_select %p8921, %s79, 1
        %s8923 = smul.addr %s8922, 8
        %s8924 = smul.addr %s8923, 8
        %s8925 = scalar_lea.vmem %s67, %s8924
      $region164: #{up_forward.1} parent=159 // pred_fallthru
        _
    $region160: #{up_forward.1} parent=5 // pred_fallthru
      _
  $region6: #{up_forward.1} parent=0 // loop_footer
    %s77 = sadd.s32 1, %s73
  $region7: #{up_forward.1} parent=0 // loop_footer_branch
    %72 = sbr.rel target = $region3
  $region8: #{up_forward.1} parent=0 // loop_exit
    _

</llo_original>
